<compile_context>
chip_gen: v6e
topology: v6e:2x2x1
jax: 0.10.0
libtpu: 0.0.40
codegen_flags: <defaults>
</compile_context>

<pallas_src>
import jax
import jax.numpy as jnp
import numpy as np
from jax.experimental import pallas as pl
from jax.experimental.pallas import tpu as pltpu

BN_EPS = 1e-5
LANE = 256  # lane width of both packed constant slabs and all intermediate activations


def _fold_bn(bn):
    s = bn["gamma"] / jnp.sqrt(bn["var"] + BN_EPS)
    return s, bn["beta"] - bn["mean"] * s


# ----------------------------- constant packing -----------------------------

class _Packer:
    """Packs many small 2-D constants into one (rows, LANE) slab.

    Every block is zero-padded to LANE lanes and its row count rounded up to
    `align`, so each block starts at an aligned sublane offset and the kernel
    can address it with static slices (zero-cost ref views)."""

    def __init__(self, lane, align):
        self.lane, self.align = lane, align
        self.blocks, self.meta, self.row = [], {}, 0

    def add(self, name, a):
        a = jnp.asarray(a, jnp.float32)
        r, c = int(a.shape[0]), int(a.shape[1])
        rp = -(-r // self.align) * self.align
        self.blocks.append(jnp.pad(a, ((0, rp - r), (0, self.lane - c))))
        self.meta[name] = (self.row, r, c)
        self.row += rp

    def finish(self, dtype):
        return jnp.concatenate(self.blocks, axis=0).astype(dtype), dict(self.meta)


def _sel_mats(batch, h_in, stride):
    """Row-selection matrices (3, batch*h_out, batch*h_in): H padding + stride."""
    h_out = (h_in + 2 - 3) // stride + 1
    sel = np.zeros((3, batch * h_out, batch * h_in), np.float32)
    for kh in range(3):
        for b in range(batch):
            for io in range(h_out):
                ii = stride * io + kh - 1
                if 0 <= ii < h_in:
                    sel[kh, b * h_out + io, b * h_in + ii] = 1.0
    return sel, h_out


def _baked_weights(w_oihw, scale, shift, w_in, stride):
    """Stacked (3*W_in*C_in, W_out*C_out) weight matrix (kh-major rows; W
    padding, stride and folded BN scale baked in) and (1, W_out*C_out) bias."""
    c_out, c_in = int(w_oihw.shape[0]), int(w_oihw.shape[1])
    w_out = (w_in + 2 - 3) // stride + 1
    place = np.zeros((3, w_in, w_out), np.float32)
    for kw in range(3):
        for jo in range(w_out):
            ji = stride * jo + kw - 1
            if 0 <= ji < w_in:
                place[kw, ji, jo] = 1.0
    ws = jnp.asarray(w_oihw, jnp.float32) * scale[:, None, None, None]
    wb = jnp.einsum("dpq,oiad->apiqo", jnp.asarray(place), ws)
    wb = wb.reshape(3 * w_in * c_in, w_out * c_out)
    bias_row = jnp.tile(shift, w_out).reshape(1, w_out * c_out)
    return wb, bias_row


def _se_consts(batch, h, w, c):
    pr = np.zeros((batch, batch * h), np.float32)
    er = np.zeros((batch * h, batch), np.float32)
    for b in range(batch):
        pr[b, b * h:(b + 1) * h] = 1.0 / h
        er[b * h:(b + 1) * h, b] = 1.0
    plm = np.tile(np.eye(c, dtype=np.float32), (w, 1)) / w      # (W*C, C)
    elm = np.tile(np.eye(c, dtype=np.float32), (1, w))          # (C, W*C)
    return pr, plm, er, elm


def pack_constants(params, batch_block):
    """One-time (outside jit) packing of every constant the kernel needs into
    a bf16 slab (weights / selection / SE matrices) and an f32 slab (biases,
    BN shifts, linear head)."""
    p = params
    bb = batch_block
    pc = _Packer(LANE, align=16)   # bf16 slab (16-row alignment for bf16 tiling)
    pm = _Packer(LANE, align=8)    # f32 slab

    # Selection matrices (shared between layers with identical geometry).
    for nm, (sel, _) in (
        ("s1", _sel_mats(bb, 32, 2)),   # 32 -> 16, stride 2   (conv1)
        ("sA", _sel_mats(bb, 16, 1)),   # 16 -> 16, stride 1   (conv2, conv3)
        ("s4", _sel_mats(bb, 16, 2)),   # 16 -> 8,  stride 2   (conv4)
        ("sB", _sel_mats(bb, 8, 1)),    # 8  -> 8,  stride 1   (conv5, conv6)
        ("s7", _sel_mats(bb, 8, 2)),    # 8  -> 4,  stride 2   (conv7)
    ):
        for kh in range(3):
            pc.add(f"{nm}_k{kh}", sel[kh])

    ones16 = jnp.ones((16,), jnp.float32)
    ones32 = jnp.ones((32,), jnp.float32)
    ones1 = jnp.ones((1,), jnp.float32)

    sc, sh = _fold_bn(p["bn1"])
    wb, br = _baked_weights(p["w1"], sc, sh, 32, 2)
    pc.add("wb1", wb); pm.add("b1", br)
    sc, sh = _fold_bn(p["bn2"])
    wb, br = _baked_weights(p["w2"], sc, sh, 16, 1)
    pc.add("wb2", wb); pm.add("b2", br)
    wb, br = _baked_weights(p["w3"], ones16, p["b3"], 16, 1)
    pc.add("wb3", wb); pm.add("b3", br)
    sc, sh = _fold_bn(p["bn3"])
    wb, br = _baked_weights(p["w4"], sc, sh, 16, 2)
    pc.add("wb4", wb); pm.add("b4", br)
    sc, sh = _fold_bn(p["bn4"])
    wb, br = _baked_weights(p["w5"], sc, sh, 8, 1)
    pc.add("wb5", wb); pm.add("b5", br)
    wb, br = _baked_weights(p["w6"], ones32, p["b6"], 8, 1)
    pc.add("wb6", wb); pm.add("b6", br)
    wb, _ = _baked_weights(p["w7"], ones1, jnp.zeros((1,), jnp.float32), 8, 2)
    pc.add("wb7", jnp.pad(wb, ((0, 0), (0, LANE - wb.shape[1]))))   # N padded 4 -> 256
    pm.add("b7", jnp.zeros((1, LANE), jnp.float32))                  # bias-free conv

    # SE blocks.
    for nm, se_p, h, c in (("se1", p["se1"], 16, 16), ("se2", p["se2"], 8, 32)):
        pr, plm, er, elm = _se_consts(bb, h, h, c)
        pc.add(nm + "_pr", pr); pc.add(nm + "_pl", plm)
        pc.add(nm + "_er", er); pc.add(nm + "_el", elm)
        pc.add(nm + "_w1", se_p["w1"]); pc.add(nm + "_w2", se_p["w2"])
        pm.add(nm + "_b1", se_p["b1"]); pm.add(nm + "_b2", se_p["b2"])

    # Flatten + Linear(16 -> 1) head (C_out of conv7 == 1, so NCHW flatten == row layout).
    wlin = jnp.tile(p["lin_w"].reshape(4, 4), (bb, 1))               # (bb*4, 4)
    pm.add("wlin", jnp.pad(wlin, ((0, 0), (0, LANE - 4))))
    rsum = np.zeros((bb, bb * 4), np.float32)
    for b in range(bb):
        rsum[b, b * 4:(b + 1) * 4] = 1.0
    pm.add("rsum", rsum)
    pm.add("linb", p["lin_b"].reshape(1, 1))

    cb, meta_c = pc.finish(jnp.bfloat16)
    ms, meta_m = pm.finish(jnp.float32)
    return cb, ms, meta_c, meta_m


# ----------------------------- fused Pallas forward -----------------------------

def make_forward(meta_c, meta_m, batch_block):
    bb = batch_block

    def kernel(x_ref, cb_ref, ms_ref, o_ref, lhs_ref):
        def blk(name):                       # bf16 constant block (static view)
            r0, r, c = meta_c[name]
            return cb_ref[r0:r0 + r, 0:c]

        def mblk(name):                      # f32 constant block (static view)
            r0, r, c = meta_m[name]
            return ms_ref[r0:r0 + r, 0:c]

        def swish(z):
            return z * jax.nn.sigmoid(z)

        def conv_fused(x, s_name, m_out, wb_name, b_name, act):
            # Assemble [S0@x | S1@x | S2@x] at lane offsets 0/256/512 (128-aligned),
            # then a single K=768 matmul against the vertically stacked weights.
            xb = x.astype(jnp.bfloat16)
            for kh in range(3):
                part = jnp.dot(blk(f"{s_name}_k{kh}"), xb,
                               preferred_element_type=jnp.float32)
                lhs_ref[0:m_out, kh * LANE:(kh + 1) * LANE] = part.astype(jnp.bfloat16)
            y = jnp.dot(lhs_ref[0:m_out, :], blk(wb_name),
                        preferred_element_type=jnp.float32) + mblk(b_name)
            return swish(y) if act else y

        def conv1(x):
            # K per kh is only 32 (single input channel): keep the 3-matmul
            # accumulate form instead of zero-padding the fused LHS.
            xb = x.astype(jnp.bfloat16)
            r0, rows, _ = meta_c["wb1"]
            k1 = rows // 3
            acc = None
            for kh in range(3):
                t = jnp.dot(blk(f"s1_k{kh}"), xb, preferred_element_type=jnp.float32)
                w = cb_ref[r0 + kh * k1:r0 + (kh + 1) * k1, 0:LANE]
                p = jnp.dot(t.astype(jnp.bfloat16), w, preferred_element_type=jnp.float32)
                acc = p if acc is None else acc + p
            return swish(acc + mblk("b1"))

        def se_block(x, nm):
            xb = x.astype(jnp.bfloat16)
            pooled = jnp.dot(
                jnp.dot(blk(nm + "_pr"), xb,
                        preferred_element_type=jnp.float32).astype(jnp.bfloat16),
                blk(nm + "_pl"), preferred_element_type=jnp.float32)        # (bb, C)
            h = swish(jnp.dot(pooled.astype(jnp.bfloat16), blk(nm + "_w1"),
                              preferred_element_type=jnp.float32) + mblk(nm + "_b1"))
            g = jax.nn.sigmoid(jnp.dot(h.astype(jnp.bfloat16), blk(nm + "_w2"),
                                       preferred_element_type=jnp.float32) + mblk(nm + "_b2"))
            gate = jnp.dot(
                jnp.dot(blk(nm + "_er"), g.astype(jnp.bfloat16),
                        preferred_element_type=jnp.float32).astype(jnp.bfloat16),
                blk(nm + "_el"), preferred_element_type=jnp.float32)        # (bb*H, W*C)
            return x * gate

        x = conv1(x_ref[...])                                  # (bb*16, 256)
        x = conv_fused(x, "sA", bb * 16, "wb2", "b2", True)    # (bb*16, 256)
        x = conv_fused(x, "sA", bb * 16, "wb3", "b3", False)   # (bb*16, 256)
        x = se_block(x, "se1")
        x = conv_fused(x, "s4", bb * 8, "wb4", "b4", True)     # (bb*8, 256)
        x = conv_fused(x, "sB", bb * 8, "wb5", "b5", True)     # (bb*8, 256)
        x = conv_fused(x, "sB", bb * 8, "wb6", "b6", False)    # (bb*8, 256)
        x = se_block(x, "se2")
        x = conv_fused(x, "s7", bb * 4, "wb7", "b7", True)     # (bb*4, 256); cols>=4 are 0

        # Flatten + Linear(16 -> 1): lane-weighted sum, then per-batch row sum.
        z = jnp.sum(x * mblk("wlin"), axis=1, keepdims=True)   # (bb*4, 1)
        out = jnp.dot(mblk("rsum"), z,
                      preferred_element_type=jnp.float32) + mblk("linb")    # (bb, 1)
        o_ref[0, :, :] = out

    def forward(cb, ms, x_nchw):
        batch = x_nchw.shape[0]
        assert batch % bb == 0, "batch must be a multiple of the batch block"
        nblk = batch // bb
        x0 = x_nchw.astype(jnp.float32).reshape(batch * 32, 32)   # row layout (B*H, W*Cin)

        const_bytes = cb.size * cb.dtype.itemsize + ms.size * ms.dtype.itemsize
        # Derived from the packed (double-buffered) footprint + slack, not a fixed 32 MiB.
        vmem_limit = int(2 * const_bytes + 16 * 1024 * 1024)

        m16, m8, m4 = bb * 16, bb * 8, bb * 4
        macs = (3 * (m16 * (bb * 32) * 32 + m16 * 32 * 256)                      # conv1
                + 3 * 256 * (2 * m16 * m16 + m8 * m16 + 2 * m8 * m8 + m4 * m8)  # S fills
                + (2 * m16 + 3 * m8 + m4) * 768 * 256                           # fused convs
                + 2 * (m16 * 256 * 48 + bb * 16 * 64))                          # SE (approx)
        cost = pl.CostEstimate(
            flops=int(2 * nblk * macs),
            transcendentals=int(nblk * (2 * m16 + 2 * m8 + m4 + 8 * bb) * 256),
            bytes_accessed=int(const_bytes + batch * 32 * 32 * 4 + batch * 4))

        out = pl.pallas_call(
            kernel,
            out_shape=jax.ShapeDtypeStruct((nblk, bb, 1), jnp.float32),
            grid_spec=pltpu.PrefetchScalarGridSpec(
                num_scalar_prefetch=0,
                grid=(nblk,),
                in_specs=[
                    pl.BlockSpec((bb * 32, 32), lambda i: (i, 0)),   # activations: per block
                    pl.BlockSpec(cb.shape, lambda i: (0, 0)),        # packed bf16 consts: resident
                    pl.BlockSpec(ms.shape, lambda i: (0, 0)),        # packed f32 consts: resident
                ],
                out_specs=pl.BlockSpec((1, bb, 1), lambda i: (i, 0, 0)),
                scratch_shapes=[pltpu.VMEM((bb * 16, 3 * LANE), jnp.bfloat16)],
            ),
            compiler_params=pltpu.CompilerParams(
                dimension_semantics=("parallel",),
                vmem_limit_bytes=vmem_limit),
            cost_estimate=cost,
        )(x0, cb, ms)
        return out.reshape(batch, 1)

    return forward


# ----------------------------- parameters -----------------------------

def init_params(key):
    keys = iter(jax.random.split(key, 64))
    nk = lambda: next(keys)

    def conv_w(cout, cin):
        return 0.1 * jax.random.normal(nk(), (cout, cin, 3, 3), jnp.float32)

    def bn(c):
        # Eval-mode BatchNorm with synthetic (deterministic) running stats.
        return dict(
            gamma=1.0 + 0.1 * jax.random.normal(nk(), (c,), jnp.float32),
            beta=0.1 * jax.random.normal(nk(), (c,), jnp.float32),
            mean=0.1 * jax.random.normal(nk(), (c,), jnp.float32),
            var=1.0 + 0.1 * jax.random.uniform(nk(), (c,), jnp.float32),
        )

    def se(c, reduction=4):
        cr = max(c // reduction, 1)
        return dict(
            w1=0.1 * jax.random.normal(nk(), (c, cr), jnp.float32),
            b1=0.1 * jax.random.normal(nk(), (1, cr), jnp.float32),
            w2=0.1 * jax.random.normal(nk(), (cr, c), jnp.float32),
            b2=0.1 * jax.random.normal(nk(), (1, c), jnp.float32),
        )

    return dict(
        w1=conv_w(16, 1), bn1=bn(16),
        w2=conv_w(16, 16), bn2=bn(16),
        w3=conv_w(16, 16), b3=0.1 * jax.random.normal(nk(), (16,), jnp.float32),
        se1=se(16),
        w4=conv_w(32, 16), bn3=bn(32),
        w5=conv_w(32, 32), bn4=bn(32),
        w6=conv_w(32, 32), b6=0.1 * jax.random.normal(nk(), (32,), jnp.float32),
        se2=se(32),
        w7=conv_w(1, 32),
        lin_w=0.1 * jax.random.normal(nk(), (16, 1), jnp.float32),
        lin_b=0.1 * jax.random.normal(nk(), (1,), jnp.float32),
    )


# ----------------------------- pure-JAX reference -----------------------------

def reference_forward(params, x_nchw):
    p = params
    hi = jax.lax.Precision.HIGHEST

    def conv(x, w_oihw, stride, bias=None):
        y = jax.lax.conv_general_dilated(
            x, jnp.transpose(w_oihw, (2, 3, 1, 0)),
            window_strides=(stride, stride), padding=((1, 1), (1, 1)),
            dimension_numbers=("NHWC", "HWIO", "NHWC"), precision=hi)
        return y if bias is None else y + bias

    def swish(z):
        return z * jax.nn.sigmoid(z)

    def bn(x, d):
        s, b = _fold_bn(d)
        return x * s + b

    def se(x, d):
        pooled = x.mean(axis=(1, 2))
        h = swish(jnp.dot(pooled, d["w1"], precision=hi) + d["b1"])
        g = jax.nn.sigmoid(jnp.dot(h, d["w2"], precision=hi) + d["b2"])
        return x * g[:, None, None, :]

    x = jnp.transpose(x_nchw, (0, 2, 3, 1)).astype(jnp.float32)
    x = swish(bn(conv(x, p["w1"], 2), p["bn1"]))
    x = swish(bn(conv(x, p["w2"], 1), p["bn2"]))
    x = conv(x, p["w3"], 1, bias=p["b3"])
    x = se(x, p["se1"])
    x = swish(bn(conv(x, p["w4"], 2), p["bn3"]))
    x = swish(bn(conv(x, p["w5"], 1), p["bn4"]))
    x = conv(x, p["w6"], 1, bias=p["b6"])
    x = se(x, p["se2"])
    x = swish(conv(x, p["w7"], 2))
    flat = x.reshape(x.shape[0], 16)
    return jnp.dot(flat, p["lin_w"], precision=hi) + p["lin_b"].reshape(1, 1)


# ----------------------------- main -----------------------------

if __name__ == "__main__":
    key = jax.random.PRNGKey(0)
    k_params, k_x = jax.random.split(key)

    params = init_params(k_params)
    # StandardImageBatch.data: single-channel 32x32 images (Linear(1*4*4, 1)
    # after three stride-2 convs implies 32x32 input), NCHW as in PyTorch.
    x = jax.random.normal(k_x, (2, 1, 32, 32), jnp.float32)

    batch_block = 2
    cb, ms, meta_c, meta_m = pack_constants(params, batch_block)   # one-time weight packing
    fwd = jax.jit(make_forward(meta_c, meta_m, batch_block))

    logits = jax.block_until_ready(fwd(cb, ms, x))

    ref = reference_forward(params, x)
    assert logits.shape == (2, 1), logits.shape
    # bf16 matmul inputs (f32 accumulation) vs. pure-f32 reference.
    assert jnp.allclose(logits, ref, atol=3e-2, rtol=3e-2), (logits, ref)

    print("KERNEL_OK")
</pallas_src>

<mosaic_0001>
module attributes {stable_mosaic.version = 11 : i64} {
  func.func @kernel(%arg0: i32, %arg1: memref<64x32xf32, #tpu.memory_space<vmem>>, %arg2: memref<5760x256xbf16, #tpu.memory_space<vmem>>, %arg3: memref<112x256xf32, #tpu.memory_space<vmem>>, %arg4: memref<1x2x1xf32, #tpu.memory_space<vmem>>, %arg5: memref<32x768xbf16, #tpu.memory_space<vmem>>) attributes {dimension_semantics = [#tpu.dimension_semantics<parallel>], iteration_bounds = array<i64: 1>, scalar_prefetch = 0 : i64, scratch_operands = 1 : i64, tpu.core_type = #tpu.core_type<tc>, window_params = [{transform_indices = @transform_0, window_bounds = array<i64: 64, 32>}, {pipeline_mode = #tpu.pipeline_mode<synchronous>, transform_indices = @transform_1, window_bounds = array<i64: 5760, 256>}, {pipeline_mode = #tpu.pipeline_mode<synchronous>, transform_indices = @transform_2, window_bounds = array<i64: 112, 256>}, {transform_indices = @transform_3, window_bounds = array<i64: 1, 2, 1>}]} {
    %c0 = arith.constant 0 : index
    %c0_0 = arith.constant 0 : index
    %0 = vector.load %arg1[%c0, %c0_0] : memref<64x32xf32, #tpu.memory_space<vmem>>, vector<64x32xf32>
    %1 = arith.truncf %0 : vector<64x32xf32> to vector<64x32xbf16>
    %c0_1 = arith.constant 0 : index
    %c0_2 = arith.constant 0 : index
    %2 = vector.load %arg2[%c0_1, %c0_2] : memref<5760x256xbf16, #tpu.memory_space<vmem>>, vector<32x64xbf16>
    %cst = arith.constant dense<0.000000e+00> : vector<32x32xf32>
    %3 = tpu.matmul %2, %1, %cst {dimension_numbers = #tpu.dot_dimension_numbers<[1], [0], [0], [1], [0, 0, 1, 1], [], []>} : vector<32x64xbf16>, vector<64x32xbf16>, vector<32x32xf32> -> vector<32x32xf32>
    %c336 = arith.constant 336 : index
    %c0_3 = arith.constant 0 : index
    %4 = vector.load %arg2[%c336, %c0_3] : memref<5760x256xbf16, #tpu.memory_space<vmem>>, vector<32x256xbf16>
    %5 = arith.truncf %3 : vector<32x32xf32> to vector<32x32xbf16>
    %cst_4 = arith.constant dense<0.000000e+00> : vector<32x256xf32>
    %6 = tpu.matmul %5, %4, %cst_4 {dimension_numbers = #tpu.dot_dimension_numbers<[1], [0], [0], [1], [0, 0, 1, 1], [], []>} : vector<32x32xbf16>, vector<32x256xbf16>, vector<32x256xf32> -> vector<32x256xf32>
    %c32 = arith.constant 32 : index
    %c0_5 = arith.constant 0 : index
    %7 = vector.load %arg2[%c32, %c0_5] : memref<5760x256xbf16, #tpu.memory_space<vmem>>, vector<32x64xbf16>
    %cst_6 = arith.constant dense<0.000000e+00> : vector<32x32xf32>
    %8 = tpu.matmul %7, %1, %cst_6 {dimension_numbers = #tpu.dot_dimension_numbers<[1], [0], [0], [1], [0, 0, 1, 1], [], []>} : vector<32x64xbf16>, vector<64x32xbf16>, vector<32x32xf32> -> vector<32x32xf32>
    %c368 = arith.constant 368 : index
    %c0_7 = arith.constant 0 : index
    %9 = vector.load %arg2[%c368, %c0_7] : memref<5760x256xbf16, #tpu.memory_space<vmem>>, vector<32x256xbf16>
    %10 = arith.truncf %8 : vector<32x32xf32> to vector<32x32xbf16>
    %cst_8 = arith.constant dense<0.000000e+00> : vector<32x256xf32>
    %11 = tpu.matmul %10, %9, %cst_8 {dimension_numbers = #tpu.dot_dimension_numbers<[1], [0], [0], [1], [0, 0, 1, 1], [], []>} : vector<32x32xbf16>, vector<32x256xbf16>, vector<32x256xf32> -> vector<32x256xf32>
    %12 = arith.addf %6, %11 : vector<32x256xf32>
    %c64 = arith.constant 64 : index
    %c0_9 = arith.constant 0 : index
    %13 = vector.load %arg2[%c64, %c0_9] : memref<5760x256xbf16, #tpu.memory_space<vmem>>, vector<32x64xbf16>
    %cst_10 = arith.constant dense<0.000000e+00> : vector<32x32xf32>
    %14 = tpu.matmul %13, %1, %cst_10 {dimension_numbers = #tpu.dot_dimension_numbers<[1], [0], [0], [1], [0, 0, 1, 1], [], []>} : vector<32x64xbf16>, vector<64x32xbf16>, vector<32x32xf32> -> vector<32x32xf32>
    %c400 = arith.constant 400 : index
    %c0_11 = arith.constant 0 : index
    %15 = vector.load %arg2[%c400, %c0_11] : memref<5760x256xbf16, #tpu.memory_space<vmem>>, vector<32x256xbf16>
    %16 = arith.truncf %14 : vector<32x32xf32> to vector<32x32xbf16>
    %cst_12 = arith.constant dense<0.000000e+00> : vector<32x256xf32>
    %17 = tpu.matmul %16, %15, %cst_12 {dimension_numbers = #tpu.dot_dimension_numbers<[1], [0], [0], [1], [0, 0, 1, 1], [], []>} : vector<32x32xbf16>, vector<32x256xbf16>, vector<32x256xf32> -> vector<32x256xf32>
    %18 = arith.addf %12, %17 : vector<32x256xf32>
    %c0_13 = arith.constant 0 : index
    %c0_14 = arith.constant 0 : index
    %19 = vector.load %arg3[%c0_13, %c0_14] : memref<112x256xf32, #tpu.memory_space<vmem>>, vector<1x256xf32>
    %20 = vector.broadcast %19 : vector<1x256xf32> to vector<32x256xf32>
    %21 = arith.addf %18, %20 : vector<32x256xf32>
    %22 = arith.negf %21 : vector<32x256xf32>
    %23 = math.exp %22 : vector<32x256xf32>
    %cst_15 = arith.constant 1.000000e+00 : f32
    %24 = vector.broadcast %cst_15 : f32 to vector<32x256xf32>
    %25 = arith.addf %24, %23 : vector<32x256xf32>
    %26 = arith.divf %24, %25 : vector<32x256xf32>
    %27 = arith.mulf %21, %26 : vector<32x256xf32>
    %28 = arith.truncf %27 : vector<32x256xf32> to vector<32x256xbf16>
    %c96 = arith.constant 96 : index
    %c0_16 = arith.constant 0 : index
    %29 = vector.load %arg2[%c96, %c0_16] : memref<5760x256xbf16, #tpu.memory_space<vmem>>, vector<32x32xbf16>
    %cst_17 = arith.constant dense<0.000000e+00> : vector<32x256xf32>
    %30 = tpu.matmul %29, %28, %cst_17 {dimension_numbers = #tpu.dot_dimension_numbers<[1], [0], [0], [1], [0, 0, 1, 1], [], []>} : vector<32x32xbf16>, vector<32x256xbf16>, vector<32x256xf32> -> vector<32x256xf32>
    %31 = arith.truncf %30 : vector<32x256xf32> to vector<32x256xbf16>
    %c0_18 = arith.constant 0 : index
    %c0_19 = arith.constant 0 : index
    %32 = vector.load %arg5[%c0_18, %c0_19] : memref<32x768xbf16, #tpu.memory_space<vmem>>, vector<32x256xbf16>
    tpu.vector_store %arg5[%c0_18, %c0_19], %31 {strides = array<i32>} : memref<32x768xbf16, #tpu.memory_space<vmem>>, vector<32x256xbf16>,
    %c128 = arith.constant 128 : index
    %c0_20 = arith.constant 0 : index
    %33 = vector.load %arg2[%c128, %c0_20] : memref<5760x256xbf16, #tpu.memory_space<vmem>>, vector<32x32xbf16>
    %cst_21 = arith.constant dense<0.000000e+00> : vector<32x256xf32>
    %34 = tpu.matmul %33, %28, %cst_21 {dimension_numbers = #tpu.dot_dimension_numbers<[1], [0], [0], [1], [0, 0, 1, 1], [], []>} : vector<32x32xbf16>, vector<32x256xbf16>, vector<32x256xf32> -> vector<32x256xf32>
    %35 = arith.truncf %34 : vector<32x256xf32> to vector<32x256xbf16>
    %c0_22 = arith.constant 0 : index
    %c256 = arith.constant 256 : index
    %36 = vector.load %arg5[%c0_22, %c256] : memref<32x768xbf16, #tpu.memory_space<vmem>>, vector<32x256xbf16>
    tpu.vector_store %arg5[%c0_22, %c256], %35 {strides = array<i32>} : memref<32x768xbf16, #tpu.memory_space<vmem>>, vector<32x256xbf16>,
    %c160 = arith.constant 160 : index
    %c0_23 = arith.constant 0 : index
    %37 = vector.load %arg2[%c160, %c0_23] : memref<5760x256xbf16, #tpu.memory_space<vmem>>, vector<32x32xbf16>
    %cst_24 = arith.constant dense<0.000000e+00> : vector<32x256xf32>
    %38 = tpu.matmul %37, %28, %cst_24 {dimension_numbers = #tpu.dot_dimension_numbers<[1], [0], [0], [1], [0, 0, 1, 1], [], []>} : vector<32x32xbf16>, vector<32x256xbf16>, vector<32x256xf32> -> vector<32x256xf32>
    %39 = arith.truncf %38 : vector<32x256xf32> to vector<32x256xbf16>
    %c0_25 = arith.constant 0 : index
    %c512 = arith.constant 512 : index
    %40 = vector.load %arg5[%c0_25, %c512] : memref<32x768xbf16, #tpu.memory_space<vmem>>, vector<32x256xbf16>
    tpu.vector_store %arg5[%c0_25, %c512], %39 {strides = array<i32>} : memref<32x768xbf16, #tpu.memory_space<vmem>>, vector<32x256xbf16>,
    %c0_26 = arith.constant 0 : index
    %c0_27 = arith.constant 0 : index
    %41 = vector.load %arg5[%c0_26, %c0_27] : memref<32x768xbf16, #tpu.memory_space<vmem>>, vector<32x768xbf16>
    %c432 = arith.constant 432 : index
    %c0_28 = arith.constant 0 : index
    %42 = vector.load %arg2[%c432, %c0_28] : memref<5760x256xbf16, #tpu.memory_space<vmem>>, vector<768x256xbf16>
    %cst_29 = arith.constant dense<0.000000e+00> : vector<32x256xf32>
    %43 = tpu.matmul %41, %42, %cst_29 {dimension_numbers = #tpu.dot_dimension_numbers<[1], [0], [0], [1], [0, 0, 1, 1], [], []>} : vector<32x768xbf16>, vector<768x256xbf16>, vector<32x256xf32> -> vector<32x256xf32>
    %c8 = arith.constant 8 : index
    %c0_30 = arith.constant 0 : index
    %44 = vector.load %arg3[%c8, %c0_30] : memref<112x256xf32, #tpu.memory_space<vmem>>, vector<1x256xf32>
    %45 = vector.broadcast %44 : vector<1x256xf32> to vector<32x256xf32>
    %46 = arith.addf %43, %45 : vector<32x256xf32>
    %47 = arith.negf %46 : vector<32x256xf32>
    %48 = math.exp %47 : vector<32x256xf32>
    %cst_31 = arith.constant 1.000000e+00 : f32
    %49 = vector.broadcast %cst_31 : f32 to vector<32x256xf32>
    %50 = arith.addf %49, %48 : vector<32x256xf32>
    %51 = arith.divf %49, %50 : vector<32x256xf32>
    %52 = arith.mulf %46, %51 : vector<32x256xf32>
    %53 = arith.truncf %52 : vector<32x256xf32> to vector<32x256xbf16>
    %c96_32 = arith.constant 96 : index
    %c0_33 = arith.constant 0 : index
    %54 = vector.load %arg2[%c96_32, %c0_33] : memref<5760x256xbf16, #tpu.memory_space<vmem>>, vector<32x32xbf16>
    %cst_34 = arith.constant dense<0.000000e+00> : vector<32x256xf32>
    %55 = tpu.matmul %54, %53, %cst_34 {dimension_numbers = #tpu.dot_dimension_numbers<[1], [0], [0], [1], [0, 0, 1, 1], [], []>} : vector<32x32xbf16>, vector<32x256xbf16>, vector<32x256xf32> -> vector<32x256xf32>
    %56 = arith.truncf %55 : vector<32x256xf32> to vector<32x256xbf16>
    %c0_35 = arith.constant 0 : index
    %c0_36 = arith.constant 0 : index
    %57 = vector.load %arg5[%c0_35, %c0_36] : memref<32x768xbf16, #tpu.memory_space<vmem>>, vector<32x256xbf16>
    tpu.vector_store %arg5[%c0_35, %c0_36], %56 {strides = array<i32>} : memref<32x768xbf16, #tpu.memory_space<vmem>>, vector<32x256xbf16>,
    %c128_37 = arith.constant 128 : index
    %c0_38 = arith.constant 0 : index
    %58 = vector.load %arg2[%c128_37, %c0_38] : memref<5760x256xbf16, #tpu.memory_space<vmem>>, vector<32x32xbf16>
    %cst_39 = arith.constant dense<0.000000e+00> : vector<32x256xf32>
    %59 = tpu.matmul %58, %53, %cst_39 {dimension_numbers = #tpu.dot_dimension_numbers<[1], [0], [0], [1], [0, 0, 1, 1], [], []>} : vector<32x32xbf16>, vector<32x256xbf16>, vector<32x256xf32> -> vector<32x256xf32>
    %60 = arith.truncf %59 : vector<32x256xf32> to vector<32x256xbf16>
    %c0_40 = arith.constant 0 : index
    %c256_41 = arith.constant 256 : index
    %61 = vector.load %arg5[%c0_40, %c256_41] : memref<32x768xbf16, #tpu.memory_space<vmem>>, vector<32x256xbf16>
    tpu.vector_store %arg5[%c0_40, %c256_41], %60 {strides = array<i32>} : memref<32x768xbf16, #tpu.memory_space<vmem>>, vector<32x256xbf16>,
    %c160_42 = arith.constant 160 : index
    %c0_43 = arith.constant 0 : index
    %62 = vector.load %arg2[%c160_42, %c0_43] : memref<5760x256xbf16, #tpu.memory_space<vmem>>, vector<32x32xbf16>
    %cst_44 = arith.constant dense<0.000000e+00> : vector<32x256xf32>
    %63 = tpu.matmul %62, %53, %cst_44 {dimension_numbers = #tpu.dot_dimension_numbers<[1], [0], [0], [1], [0, 0, 1, 1], [], []>} : vector<32x32xbf16>, vector<32x256xbf16>, vector<32x256xf32> -> vector<32x256xf32>
    %64 = arith.truncf %63 : vector<32x256xf32> to vector<32x256xbf16>
    %c0_45 = arith.constant 0 : index
    %c512_46 = arith.constant 512 : index
    %65 = vector.load %arg5[%c0_45, %c512_46] : memref<32x768xbf16, #tpu.memory_space<vmem>>, vector<32x256xbf16>
    tpu.vector_store %arg5[%c0_45, %c512_46], %64 {strides = array<i32>} : memref<32x768xbf16, #tpu.memory_space<vmem>>, vector<32x256xbf16>,
    %c0_47 = arith.constant 0 : index
    %c0_48 = arith.constant 0 : index
    %66 = vector.load %arg5[%c0_47, %c0_48] : memref<32x768xbf16, #tpu.memory_space<vmem>>, vector<32x768xbf16>
    %c1200 = arith.constant 1200 : index
    %c0_49 = arith.constant 0 : index
    %67 = vector.load %arg2[%c1200, %c0_49] : memref<5760x256xbf16, #tpu.memory_space<vmem>>, vector<768x256xbf16>
    %cst_50 = arith.constant dense<0.000000e+00> : vector<32x256xf32>
    %68 = tpu.matmul %66, %67, %cst_50 {dimension_numbers = #tpu.dot_dimension_numbers<[1], [0], [0], [1], [0, 0, 1, 1], [], []>} : vector<32x768xbf16>, vector<768x256xbf16>, vector<32x256xf32> -> vector<32x256xf32>
    %c16 = arith.constant 16 : index
    %c0_51 = arith.constant 0 : index
    %69 = vector.load %arg3[%c16, %c0_51] : memref<112x256xf32, #tpu.memory_space<vmem>>, vector<1x256xf32>
    %70 = vector.broadcast %69 : vector<1x256xf32> to vector<32x256xf32>
    %71 = arith.addf %68, %70 : vector<32x256xf32>
    %72 = arith.truncf %71 : vector<32x256xf32> to vector<32x256xbf16>
    %c5040 = arith.constant 5040 : index
    %c0_52 = arith.constant 0 : index
    %73 = vector.load %arg2[%c5040, %c0_52] : memref<5760x256xbf16, #tpu.memory_space<vmem>>, vector<2x32xbf16>
    %cst_53 = arith.constant dense<0.000000e+00> : vector<2x256xf32>
    %74 = tpu.matmul %73, %72, %cst_53 {dimension_numbers = #tpu.dot_dimension_numbers<[1], [0], [0], [1], [0, 0, 1, 1], [], []>} : vector<2x32xbf16>, vector<32x256xbf16>, vector<2x256xf32> -> vector<2x256xf32>
    %75 = arith.truncf %74 : vector<2x256xf32> to vector<2x256xbf16>
    %c5056 = arith.constant 5056 : index
    %c0_54 = arith.constant 0 : index
    %76 = vector.load %arg2[%c5056, %c0_54] : memref<5760x256xbf16, #tpu.memory_space<vmem>>, vector<256x16xbf16>
    %cst_55 = arith.constant dense<0.000000e+00> : vector<2x16xf32>
    %77 = tpu.matmul %75, %76, %cst_55 {dimension_numbers = #tpu.dot_dimension_numbers<[1], [0], [0], [1], [0, 0, 1, 1], [], []>} : vector<2x256xbf16>, vector<256x16xbf16>, vector<2x16xf32> -> vector<2x16xf32>
    %78 = arith.truncf %77 : vector<2x16xf32> to vector<2x16xbf16>
    %c5360 = arith.constant 5360 : index
    %c0_56 = arith.constant 0 : index
    %79 = vector.load %arg2[%c5360, %c0_56] : memref<5760x256xbf16, #tpu.memory_space<vmem>>, vector<16x4xbf16>
    %cst_57 = arith.constant dense<0.000000e+00> : vector<2x4xf32>
    %80 = tpu.matmul %78, %79, %cst_57 {dimension_numbers = #tpu.dot_dimension_numbers<[1], [0], [0], [1], [0, 0, 1, 1], [], []>} : vector<2x16xbf16>, vector<16x4xbf16>, vector<2x4xf32> -> vector<2x4xf32>
    %c56 = arith.constant 56 : index
    %c0_58 = arith.constant 0 : index
    %81 = vector.load %arg3[%c56, %c0_58] : memref<112x256xf32, #tpu.memory_space<vmem>>, vector<1x4xf32>
    %82 = vector.broadcast %81 : vector<1x4xf32> to vector<2x4xf32>
    %83 = arith.addf %80, %82 : vector<2x4xf32>
    %84 = arith.negf %83 : vector<2x4xf32>
    %85 = math.exp %84 : vector<2x4xf32>
    %cst_59 = arith.constant 1.000000e+00 : f32
    %86 = vector.broadcast %cst_59 : f32 to vector<2x4xf32>
    %87 = arith.addf %86, %85 : vector<2x4xf32>
    %88 = arith.divf %86, %87 : vector<2x4xf32>
    %89 = arith.mulf %83, %88 : vector<2x4xf32>
    %90 = arith.truncf %89 : vector<2x4xf32> to vector<2x4xbf16>
    %c5376 = arith.constant 5376 : index
    %c0_60 = arith.constant 0 : index
    %91 = vector.load %arg2[%c5376, %c0_60] : memref<5760x256xbf16, #tpu.memory_space<vmem>>, vector<4x16xbf16>
    %cst_61 = arith.constant dense<0.000000e+00> : vector<2x16xf32>
    %92 = tpu.matmul %90, %91, %cst_61 {dimension_numbers = #tpu.dot_dimension_numbers<[1], [0], [0], [1], [0, 0, 1, 1], [], []>} : vector<2x4xbf16>, vector<4x16xbf16>, vector<2x16xf32> -> vector<2x16xf32>
    %c64_62 = arith.constant 64 : index
    %c0_63 = arith.constant 0 : index
    %93 = vector.load %arg3[%c64_62, %c0_63] : memref<112x256xf32, #tpu.memory_space<vmem>>, vector<1x16xf32>
    %94 = vector.broadcast %93 : vector<1x16xf32> to vector<2x16xf32>
    %95 = arith.addf %92, %94 : vector<2x16xf32>
    %96 = arith.negf %95 : vector<2x16xf32>
    %97 = math.exp %96 : vector<2x16xf32>
    %cst_64 = arith.constant 1.000000e+00 : f32
    %98 = vector.broadcast %cst_64 : f32 to vector<2x16xf32>
    %99 = arith.addf %98, %97 : vector<2x16xf32>
    %100 = arith.divf %98, %99 : vector<2x16xf32>
    %c5312 = arith.constant 5312 : index
    %c0_65 = arith.constant 0 : index
    %101 = vector.load %arg2[%c5312, %c0_65] : memref<5760x256xbf16, #tpu.memory_space<vmem>>, vector<32x2xbf16>
    %102 = arith.truncf %100 : vector<2x16xf32> to vector<2x16xbf16>
    %cst_66 = arith.constant dense<0.000000e+00> : vector<32x16xf32>
    %103 = tpu.matmul %101, %102, %cst_66 {dimension_numbers = #tpu.dot_dimension_numbers<[1], [0], [0], [1], [0, 0, 1, 1], [], []>} : vector<32x2xbf16>, vector<2x16xbf16>, vector<32x16xf32> -> vector<32x16xf32>
    %104 = arith.truncf %103 : vector<32x16xf32> to vector<32x16xbf16>
    %c5344 = arith.constant 5344 : index
    %c0_67 = arith.constant 0 : index
    %105 = vector.load %arg2[%c5344, %c0_67] : memref<5760x256xbf16, #tpu.memory_space<vmem>>, vector<16x256xbf16>
    %cst_68 = arith.constant dense<0.000000e+00> : vector<32x256xf32>
    %106 = tpu.matmul %104, %105, %cst_68 {dimension_numbers = #tpu.dot_dimension_numbers<[1], [0], [0], [1], [0, 0, 1, 1], [], []>} : vector<32x16xbf16>, vector<16x256xbf16>, vector<32x256xf32> -> vector<32x256xf32>
    %107 = arith.mulf %71, %106 : vector<32x256xf32>
    %108 = arith.truncf %107 : vector<32x256xf32> to vector<32x256xbf16>
    %c192 = arith.constant 192 : index
    %c0_69 = arith.constant 0 : index
    %109 = vector.load %arg2[%c192, %c0_69] : memref<5760x256xbf16, #tpu.memory_space<vmem>>, vector<16x32xbf16>
    %cst_70 = arith.constant dense<0.000000e+00> : vector<16x256xf32>
    %110 = tpu.matmul %109, %108, %cst_70 {dimension_numbers = #tpu.dot_dimension_numbers<[1], [0], [0], [1], [0, 0, 1, 1], [], []>} : vector<16x32xbf16>, vector<32x256xbf16>, vector<16x256xf32> -> vector<16x256xf32>
    %111 = arith.truncf %110 : vector<16x256xf32> to vector<16x256xbf16>
    %c0_71 = arith.constant 0 : index
    %c0_72 = arith.constant 0 : index
    %112 = vector.load %arg5[%c0_71, %c0_72] : memref<32x768xbf16, #tpu.memory_space<vmem>>, vector<16x256xbf16>
    tpu.vector_store %arg5[%c0_71, %c0_72], %111 {strides = array<i32>} : memref<32x768xbf16, #tpu.memory_space<vmem>>, vector<16x256xbf16>,
    %c208 = arith.constant 208 : index
    %c0_73 = arith.constant 0 : index
    %113 = vector.load %arg2[%c208, %c0_73] : memref<5760x256xbf16, #tpu.memory_space<vmem>>, vector<16x32xbf16>
    %cst_74 = arith.constant dense<0.000000e+00> : vector<16x256xf32>
    %114 = tpu.matmul %113, %108, %cst_74 {dimension_numbers = #tpu.dot_dimension_numbers<[1], [0], [0], [1], [0, 0, 1, 1], [], []>} : vector<16x32xbf16>, vector<32x256xbf16>, vector<16x256xf32> -> vector<16x256xf32>
    %115 = arith.truncf %114 : vector<16x256xf32> to vector<16x256xbf16>
    %c0_75 = arith.constant 0 : index
    %c256_76 = arith.constant 256 : index
    %116 = vector.load %arg5[%c0_75, %c256_76] : memref<32x768xbf16, #tpu.memory_space<vmem>>, vector<16x256xbf16>
    tpu.vector_store %arg5[%c0_75, %c256_76], %115 {strides = array<i32>} : memref<32x768xbf16, #tpu.memory_space<vmem>>, vector<16x256xbf16>,
    %c224 = arith.constant 224 : index
    %c0_77 = arith.constant 0 : index
    %117 = vector.load %arg2[%c224, %c0_77] : memref<5760x256xbf16, #tpu.memory_space<vmem>>, vector<16x32xbf16>
    %cst_78 = arith.constant dense<0.000000e+00> : vector<16x256xf32>
    %118 = tpu.matmul %117, %108, %cst_78 {dimension_numbers = #tpu.dot_dimension_numbers<[1], [0], [0], [1], [0, 0, 1, 1], [], []>} : vector<16x32xbf16>, vector<32x256xbf16>, vector<16x256xf32> -> vector<16x256xf32>
    %119 = arith.truncf %118 : vector<16x256xf32> to vector<16x256xbf16>
    %c0_79 = arith.constant 0 : index
    %c512_80 = arith.constant 512 : index
    %120 = vector.load %arg5[%c0_79, %c512_80] : memref<32x768xbf16, #tpu.memory_space<vmem>>, vector<16x256xbf16>
    tpu.vector_store %arg5[%c0_79, %c512_80], %119 {strides = array<i32>} : memref<32x768xbf16, #tpu.memory_space<vmem>>, vector<16x256xbf16>,
    %c0_81 = arith.constant 0 : index
    %c0_82 = arith.constant 0 : index
    %121 = vector.load %arg5[%c0_81, %c0_82] : memref<32x768xbf16, #tpu.memory_space<vmem>>, vector<16x768xbf16>
    %c1968 = arith.constant 1968 : index
    %c0_83 = arith.constant 0 : index
    %122 = vector.load %arg2[%c1968, %c0_83] : memref<5760x256xbf16, #tpu.memory_space<vmem>>, vector<768x256xbf16>
    %cst_84 = arith.constant dense<0.000000e+00> : vector<16x256xf32>
    %123 = tpu.matmul %121, %122, %cst_84 {dimension_numbers = #tpu.dot_dimension_numbers<[1], [0], [0], [1], [0, 0, 1, 1], [], []>} : vector<16x768xbf16>, vector<768x256xbf16>, vector<16x256xf32> -> vector<16x256xf32>
    %c24 = arith.constant 24 : index
    %c0_85 = arith.constant 0 : index
    %124 = vector.load %arg3[%c24, %c0_85] : memref<112x256xf32, #tpu.memory_space<vmem>>, vector<1x256xf32>
    %125 = vector.broadcast %124 : vector<1x256xf32> to vector<16x256xf32>
    %126 = arith.addf %123, %125 : vector<16x256xf32>
    %127 = arith.negf %126 : vector<16x256xf32>
    %128 = math.exp %127 : vector<16x256xf32>
    %cst_86 = arith.constant 1.000000e+00 : f32
    %129 = vector.broadcast %cst_86 : f32 to vector<16x256xf32>
    %130 = arith.addf %129, %128 : vector<16x256xf32>
    %131 = arith.divf %129, %130 : vector<16x256xf32>
    %132 = arith.mulf %126, %131 : vector<16x256xf32>
    %133 = arith.truncf %132 : vector<16x256xf32> to vector<16x256xbf16>
    %c240 = arith.constant 240 : index
    %c0_87 = arith.constant 0 : index
    %134 = vector.load %arg2[%c240, %c0_87] : memref<5760x256xbf16, #tpu.memory_space<vmem>>, vector<16x16xbf16>
    %cst_88 = arith.constant dense<0.000000e+00> : vector<16x256xf32>
    %135 = tpu.matmul %134, %133, %cst_88 {dimension_numbers = #tpu.dot_dimension_numbers<[1], [0], [0], [1], [0, 0, 1, 1], [], []>} : vector<16x16xbf16>, vector<16x256xbf16>, vector<16x256xf32> -> vector<16x256xf32>
    %136 = arith.truncf %135 : vector<16x256xf32> to vector<16x256xbf16>
    %c0_89 = arith.constant 0 : index
    %c0_90 = arith.constant 0 : index
    %137 = vector.load %arg5[%c0_89, %c0_90] : memref<32x768xbf16, #tpu.memory_space<vmem>>, vector<16x256xbf16>
    tpu.vector_store %arg5[%c0_89, %c0_90], %136 {strides = array<i32>} : memref<32x768xbf16, #tpu.memory_space<vmem>>, vector<16x256xbf16>,
    %c256_91 = arith.constant 256 : index
    %c0_92 = arith.constant 0 : index
    %138 = vector.load %arg2[%c256_91, %c0_92] : memref<5760x256xbf16, #tpu.memory_space<vmem>>, vector<16x16xbf16>
    %cst_93 = arith.constant dense<0.000000e+00> : vector<16x256xf32>
    %139 = tpu.matmul %138, %133, %cst_93 {dimension_numbers = #tpu.dot_dimension_numbers<[1], [0], [0], [1], [0, 0, 1, 1], [], []>} : vector<16x16xbf16>, vector<16x256xbf16>, vector<16x256xf32> -> vector<16x256xf32>
    %140 = arith.truncf %139 : vector<16x256xf32> to vector<16x256xbf16>
    %c0_94 = arith.constant 0 : index
    %c256_95 = arith.constant 256 : index
    %141 = vector.load %arg5[%c0_94, %c256_95] : memref<32x768xbf16, #tpu.memory_space<vmem>>, vector<16x256xbf16>
    tpu.vector_store %arg5[%c0_94, %c256_95], %140 {strides = array<i32>} : memref<32x768xbf16, #tpu.memory_space<vmem>>, vector<16x256xbf16>,
    %c272 = arith.constant 272 : index
    %c0_96 = arith.constant 0 : index
    %142 = vector.load %arg2[%c272, %c0_96] : memref<5760x256xbf16, #tpu.memory_space<vmem>>, vector<16x16xbf16>
    %cst_97 = arith.constant dense<0.000000e+00> : vector<16x256xf32>
    %143 = tpu.matmul %142, %133, %cst_97 {dimension_numbers = #tpu.dot_dimension_numbers<[1], [0], [0], [1], [0, 0, 1, 1], [], []>} : vector<16x16xbf16>, vector<16x256xbf16>, vector<16x256xf32> -> vector<16x256xf32>
    %144 = arith.truncf %143 : vector<16x256xf32> to vector<16x256xbf16>
    %c0_98 = arith.constant 0 : index
    %c512_99 = arith.constant 512 : index
    %145 = vector.load %arg5[%c0_98, %c512_99] : memref<32x768xbf16, #tpu.memory_space<vmem>>, vector<16x256xbf16>
    tpu.vector_store %arg5[%c0_98, %c512_99], %144 {strides = array<i32>} : memref<32x768xbf16, #tpu.memory_space<vmem>>, vector<16x256xbf16>,
    %c0_100 = arith.constant 0 : index
    %c0_101 = arith.constant 0 : index
    %146 = vector.load %arg5[%c0_100, %c0_101] : memref<32x768xbf16, #tpu.memory_space<vmem>>, vector<16x768xbf16>
    %c2736 = arith.constant 2736 : index
    %c0_102 = arith.constant 0 : index
    %147 = vector.load %arg2[%c2736, %c0_102] : memref<5760x256xbf16, #tpu.memory_space<vmem>>, vector<768x256xbf16>
    %cst_103 = arith.constant dense<0.000000e+00> : vector<16x256xf32>
    %148 = tpu.matmul %146, %147, %cst_103 {dimension_numbers = #tpu.dot_dimension_numbers<[1], [0], [0], [1], [0, 0, 1, 1], [], []>} : vector<16x768xbf16>, vector<768x256xbf16>, vector<16x256xf32> -> vector<16x256xf32>
    %c32_104 = arith.constant 32 : index
    %c0_105 = arith.constant 0 : index
    %149 = vector.load %arg3[%c32_104, %c0_105] : memref<112x256xf32, #tpu.memory_space<vmem>>, vector<1x256xf32>
    %150 = vector.broadcast %149 : vector<1x256xf32> to vector<16x256xf32>
    %151 = arith.addf %148, %150 : vector<16x256xf32>
    %152 = arith.negf %151 : vector<16x256xf32>
    %153 = math.exp %152 : vector<16x256xf32>
    %cst_106 = arith.constant 1.000000e+00 : f32
    %154 = vector.broadcast %cst_106 : f32 to vector<16x256xf32>
    %155 = arith.addf %154, %153 : vector<16x256xf32>
    %156 = arith.divf %154, %155 : vector<16x256xf32>
    %157 = arith.mulf %151, %156 : vector<16x256xf32>
    %158 = arith.truncf %157 : vector<16x256xf32> to vector<16x256xbf16>
    %c240_107 = arith.constant 240 : index
    %c0_108 = arith.constant 0 : index
    %159 = vector.load %arg2[%c240_107, %c0_108] : memref<5760x256xbf16, #tpu.memory_space<vmem>>, vector<16x16xbf16>
    %cst_109 = arith.constant dense<0.000000e+00> : vector<16x256xf32>
    %160 = tpu.matmul %159, %158, %cst_109 {dimension_numbers = #tpu.dot_dimension_numbers<[1], [0], [0], [1], [0, 0, 1, 1], [], []>} : vector<16x16xbf16>, vector<16x256xbf16>, vector<16x256xf32> -> vector<16x256xf32>
    %161 = arith.truncf %160 : vector<16x256xf32> to vector<16x256xbf16>
    %c0_110 = arith.constant 0 : index
    %c0_111 = arith.constant 0 : index
    %162 = vector.load %arg5[%c0_110, %c0_111] : memref<32x768xbf16, #tpu.memory_space<vmem>>, vector<16x256xbf16>
    tpu.vector_store %arg5[%c0_110, %c0_111], %161 {strides = array<i32>} : memref<32x768xbf16, #tpu.memory_space<vmem>>, vector<16x256xbf16>,
    %c256_112 = arith.constant 256 : index
    %c0_113 = arith.constant 0 : index
    %163 = vector.load %arg2[%c256_112, %c0_113] : memref<5760x256xbf16, #tpu.memory_space<vmem>>, vector<16x16xbf16>
    %cst_114 = arith.constant dense<0.000000e+00> : vector<16x256xf32>
    %164 = tpu.matmul %163, %158, %cst_114 {dimension_numbers = #tpu.dot_dimension_numbers<[1], [0], [0], [1], [0, 0, 1, 1], [], []>} : vector<16x16xbf16>, vector<16x256xbf16>, vector<16x256xf32> -> vector<16x256xf32>
    %165 = arith.truncf %164 : vector<16x256xf32> to vector<16x256xbf16>
    %c0_115 = arith.constant 0 : index
    %c256_116 = arith.constant 256 : index
    %166 = vector.load %arg5[%c0_115, %c256_116] : memref<32x768xbf16, #tpu.memory_space<vmem>>, vector<16x256xbf16>
    tpu.vector_store %arg5[%c0_115, %c256_116], %165 {strides = array<i32>} : memref<32x768xbf16, #tpu.memory_space<vmem>>, vector<16x256xbf16>,
    %c272_117 = arith.constant 272 : index
    %c0_118 = arith.constant 0 : index
    %167 = vector.load %arg2[%c272_117, %c0_118] : memref<5760x256xbf16, #tpu.memory_space<vmem>>, vector<16x16xbf16>
    %cst_119 = arith.constant dense<0.000000e+00> : vector<16x256xf32>
    %168 = tpu.matmul %167, %158, %cst_119 {dimension_numbers = #tpu.dot_dimension_numbers<[1], [0], [0], [1], [0, 0, 1, 1], [], []>} : vector<16x16xbf16>, vector<16x256xbf16>, vector<16x256xf32> -> vector<16x256xf32>
    %169 = arith.truncf %168 : vector<16x256xf32> to vector<16x256xbf16>
    %c0_120 = arith.constant 0 : index
    %c512_121 = arith.constant 512 : index
    %170 = vector.load %arg5[%c0_120, %c512_121] : memref<32x768xbf16, #tpu.memory_space<vmem>>, vector<16x256xbf16>
    tpu.vector_store %arg5[%c0_120, %c512_121], %169 {strides = array<i32>} : memref<32x768xbf16, #tpu.memory_space<vmem>>, vector<16x256xbf16>,
    %c0_122 = arith.constant 0 : index
    %c0_123 = arith.constant 0 : index
    %171 = vector.load %arg5[%c0_122, %c0_123] : memref<32x768xbf16, #tpu.memory_space<vmem>>, vector<16x768xbf16>
    %c3504 = arith.constant 3504 : index
    %c0_124 = arith.constant 0 : index
    %172 = vector.load %arg2[%c3504, %c0_124] : memref<5760x256xbf16, #tpu.memory_space<vmem>>, vector<768x256xbf16>
    %cst_125 = arith.constant dense<0.000000e+00> : vector<16x256xf32>
    %173 = tpu.matmul %171, %172, %cst_125 {dimension_numbers = #tpu.dot_dimension_numbers<[1], [0], [0], [1], [0, 0, 1, 1], [], []>} : vector<16x768xbf16>, vector<768x256xbf16>, vector<16x256xf32> -> vector<16x256xf32>
    %c40 = arith.constant 40 : index
    %c0_126 = arith.constant 0 : index
    %174 = vector.load %arg3[%c40, %c0_126] : memref<112x256xf32, #tpu.memory_space<vmem>>, vector<1x256xf32>
    %175 = vector.broadcast %174 : vector<1x256xf32> to vector<16x256xf32>
    %176 = arith.addf %173, %175 : vector<16x256xf32>
    %177 = arith.truncf %176 : vector<16x256xf32> to vector<16x256xbf16>
    %c5392 = arith.constant 5392 : index
    %c0_127 = arith.constant 0 : index
    %178 = vector.load %arg2[%c5392, %c0_127] : memref<5760x256xbf16, #tpu.memory_space<vmem>>, vector<2x16xbf16>
    %cst_128 = arith.constant dense<0.000000e+00> : vector<2x256xf32>
    %179 = tpu.matmul %178, %177, %cst_128 {dimension_numbers = #tpu.dot_dimension_numbers<[1], [0], [0], [1], [0, 0, 1, 1], [], []>} : vector<2x16xbf16>, vector<16x256xbf16>, vector<2x256xf32> -> vector<2x256xf32>
    %180 = arith.truncf %179 : vector<2x256xf32> to vector<2x256xbf16>
    %c5408 = arith.constant 5408 : index
    %c0_129 = arith.constant 0 : index
    %181 = vector.load %arg2[%c5408, %c0_129] : memref<5760x256xbf16, #tpu.memory_space<vmem>>, vector<256x32xbf16>
    %cst_130 = arith.constant dense<0.000000e+00> : vector<2x32xf32>
    %182 = tpu.matmul %180, %181, %cst_130 {dimension_numbers = #tpu.dot_dimension_numbers<[1], [0], [0], [1], [0, 0, 1, 1], [], []>} : vector<2x256xbf16>, vector<256x32xbf16>, vector<2x32xf32> -> vector<2x32xf32>
    %183 = arith.truncf %182 : vector<2x32xf32> to vector<2x32xbf16>
    %c5712 = arith.constant 5712 : index
    %c0_131 = arith.constant 0 : index
    %184 = vector.load %arg2[%c5712, %c0_131] : memref<5760x256xbf16, #tpu.memory_space<vmem>>, vector<32x8xbf16>
    %cst_132 = arith.constant dense<0.000000e+00> : vector<2x8xf32>
    %185 = tpu.matmul %183, %184, %cst_132 {dimension_numbers = #tpu.dot_dimension_numbers<[1], [0], [0], [1], [0, 0, 1, 1], [], []>} : vector<2x32xbf16>, vector<32x8xbf16>, vector<2x8xf32> -> vector<2x8xf32>
    %c72 = arith.constant 72 : index
    %c0_133 = arith.constant 0 : index
    %186 = vector.load %arg3[%c72, %c0_133] : memref<112x256xf32, #tpu.memory_space<vmem>>, vector<1x8xf32>
    %187 = vector.broadcast %186 : vector<1x8xf32> to vector<2x8xf32>
    %188 = arith.addf %185, %187 : vector<2x8xf32>
    %189 = arith.negf %188 : vector<2x8xf32>
    %190 = math.exp %189 : vector<2x8xf32>
    %cst_134 = arith.constant 1.000000e+00 : f32
    %191 = vector.broadcast %cst_134 : f32 to vector<2x8xf32>
    %192 = arith.addf %191, %190 : vector<2x8xf32>
    %193 = arith.divf %191, %192 : vector<2x8xf32>
    %194 = arith.mulf %188, %193 : vector<2x8xf32>
    %195 = arith.truncf %194 : vector<2x8xf32> to vector<2x8xbf16>
    %c5744 = arith.constant 5744 : index
    %c0_135 = arith.constant 0 : index
    %196 = vector.load %arg2[%c5744, %c0_135] : memref<5760x256xbf16, #tpu.memory_space<vmem>>, vector<8x32xbf16>
    %cst_136 = arith.constant dense<0.000000e+00> : vector<2x32xf32>
    %197 = tpu.matmul %195, %196, %cst_136 {dimension_numbers = #tpu.dot_dimension_numbers<[1], [0], [0], [1], [0, 0, 1, 1], [], []>} : vector<2x8xbf16>, vector<8x32xbf16>, vector<2x32xf32> -> vector<2x32xf32>
    %c80 = arith.constant 80 : index
    %c0_137 = arith.constant 0 : index
    %198 = vector.load %arg3[%c80, %c0_137] : memref<112x256xf32, #tpu.memory_space<vmem>>, vector<1x32xf32>
    %199 = vector.broadcast %198 : vector<1x32xf32> to vector<2x32xf32>
    %200 = arith.addf %197, %199 : vector<2x32xf32>
    %201 = arith.negf %200 : vector<2x32xf32>
    %202 = math.exp %201 : vector<2x32xf32>
    %cst_138 = arith.constant 1.000000e+00 : f32
    %203 = vector.broadcast %cst_138 : f32 to vector<2x32xf32>
    %204 = arith.addf %203, %202 : vector<2x32xf32>
    %205 = arith.divf %203, %204 : vector<2x32xf32>
    %c5664 = arith.constant 5664 : index
    %c0_139 = arith.constant 0 : index
    %206 = vector.load %arg2[%c5664, %c0_139] : memref<5760x256xbf16, #tpu.memory_space<vmem>>, vector<16x2xbf16>
    %207 = arith.truncf %205 : vector<2x32xf32> to vector<2x32xbf16>
    %cst_140 = arith.constant dense<0.000000e+00> : vector<16x32xf32>
    %208 = tpu.matmul %206, %207, %cst_140 {dimension_numbers = #tpu.dot_dimension_numbers<[1], [0], [0], [1], [0, 0, 1, 1], [], []>} : vector<16x2xbf16>, vector<2x32xbf16>, vector<16x32xf32> -> vector<16x32xf32>
    %209 = arith.truncf %208 : vector<16x32xf32> to vector<16x32xbf16>
    %c5680 = arith.constant 5680 : index
    %c0_141 = arith.constant 0 : index
    %210 = vector.load %arg2[%c5680, %c0_141] : memref<5760x256xbf16, #tpu.memory_space<vmem>>, vector<32x256xbf16>
    %cst_142 = arith.constant dense<0.000000e+00> : vector<16x256xf32>
    %211 = tpu.matmul %209, %210, %cst_142 {dimension_numbers = #tpu.dot_dimension_numbers<[1], [0], [0], [1], [0, 0, 1, 1], [], []>} : vector<16x32xbf16>, vector<32x256xbf16>, vector<16x256xf32> -> vector<16x256xf32>
    %212 = arith.mulf %176, %211 : vector<16x256xf32>
    %213 = arith.truncf %212 : vector<16x256xf32> to vector<16x256xbf16>
    %c288 = arith.constant 288 : index
    %c0_143 = arith.constant 0 : index
    %214 = vector.load %arg2[%c288, %c0_143] : memref<5760x256xbf16, #tpu.memory_space<vmem>>, vector<8x16xbf16>
    %cst_144 = arith.constant dense<0.000000e+00> : vector<8x256xf32>
    %215 = tpu.matmul %214, %213, %cst_144 {dimension_numbers = #tpu.dot_dimension_numbers<[1], [0], [0], [1], [0, 0, 1, 1], [], []>} : vector<8x16xbf16>, vector<16x256xbf16>, vector<8x256xf32> -> vector<8x256xf32>
    %216 = arith.truncf %215 : vector<8x256xf32> to vector<8x256xbf16>
    %c0_145 = arith.constant 0 : index
    %c0_146 = arith.constant 0 : index
    %217 = vector.load %arg5[%c0_145, %c0_146] : memref<32x768xbf16, #tpu.memory_space<vmem>>, vector<8x256xbf16>
    tpu.vector_store %arg5[%c0_145, %c0_146], %216 {strides = array<i32>} : memref<32x768xbf16, #tpu.memory_space<vmem>>, vector<8x256xbf16>,
    %c304 = arith.constant 304 : index
    %c0_147 = arith.constant 0 : index
    %218 = vector.load %arg2[%c304, %c0_147] : memref<5760x256xbf16, #tpu.memory_space<vmem>>, vector<8x16xbf16>
    %cst_148 = arith.constant dense<0.000000e+00> : vector<8x256xf32>
    %219 = tpu.matmul %218, %213, %cst_148 {dimension_numbers = #tpu.dot_dimension_numbers<[1], [0], [0], [1], [0, 0, 1, 1], [], []>} : vector<8x16xbf16>, vector<16x256xbf16>, vector<8x256xf32> -> vector<8x256xf32>
    %220 = arith.truncf %219 : vector<8x256xf32> to vector<8x256xbf16>
    %c0_149 = arith.constant 0 : index
    %c256_150 = arith.constant 256 : index
    %221 = vector.load %arg5[%c0_149, %c256_150] : memref<32x768xbf16, #tpu.memory_space<vmem>>, vector<8x256xbf16>
    tpu.vector_store %arg5[%c0_149, %c256_150], %220 {strides = array<i32>} : memref<32x768xbf16, #tpu.memory_space<vmem>>, vector<8x256xbf16>,
    %c320 = arith.constant 320 : index
    %c0_151 = arith.constant 0 : index
    %222 = vector.load %arg2[%c320, %c0_151] : memref<5760x256xbf16, #tpu.memory_space<vmem>>, vector<8x16xbf16>
    %cst_152 = arith.constant dense<0.000000e+00> : vector<8x256xf32>
    %223 = tpu.matmul %222, %213, %cst_152 {dimension_numbers = #tpu.dot_dimension_numbers<[1], [0], [0], [1], [0, 0, 1, 1], [], []>} : vector<8x16xbf16>, vector<16x256xbf16>, vector<8x256xf32> -> vector<8x256xf32>
    %224 = arith.truncf %223 : vector<8x256xf32> to vector<8x256xbf16>
    %c0_153 = arith.constant 0 : index
    %c512_154 = arith.constant 512 : index
    %225 = vector.load %arg5[%c0_153, %c512_154] : memref<32x768xbf16, #tpu.memory_space<vmem>>, vector<8x256xbf16>
    tpu.vector_store %arg5[%c0_153, %c512_154], %224 {strides = array<i32>} : memref<32x768xbf16, #tpu.memory_space<vmem>>, vector<8x256xbf16>,
    %c0_155 = arith.constant 0 : index
    %c0_156 = arith.constant 0 : index
    %226 = vector.load %arg5[%c0_155, %c0_156] : memref<32x768xbf16, #tpu.memory_space<vmem>>, vector<8x768xbf16>
    %c4272 = arith.constant 4272 : index
    %c0_157 = arith.constant 0 : index
    %227 = vector.load %arg2[%c4272, %c0_157] : memref<5760x256xbf16, #tpu.memory_space<vmem>>, vector<768x256xbf16>
    %cst_158 = arith.constant dense<0.000000e+00> : vector<8x256xf32>
    %228 = tpu.matmul %226, %227, %cst_158 {dimension_numbers = #tpu.dot_dimension_numbers<[1], [0], [0], [1], [0, 0, 1, 1], [], []>} : vector<8x768xbf16>, vector<768x256xbf16>, vector<8x256xf32> -> vector<8x256xf32>
    %c48 = arith.constant 48 : index
    %c0_159 = arith.constant 0 : index
    %229 = vector.load %arg3[%c48, %c0_159] : memref<112x256xf32, #tpu.memory_space<vmem>>, vector<1x256xf32>
    %230 = vector.broadcast %229 : vector<1x256xf32> to vector<8x256xf32>
    %231 = arith.addf %228, %230 : vector<8x256xf32>
    %232 = arith.negf %231 : vector<8x256xf32>
    %233 = math.exp %232 : vector<8x256xf32>
    %cst_160 = arith.constant 1.000000e+00 : f32
    %234 = vector.broadcast %cst_160 : f32 to vector<8x256xf32>
    %235 = arith.addf %234, %233 : vector<8x256xf32>
    %236 = arith.divf %234, %235 : vector<8x256xf32>
    %237 = arith.mulf %231, %236 : vector<8x256xf32>
    %c88 = arith.constant 88 : index
    %c0_161 = arith.constant 0 : index
    %238 = vector.load %arg3[%c88, %c0_161] : memref<112x256xf32, #tpu.memory_space<vmem>>, vector<8x256xf32>
    %239 = arith.mulf %237, %238 : vector<8x256xf32>
    %cst_162 = arith.constant dense<0.000000e+00> : vector<8xf32>
    %240 = vector.multi_reduction <add>, %239, %cst_162 [1] : vector<8x256xf32> to vector<8xf32>
    %241 = vector.shape_cast %240 : vector<8xf32> to vector<8x1xf32>
    %c96_163 = arith.constant 96 : index
    %c0_164 = arith.constant 0 : index
    %242 = vector.load %arg3[%c96_163, %c0_164] : memref<112x256xf32, #tpu.memory_space<vmem>>, vector<2x8xf32>
    %cst_165 = arith.constant dense<0.000000e+00> : vector<2x1xf32>
    %243 = tpu.matmul %242, %241, %cst_165 {dimension_numbers = #tpu.dot_dimension_numbers<[1], [0], [0], [1], [0, 0, 1, 1], [], []>} : vector<2x8xf32>, vector<8x1xf32>, vector<2x1xf32> -> vector<2x1xf32>
    %c104 = arith.constant 104 : index
    %c0_166 = arith.constant 0 : index
    %244 = vector.load %arg3[%c104, %c0_166] : memref<112x256xf32, #tpu.memory_space<vmem>>, vector<1x1xf32>
    %245 = vector.broadcast %244 : vector<1x1xf32> to vector<2x1xf32>
    %246 = arith.addf %243, %245 : vector<2x1xf32>
    %c0_167 = arith.constant 0 : index
    %c0_168 = arith.constant 0 : index
    %c0_169 = arith.constant 0 : index
    %247 = vector.load %arg4[%c0_167, %c0_168, %c0_169] : memref<1x2x1xf32, #tpu.memory_space<vmem>>, vector<1x2x1xf32>
    %248 = vector.shape_cast %247 : vector<1x2x1xf32> to vector<2x1xf32>
    %249 = vector.shape_cast %246 : vector<2x1xf32> to vector<1x2x1xf32>
    tpu.vector_store %arg4[%c0_167, %c0_168, %c0_169], %249 {strides = array<i32>} : memref<1x2x1xf32, #tpu.memory_space<vmem>>, vector<1x2x1xf32>,
    return
  }
  func.func @transform_0(%arg0: i32) -> (i32, i32) {
    %c0_i32 = arith.constant 0 : i32
    %c0_i32_0 = arith.constant 0 : i32
    return %arg0, %c0_i32 : i32, i32
  }
  func.func @transform_1(%arg0: i32) -> (i32, i32) {
    %c0_i32 = arith.constant 0 : i32
    %c0_i32_0 = arith.constant 0 : i32
    %c0_i32_1 = arith.constant 0 : i32
    return %c0_i32, %c0_i32_0 : i32, i32
  }
  func.func @transform_2(%arg0: i32) -> (i32, i32) {
    %c0_i32 = arith.constant 0 : i32
    %c0_i32_0 = arith.constant 0 : i32
    %c0_i32_1 = arith.constant 0 : i32
    return %c0_i32, %c0_i32_0 : i32, i32
  }
  func.func @transform_3(%arg0: i32) -> (i32, i32, i32) {
    %c0_i32 = arith.constant 0 : i32
    %c0_i32_0 = arith.constant 0 : i32
    %c0_i32_1 = arith.constant 0 : i32
    return %arg0, %c0_i32, %c0_i32_0 : i32, i32, i32
  }
}

</mosaic_0001>

<llo_original>
// kernel: forward.1
$region0: #{forward.1}
  #allocation0 [shape = 'u32[]', space=smem, size = 0x4, offset = 0x4, fixed_abs, tag = 'smem constant byte address 0x4 - core index']
  #allocation1 [shape = 'u32[144,128]{1,0:T(1,128)}', space=vmem, size = 0x12000, scoped, tag = 'internal scratch']
  #allocation2 [shape = 'bf16[32,768]{1,0:T(8,128)(2,1)}', space=vmem, size = 0xc000, scoped, tag = 'scratch operand']
  %s0 = inlined_call_operand.hbm [shape: f32[64,32], index: 0, kind: input, shape index: {}]
  %s1 = inlined_call_operand.hbm [shape: bf16[5760,256], index: 1, kind: input, shape index: {}]
  %s2 = inlined_call_operand.hbm [shape: f32[112,256], index: 2, kind: input, shape index: {}]
  %s3 = inlined_call_operand.vmem [shape: f32[1,2,1], index: 3, kind: output, shape index: {}]
  %s4 = sld [smem:[#allocation0]]
  $region34: #{forward.1} parent=0
    _
  %s6 = ssub.s32 1, %s4
  %s7 = scalar_select 0, %s6, %s4
  $region1: #{forward.1} parent=0
    #allocation3 [shape = 'u8[32768]{0}', space=vmem, size = 0x8000, scoped, tag = 'input window, operand 0, single buffered']
    #allocation4 [shape = 's32[1]{0}', space=sflag, size = 0x4, scoped, tag = 'scoped memory for forward.1']
    #allocation5 [shape = 'u8[2949120]{0}', space=vmem, size = 0x2d0000, scoped, tag = 'input window, operand 1, single buffered']
    #allocation6 [shape = 's32[1]{0}', space=sflag, size = 0x4, scoped, tag = 'scoped memory for forward.1']
    #allocation7 [shape = 'u8[114688]{0}', space=vmem, size = 0x1c000, scoped, tag = 'input window, operand 2, single buffered']
    %8 = vsyncpa [#allocation4], 0
    %9 = vsyncpa [#allocation6], 0
    // Predicated region
    $region2: #{forward.1} parent=1 // pred_check
      _
    $region3: #{forward.1} parent=1 // pred_check_branch
      %11 = sbr.rel (0) target = $region5
    $region4: #{forward.1} parent=1 // pred_region
      %s13 = ssub.s32 1024, 1024
      %14 = vsyncadd [#allocation4], %s13
      %s15 = sshll.u32 [#allocation3], 4
      %s16 = int_to_ptr.vmem [resolvable:$true] %s15
      %21 = dma.hbm_to_vmem [thread:$0]  %s0, 1024, %s16, [#allocation4], 128, 128, 8
    $region5: #{forward.1} parent=1 // pred_fallthru
      _
    // Predicated region
    $region6: #{forward.1} parent=1 // pred_check
      _
    $region7: #{forward.1} parent=1 // pred_check_branch
      %23 = sbr.rel (0) target = $region9
    $region8: #{forward.1} parent=1 // pred_region
      %s25 = ssub.s32 92160, 92160
      %26 = vsyncadd [#allocation6], %s25
      %s27 = sshll.u32 [#allocation5], 4
      %s28 = int_to_ptr.vmem [resolvable:$true] %s27
      %33 = dma.hbm_to_vmem [thread:$0]  %s1, 92160, %s28, [#allocation6], 128, 128, 8
    $region9: #{forward.1} parent=1 // pred_fallthru
      _
    // Predicated region
    $region10: #{forward.1} parent=1 // pred_check
      _
    $region11: #{forward.1} parent=1 // pred_check_branch
      %35 = sbr.rel (0) target = $region13
    $region12: #{forward.1} parent=1 // pred_region
      %s37 = ssub.s32 3584, 3584
      %38 = vsyncadd [#allocation6], %s37
      %s39 = sshll.u32 [#allocation7], 4
      %s40 = int_to_ptr.vmem [resolvable:$true] %s39
      %45 = dma.hbm_to_vmem [thread:$0]  %s2, 3584, %s40, [#allocation6], 256, 256, 16
    $region13: #{forward.1} parent=1 // pred_fallthru
      _
    // Predicated region
    $region14: #{forward.1} parent=1 // pred_check
      _
    $region15: #{forward.1} parent=1 // pred_check_branch
      %47 = sbr.rel (0) target = $region17
    $region16: #{forward.1} parent=1 // pred_region
      %48 = dma.done [#allocation4], 1024
    $region17: #{forward.1} parent=1 // pred_fallthru
      _
    // Predicated region
    $region18: #{forward.1} parent=1 // pred_check
      _
    $region19: #{forward.1} parent=1 // pred_check_branch
      %50 = sbr.rel (0) target = $region21
    $region20: #{forward.1} parent=1 // pred_region
      %51 = dma.done [#allocation6], 92160
    $region21: #{forward.1} parent=1 // pred_fallthru
      _
    // Predicated region
    $region22: #{forward.1} parent=1 // pred_check
      _
    $region23: #{forward.1} parent=1 // pred_check_branch
      %53 = sbr.rel (0) target = $region25
    $region24: #{forward.1} parent=1 // pred_region
      %54 = dma.done [#allocation6], 3584
    $region25: #{forward.1} parent=1 // pred_fallthru
      _
    %v56 = vld [vmem:[#allocation3] sm:$0xff]
    %v57 = vld [vmem:[#allocation3 + $0x8] sm:$0xff]
    %v58 = vld [vmem:[#allocation3 + $0x10] sm:$0xff]
    %v59 = vld [vmem:[#allocation3 + $0x18] sm:$0xff]
    %v60 = vld [vmem:[#allocation3 + $0x20] sm:$0xff]
    %v61 = vld [vmem:[#allocation3 + $0x28] sm:$0xff]
    %v62 = vld [vmem:[#allocation3 + $0x30] sm:$0xff]
    %v63 = vld [vmem:[#allocation3 + $0x38] sm:$0xff]
    %v64 = vpack.c.bf16 %v57, %v56
    %v65 = vpack.c.bf16 %v59, %v58
    %v66 = vpack.c.bf16 %v61, %v60
    %v67 = vpack.c.bf16 %v63, %v62
    %v68 = vld [vmem:[#allocation5] sm:$0xf]
    %v69 = vld [vmem:[#allocation5 + $0x8] sm:$0xf]
    %v70 = vld [vmem:[#allocation5 + $0x10] sm:$0xf]
    %v71 = vld [vmem:[#allocation5 + $0x18] sm:$0xf]
    %v76 = vunpack.c.l.b16 %v68
    %v77 = vunpack.c.l.b16 %v69
    %v78 = vunpack.c.l.b16 %v70
    %v79 = vunpack.c.l.b16 %v71
    %v80 = vpack.c.b16 %v77, %v76
    %v81 = vpack.c.b16 %v79, %v78
    %vm82 = vcmask 523264
    %v84 = vsel %vm82, %v80, 0
    %v87 = vsel %vm82, %v81, 0
    %89 = vmatprep.subr.bf16.mxu0 0
    %90 = vmatpush1.bf16.msra.mxu0 0
    %91 = vmatprep.subr.bf16.mxu0 0
    %92 = vmatpush1.bf16.msra.mxu0 0
    %93 = vmatprep.subr.bf16.mxu0 0
    %94 = vmatpush1.bf16.msra.mxu0 0
    %95 = vmatprep.subr.bf16.mxu0 0
    %96 = vmatpush1.bf16.msra.mxu0 0
    %97 = vmatprep.subr.bf16.mxu0 0
    %98 = vmatpush1.bf16.msra.mxu0 %v67
    %99 = vmatprep.subr.bf16.mxu0 0
    %100 = vmatpush1.bf16.msra.mxu0 %v66
    %101 = vmatprep.subr.bf16.mxu0 0
    %102 = vmatpush1.bf16.msra.mxu0 %v65
    %103 = vmatprep.subr.bf16.mxu0 0
    %104 = vmatpush1.bf16.msra.mxu0 %v64
    %105 = vmatprep.subr.bf16.mxu0 0
    %106 = vmatpush2.bf16.msra.mxu0 0
    %107 = vmatprep.subr.bf16.mxu0 0
    %108 = vmatpush2.bf16.msra.mxu0 0
    %109 = vmatprep.subr.bf16.mxu0 0
    %110 = vmatpush2.bf16.msra.mxu0 0
    %111 = vmatprep.subr.bf16.mxu0 0
    %112 = vmatpush2.bf16.msra.mxu0 0
    %113 = vmatprep.subr.bf16.mxu0 0
    %114 = vmatpush2.bf16.msra.mxu0 0
    %115 = vmatprep.subr.bf16.mxu0 0
    %116 = vmatpush2.bf16.msra.mxu0 0
    %117 = vmatprep.subr.bf16.mxu0 0
    %118 = vmatpush2.bf16.msra.mxu0 0
    %119 = vmatprep.subr.bf16.mxu0 0
    %120 = vmatpush2.bf16.msra.mxu0 0
    %121 = vmatprep.mubr.bf16.mxu0 0
    %122 = vmatmul.mubr.bf16.gmra.mxu0 %v84
    %v123 = vpop.f32.mrf.mxu0
    %v124 = vadd.f32 0.0, %v123
    %v125 = vpop.f32.mrf.mxu0
    %v126 = vpop.f32.mrf.mxu0
    %v127 = vadd.f32 0.0, %v126
    %v128 = vpop.f32.mrf.mxu0
    %129 = vmatprep.mubr.bf16.mxu0 0
    %130 = vmatmul.mubr.bf16.gmra.mxu0 %v87
    %v131 = vpop.f32.mrf.mxu0
    %v132 = vadd.f32 0.0, %v131
    %v133 = vpop.f32.mrf.mxu0
    %v134 = vpop.f32.mrf.mxu0
    %v135 = vadd.f32 0.0, %v134
    %v136 = vpop.f32.mrf.mxu0
    %137 = vdwg.mxu0
    %v138 = vld [vmem:[#allocation5 + $0x150] sm:$0xff]
    %v139 = vld [vmem:[#allocation5 + $0x158] sm:$0xff]
    %v140 = vld [vmem:[#allocation5 + $0x160] sm:$0xff]
    %v141 = vld [vmem:[#allocation5 + $0x168] sm:$0xff]
    %v142 = vpack.c.bf16 %v127, %v124
    %v143 = vpack.c.bf16 %v135, %v132
    %v144 = vld [vmem:[#allocation5 + $0x20] sm:$0xf]
    %v145 = vld [vmem:[#allocation5 + $0x28] sm:$0xf]
    %v146 = vld [vmem:[#allocation5 + $0x30] sm:$0xf]
    %v147 = vld [vmem:[#allocation5 + $0x38] sm:$0xf]
    %v152 = vunpack.c.l.b16 %v144
    %v153 = vunpack.c.l.b16 %v145
    %v154 = vunpack.c.l.b16 %v146
    %v155 = vunpack.c.l.b16 %v147
    %v156 = vpack.c.b16 %v153, %v152
    %v157 = vpack.c.b16 %v155, %v154
    %v159 = vsel %vm82, %v156, 0
    %v162 = vsel %vm82, %v157, 0
    %164 = vmatprep.subr.bf16.mxu0 0
    %165 = vmatpush1.bf16.msra.mxu0 0
    %166 = vmatprep.subr.bf16.mxu0 0
    %167 = vmatpush1.bf16.msra.mxu0 0
    %168 = vmatprep.subr.bf16.mxu0 0
    %169 = vmatpush1.bf16.msra.mxu0 0
    %170 = vmatprep.subr.bf16.mxu0 0
    %171 = vmatpush1.bf16.msra.mxu0 0
    %172 = vmatprep.subr.bf16.mxu0 0
    %173 = vmatpush1.bf16.msra.mxu0 %v67
    %174 = vmatprep.subr.bf16.mxu0 0
    %175 = vmatpush1.bf16.msra.mxu0 %v66
    %176 = vmatprep.subr.bf16.mxu0 0
    %177 = vmatpush1.bf16.msra.mxu0 %v65
    %178 = vmatprep.subr.bf16.mxu0 0
    %179 = vmatpush1.bf16.msra.mxu0 %v64
    %180 = vmatprep.subr.bf16.mxu0 0
    %181 = vmatpush2.bf16.msra.mxu0 0
    %182 = vmatprep.subr.bf16.mxu0 0
    %183 = vmatpush2.bf16.msra.mxu0 0
    %184 = vmatprep.subr.bf16.mxu0 0
    %185 = vmatpush2.bf16.msra.mxu0 0
    %186 = vmatprep.subr.bf16.mxu0 0
    %187 = vmatpush2.bf16.msra.mxu0 0
    %188 = vmatprep.subr.bf16.mxu0 0
    %189 = vmatpush2.bf16.msra.mxu0 0
    %190 = vmatprep.subr.bf16.mxu0 0
    %191 = vmatpush2.bf16.msra.mxu0 0
    %192 = vmatprep.subr.bf16.mxu0 0
    %193 = vmatpush2.bf16.msra.mxu0 0
    %194 = vmatprep.subr.bf16.mxu0 0
    %195 = vmatpush2.bf16.msra.mxu0 0
    %196 = vmatprep.mubr.bf16.mxu0 0
    %197 = vmatmul.mubr.bf16.gmra.mxu0 %v159
    %v198 = vpop.f32.mrf.mxu0
    %v199 = vadd.f32 0.0, %v198
    %v200 = vpop.f32.mrf.mxu0
    %v201 = vpop.f32.mrf.mxu0
    %v202 = vadd.f32 0.0, %v201
    %v203 = vpop.f32.mrf.mxu0
    %204 = vmatprep.mubr.bf16.mxu0 0
    %205 = vmatmul.mubr.bf16.gmra.mxu0 %v162
    %v206 = vpop.f32.mrf.mxu0
    %v207 = vadd.f32 0.0, %v206
    %v208 = vpop.f32.mrf.mxu0
    %v209 = vpop.f32.mrf.mxu0
    %v210 = vadd.f32 0.0, %v209
    %v211 = vpop.f32.mrf.mxu0
    %212 = vdwg.mxu0
    %v213 = vld [vmem:[#allocation5 + $0x170] sm:$0xff]
    %v214 = vld [vmem:[#allocation5 + $0x178] sm:$0xff]
    %v215 = vld [vmem:[#allocation5 + $0x180] sm:$0xff]
    %v216 = vld [vmem:[#allocation5 + $0x188] sm:$0xff]
    %v217 = vpack.c.bf16 %v202, %v199
    %v218 = vpack.c.bf16 %v210, %v207
    %v223 = vunpack.c.l.b16 %v213
    %v224 = vunpack.c.h.b16 %v213
    %v225 = vunpack.c.l.b16 %v214
    %v226 = vunpack.c.h.b16 %v214
    %v227 = vunpack.c.l.b16 %v215
    %v228 = vunpack.c.h.b16 %v215
    %v229 = vunpack.c.l.b16 %v216
    %v230 = vunpack.c.h.b16 %v216
    %v231 = vpack.c.b16 %v225, %v223
    %v232 = vpack.c.b16 %v226, %v224
    %v233 = vpack.c.b16 %v229, %v227
    %v234 = vpack.c.b16 %v230, %v228
    %vm239 = vcmask 261120
    %v241 = vsel %vm239, %v217, 0
    %v244 = vsel %vm239, %v218, 0
    %246 = vmatprep.subr.bf16.mxu0 0
    %247 = vmatpush1.bf16.msra.mxu0 0
    %248 = vmatprep.subr.bf16.mxu0 0
    %249 = vmatpush1.bf16.msra.mxu0 0
    %250 = vmatprep.subr.bf16.mxu0 0
    %251 = vmatpush1.bf16.msra.mxu0 0
    %252 = vmatprep.subr.bf16.mxu0 0
    %253 = vmatpush1.bf16.msra.mxu0 0
    %254 = vmatprep.subr.bf16.mxu0 0
    %255 = vmatpush1.bf16.msra.mxu0 0
    %256 = vmatprep.subr.bf16.mxu0 0
    %257 = vmatpush1.bf16.msra.mxu0 0
    %258 = vmatprep.subr.bf16.mxu0 %v234
    %259 = vmatpush1.bf16.msra.mxu0 %v233
    %260 = vmatprep.subr.bf16.mxu0 %v232
    %261 = vmatpush1.bf16.msra.mxu0 %v231
    %262 = vmatprep.subr.bf16.mxu0 0
    %263 = vmatpush2.bf16.msra.mxu0 0
    %264 = vmatprep.subr.bf16.mxu0 0
    %265 = vmatpush2.bf16.msra.mxu0 0
    %266 = vmatprep.subr.bf16.mxu0 0
    %267 = vmatpush2.bf16.msra.mxu0 0
    %268 = vmatprep.subr.bf16.mxu0 0
    %269 = vmatpush2.bf16.msra.mxu0 0
    %270 = vmatprep.subr.bf16.mxu0 0
    %271 = vmatpush2.bf16.msra.mxu0 0
    %272 = vmatprep.subr.bf16.mxu0 0
    %273 = vmatpush2.bf16.msra.mxu0 0
    %274 = vmatprep.subr.bf16.mxu0 0
    %275 = vmatpush2.bf16.msra.mxu0 0
    %276 = vmatprep.subr.bf16.mxu0 0
    %277 = vmatpush2.bf16.msra.mxu0 0
    %278 = vmatprep.mubr.bf16.mxu0 0
    %279 = vmatmul.mubr.bf16.gmra.mxu0 %v241
    %v280 = vpop.f32.mrf.mxu0
    %v281 = vadd.f32 0.0, %v280
    %v282 = vpop.f32.mrf.mxu0
    %v283 = vadd.f32 0.0, %v282
    %v284 = vpop.f32.mrf.mxu0
    %v285 = vadd.f32 0.0, %v284
    %v286 = vpop.f32.mrf.mxu0
    %v287 = vadd.f32 0.0, %v286
    %288 = vmatprep.mubr.bf16.mxu0 0
    %289 = vmatmul.mubr.bf16.gmra.mxu0 %v244
    %v290 = vpop.f32.mrf.mxu0
    %v291 = vadd.f32 0.0, %v290
    %v292 = vpop.f32.mrf.mxu0
    %v293 = vadd.f32 0.0, %v292
    %v294 = vpop.f32.mrf.mxu0
    %v295 = vadd.f32 0.0, %v294
    %v296 = vpop.f32.mrf.mxu0
    %v297 = vadd.f32 0.0, %v296
    %298 = vdwg.mxu0
    %v303 = vunpack.c.l.b16 %v138
    %v304 = vunpack.c.h.b16 %v138
    %v305 = vunpack.c.l.b16 %v139
    %v306 = vunpack.c.h.b16 %v139
    %v307 = vunpack.c.l.b16 %v140
    %v308 = vunpack.c.h.b16 %v140
    %v309 = vunpack.c.l.b16 %v141
    %v310 = vunpack.c.h.b16 %v141
    %v311 = vpack.c.b16 %v305, %v303
    %v312 = vpack.c.b16 %v306, %v304
    %v313 = vpack.c.b16 %v309, %v307
    %v314 = vpack.c.b16 %v310, %v308
    %v320 = vsel %vm239, %v142, 0
    %v323 = vsel %vm239, %v143, 0
    %325 = vmatprep.subr.bf16.mxu0 0
    %326 = vmatpush1.bf16.msra.mxu0 0
    %327 = vmatprep.subr.bf16.mxu0 0
    %328 = vmatpush1.bf16.msra.mxu0 0
    %329 = vmatprep.subr.bf16.mxu0 0
    %330 = vmatpush1.bf16.msra.mxu0 0
    %331 = vmatprep.subr.bf16.mxu0 0
    %332 = vmatpush1.bf16.msra.mxu0 0
    %333 = vmatprep.subr.bf16.mxu0 0
    %334 = vmatpush1.bf16.msra.mxu0 0
    %335 = vmatprep.subr.bf16.mxu0 0
    %336 = vmatpush1.bf16.msra.mxu0 0
    %337 = vmatprep.subr.bf16.mxu0 %v314
    %338 = vmatpush1.bf16.msra.mxu0 %v313
    %339 = vmatprep.subr.bf16.mxu0 %v312
    %340 = vmatpush1.bf16.msra.mxu0 %v311
    %341 = vmatprep.subr.bf16.mxu0 0
    %342 = vmatpush2.bf16.msra.mxu0 0
    %343 = vmatprep.subr.bf16.mxu0 0
    %344 = vmatpush2.bf16.msra.mxu0 0
    %345 = vmatprep.subr.bf16.mxu0 0
    %346 = vmatpush2.bf16.msra.mxu0 0
    %347 = vmatprep.subr.bf16.mxu0 0
    %348 = vmatpush2.bf16.msra.mxu0 0
    %349 = vmatprep.subr.bf16.mxu0 0
    %350 = vmatpush2.bf16.msra.mxu0 0
    %351 = vmatprep.subr.bf16.mxu0 0
    %352 = vmatpush2.bf16.msra.mxu0 0
    %353 = vmatprep.subr.bf16.mxu0 0
    %354 = vmatpush2.bf16.msra.mxu0 0
    %355 = vmatprep.subr.bf16.mxu0 0
    %356 = vmatpush2.bf16.msra.mxu0 0
    %357 = vmatprep.mubr.bf16.mxu0 0
    %358 = vmatmul.mubr.bf16.gmra.mxu0 %v320
    %v359 = vpop.f32.mrf.mxu0
    %v360 = vadd.f32 %v281, %v359
    %v361 = vpop.f32.mrf.mxu0
    %v362 = vadd.f32 %v283, %v361
    %v363 = vpop.f32.mrf.mxu0
    %v364 = vadd.f32 %v285, %v363
    %v365 = vpop.f32.mrf.mxu0
    %v366 = vadd.f32 %v287, %v365
    %367 = vmatprep.mubr.bf16.mxu0 0
    %368 = vmatmul.mubr.bf16.gmra.mxu0 %v323
    %v369 = vpop.f32.mrf.mxu0
    %v370 = vadd.f32 %v291, %v369
    %v371 = vpop.f32.mrf.mxu0
    %v372 = vadd.f32 %v293, %v371
    %v373 = vpop.f32.mrf.mxu0
    %v374 = vadd.f32 %v295, %v373
    %v375 = vpop.f32.mrf.mxu0
    %v376 = vadd.f32 %v297, %v375
    %377 = vdwg.mxu0
    %v378 = vld [vmem:[#allocation5 + $0x40] sm:$0xf]
    %v379 = vld [vmem:[#allocation5 + $0x48] sm:$0xf]
    %v380 = vld [vmem:[#allocation5 + $0x50] sm:$0xf]
    %v381 = vld [vmem:[#allocation5 + $0x58] sm:$0xf]
    %v386 = vunpack.c.l.b16 %v378
    %v387 = vunpack.c.l.b16 %v379
    %v388 = vunpack.c.l.b16 %v380
    %v389 = vunpack.c.l.b16 %v381
    %v390 = vpack.c.b16 %v387, %v386
    %v391 = vpack.c.b16 %v389, %v388
    %v393 = vsel %vm82, %v390, 0
    %v396 = vsel %vm82, %v391, 0
    %398 = vmatprep.subr.bf16.mxu0 0
    %399 = vmatpush1.bf16.msra.mxu0 0
    %400 = vmatprep.subr.bf16.mxu0 0
    %401 = vmatpush1.bf16.msra.mxu0 0
    %402 = vmatprep.subr.bf16.mxu0 0
    %403 = vmatpush1.bf16.msra.mxu0 0
    %404 = vmatprep.subr.bf16.mxu0 0
    %405 = vmatpush1.bf16.msra.mxu0 0
    %406 = vmatprep.subr.bf16.mxu0 0
    %407 = vmatpush1.bf16.msra.mxu0 %v67
    %408 = vmatprep.subr.bf16.mxu0 0
    %409 = vmatpush1.bf16.msra.mxu0 %v66
    %410 = vmatprep.subr.bf16.mxu0 0
    %411 = vmatpush1.bf16.msra.mxu0 %v65
    %412 = vmatprep.subr.bf16.mxu0 0
    %413 = vmatpush1.bf16.msra.mxu0 %v64
    %414 = vmatprep.subr.bf16.mxu0 0
    %415 = vmatpush2.bf16.msra.mxu0 0
    %416 = vmatprep.subr.bf16.mxu0 0
    %417 = vmatpush2.bf16.msra.mxu0 0
    %418 = vmatprep.subr.bf16.mxu0 0
    %419 = vmatpush2.bf16.msra.mxu0 0
    %420 = vmatprep.subr.bf16.mxu0 0
    %421 = vmatpush2.bf16.msra.mxu0 0
    %422 = vmatprep.subr.bf16.mxu0 0
    %423 = vmatpush2.bf16.msra.mxu0 0
    %424 = vmatprep.subr.bf16.mxu0 0
    %425 = vmatpush2.bf16.msra.mxu0 0
    %426 = vmatprep.subr.bf16.mxu0 0
    %427 = vmatpush2.bf16.msra.mxu0 0
    %428 = vmatprep.subr.bf16.mxu0 0
    %429 = vmatpush2.bf16.msra.mxu0 0
    %430 = vmatprep.mubr.bf16.mxu0 0
    %431 = vmatmul.mubr.bf16.gmra.mxu0 %v393
    %v432 = vpop.f32.mrf.mxu0
    %v433 = vadd.f32 0.0, %v432
    %v434 = vpop.f32.mrf.mxu0
    %v435 = vpop.f32.mrf.mxu0
    %v436 = vadd.f32 0.0, %v435
    %v437 = vpop.f32.mrf.mxu0
    %438 = vmatprep.mubr.bf16.mxu0 0
    %439 = vmatmul.mubr.bf16.gmra.mxu0 %v396
    %v440 = vpop.f32.mrf.mxu0
    %v441 = vadd.f32 0.0, %v440
    %v442 = vpop.f32.mrf.mxu0
    %v443 = vpop.f32.mrf.mxu0
    %v444 = vadd.f32 0.0, %v443
    %v445 = vpop.f32.mrf.mxu0
    %446 = vdwg.mxu0
    %v447 = vld [vmem:[#allocation5 + $0x190] sm:$0xff]
    %v448 = vld [vmem:[#allocation5 + $0x198] sm:$0xff]
    %v449 = vld [vmem:[#allocation5 + $0x1a0] sm:$0xff]
    %v450 = vld [vmem:[#allocation5 + $0x1a8] sm:$0xff]
    %v451 = vpack.c.bf16 %v436, %v433
    %v452 = vpack.c.bf16 %v444, %v441
    %v457 = vunpack.c.l.b16 %v447
    %v458 = vunpack.c.h.b16 %v447
    %v459 = vunpack.c.l.b16 %v448
    %v460 = vunpack.c.h.b16 %v448
    %v461 = vunpack.c.l.b16 %v449
    %v462 = vunpack.c.h.b16 %v449
    %v463 = vunpack.c.l.b16 %v450
    %v464 = vunpack.c.h.b16 %v450
    %v465 = vpack.c.b16 %v459, %v457
    %v466 = vpack.c.b16 %v460, %v458
    %v467 = vpack.c.b16 %v463, %v461
    %v468 = vpack.c.b16 %v464, %v462
    %v474 = vsel %vm239, %v451, 0
    %v477 = vsel %vm239, %v452, 0
    %479 = vmatprep.subr.bf16.mxu0 0
    %480 = vmatpush1.bf16.msra.mxu0 0
    %481 = vmatprep.subr.bf16.mxu0 0
    %482 = vmatpush1.bf16.msra.mxu0 0
    %483 = vmatprep.subr.bf16.mxu0 0
    %484 = vmatpush1.bf16.msra.mxu0 0
    %485 = vmatprep.subr.bf16.mxu0 0
    %486 = vmatpush1.bf16.msra.mxu0 0
    %487 = vmatprep.subr.bf16.mxu0 0
    %488 = vmatpush1.bf16.msra.mxu0 0
    %489 = vmatprep.subr.bf16.mxu0 0
    %490 = vmatpush1.bf16.msra.mxu0 0
    %491 = vmatprep.subr.bf16.mxu0 %v468
    %492 = vmatpush1.bf16.msra.mxu0 %v467
    %493 = vmatprep.subr.bf16.mxu0 %v466
    %494 = vmatpush1.bf16.msra.mxu0 %v465
    %495 = vmatprep.subr.bf16.mxu0 0
    %496 = vmatpush2.bf16.msra.mxu0 0
    %497 = vmatprep.subr.bf16.mxu0 0
    %498 = vmatpush2.bf16.msra.mxu0 0
    %499 = vmatprep.subr.bf16.mxu0 0
    %500 = vmatpush2.bf16.msra.mxu0 0
    %501 = vmatprep.subr.bf16.mxu0 0
    %502 = vmatpush2.bf16.msra.mxu0 0
    %503 = vmatprep.subr.bf16.mxu0 0
    %504 = vmatpush2.bf16.msra.mxu0 0
    %505 = vmatprep.subr.bf16.mxu0 0
    %506 = vmatpush2.bf16.msra.mxu0 0
    %507 = vmatprep.subr.bf16.mxu0 0
    %508 = vmatpush2.bf16.msra.mxu0 0
    %509 = vmatprep.subr.bf16.mxu0 0
    %510 = vmatpush2.bf16.msra.mxu0 0
    %511 = vmatprep.mubr.bf16.mxu0 0
    %512 = vmatmul.mubr.bf16.gmra.mxu0 %v474
    %v513 = vpop.f32.mrf.mxu0
    %v514 = vadd.f32 0.0, %v513
    %v515 = vpop.f32.mrf.mxu0
    %v516 = vadd.f32 0.0, %v515
    %v517 = vpop.f32.mrf.mxu0
    %v518 = vadd.f32 0.0, %v517
    %v519 = vpop.f32.mrf.mxu0
    %v520 = vadd.f32 0.0, %v519
    %521 = vmatprep.mubr.bf16.mxu0 0
    %522 = vmatmul.mubr.bf16.gmra.mxu0 %v477
    %v523 = vpop.f32.mrf.mxu0
    %v524 = vadd.f32 0.0, %v523
    %v525 = vpop.f32.mrf.mxu0
    %v526 = vadd.f32 0.0, %v525
    %v527 = vpop.f32.mrf.mxu0
    %v528 = vadd.f32 0.0, %v527
    %v529 = vpop.f32.mrf.mxu0
    %v530 = vadd.f32 0.0, %v529
    %531 = vdwg.mxu0
    %v532 = vadd.f32 %v360, %v514
    %v533 = vadd.f32 %v362, %v516
    %v534 = vadd.f32 %v364, %v518
    %v535 = vadd.f32 %v366, %v520
    %v536 = vadd.f32 %v370, %v524
    %v537 = vadd.f32 %v372, %v526
    %v538 = vadd.f32 %v374, %v528
    %v539 = vadd.f32 %v376, %v530
    %v540 = vld [vmem:[#allocation7] ss:$8 sm:$0x3]
    %v542 = vlaneseq
    %v543 = vshrl.u32 %v542, 7
    %v544 = vsub.s32 0, %v543
    %v545 = vrot.slane %v540, %v544
    %v546 = vlaneseq
    %v547 = vshrl.u32 %v546, 7
    %v548 = vsub.s32 1, %v547
    %v549 = vrot.slane %v540, %v548
    %v552 = vadd.f32 %v532, %v545
    %v553 = vadd.f32 %v533, %v549
    %v554 = vadd.f32 %v534, %v545
    %v555 = vadd.f32 %v535, %v549
    %v556 = vadd.f32 %v536, %v545
    %v557 = vadd.f32 %v537, %v549
    %v558 = vadd.f32 %v538, %v545
    %v559 = vadd.f32 %v539, %v549
    %v560 = vxor.u32 %v552, 2147483648
    %v561 = vxor.u32 %v553, 2147483648
    %v562 = vxor.u32 %v554, 2147483648
    %v563 = vxor.u32 %v555, 2147483648
    %v564 = vxor.u32 %v556, 2147483648
    %v565 = vxor.u32 %v557, 2147483648
    %v566 = vxor.u32 %v558, 2147483648
    %v567 = vxor.u32 %v559, 2147483648
    %v568 = vmul.f32 %v560, 1.442695
    %v569 = vpow.pop %v568
    %v570 = vmul.f32 %v561, 1.442695
    %v571 = vpow.pop %v570
    %v572 = vmul.f32 %v562, 1.442695
    %v573 = vpow.pop %v572
    %v574 = vmul.f32 %v563, 1.442695
    %v575 = vpow.pop %v574
    %v576 = vmul.f32 %v564, 1.442695
    %v577 = vpow.pop %v576
    %v578 = vmul.f32 %v565, 1.442695
    %v579 = vpow.pop %v578
    %v580 = vmul.f32 %v566, 1.442695
    %v581 = vpow.pop %v580
    %v582 = vmul.f32 %v567, 1.442695
    %v583 = vpow.pop %v582
    %v584 = vadd.f32 %v569, 1.0
    %v585 = vadd.f32 %v571, 1.0
    %v586 = vadd.f32 %v573, 1.0
    %v587 = vadd.f32 %v575, 1.0
    %v588 = vadd.f32 %v577, 1.0
    %v589 = vadd.f32 %v579, 1.0
    %v590 = vadd.f32 %v581, 1.0
    %v591 = vadd.f32 %v583, 1.0
    %v592 = vrcp.pop %v584
    %v593 = vmul.f32 1.0, %v592
    %v594 = vrcp.pop %v585
    %v595 = vmul.f32 1.0, %v594
    %v596 = vrcp.pop %v586
    %v597 = vmul.f32 1.0, %v596
    %v598 = vrcp.pop %v587
    %v599 = vmul.f32 1.0, %v598
    %v600 = vrcp.pop %v588
    %v601 = vmul.f32 1.0, %v600
    %v602 = vrcp.pop %v589
    %v603 = vmul.f32 1.0, %v602
    %v604 = vrcp.pop %v590
    %v605 = vmul.f32 1.0, %v604
    %v606 = vrcp.pop %v591
    %v607 = vmul.f32 1.0, %v606
    %v608 = vmul.f32 %v552, %v593
    %v609 = vmul.f32 %v553, %v595
    %v610 = vmul.f32 %v554, %v597
    %v611 = vmul.f32 %v555, %v599
    %v612 = vmul.f32 %v556, %v601
    %v613 = vmul.f32 %v557, %v603
    %v614 = vmul.f32 %v558, %v605
    %v615 = vmul.f32 %v559, %v607
    %v616 = vpack.c.bf16 %v610, %v608
    %v617 = vpack.c.bf16 %v611, %v609
    %v618 = vpack.c.bf16 %v614, %v612
    %v619 = vpack.c.bf16 %v615, %v613
    %v620 = vld [vmem:[#allocation5 + $0x60] sm:$0xf]
    %v621 = vld [vmem:[#allocation5 + $0x68] sm:$0xf]
    %v622 = vld [vmem:[#allocation5 + $0x70] sm:$0xf]
    %v623 = vld [vmem:[#allocation5 + $0x78] sm:$0xf]
    %v628 = vunpack.c.l.b16 %v620
    %v629 = vunpack.c.l.b16 %v621
    %v630 = vunpack.c.l.b16 %v622
    %v631 = vunpack.c.l.b16 %v623
    %v632 = vpack.c.b16 %v629, %v628
    %v633 = vpack.c.b16 %v631, %v630
    %v635 = vsel %vm239, %v632, 0
    %v638 = vsel %vm239, %v633, 0
    %640 = vmatprep.subr.bf16.mxu0 0
    %641 = vmatpush1.bf16.msra.mxu0 0
    %642 = vmatprep.subr.bf16.mxu0 0
    %643 = vmatpush1.bf16.msra.mxu0 0
    %644 = vmatprep.subr.bf16.mxu0 0
    %645 = vmatpush1.bf16.msra.mxu0 0
    %646 = vmatprep.subr.bf16.mxu0 0
    %647 = vmatpush1.bf16.msra.mxu0 0
    %648 = vmatprep.subr.bf16.mxu0 0
    %649 = vmatpush1.bf16.msra.mxu0 0
    %650 = vmatprep.subr.bf16.mxu0 0
    %651 = vmatpush1.bf16.msra.mxu0 0
    %652 = vmatprep.subr.bf16.mxu0 %v619
    %653 = vmatpush1.bf16.msra.mxu0 %v618
    %654 = vmatprep.subr.bf16.mxu0 %v617
    %655 = vmatpush1.bf16.msra.mxu0 %v616
    %656 = vmatprep.subr.bf16.mxu0 0
    %657 = vmatpush2.bf16.msra.mxu0 0
    %658 = vmatprep.subr.bf16.mxu0 0
    %659 = vmatpush2.bf16.msra.mxu0 0
    %660 = vmatprep.subr.bf16.mxu0 0
    %661 = vmatpush2.bf16.msra.mxu0 0
    %662 = vmatprep.subr.bf16.mxu0 0
    %663 = vmatpush2.bf16.msra.mxu0 0
    %664 = vmatprep.subr.bf16.mxu0 0
    %665 = vmatpush2.bf16.msra.mxu0 0
    %666 = vmatprep.subr.bf16.mxu0 0
    %667 = vmatpush2.bf16.msra.mxu0 0
    %668 = vmatprep.subr.bf16.mxu0 0
    %669 = vmatpush2.bf16.msra.mxu0 0
    %670 = vmatprep.subr.bf16.mxu0 0
    %671 = vmatpush2.bf16.msra.mxu0 0
    %672 = vmatprep.mubr.bf16.mxu0 0
    %673 = vmatmul.mubr.bf16.gmra.mxu0 %v635
    %v674 = vpop.f32.mrf.mxu0
    %v675 = vadd.f32 0.0, %v674
    %v676 = vpop.f32.mrf.mxu0
    %v677 = vadd.f32 0.0, %v676
    %v678 = vpop.f32.mrf.mxu0
    %v679 = vadd.f32 0.0, %v678
    %v680 = vpop.f32.mrf.mxu0
    %v681 = vadd.f32 0.0, %v680
    %682 = vmatprep.mubr.bf16.mxu0 0
    %683 = vmatmul.mubr.bf16.gmra.mxu0 %v638
    %v684 = vpop.f32.mrf.mxu0
    %v685 = vadd.f32 0.0, %v684
    %v686 = vpop.f32.mrf.mxu0
    %v687 = vadd.f32 0.0, %v686
    %v688 = vpop.f32.mrf.mxu0
    %v689 = vadd.f32 0.0, %v688
    %v690 = vpop.f32.mrf.mxu0
    %v691 = vadd.f32 0.0, %v690
    %692 = vdwg.mxu0
    %v693 = vpack.c.bf16 %v679, %v675
    %v694 = vpack.c.bf16 %v681, %v677
    %v695 = vpack.c.bf16 %v689, %v685
    %v696 = vpack.c.bf16 %v691, %v687
    %v701 = vunpack.c.l.b16 %v693
    %v702 = vunpack.c.l.b16 %v694
    %v703 = vunpack.c.h.b16 %v693
    %v704 = vunpack.c.h.b16 %v694
    %v705 = vunpack.c.l.b16 %v695
    %v706 = vunpack.c.l.b16 %v696
    %v707 = vunpack.c.h.b16 %v695
    %v708 = vunpack.c.h.b16 %v696
    %v709 = vpack.c.b16 %v702, %v701
    %v710 = vpack.c.b16 %v704, %v703
    %v711 = vpack.c.b16 %v706, %v705
    %v712 = vpack.c.b16 %v708, %v707
    %717 = vst [vmem:[#allocation2] sm:$0xff] %v709
    %718 = vst [vmem:[#allocation2 + $0x18] sm:$0xff] %v710
    %719 = vst [vmem:[#allocation2 + $0x30] sm:$0xff] %v711
    %720 = vst [vmem:[#allocation2 + $0x48] sm:$0xff] %v712
    %v721 = vld [vmem:[#allocation5 + $0x80] sm:$0xf]
    %v722 = vld [vmem:[#allocation5 + $0x88] sm:$0xf]
    %v723 = vld [vmem:[#allocation5 + $0x90] sm:$0xf]
    %v724 = vld [vmem:[#allocation5 + $0x98] sm:$0xf]
    %v729 = vunpack.c.l.b16 %v721
    %v730 = vunpack.c.l.b16 %v722
    %v731 = vunpack.c.l.b16 %v723
    %v732 = vunpack.c.l.b16 %v724
    %v733 = vpack.c.b16 %v730, %v729
    %v734 = vpack.c.b16 %v732, %v731
    %v736 = vsel %vm239, %v733, 0
    %v739 = vsel %vm239, %v734, 0
    %741 = vmatprep.subr.bf16.mxu0 0
    %742 = vmatpush1.bf16.msra.mxu0 0
    %743 = vmatprep.subr.bf16.mxu0 0
    %744 = vmatpush1.bf16.msra.mxu0 0
    %745 = vmatprep.subr.bf16.mxu0 0
    %746 = vmatpush1.bf16.msra.mxu0 0
    %747 = vmatprep.subr.bf16.mxu0 0
    %748 = vmatpush1.bf16.msra.mxu0 0
    %749 = vmatprep.subr.bf16.mxu0 0
    %750 = vmatpush1.bf16.msra.mxu0 0
    %751 = vmatprep.subr.bf16.mxu0 0
    %752 = vmatpush1.bf16.msra.mxu0 0
    %753 = vmatprep.subr.bf16.mxu0 %v619
    %754 = vmatpush1.bf16.msra.mxu0 %v618
    %755 = vmatprep.subr.bf16.mxu0 %v617
    %756 = vmatpush1.bf16.msra.mxu0 %v616
    %757 = vmatprep.subr.bf16.mxu0 0
    %758 = vmatpush2.bf16.msra.mxu0 0
    %759 = vmatprep.subr.bf16.mxu0 0
    %760 = vmatpush2.bf16.msra.mxu0 0
    %761 = vmatprep.subr.bf16.mxu0 0
    %762 = vmatpush2.bf16.msra.mxu0 0
    %763 = vmatprep.subr.bf16.mxu0 0
    %764 = vmatpush2.bf16.msra.mxu0 0
    %765 = vmatprep.subr.bf16.mxu0 0
    %766 = vmatpush2.bf16.msra.mxu0 0
    %767 = vmatprep.subr.bf16.mxu0 0
    %768 = vmatpush2.bf16.msra.mxu0 0
    %769 = vmatprep.subr.bf16.mxu0 0
    %770 = vmatpush2.bf16.msra.mxu0 0
    %771 = vmatprep.subr.bf16.mxu0 0
    %772 = vmatpush2.bf16.msra.mxu0 0
    %773 = vmatprep.mubr.bf16.mxu0 0
    %774 = vmatmul.mubr.bf16.gmra.mxu0 %v736
    %v775 = vpop.f32.mrf.mxu0
    %v776 = vadd.f32 0.0, %v775
    %v777 = vpop.f32.mrf.mxu0
    %v778 = vadd.f32 0.0, %v777
    %v779 = vpop.f32.mrf.mxu0
    %v780 = vadd.f32 0.0, %v779
    %v781 = vpop.f32.mrf.mxu0
    %v782 = vadd.f32 0.0, %v781
    %783 = vmatprep.mubr.bf16.mxu0 0
    %784 = vmatmul.mubr.bf16.gmra.mxu0 %v739
    %v785 = vpop.f32.mrf.mxu0
    %v786 = vadd.f32 0.0, %v785
    %v787 = vpop.f32.mrf.mxu0
    %v788 = vadd.f32 0.0, %v787
    %v789 = vpop.f32.mrf.mxu0
    %v790 = vadd.f32 0.0, %v789
    %v791 = vpop.f32.mrf.mxu0
    %v792 = vadd.f32 0.0, %v791
    %793 = vdwg.mxu0
    %v794 = vpack.c.bf16 %v780, %v776
    %v795 = vpack.c.bf16 %v782, %v778
    %v796 = vpack.c.bf16 %v790, %v786
    %v797 = vpack.c.bf16 %v792, %v788
    %v802 = vunpack.c.l.b16 %v794
    %v803 = vunpack.c.l.b16 %v795
    %v804 = vunpack.c.h.b16 %v794
    %v805 = vunpack.c.h.b16 %v795
    %v806 = vunpack.c.l.b16 %v796
    %v807 = vunpack.c.l.b16 %v797
    %v808 = vunpack.c.h.b16 %v796
    %v809 = vunpack.c.h.b16 %v797
    %v810 = vpack.c.b16 %v803, %v802
    %v811 = vpack.c.b16 %v805, %v804
    %v812 = vpack.c.b16 %v807, %v806
    %v813 = vpack.c.b16 %v809, %v808
    %818 = vst [vmem:[#allocation2 + $0x8] sm:$0xff] %v810
    %819 = vst [vmem:[#allocation2 + $0x20] sm:$0xff] %v811
    %820 = vst [vmem:[#allocation2 + $0x38] sm:$0xff] %v812
    %821 = vst [vmem:[#allocation2 + $0x50] sm:$0xff] %v813
    %v822 = vld [vmem:[#allocation5 + $0xa0] sm:$0xf]
    %v823 = vld [vmem:[#allocation5 + $0xa8] sm:$0xf]
    %v824 = vld [vmem:[#allocation5 + $0xb0] sm:$0xf]
    %v825 = vld [vmem:[#allocation5 + $0xb8] sm:$0xf]
    %v830 = vunpack.c.l.b16 %v822
    %v831 = vunpack.c.l.b16 %v823
    %v832 = vunpack.c.l.b16 %v824
    %v833 = vunpack.c.l.b16 %v825
    %v834 = vpack.c.b16 %v831, %v830
    %v835 = vpack.c.b16 %v833, %v832
    %v837 = vsel %vm239, %v834, 0
    %v840 = vsel %vm239, %v835, 0
    %842 = vmatprep.subr.bf16.mxu0 0
    %843 = vmatpush1.bf16.msra.mxu0 0
    %844 = vmatprep.subr.bf16.mxu0 0
    %845 = vmatpush1.bf16.msra.mxu0 0
    %846 = vmatprep.subr.bf16.mxu0 0
    %847 = vmatpush1.bf16.msra.mxu0 0
    %848 = vmatprep.subr.bf16.mxu0 0
    %849 = vmatpush1.bf16.msra.mxu0 0
    %850 = vmatprep.subr.bf16.mxu0 0
    %851 = vmatpush1.bf16.msra.mxu0 0
    %852 = vmatprep.subr.bf16.mxu0 0
    %853 = vmatpush1.bf16.msra.mxu0 0
    %854 = vmatprep.subr.bf16.mxu0 %v619
    %855 = vmatpush1.bf16.msra.mxu0 %v618
    %856 = vmatprep.subr.bf16.mxu0 %v617
    %857 = vmatpush1.bf16.msra.mxu0 %v616
    %858 = vmatprep.subr.bf16.mxu0 0
    %859 = vmatpush2.bf16.msra.mxu0 0
    %860 = vmatprep.subr.bf16.mxu0 0
    %861 = vmatpush2.bf16.msra.mxu0 0
    %862 = vmatprep.subr.bf16.mxu0 0
    %863 = vmatpush2.bf16.msra.mxu0 0
    %864 = vmatprep.subr.bf16.mxu0 0
    %865 = vmatpush2.bf16.msra.mxu0 0
    %866 = vmatprep.subr.bf16.mxu0 0
    %867 = vmatpush2.bf16.msra.mxu0 0
    %868 = vmatprep.subr.bf16.mxu0 0
    %869 = vmatpush2.bf16.msra.mxu0 0
    %870 = vmatprep.subr.bf16.mxu0 0
    %871 = vmatpush2.bf16.msra.mxu0 0
    %872 = vmatprep.subr.bf16.mxu0 0
    %873 = vmatpush2.bf16.msra.mxu0 0
    %874 = vmatprep.mubr.bf16.mxu0 0
    %875 = vmatmul.mubr.bf16.gmra.mxu0 %v837
    %v876 = vpop.f32.mrf.mxu0
    %v877 = vadd.f32 0.0, %v876
    %v878 = vpop.f32.mrf.mxu0
    %v879 = vadd.f32 0.0, %v878
    %v880 = vpop.f32.mrf.mxu0
    %v881 = vadd.f32 0.0, %v880
    %v882 = vpop.f32.mrf.mxu0
    %v883 = vadd.f32 0.0, %v882
    %884 = vmatprep.mubr.bf16.mxu0 0
    %885 = vmatmul.mubr.bf16.gmra.mxu0 %v840
    %v886 = vpop.f32.mrf.mxu0
    %v887 = vadd.f32 0.0, %v886
    %v888 = vpop.f32.mrf.mxu0
    %v889 = vadd.f32 0.0, %v888
    %v890 = vpop.f32.mrf.mxu0
    %v891 = vadd.f32 0.0, %v890
    %v892 = vpop.f32.mrf.mxu0
    %v893 = vadd.f32 0.0, %v892
    %894 = vdwg.mxu0
    %v895 = vpack.c.bf16 %v881, %v877
    %v896 = vpack.c.bf16 %v883, %v879
    %v897 = vpack.c.bf16 %v891, %v887
    %v898 = vpack.c.bf16 %v893, %v889
    %v903 = vunpack.c.l.b16 %v895
    %v904 = vunpack.c.l.b16 %v896
    %v905 = vunpack.c.h.b16 %v895
    %v906 = vunpack.c.h.b16 %v896
    %v907 = vunpack.c.l.b16 %v897
    %v908 = vunpack.c.l.b16 %v898
    %v909 = vunpack.c.h.b16 %v897
    %v910 = vunpack.c.h.b16 %v898
    %v911 = vpack.c.b16 %v904, %v903
    %v912 = vpack.c.b16 %v906, %v905
    %v913 = vpack.c.b16 %v908, %v907
    %v914 = vpack.c.b16 %v910, %v909
    %919 = vst [vmem:[#allocation2 + $0x10] sm:$0xff] %v911
    %920 = vst [vmem:[#allocation2 + $0x28] sm:$0xff] %v912
    %921 = vst [vmem:[#allocation2 + $0x40] sm:$0xff] %v913
    %922 = vst [vmem:[#allocation2 + $0x58] sm:$0xff] %v914
    %v923 = vld [vmem:[#allocation2] sm:$0xff]
    %v924 = vld [vmem:[#allocation2 + $0x8] sm:$0xff]
    %v925 = vld [vmem:[#allocation2 + $0x10] sm:$0xff]
    %v926 = vld [vmem:[#allocation2 + $0x18] sm:$0xff]
    %v927 = vld [vmem:[#allocation2 + $0x20] sm:$0xff]
    %v928 = vld [vmem:[#allocation2 + $0x28] sm:$0xff]
    %v929 = vld [vmem:[#allocation2 + $0x30] sm:$0xff]
    %v930 = vld [vmem:[#allocation2 + $0x38] sm:$0xff]
    %v931 = vld [vmem:[#allocation2 + $0x40] sm:$0xff]
    %v932 = vld [vmem:[#allocation2 + $0x48] sm:$0xff]
    %v933 = vld [vmem:[#allocation2 + $0x50] sm:$0xff]
    %v934 = vld [vmem:[#allocation2 + $0x58] sm:$0xff]
    %v935 = vld [vmem:[#allocation5 + $0x1b0] sm:$0xff]
    %v936 = vld [vmem:[#allocation5 + $0x1b8] sm:$0xff]
    %v937 = vld [vmem:[#allocation5 + $0x1c0] sm:$0xff]
    %v938 = vld [vmem:[#allocation5 + $0x1c8] sm:$0xff]
    %v939 = vld [vmem:[#allocation5 + $0x1d0] sm:$0xff]
    %v940 = vld [vmem:[#allocation5 + $0x1d8] sm:$0xff]
    %v941 = vld [vmem:[#allocation5 + $0x1e0] sm:$0xff]
    %v942 = vld [vmem:[#allocation5 + $0x1e8] sm:$0xff]
    %v943 = vld [vmem:[#allocation5 + $0x1f0] sm:$0xff]
    %v944 = vld [vmem:[#allocation5 + $0x1f8] sm:$0xff]
    %v945 = vld [vmem:[#allocation5 + $0x200] sm:$0xff]
    %v946 = vld [vmem:[#allocation5 + $0x208] sm:$0xff]
    %v947 = vld [vmem:[#allocation5 + $0x210] sm:$0xff]
    %v948 = vld [vmem:[#allocation5 + $0x218] sm:$0xff]
    %v949 = vld [vmem:[#allocation5 + $0x220] sm:$0xff]
    %v950 = vld [vmem:[#allocation5 + $0x228] sm:$0xff]
    %v951 = vld [vmem:[#allocation5 + $0x230] sm:$0xff]
    %v952 = vld [vmem:[#allocation5 + $0x238] sm:$0xff]
    %v953 = vld [vmem:[#allocation5 + $0x240] sm:$0xff]
    %v954 = vld [vmem:[#allocation5 + $0x248] sm:$0xff]
    %v955 = vld [vmem:[#allocation5 + $0x250] sm:$0xff]
    %v956 = vld [vmem:[#allocation5 + $0x258] sm:$0xff]
    %v957 = vld [vmem:[#allocation5 + $0x260] sm:$0xff]
    %v958 = vld [vmem:[#allocation5 + $0x268] sm:$0xff]
    %v959 = vld [vmem:[#allocation5 + $0x270] sm:$0xff]
    %v960 = vld [vmem:[#allocation5 + $0x278] sm:$0xff]
    %v961 = vld [vmem:[#allocation5 + $0x280] sm:$0xff]
    %v962 = vld [vmem:[#allocation5 + $0x288] sm:$0xff]
    %v963 = vld [vmem:[#allocation5 + $0x290] sm:$0xff]
    %v964 = vld [vmem:[#allocation5 + $0x298] sm:$0xff]
    %v965 = vld [vmem:[#allocation5 + $0x2a0] sm:$0xff]
    %v966 = vld [vmem:[#allocation5 + $0x2a8] sm:$0xff]
    %v967 = vld [vmem:[#allocation5 + $0x2b0] sm:$0xff]
    %v968 = vld [vmem:[#allocation5 + $0x2b8] sm:$0xff]
    %v969 = vld [vmem:[#allocation5 + $0x2c0] sm:$0xff]
    %v970 = vld [vmem:[#allocation5 + $0x2c8] sm:$0xff]
    %v971 = vld [vmem:[#allocation5 + $0x2d0] sm:$0xff]
    %v972 = vld [vmem:[#allocation5 + $0x2d8] sm:$0xff]
    %v973 = vld [vmem:[#allocation5 + $0x2e0] sm:$0xff]
    %v974 = vld [vmem:[#allocation5 + $0x2e8] sm:$0xff]
    %v975 = vld [vmem:[#allocation5 + $0x2f0] sm:$0xff]
    %v976 = vld [vmem:[#allocation5 + $0x2f8] sm:$0xff]
    %v977 = vld [vmem:[#allocation5 + $0x300] sm:$0xff]
    %v978 = vld [vmem:[#allocation5 + $0x308] sm:$0xff]
    %v979 = vld [vmem:[#allocation5 + $0x310] sm:$0xff]
    %v980 = vld [vmem:[#allocation5 + $0x318] sm:$0xff]
    %v981 = vld [vmem:[#allocation5 + $0x320] sm:$0xff]
    %v982 = vld [vmem:[#allocation5 + $0x328] sm:$0xff]
    %v983 = vld [vmem:[#allocation5 + $0x330] sm:$0xff]
    %v984 = vld [vmem:[#allocation5 + $0x338] sm:$0xff]
    %v985 = vld [vmem:[#allocation5 + $0x340] sm:$0xff]
    %v986 = vld [vmem:[#allocation5 + $0x348] sm:$0xff]
    %v987 = vld [vmem:[#allocation5 + $0x350] sm:$0xff]
    %v988 = vld [vmem:[#allocation5 + $0x358] sm:$0xff]
    %v989 = vld [vmem:[#allocation5 + $0x360] sm:$0xff]
    %v990 = vld [vmem:[#allocation5 + $0x368] sm:$0xff]
    %v991 = vld [vmem:[#allocation5 + $0x370] sm:$0xff]
    %v992 = vld [vmem:[#allocation5 + $0x378] sm:$0xff]
    %v993 = vld [vmem:[#allocation5 + $0x380] sm:$0xff]
    %v994 = vld [vmem:[#allocation5 + $0x388] sm:$0xff]
    %v995 = vld [vmem:[#allocation5 + $0x390] sm:$0xff]
    %v996 = vld [vmem:[#allocation5 + $0x398] sm:$0xff]
    %v997 = vld [vmem:[#allocation5 + $0x3a0] sm:$0xff]
    %v998 = vld [vmem:[#allocation5 + $0x3a8] sm:$0xff]
    %v999 = vld [vmem:[#allocation5 + $0x3b0] sm:$0xff]
    %v1000 = vld [vmem:[#allocation5 + $0x3b8] sm:$0xff]
    %v1001 = vld [vmem:[#allocation5 + $0x3c0] sm:$0xff]
    %v1002 = vld [vmem:[#allocation5 + $0x3c8] sm:$0xff]
    %v1003 = vld [vmem:[#allocation5 + $0x3d0] sm:$0xff]
    %v1004 = vld [vmem:[#allocation5 + $0x3d8] sm:$0xff]
    %v1005 = vld [vmem:[#allocation5 + $0x3e0] sm:$0xff]
    %v1006 = vld [vmem:[#allocation5 + $0x3e8] sm:$0xff]
    %v1007 = vld [vmem:[#allocation5 + $0x3f0] sm:$0xff]
    %v1008 = vld [vmem:[#allocation5 + $0x3f8] sm:$0xff]
    %v1009 = vld [vmem:[#allocation5 + $0x400] sm:$0xff]
    %v1010 = vld [vmem:[#allocation5 + $0x408] sm:$0xff]
    %v1011 = vld [vmem:[#allocation5 + $0x410] sm:$0xff]
    %v1012 = vld [vmem:[#allocation5 + $0x418] sm:$0xff]
    %v1013 = vld [vmem:[#allocation5 + $0x420] sm:$0xff]
    %v1014 = vld [vmem:[#allocation5 + $0x428] sm:$0xff]
    %v1015 = vld [vmem:[#allocation5 + $0x430] sm:$0xff]
    %v1016 = vld [vmem:[#allocation5 + $0x438] sm:$0xff]
    %v1017 = vld [vmem:[#allocation5 + $0x440] sm:$0xff]
    %v1018 = vld [vmem:[#allocation5 + $0x448] sm:$0xff]
    %v1019 = vld [vmem:[#allocation5 + $0x450] sm:$0xff]
    %v1020 = vld [vmem:[#allocation5 + $0x458] sm:$0xff]
    %v1021 = vld [vmem:[#allocation5 + $0x460] sm:$0xff]
    %v1022 = vld [vmem:[#allocation5 + $0x468] sm:$0xff]
    %v1023 = vld [vmem:[#allocation5 + $0x470] sm:$0xff]
    %v1024 = vld [vmem:[#allocation5 + $0x478] sm:$0xff]
    %v1025 = vld [vmem:[#allocation5 + $0x480] sm:$0xff]
    %v1026 = vld [vmem:[#allocation5 + $0x488] sm:$0xff]
    %v1027 = vld [vmem:[#allocation5 + $0x490] sm:$0xff]
    %v1028 = vld [vmem:[#allocation5 + $0x498] sm:$0xff]
    %v1029 = vld [vmem:[#allocation5 + $0x4a0] sm:$0xff]
    %v1030 = vld [vmem:[#allocation5 + $0x4a8] sm:$0xff]
    %s1031 = scalar_lea.vmem [#allocation7], 16
    %v1032 = vld [vmem:[%s1031] ss:$8 sm:$0x3]
    %v1034 = vlaneseq
    %v1035 = vshrl.u32 %v1034, 7
    %v1036 = vsub.s32 0, %v1035
    %v1037 = vrot.slane %v1032, %v1036
    %v1038 = vlaneseq
    %v1039 = vshrl.u32 %v1038, 7
    %v1040 = vsub.s32 1, %v1039
    %v1041 = vrot.slane %v1032, %v1040
    %v1056 = vunpack.c.l.b16 %v923
    %v1057 = vunpack.c.h.b16 %v923
    %v1058 = vunpack.c.l.b16 %v924
    %v1059 = vunpack.c.h.b16 %v924
    %v1060 = vunpack.c.l.b16 %v925
    %v1061 = vunpack.c.h.b16 %v925
    %v1062 = vunpack.c.l.b16 %v926
    %v1063 = vunpack.c.h.b16 %v926
    %v1064 = vunpack.c.l.b16 %v927
    %v1065 = vunpack.c.h.b16 %v927
    %v1066 = vunpack.c.l.b16 %v928
    %v1067 = vunpack.c.h.b16 %v928
    %v1068 = vunpack.c.l.b16 %v929
    %v1069 = vunpack.c.h.b16 %v929
    %v1070 = vunpack.c.l.b16 %v930
    %v1071 = vunpack.c.h.b16 %v930
    %v1072 = vunpack.c.l.b16 %v931
    %v1073 = vunpack.c.h.b16 %v931
    %v1074 = vunpack.c.l.b16 %v932
    %v1075 = vunpack.c.h.b16 %v932
    %v1076 = vunpack.c.l.b16 %v933
    %v1077 = vunpack.c.h.b16 %v933
    %v1078 = vunpack.c.l.b16 %v934
    %v1079 = vunpack.c.h.b16 %v934
    %v1080 = vpack.c.b16 %v1062, %v1056
    %v1081 = vpack.c.b16 %v1063, %v1057
    %v1082 = vpack.c.b16 %v1064, %v1058
    %v1083 = vpack.c.b16 %v1065, %v1059
    %v1084 = vpack.c.b16 %v1066, %v1060
    %v1085 = vpack.c.b16 %v1067, %v1061
    %v1086 = vpack.c.b16 %v1074, %v1068
    %v1087 = vpack.c.b16 %v1075, %v1069
    %v1088 = vpack.c.b16 %v1076, %v1070
    %v1089 = vpack.c.b16 %v1077, %v1071
    %v1090 = vpack.c.b16 %v1078, %v1072
    %v1091 = vpack.c.b16 %v1079, %v1073
    %v1200 = vunpack.c.l.b16 %v935
    %v1201 = vunpack.c.h.b16 %v935
    %v1202 = vunpack.c.l.b16 %v936
    %v1203 = vunpack.c.h.b16 %v936
    %v1204 = vunpack.c.l.b16 %v937
    %v1205 = vunpack.c.h.b16 %v937
    %v1206 = vunpack.c.l.b16 %v938
    %v1207 = vunpack.c.h.b16 %v938
    %v1208 = vunpack.c.l.b16 %v939
    %v1209 = vunpack.c.h.b16 %v939
    %v1210 = vunpack.c.l.b16 %v940
    %v1211 = vunpack.c.h.b16 %v940
    %v1212 = vunpack.c.l.b16 %v941
    %v1213 = vunpack.c.h.b16 %v941
    %v1214 = vunpack.c.l.b16 %v942
    %v1215 = vunpack.c.h.b16 %v942
    %v1216 = vunpack.c.l.b16 %v943
    %v1217 = vunpack.c.h.b16 %v943
    %v1218 = vunpack.c.l.b16 %v944
    %v1219 = vunpack.c.h.b16 %v944
    %v1220 = vunpack.c.l.b16 %v945
    %v1221 = vunpack.c.h.b16 %v945
    %v1222 = vunpack.c.l.b16 %v946
    %v1223 = vunpack.c.h.b16 %v946
    %v1224 = vunpack.c.l.b16 %v947
    %v1225 = vunpack.c.h.b16 %v947
    %v1226 = vunpack.c.l.b16 %v948
    %v1227 = vunpack.c.h.b16 %v948
    %v1228 = vunpack.c.l.b16 %v949
    %v1229 = vunpack.c.h.b16 %v949
    %v1230 = vunpack.c.l.b16 %v950
    %v1231 = vunpack.c.h.b16 %v950
    %v1232 = vunpack.c.l.b16 %v951
    %v1233 = vunpack.c.h.b16 %v951
    %v1234 = vunpack.c.l.b16 %v952
    %v1235 = vunpack.c.h.b16 %v952
    %v1236 = vunpack.c.l.b16 %v953
    %v1237 = vunpack.c.h.b16 %v953
    %v1238 = vunpack.c.l.b16 %v954
    %v1239 = vunpack.c.h.b16 %v954
    %v1240 = vunpack.c.l.b16 %v955
    %v1241 = vunpack.c.h.b16 %v955
    %v1242 = vunpack.c.l.b16 %v956
    %v1243 = vunpack.c.h.b16 %v956
    %v1244 = vunpack.c.l.b16 %v957
    %v1245 = vunpack.c.h.b16 %v957
    %v1246 = vunpack.c.l.b16 %v958
    %v1247 = vunpack.c.h.b16 %v958
    %v1248 = vunpack.c.l.b16 %v959
    %v1249 = vunpack.c.h.b16 %v959
    %v1250 = vunpack.c.l.b16 %v960
    %v1251 = vunpack.c.h.b16 %v960
    %v1252 = vunpack.c.l.b16 %v961
    %v1253 = vunpack.c.h.b16 %v961
    %v1254 = vunpack.c.l.b16 %v962
    %v1255 = vunpack.c.h.b16 %v962
    %v1256 = vunpack.c.l.b16 %v963
    %v1257 = vunpack.c.h.b16 %v963
    %v1258 = vunpack.c.l.b16 %v964
    %v1259 = vunpack.c.h.b16 %v964
    %v1260 = vunpack.c.l.b16 %v965
    %v1261 = vunpack.c.h.b16 %v965
    %v1262 = vunpack.c.l.b16 %v966
    %v1263 = vunpack.c.h.b16 %v966
    %v1264 = vunpack.c.l.b16 %v967
    %v1265 = vunpack.c.h.b16 %v967
    %v1266 = vunpack.c.l.b16 %v968
    %v1267 = vunpack.c.h.b16 %v968
    %v1268 = vunpack.c.l.b16 %v969
    %v1269 = vunpack.c.h.b16 %v969
    %v1270 = vunpack.c.l.b16 %v970
    %v1271 = vunpack.c.h.b16 %v970
    %v1272 = vunpack.c.l.b16 %v971
    %v1273 = vunpack.c.h.b16 %v971
    %v1274 = vunpack.c.l.b16 %v972
    %v1275 = vunpack.c.h.b16 %v972
    %v1276 = vunpack.c.l.b16 %v973
    %v1277 = vunpack.c.h.b16 %v973
    %v1278 = vunpack.c.l.b16 %v974
    %v1279 = vunpack.c.h.b16 %v974
    %v1280 = vunpack.c.l.b16 %v975
    %v1281 = vunpack.c.h.b16 %v975
    %v1282 = vunpack.c.l.b16 %v976
    %v1283 = vunpack.c.h.b16 %v976
    %v1284 = vunpack.c.l.b16 %v977
    %v1285 = vunpack.c.h.b16 %v977
    %v1286 = vunpack.c.l.b16 %v978
    %v1287 = vunpack.c.h.b16 %v978
    %v1288 = vunpack.c.l.b16 %v979
    %v1289 = vunpack.c.h.b16 %v979
    %v1290 = vunpack.c.l.b16 %v980
    %v1291 = vunpack.c.h.b16 %v980
    %v1292 = vunpack.c.l.b16 %v981
    %v1293 = vunpack.c.h.b16 %v981
    %v1294 = vunpack.c.l.b16 %v982
    %v1295 = vunpack.c.h.b16 %v982
    %v1296 = vunpack.c.l.b16 %v983
    %v1297 = vunpack.c.h.b16 %v983
    %v1298 = vunpack.c.l.b16 %v984
    %v1299 = vunpack.c.h.b16 %v984
    %v1300 = vunpack.c.l.b16 %v985
    %v1301 = vunpack.c.h.b16 %v985
    %v1302 = vunpack.c.l.b16 %v986
    %v1303 = vunpack.c.h.b16 %v986
    %v1304 = vunpack.c.l.b16 %v987
    %v1305 = vunpack.c.h.b16 %v987
    %v1306 = vunpack.c.l.b16 %v988
    %v1307 = vunpack.c.h.b16 %v988
    %v1308 = vunpack.c.l.b16 %v989
    %v1309 = vunpack.c.h.b16 %v989
    %v1310 = vunpack.c.l.b16 %v990
    %v1311 = vunpack.c.h.b16 %v990
    %v1312 = vunpack.c.l.b16 %v991
    %v1313 = vunpack.c.h.b16 %v991
    %v1314 = vunpack.c.l.b16 %v992
    %v1315 = vunpack.c.h.b16 %v992
    %v1316 = vunpack.c.l.b16 %v993
    %v1317 = vunpack.c.h.b16 %v993
    %v1318 = vunpack.c.l.b16 %v994
    %v1319 = vunpack.c.h.b16 %v994
    %v1320 = vunpack.c.l.b16 %v995
    %v1321 = vunpack.c.h.b16 %v995
    %v1322 = vunpack.c.l.b16 %v996
    %v1323 = vunpack.c.h.b16 %v996
    %v1324 = vunpack.c.l.b16 %v997
    %v1325 = vunpack.c.h.b16 %v997
    %v1326 = vunpack.c.l.b16 %v998
    %v1327 = vunpack.c.h.b16 %v998
    %v1328 = vunpack.c.l.b16 %v999
    %v1329 = vunpack.c.h.b16 %v999
    %v1330 = vunpack.c.l.b16 %v1000
    %v1331 = vunpack.c.h.b16 %v1000
    %v1332 = vunpack.c.l.b16 %v1001
    %v1333 = vunpack.c.h.b16 %v1001
    %v1334 = vunpack.c.l.b16 %v1002
    %v1335 = vunpack.c.h.b16 %v1002
    %v1336 = vunpack.c.l.b16 %v1003
    %v1337 = vunpack.c.h.b16 %v1003
    %v1338 = vunpack.c.l.b16 %v1004
    %v1339 = vunpack.c.h.b16 %v1004
    %v1340 = vunpack.c.l.b16 %v1005
    %v1341 = vunpack.c.h.b16 %v1005
    %v1342 = vunpack.c.l.b16 %v1006
    %v1343 = vunpack.c.h.b16 %v1006
    %v1344 = vunpack.c.l.b16 %v1007
    %v1345 = vunpack.c.h.b16 %v1007
    %v1346 = vunpack.c.l.b16 %v1008
    %v1347 = vunpack.c.h.b16 %v1008
    %v1348 = vunpack.c.l.b16 %v1009
    %v1349 = vunpack.c.h.b16 %v1009
    %v1350 = vunpack.c.l.b16 %v1010
    %v1351 = vunpack.c.h.b16 %v1010
    %v1352 = vunpack.c.l.b16 %v1011
    %v1353 = vunpack.c.h.b16 %v1011
    %v1354 = vunpack.c.l.b16 %v1012
    %v1355 = vunpack.c.h.b16 %v1012
    %v1356 = vunpack.c.l.b16 %v1013
    %v1357 = vunpack.c.h.b16 %v1013
    %v1358 = vunpack.c.l.b16 %v1014
    %v1359 = vunpack.c.h.b16 %v1014
    %v1360 = vunpack.c.l.b16 %v1015
    %v1361 = vunpack.c.h.b16 %v1015
    %v1362 = vunpack.c.l.b16 %v1016
    %v1363 = vunpack.c.h.b16 %v1016
    %v1364 = vunpack.c.l.b16 %v1017
    %v1365 = vunpack.c.h.b16 %v1017
    %v1366 = vunpack.c.l.b16 %v1018
    %v1367 = vunpack.c.h.b16 %v1018
    %v1368 = vunpack.c.l.b16 %v1019
    %v1369 = vunpack.c.h.b16 %v1019
    %v1370 = vunpack.c.l.b16 %v1020
    %v1371 = vunpack.c.h.b16 %v1020
    %v1372 = vunpack.c.l.b16 %v1021
    %v1373 = vunpack.c.h.b16 %v1021
    %v1374 = vunpack.c.l.b16 %v1022
    %v1375 = vunpack.c.h.b16 %v1022
    %v1376 = vunpack.c.l.b16 %v1023
    %v1377 = vunpack.c.h.b16 %v1023
    %v1378 = vunpack.c.l.b16 %v1024
    %v1379 = vunpack.c.h.b16 %v1024
    %v1380 = vunpack.c.l.b16 %v1025
    %v1381 = vunpack.c.h.b16 %v1025
    %v1382 = vunpack.c.l.b16 %v1026
    %v1383 = vunpack.c.h.b16 %v1026
    %v1384 = vunpack.c.l.b16 %v1027
    %v1385 = vunpack.c.h.b16 %v1027
    %v1386 = vunpack.c.l.b16 %v1028
    %v1387 = vunpack.c.h.b16 %v1028
    %v1388 = vunpack.c.l.b16 %v1029
    %v1389 = vunpack.c.h.b16 %v1029
    %v1390 = vunpack.c.l.b16 %v1030
    %v1391 = vunpack.c.h.b16 %v1030
    %v1392 = vpack.c.b16 %v1202, %v1200
    %v1393 = vpack.c.b16 %v1203, %v1201
    %v1394 = vpack.c.b16 %v1206, %v1204
    %v1395 = vpack.c.b16 %v1207, %v1205
    %v1396 = vpack.c.b16 %v1210, %v1208
    %v1397 = vpack.c.b16 %v1211, %v1209
    %v1398 = vpack.c.b16 %v1214, %v1212
    %v1399 = vpack.c.b16 %v1215, %v1213
    %v1400 = vpack.c.b16 %v1218, %v1216
    %v1401 = vpack.c.b16 %v1219, %v1217
    %v1402 = vpack.c.b16 %v1222, %v1220
    %v1403 = vpack.c.b16 %v1223, %v1221
    %v1404 = vpack.c.b16 %v1226, %v1224
    %v1405 = vpack.c.b16 %v1227, %v1225
    %v1406 = vpack.c.b16 %v1230, %v1228
    %v1407 = vpack.c.b16 %v1231, %v1229
    %v1408 = vpack.c.b16 %v1234, %v1232
    %v1409 = vpack.c.b16 %v1235, %v1233
    %v1410 = vpack.c.b16 %v1238, %v1236
    %v1411 = vpack.c.b16 %v1239, %v1237
    %v1412 = vpack.c.b16 %v1242, %v1240
    %v1413 = vpack.c.b16 %v1243, %v1241
    %v1414 = vpack.c.b16 %v1246, %v1244
    %v1415 = vpack.c.b16 %v1247, %v1245
    %v1416 = vpack.c.b16 %v1250, %v1248
    %v1417 = vpack.c.b16 %v1251, %v1249
    %v1418 = vpack.c.b16 %v1254, %v1252
    %v1419 = vpack.c.b16 %v1255, %v1253
    %v1420 = vpack.c.b16 %v1258, %v1256
    %v1421 = vpack.c.b16 %v1259, %v1257
    %v1422 = vpack.c.b16 %v1262, %v1260
    %v1423 = vpack.c.b16 %v1263, %v1261
    %v1424 = vpack.c.b16 %v1266, %v1264
    %v1425 = vpack.c.b16 %v1267, %v1265
    %v1426 = vpack.c.b16 %v1270, %v1268
    %v1427 = vpack.c.b16 %v1271, %v1269
    %v1428 = vpack.c.b16 %v1274, %v1272
    %v1429 = vpack.c.b16 %v1275, %v1273
    %v1430 = vpack.c.b16 %v1278, %v1276
    %v1431 = vpack.c.b16 %v1279, %v1277
    %v1432 = vpack.c.b16 %v1282, %v1280
    %v1433 = vpack.c.b16 %v1283, %v1281
    %v1434 = vpack.c.b16 %v1286, %v1284
    %v1435 = vpack.c.b16 %v1287, %v1285
    %v1436 = vpack.c.b16 %v1290, %v1288
    %v1437 = vpack.c.b16 %v1291, %v1289
    %v1438 = vpack.c.b16 %v1294, %v1292
    %v1439 = vpack.c.b16 %v1295, %v1293
    %v1440 = vpack.c.b16 %v1298, %v1296
    %v1441 = vpack.c.b16 %v1299, %v1297
    %v1442 = vpack.c.b16 %v1302, %v1300
    %v1443 = vpack.c.b16 %v1303, %v1301
    %v1444 = vpack.c.b16 %v1306, %v1304
    %v1445 = vpack.c.b16 %v1307, %v1305
    %v1446 = vpack.c.b16 %v1310, %v1308
    %v1447 = vpack.c.b16 %v1311, %v1309
    %v1448 = vpack.c.b16 %v1314, %v1312
    %v1449 = vpack.c.b16 %v1315, %v1313
    %v1450 = vpack.c.b16 %v1318, %v1316
    %v1451 = vpack.c.b16 %v1319, %v1317
    %v1452 = vpack.c.b16 %v1322, %v1320
    %v1453 = vpack.c.b16 %v1323, %v1321
    %v1454 = vpack.c.b16 %v1326, %v1324
    %v1455 = vpack.c.b16 %v1327, %v1325
    %v1456 = vpack.c.b16 %v1330, %v1328
    %v1457 = vpack.c.b16 %v1331, %v1329
    %v1458 = vpack.c.b16 %v1334, %v1332
    %v1459 = vpack.c.b16 %v1335, %v1333
    %v1460 = vpack.c.b16 %v1338, %v1336
    %v1461 = vpack.c.b16 %v1339, %v1337
    %v1462 = vpack.c.b16 %v1342, %v1340
    %v1463 = vpack.c.b16 %v1343, %v1341
    %v1464 = vpack.c.b16 %v1346, %v1344
    %v1465 = vpack.c.b16 %v1347, %v1345
    %v1466 = vpack.c.b16 %v1350, %v1348
    %v1467 = vpack.c.b16 %v1351, %v1349
    %v1468 = vpack.c.b16 %v1354, %v1352
    %v1469 = vpack.c.b16 %v1355, %v1353
    %v1470 = vpack.c.b16 %v1358, %v1356
    %v1471 = vpack.c.b16 %v1359, %v1357
    %v1472 = vpack.c.b16 %v1362, %v1360
    %v1473 = vpack.c.b16 %v1363, %v1361
    %v1474 = vpack.c.b16 %v1366, %v1364
    %v1475 = vpack.c.b16 %v1367, %v1365
    %v1476 = vpack.c.b16 %v1370, %v1368
    %v1477 = vpack.c.b16 %v1371, %v1369
    %v1478 = vpack.c.b16 %v1374, %v1372
    %v1479 = vpack.c.b16 %v1375, %v1373
    %v1480 = vpack.c.b16 %v1378, %v1376
    %v1481 = vpack.c.b16 %v1379, %v1377
    %v1482 = vpack.c.b16 %v1382, %v1380
    %v1483 = vpack.c.b16 %v1383, %v1381
    %v1484 = vpack.c.b16 %v1386, %v1384
    %v1485 = vpack.c.b16 %v1387, %v1385
    %v1486 = vpack.c.b16 %v1390, %v1388
    %v1487 = vpack.c.b16 %v1391, %v1389
    %1584 = vmatprep.subr.bf16.mxu0 %v1407
    %1585 = vmatpush1.bf16.msra.mxu0 %v1406
    %1586 = vmatprep.subr.bf16.mxu0 %v1405
    %1587 = vmatpush1.bf16.msra.mxu0 %v1404
    %1588 = vmatprep.subr.bf16.mxu0 %v1403
    %1589 = vmatpush1.bf16.msra.mxu0 %v1402
    %1590 = vmatprep.subr.bf16.mxu0 %v1401
    %1591 = vmatpush1.bf16.msra.mxu0 %v1400
    %1592 = vmatprep.subr.bf16.mxu0 %v1399
    %1593 = vmatpush1.bf16.msra.mxu0 %v1398
    %1594 = vmatprep.subr.bf16.mxu0 %v1397
    %1595 = vmatpush1.bf16.msra.mxu0 %v1396
    %1596 = vmatprep.subr.bf16.mxu0 %v1395
    %1597 = vmatpush1.bf16.msra.mxu0 %v1394
    %1598 = vmatprep.subr.bf16.mxu0 %v1393
    %1599 = vmatpush1.bf16.msra.mxu0 %v1392
    %1600 = vmatprep.subr.bf16.mxu0 %v1423
    %1601 = vmatpush2.bf16.msra.mxu0 %v1422
    %1602 = vmatprep.subr.bf16.mxu0 %v1421
    %1603 = vmatpush2.bf16.msra.mxu0 %v1420
    %1604 = vmatprep.subr.bf16.mxu0 %v1419
    %1605 = vmatpush2.bf16.msra.mxu0 %v1418
    %1606 = vmatprep.subr.bf16.mxu0 %v1417
    %1607 = vmatpush2.bf16.msra.mxu0 %v1416
    %1608 = vmatprep.subr.bf16.mxu0 %v1415
    %1609 = vmatpush2.bf16.msra.mxu0 %v1414
    %1610 = vmatprep.subr.bf16.mxu0 %v1413
    %1611 = vmatpush2.bf16.msra.mxu0 %v1412
    %1612 = vmatprep.subr.bf16.mxu0 %v1411
    %1613 = vmatpush2.bf16.msra.mxu0 %v1410
    %1614 = vmatprep.subr.bf16.mxu0 %v1409
    %1615 = vmatpush2.bf16.msra.mxu0 %v1408
    %1616 = vmatprep.mubr.bf16.mxu0 %v1081
    %1617 = vmatmul.mubr.bf16.gmra.mxu0 %v1080
    %v1618 = vpop.f32.mrf.mxu0
    %v1619 = vadd.f32 %v1037, %v1618
    %v1620 = vpop.f32.mrf.mxu0
    %v1621 = vadd.f32 %v1041, %v1620
    %v1622 = vpop.f32.mrf.mxu0
    %v1623 = vadd.f32 %v1037, %v1622
    %v1624 = vpop.f32.mrf.mxu0
    %v1625 = vadd.f32 %v1041, %v1624
    %1626 = vmatprep.mubr.bf16.mxu0 %v1087
    %1627 = vmatmul.mubr.bf16.gmra.mxu0 %v1086
    %v1628 = vpop.f32.mrf.mxu0
    %v1629 = vadd.f32 %v1037, %v1628
    %v1630 = vpop.f32.mrf.mxu0
    %v1631 = vadd.f32 %v1041, %v1630
    %v1632 = vpop.f32.mrf.mxu0
    %v1633 = vadd.f32 %v1037, %v1632
    %v1634 = vpop.f32.mrf.mxu0
    %v1635 = vadd.f32 %v1041, %v1634
    %1636 = vdwg.mxu0
    %1637 = vmatprep.subr.bf16.mxu0 %v1439
    %1638 = vmatpush1.bf16.msra.mxu0 %v1438
    %1639 = vmatprep.subr.bf16.mxu0 %v1437
    %1640 = vmatpush1.bf16.msra.mxu0 %v1436
    %1641 = vmatprep.subr.bf16.mxu0 %v1435
    %1642 = vmatpush1.bf16.msra.mxu0 %v1434
    %1643 = vmatprep.subr.bf16.mxu0 %v1433
    %1644 = vmatpush1.bf16.msra.mxu0 %v1432
    %1645 = vmatprep.subr.bf16.mxu0 %v1431
    %1646 = vmatpush1.bf16.msra.mxu0 %v1430
    %1647 = vmatprep.subr.bf16.mxu0 %v1429
    %1648 = vmatpush1.bf16.msra.mxu0 %v1428
    %1649 = vmatprep.subr.bf16.mxu0 %v1427
    %1650 = vmatpush1.bf16.msra.mxu0 %v1426
    %1651 = vmatprep.subr.bf16.mxu0 %v1425
    %1652 = vmatpush1.bf16.msra.mxu0 %v1424
    %1653 = vmatprep.subr.bf16.mxu0 %v1455
    %1654 = vmatpush2.bf16.msra.mxu0 %v1454
    %1655 = vmatprep.subr.bf16.mxu0 %v1453
    %1656 = vmatpush2.bf16.msra.mxu0 %v1452
    %1657 = vmatprep.subr.bf16.mxu0 %v1451
    %1658 = vmatpush2.bf16.msra.mxu0 %v1450
    %1659 = vmatprep.subr.bf16.mxu0 %v1449
    %1660 = vmatpush2.bf16.msra.mxu0 %v1448
    %1661 = vmatprep.subr.bf16.mxu0 %v1447
    %1662 = vmatpush2.bf16.msra.mxu0 %v1446
    %1663 = vmatprep.subr.bf16.mxu0 %v1445
    %1664 = vmatpush2.bf16.msra.mxu0 %v1444
    %1665 = vmatprep.subr.bf16.mxu0 %v1443
    %1666 = vmatpush2.bf16.msra.mxu0 %v1442
    %1667 = vmatprep.subr.bf16.mxu0 %v1441
    %1668 = vmatpush2.bf16.msra.mxu0 %v1440
    %1669 = vmatprep.mubr.bf16.mxu0 %v1083
    %1670 = vmatmul.mubr.bf16.gmra.mxu0 %v1082
    %v1671 = vpop.f32.mrf.mxu0
    %v1672 = vadd.f32 %v1619, %v1671
    %v1673 = vpop.f32.mrf.mxu0
    %v1674 = vadd.f32 %v1621, %v1673
    %v1675 = vpop.f32.mrf.mxu0
    %v1676 = vadd.f32 %v1623, %v1675
    %v1677 = vpop.f32.mrf.mxu0
    %v1678 = vadd.f32 %v1625, %v1677
    %1679 = vmatprep.mubr.bf16.mxu0 %v1089
    %1680 = vmatmul.mubr.bf16.gmra.mxu0 %v1088
    %v1681 = vpop.f32.mrf.mxu0
    %v1682 = vadd.f32 %v1629, %v1681
    %v1683 = vpop.f32.mrf.mxu0
    %v1684 = vadd.f32 %v1631, %v1683
    %v1685 = vpop.f32.mrf.mxu0
    %v1686 = vadd.f32 %v1633, %v1685
    %v1687 = vpop.f32.mrf.mxu0
    %v1688 = vadd.f32 %v1635, %v1687
    %1689 = vdwg.mxu0
    %1690 = vmatprep.subr.bf16.mxu0 %v1471
    %1691 = vmatpush1.bf16.msra.mxu0 %v1470
    %1692 = vmatprep.subr.bf16.mxu0 %v1469
    %1693 = vmatpush1.bf16.msra.mxu0 %v1468
    %1694 = vmatprep.subr.bf16.mxu0 %v1467
    %1695 = vmatpush1.bf16.msra.mxu0 %v1466
    %1696 = vmatprep.subr.bf16.mxu0 %v1465
    %1697 = vmatpush1.bf16.msra.mxu0 %v1464
    %1698 = vmatprep.subr.bf16.mxu0 %v1463
    %1699 = vmatpush1.bf16.msra.mxu0 %v1462
    %1700 = vmatprep.subr.bf16.mxu0 %v1461
    %1701 = vmatpush1.bf16.msra.mxu0 %v1460
    %1702 = vmatprep.subr.bf16.mxu0 %v1459
    %1703 = vmatpush1.bf16.msra.mxu0 %v1458
    %1704 = vmatprep.subr.bf16.mxu0 %v1457
    %1705 = vmatpush1.bf16.msra.mxu0 %v1456
    %1706 = vmatprep.subr.bf16.mxu0 %v1487
    %1707 = vmatpush2.bf16.msra.mxu0 %v1486
    %1708 = vmatprep.subr.bf16.mxu0 %v1485
    %1709 = vmatpush2.bf16.msra.mxu0 %v1484
    %1710 = vmatprep.subr.bf16.mxu0 %v1483
    %1711 = vmatpush2.bf16.msra.mxu0 %v1482
    %1712 = vmatprep.subr.bf16.mxu0 %v1481
    %1713 = vmatpush2.bf16.msra.mxu0 %v1480
    %1714 = vmatprep.subr.bf16.mxu0 %v1479
    %1715 = vmatpush2.bf16.msra.mxu0 %v1478
    %1716 = vmatprep.subr.bf16.mxu0 %v1477
    %1717 = vmatpush2.bf16.msra.mxu0 %v1476
    %1718 = vmatprep.subr.bf16.mxu0 %v1475
    %1719 = vmatpush2.bf16.msra.mxu0 %v1474
    %1720 = vmatprep.subr.bf16.mxu0 %v1473
    %1721 = vmatpush2.bf16.msra.mxu0 %v1472
    %1722 = vmatprep.mubr.bf16.mxu0 %v1085
    %1723 = vmatmul.mubr.bf16.gmra.mxu0 %v1084
    %v1724 = vpop.f32.mrf.mxu0
    %v1725 = vadd.f32 %v1672, %v1724
    %v1726 = vpop.f32.mrf.mxu0
    %v1727 = vadd.f32 %v1674, %v1726
    %v1728 = vpop.f32.mrf.mxu0
    %v1729 = vadd.f32 %v1676, %v1728
    %v1730 = vpop.f32.mrf.mxu0
    %v1731 = vadd.f32 %v1678, %v1730
    %1732 = vmatprep.mubr.bf16.mxu0 %v1091
    %1733 = vmatmul.mubr.bf16.gmra.mxu0 %v1090
    %v1734 = vpop.f32.mrf.mxu0
    %v1735 = vadd.f32 %v1682, %v1734
    %v1736 = vpop.f32.mrf.mxu0
    %v1737 = vadd.f32 %v1684, %v1736
    %v1738 = vpop.f32.mrf.mxu0
    %v1739 = vadd.f32 %v1686, %v1738
    %v1740 = vpop.f32.mrf.mxu0
    %v1741 = vadd.f32 %v1688, %v1740
    %1742 = vdwg.mxu0
    %v1743 = vxor.u32 %v1725, 2147483648
    %v1744 = vxor.u32 %v1727, 2147483648
    %v1745 = vxor.u32 %v1729, 2147483648
    %v1746 = vxor.u32 %v1731, 2147483648
    %v1747 = vxor.u32 %v1735, 2147483648
    %v1748 = vxor.u32 %v1737, 2147483648
    %v1749 = vxor.u32 %v1739, 2147483648
    %v1750 = vxor.u32 %v1741, 2147483648
    %v1751 = vmul.f32 %v1743, 1.442695
    %v1752 = vpow.pop %v1751
    %v1753 = vmul.f32 %v1744, 1.442695
    %v1754 = vpow.pop %v1753
    %v1755 = vmul.f32 %v1745, 1.442695
    %v1756 = vpow.pop %v1755
    %v1757 = vmul.f32 %v1746, 1.442695
    %v1758 = vpow.pop %v1757
    %v1759 = vmul.f32 %v1747, 1.442695
    %v1760 = vpow.pop %v1759
    %v1761 = vmul.f32 %v1748, 1.442695
    %v1762 = vpow.pop %v1761
    %v1763 = vmul.f32 %v1749, 1.442695
    %v1764 = vpow.pop %v1763
    %v1765 = vmul.f32 %v1750, 1.442695
    %v1766 = vpow.pop %v1765
    %v1767 = vadd.f32 %v1752, 1.0
    %v1768 = vadd.f32 %v1754, 1.0
    %v1769 = vadd.f32 %v1756, 1.0
    %v1770 = vadd.f32 %v1758, 1.0
    %v1771 = vadd.f32 %v1760, 1.0
    %v1772 = vadd.f32 %v1762, 1.0
    %v1773 = vadd.f32 %v1764, 1.0
    %v1774 = vadd.f32 %v1766, 1.0
    %v1775 = vrcp.pop %v1767
    %v1776 = vmul.f32 1.0, %v1775
    %v1777 = vrcp.pop %v1768
    %v1778 = vmul.f32 1.0, %v1777
    %v1779 = vrcp.pop %v1769
    %v1780 = vmul.f32 1.0, %v1779
    %v1781 = vrcp.pop %v1770
    %v1782 = vmul.f32 1.0, %v1781
    %v1783 = vrcp.pop %v1771
    %v1784 = vmul.f32 1.0, %v1783
    %v1785 = vrcp.pop %v1772
    %v1786 = vmul.f32 1.0, %v1785
    %v1787 = vrcp.pop %v1773
    %v1788 = vmul.f32 1.0, %v1787
    %v1789 = vrcp.pop %v1774
    %v1790 = vmul.f32 1.0, %v1789
    %v1791 = vmul.f32 %v1725, %v1776
    %v1792 = vmul.f32 %v1727, %v1778
    %v1793 = vmul.f32 %v1729, %v1780
    %v1794 = vmul.f32 %v1731, %v1782
    %v1795 = vmul.f32 %v1735, %v1784
    %v1796 = vmul.f32 %v1737, %v1786
    %v1797 = vmul.f32 %v1739, %v1788
    %v1798 = vmul.f32 %v1741, %v1790
    %v1799 = vpack.c.bf16 %v1793, %v1791
    %v1800 = vpack.c.bf16 %v1794, %v1792
    %v1801 = vpack.c.bf16 %v1797, %v1795
    %v1802 = vpack.c.bf16 %v1798, %v1796
    %v1803 = vld [vmem:[#allocation5 + $0x60] sm:$0xf]
    %v1804 = vld [vmem:[#allocation5 + $0x68] sm:$0xf]
    %v1805 = vld [vmem:[#allocation5 + $0x70] sm:$0xf]
    %v1806 = vld [vmem:[#allocation5 + $0x78] sm:$0xf]
    %v1811 = vunpack.c.l.b16 %v1803
    %v1812 = vunpack.c.l.b16 %v1804
    %v1813 = vunpack.c.l.b16 %v1805
    %v1814 = vunpack.c.l.b16 %v1806
    %v1815 = vpack.c.b16 %v1812, %v1811
    %v1816 = vpack.c.b16 %v1814, %v1813
    %v1818 = vsel %vm239, %v1815, 0
    %v1821 = vsel %vm239, %v1816, 0
    %1823 = vmatprep.subr.bf16.mxu0 0
    %1824 = vmatpush1.bf16.msra.mxu0 0
    %1825 = vmatprep.subr.bf16.mxu0 0
    %1826 = vmatpush1.bf16.msra.mxu0 0
    %1827 = vmatprep.subr.bf16.mxu0 0
    %1828 = vmatpush1.bf16.msra.mxu0 0
    %1829 = vmatprep.subr.bf16.mxu0 0
    %1830 = vmatpush1.bf16.msra.mxu0 0
    %1831 = vmatprep.subr.bf16.mxu0 0
    %1832 = vmatpush1.bf16.msra.mxu0 0
    %1833 = vmatprep.subr.bf16.mxu0 0
    %1834 = vmatpush1.bf16.msra.mxu0 0
    %1835 = vmatprep.subr.bf16.mxu0 %v1802
    %1836 = vmatpush1.bf16.msra.mxu0 %v1801
    %1837 = vmatprep.subr.bf16.mxu0 %v1800
    %1838 = vmatpush1.bf16.msra.mxu0 %v1799
    %1839 = vmatprep.subr.bf16.mxu0 0
    %1840 = vmatpush2.bf16.msra.mxu0 0
    %1841 = vmatprep.subr.bf16.mxu0 0
    %1842 = vmatpush2.bf16.msra.mxu0 0
    %1843 = vmatprep.subr.bf16.mxu0 0
    %1844 = vmatpush2.bf16.msra.mxu0 0
    %1845 = vmatprep.subr.bf16.mxu0 0
    %1846 = vmatpush2.bf16.msra.mxu0 0
    %1847 = vmatprep.subr.bf16.mxu0 0
    %1848 = vmatpush2.bf16.msra.mxu0 0
    %1849 = vmatprep.subr.bf16.mxu0 0
    %1850 = vmatpush2.bf16.msra.mxu0 0
    %1851 = vmatprep.subr.bf16.mxu0 0
    %1852 = vmatpush2.bf16.msra.mxu0 0
    %1853 = vmatprep.subr.bf16.mxu0 0
    %1854 = vmatpush2.bf16.msra.mxu0 0
    %1855 = vmatprep.mubr.bf16.mxu0 0
    %1856 = vmatmul.mubr.bf16.gmra.mxu0 %v1818
    %v1857 = vpop.f32.mrf.mxu0
    %v1858 = vadd.f32 0.0, %v1857
    %v1859 = vpop.f32.mrf.mxu0
    %v1860 = vadd.f32 0.0, %v1859
    %v1861 = vpop.f32.mrf.mxu0
    %v1862 = vadd.f32 0.0, %v1861
    %v1863 = vpop.f32.mrf.mxu0
    %v1864 = vadd.f32 0.0, %v1863
    %1865 = vmatprep.mubr.bf16.mxu0 0
    %1866 = vmatmul.mubr.bf16.gmra.mxu0 %v1821
    %v1867 = vpop.f32.mrf.mxu0
    %v1868 = vadd.f32 0.0, %v1867
    %v1869 = vpop.f32.mrf.mxu0
    %v1870 = vadd.f32 0.0, %v1869
    %v1871 = vpop.f32.mrf.mxu0
    %v1872 = vadd.f32 0.0, %v1871
    %v1873 = vpop.f32.mrf.mxu0
    %v1874 = vadd.f32 0.0, %v1873
    %1875 = vdwg.mxu0
    %v1876 = vpack.c.bf16 %v1862, %v1858
    %v1877 = vpack.c.bf16 %v1864, %v1860
    %v1878 = vpack.c.bf16 %v1872, %v1868
    %v1879 = vpack.c.bf16 %v1874, %v1870
    %v1884 = vunpack.c.l.b16 %v1876
    %v1885 = vunpack.c.l.b16 %v1877
    %v1886 = vunpack.c.h.b16 %v1876
    %v1887 = vunpack.c.h.b16 %v1877
    %v1888 = vunpack.c.l.b16 %v1878
    %v1889 = vunpack.c.l.b16 %v1879
    %v1890 = vunpack.c.h.b16 %v1878
    %v1891 = vunpack.c.h.b16 %v1879
    %v1892 = vpack.c.b16 %v1885, %v1884
    %v1893 = vpack.c.b16 %v1887, %v1886
    %v1894 = vpack.c.b16 %v1889, %v1888
    %v1895 = vpack.c.b16 %v1891, %v1890
    %1900 = vst [vmem:[#allocation2] sm:$0xff] %v1892
    %1901 = vst [vmem:[#allocation2 + $0x18] sm:$0xff] %v1893
    %1902 = vst [vmem:[#allocation2 + $0x30] sm:$0xff] %v1894
    %1903 = vst [vmem:[#allocation2 + $0x48] sm:$0xff] %v1895
    %v1904 = vld [vmem:[#allocation5 + $0x80] sm:$0xf]
    %v1905 = vld [vmem:[#allocation5 + $0x88] sm:$0xf]
    %v1906 = vld [vmem:[#allocation5 + $0x90] sm:$0xf]
    %v1907 = vld [vmem:[#allocation5 + $0x98] sm:$0xf]
    %v1912 = vunpack.c.l.b16 %v1904
    %v1913 = vunpack.c.l.b16 %v1905
    %v1914 = vunpack.c.l.b16 %v1906
    %v1915 = vunpack.c.l.b16 %v1907
    %v1916 = vpack.c.b16 %v1913, %v1912
    %v1917 = vpack.c.b16 %v1915, %v1914
    %v1919 = vsel %vm239, %v1916, 0
    %v1922 = vsel %vm239, %v1917, 0
    %1924 = vmatprep.subr.bf16.mxu0 0
    %1925 = vmatpush1.bf16.msra.mxu0 0
    %1926 = vmatprep.subr.bf16.mxu0 0
    %1927 = vmatpush1.bf16.msra.mxu0 0
    %1928 = vmatprep.subr.bf16.mxu0 0
    %1929 = vmatpush1.bf16.msra.mxu0 0
    %1930 = vmatprep.subr.bf16.mxu0 0
    %1931 = vmatpush1.bf16.msra.mxu0 0
    %1932 = vmatprep.subr.bf16.mxu0 0
    %1933 = vmatpush1.bf16.msra.mxu0 0
    %1934 = vmatprep.subr.bf16.mxu0 0
    %1935 = vmatpush1.bf16.msra.mxu0 0
    %1936 = vmatprep.subr.bf16.mxu0 %v1802
    %1937 = vmatpush1.bf16.msra.mxu0 %v1801
    %1938 = vmatprep.subr.bf16.mxu0 %v1800
    %1939 = vmatpush1.bf16.msra.mxu0 %v1799
    %1940 = vmatprep.subr.bf16.mxu0 0
    %1941 = vmatpush2.bf16.msra.mxu0 0
    %1942 = vmatprep.subr.bf16.mxu0 0
    %1943 = vmatpush2.bf16.msra.mxu0 0
    %1944 = vmatprep.subr.bf16.mxu0 0
    %1945 = vmatpush2.bf16.msra.mxu0 0
    %1946 = vmatprep.subr.bf16.mxu0 0
    %1947 = vmatpush2.bf16.msra.mxu0 0
    %1948 = vmatprep.subr.bf16.mxu0 0
    %1949 = vmatpush2.bf16.msra.mxu0 0
    %1950 = vmatprep.subr.bf16.mxu0 0
    %1951 = vmatpush2.bf16.msra.mxu0 0
    %1952 = vmatprep.subr.bf16.mxu0 0
    %1953 = vmatpush2.bf16.msra.mxu0 0
    %1954 = vmatprep.subr.bf16.mxu0 0
    %1955 = vmatpush2.bf16.msra.mxu0 0
    %1956 = vmatprep.mubr.bf16.mxu0 0
    %1957 = vmatmul.mubr.bf16.gmra.mxu0 %v1919
    %v1958 = vpop.f32.mrf.mxu0
    %v1959 = vadd.f32 0.0, %v1958
    %v1960 = vpop.f32.mrf.mxu0
    %v1961 = vadd.f32 0.0, %v1960
    %v1962 = vpop.f32.mrf.mxu0
    %v1963 = vadd.f32 0.0, %v1962
    %v1964 = vpop.f32.mrf.mxu0
    %v1965 = vadd.f32 0.0, %v1964
    %1966 = vmatprep.mubr.bf16.mxu0 0
    %1967 = vmatmul.mubr.bf16.gmra.mxu0 %v1922
    %v1968 = vpop.f32.mrf.mxu0
    %v1969 = vadd.f32 0.0, %v1968
    %v1970 = vpop.f32.mrf.mxu0
    %v1971 = vadd.f32 0.0, %v1970
    %v1972 = vpop.f32.mrf.mxu0
    %v1973 = vadd.f32 0.0, %v1972
    %v1974 = vpop.f32.mrf.mxu0
    %v1975 = vadd.f32 0.0, %v1974
    %1976 = vdwg.mxu0
    %v1977 = vpack.c.bf16 %v1963, %v1959
    %v1978 = vpack.c.bf16 %v1965, %v1961
    %v1979 = vpack.c.bf16 %v1973, %v1969
    %v1980 = vpack.c.bf16 %v1975, %v1971
    %v1985 = vunpack.c.l.b16 %v1977
    %v1986 = vunpack.c.l.b16 %v1978
    %v1987 = vunpack.c.h.b16 %v1977
    %v1988 = vunpack.c.h.b16 %v1978
    %v1989 = vunpack.c.l.b16 %v1979
    %v1990 = vunpack.c.l.b16 %v1980
    %v1991 = vunpack.c.h.b16 %v1979
    %v1992 = vunpack.c.h.b16 %v1980
    %v1993 = vpack.c.b16 %v1986, %v1985
    %v1994 = vpack.c.b16 %v1988, %v1987
    %v1995 = vpack.c.b16 %v1990, %v1989
    %v1996 = vpack.c.b16 %v1992, %v1991
    %2001 = vst [vmem:[#allocation2 + $0x8] sm:$0xff] %v1993
    %2002 = vst [vmem:[#allocation2 + $0x20] sm:$0xff] %v1994
    %2003 = vst [vmem:[#allocation2 + $0x38] sm:$0xff] %v1995
    %2004 = vst [vmem:[#allocation2 + $0x50] sm:$0xff] %v1996
    %v2005 = vld [vmem:[#allocation5 + $0xa0] sm:$0xf]
    %v2006 = vld [vmem:[#allocation5 + $0xa8] sm:$0xf]
    %v2007 = vld [vmem:[#allocation5 + $0xb0] sm:$0xf]
    %v2008 = vld [vmem:[#allocation5 + $0xb8] sm:$0xf]
    %v2013 = vunpack.c.l.b16 %v2005
    %v2014 = vunpack.c.l.b16 %v2006
    %v2015 = vunpack.c.l.b16 %v2007
    %v2016 = vunpack.c.l.b16 %v2008
    %v2017 = vpack.c.b16 %v2014, %v2013
    %v2018 = vpack.c.b16 %v2016, %v2015
    %v2020 = vsel %vm239, %v2017, 0
    %v2023 = vsel %vm239, %v2018, 0
    %2025 = vmatprep.subr.bf16.mxu0 0
    %2026 = vmatpush1.bf16.msra.mxu0 0
    %2027 = vmatprep.subr.bf16.mxu0 0
    %2028 = vmatpush1.bf16.msra.mxu0 0
    %2029 = vmatprep.subr.bf16.mxu0 0
    %2030 = vmatpush1.bf16.msra.mxu0 0
    %2031 = vmatprep.subr.bf16.mxu0 0
    %2032 = vmatpush1.bf16.msra.mxu0 0
    %2033 = vmatprep.subr.bf16.mxu0 0
    %2034 = vmatpush1.bf16.msra.mxu0 0
    %2035 = vmatprep.subr.bf16.mxu0 0
    %2036 = vmatpush1.bf16.msra.mxu0 0
    %2037 = vmatprep.subr.bf16.mxu0 %v1802
    %2038 = vmatpush1.bf16.msra.mxu0 %v1801
    %2039 = vmatprep.subr.bf16.mxu0 %v1800
    %2040 = vmatpush1.bf16.msra.mxu0 %v1799
    %2041 = vmatprep.subr.bf16.mxu0 0
    %2042 = vmatpush2.bf16.msra.mxu0 0
    %2043 = vmatprep.subr.bf16.mxu0 0
    %2044 = vmatpush2.bf16.msra.mxu0 0
    %2045 = vmatprep.subr.bf16.mxu0 0
    %2046 = vmatpush2.bf16.msra.mxu0 0
    %2047 = vmatprep.subr.bf16.mxu0 0
    %2048 = vmatpush2.bf16.msra.mxu0 0
    %2049 = vmatprep.subr.bf16.mxu0 0
    %2050 = vmatpush2.bf16.msra.mxu0 0
    %2051 = vmatprep.subr.bf16.mxu0 0
    %2052 = vmatpush2.bf16.msra.mxu0 0
    %2053 = vmatprep.subr.bf16.mxu0 0
    %2054 = vmatpush2.bf16.msra.mxu0 0
    %2055 = vmatprep.subr.bf16.mxu0 0
    %2056 = vmatpush2.bf16.msra.mxu0 0
    %2057 = vmatprep.mubr.bf16.mxu0 0
    %2058 = vmatmul.mubr.bf16.gmra.mxu0 %v2020
    %v2059 = vpop.f32.mrf.mxu0
    %v2060 = vadd.f32 0.0, %v2059
    %v2061 = vpop.f32.mrf.mxu0
    %v2062 = vadd.f32 0.0, %v2061
    %v2063 = vpop.f32.mrf.mxu0
    %v2064 = vadd.f32 0.0, %v2063
    %v2065 = vpop.f32.mrf.mxu0
    %v2066 = vadd.f32 0.0, %v2065
    %2067 = vmatprep.mubr.bf16.mxu0 0
    %2068 = vmatmul.mubr.bf16.gmra.mxu0 %v2023
    %v2069 = vpop.f32.mrf.mxu0
    %v2070 = vadd.f32 0.0, %v2069
    %v2071 = vpop.f32.mrf.mxu0
    %v2072 = vadd.f32 0.0, %v2071
    %v2073 = vpop.f32.mrf.mxu0
    %v2074 = vadd.f32 0.0, %v2073
    %v2075 = vpop.f32.mrf.mxu0
    %v2076 = vadd.f32 0.0, %v2075
    %2077 = vdwg.mxu0
    %v2078 = vpack.c.bf16 %v2064, %v2060
    %v2079 = vpack.c.bf16 %v2066, %v2062
    %v2080 = vpack.c.bf16 %v2074, %v2070
    %v2081 = vpack.c.bf16 %v2076, %v2072
    %v2086 = vunpack.c.l.b16 %v2078
    %v2087 = vunpack.c.l.b16 %v2079
    %v2088 = vunpack.c.h.b16 %v2078
    %v2089 = vunpack.c.h.b16 %v2079
    %v2090 = vunpack.c.l.b16 %v2080
    %v2091 = vunpack.c.l.b16 %v2081
    %v2092 = vunpack.c.h.b16 %v2080
    %v2093 = vunpack.c.h.b16 %v2081
    %v2094 = vpack.c.b16 %v2087, %v2086
    %v2095 = vpack.c.b16 %v2089, %v2088
    %v2096 = vpack.c.b16 %v2091, %v2090
    %v2097 = vpack.c.b16 %v2093, %v2092
    %2102 = vst [vmem:[#allocation2 + $0x10] sm:$0xff] %v2094
    %2103 = vst [vmem:[#allocation2 + $0x28] sm:$0xff] %v2095
    %2104 = vst [vmem:[#allocation2 + $0x40] sm:$0xff] %v2096
    %2105 = vst [vmem:[#allocation2 + $0x58] sm:$0xff] %v2097
    %v2106 = vld [vmem:[#allocation2] sm:$0xff]
    %v2107 = vld [vmem:[#allocation2 + $0x8] sm:$0xff]
    %v2108 = vld [vmem:[#allocation2 + $0x10] sm:$0xff]
    %v2109 = vld [vmem:[#allocation2 + $0x18] sm:$0xff]
    %v2110 = vld [vmem:[#allocation2 + $0x20] sm:$0xff]
    %v2111 = vld [vmem:[#allocation2 + $0x28] sm:$0xff]
    %v2112 = vld [vmem:[#allocation2 + $0x30] sm:$0xff]
    %v2113 = vld [vmem:[#allocation2 + $0x38] sm:$0xff]
    %v2114 = vld [vmem:[#allocation2 + $0x40] sm:$0xff]
    %v2115 = vld [vmem:[#allocation2 + $0x48] sm:$0xff]
    %v2116 = vld [vmem:[#allocation2 + $0x50] sm:$0xff]
    %v2117 = vld [vmem:[#allocation2 + $0x58] sm:$0xff]
    %v2118 = vld [vmem:[#allocation5 + $0x4b0] sm:$0xff]
    %v2119 = vld [vmem:[#allocation5 + $0x4b8] sm:$0xff]
    %v2120 = vld [vmem:[#allocation5 + $0x4c0] sm:$0xff]
    %v2121 = vld [vmem:[#allocation5 + $0x4c8] sm:$0xff]
    %v2122 = vld [vmem:[#allocation5 + $0x4d0] sm:$0xff]
    %v2123 = vld [vmem:[#allocation5 + $0x4d8] sm:$0xff]
    %v2124 = vld [vmem:[#allocation5 + $0x4e0] sm:$0xff]
    %v2125 = vld [vmem:[#allocation5 + $0x4e8] sm:$0xff]
    %v2126 = vld [vmem:[#allocation5 + $0x4f0] sm:$0xff]
    %v2127 = vld [vmem:[#allocation5 + $0x4f8] sm:$0xff]
    %v2128 = vld [vmem:[#allocation5 + $0x500] sm:$0xff]
    %v2129 = vld [vmem:[#allocation5 + $0x508] sm:$0xff]
    %v2130 = vld [vmem:[#allocation5 + $0x510] sm:$0xff]
    %v2131 = vld [vmem:[#allocation5 + $0x518] sm:$0xff]
    %v2132 = vld [vmem:[#allocation5 + $0x520] sm:$0xff]
    %v2133 = vld [vmem:[#allocation5 + $0x528] sm:$0xff]
    %v2134 = vld [vmem:[#allocation5 + $0x530] sm:$0xff]
    %v2135 = vld [vmem:[#allocation5 + $0x538] sm:$0xff]
    %v2136 = vld [vmem:[#allocation5 + $0x540] sm:$0xff]
    %v2137 = vld [vmem:[#allocation5 + $0x548] sm:$0xff]
    %v2138 = vld [vmem:[#allocation5 + $0x550] sm:$0xff]
    %v2139 = vld [vmem:[#allocation5 + $0x558] sm:$0xff]
    %v2140 = vld [vmem:[#allocation5 + $0x560] sm:$0xff]
    %v2141 = vld [vmem:[#allocation5 + $0x568] sm:$0xff]
    %v2142 = vld [vmem:[#allocation5 + $0x570] sm:$0xff]
    %v2143 = vld [vmem:[#allocation5 + $0x578] sm:$0xff]
    %v2144 = vld [vmem:[#allocation5 + $0x580] sm:$0xff]
    %v2145 = vld [vmem:[#allocation5 + $0x588] sm:$0xff]
    %v2146 = vld [vmem:[#allocation5 + $0x590] sm:$0xff]
    %v2147 = vld [vmem:[#allocation5 + $0x598] sm:$0xff]
    %v2148 = vld [vmem:[#allocation5 + $0x5a0] sm:$0xff]
    %v2149 = vld [vmem:[#allocation5 + $0x5a8] sm:$0xff]
    %v2150 = vld [vmem:[#allocation5 + $0x5b0] sm:$0xff]
    %v2151 = vld [vmem:[#allocation5 + $0x5b8] sm:$0xff]
    %v2152 = vld [vmem:[#allocation5 + $0x5c0] sm:$0xff]
    %v2153 = vld [vmem:[#allocation5 + $0x5c8] sm:$0xff]
    %v2154 = vld [vmem:[#allocation5 + $0x5d0] sm:$0xff]
    %v2155 = vld [vmem:[#allocation5 + $0x5d8] sm:$0xff]
    %v2156 = vld [vmem:[#allocation5 + $0x5e0] sm:$0xff]
    %v2157 = vld [vmem:[#allocation5 + $0x5e8] sm:$0xff]
    %v2158 = vld [vmem:[#allocation5 + $0x5f0] sm:$0xff]
    %v2159 = vld [vmem:[#allocation5 + $0x5f8] sm:$0xff]
    %v2160 = vld [vmem:[#allocation5 + $0x600] sm:$0xff]
    %v2161 = vld [vmem:[#allocation5 + $0x608] sm:$0xff]
    %v2162 = vld [vmem:[#allocation5 + $0x610] sm:$0xff]
    %v2163 = vld [vmem:[#allocation5 + $0x618] sm:$0xff]
    %v2164 = vld [vmem:[#allocation5 + $0x620] sm:$0xff]
    %v2165 = vld [vmem:[#allocation5 + $0x628] sm:$0xff]
    %v2166 = vld [vmem:[#allocation5 + $0x630] sm:$0xff]
    %v2167 = vld [vmem:[#allocation5 + $0x638] sm:$0xff]
    %v2168 = vld [vmem:[#allocation5 + $0x640] sm:$0xff]
    %v2169 = vld [vmem:[#allocation5 + $0x648] sm:$0xff]
    %v2170 = vld [vmem:[#allocation5 + $0x650] sm:$0xff]
    %v2171 = vld [vmem:[#allocation5 + $0x658] sm:$0xff]
    %v2172 = vld [vmem:[#allocation5 + $0x660] sm:$0xff]
    %v2173 = vld [vmem:[#allocation5 + $0x668] sm:$0xff]
    %v2174 = vld [vmem:[#allocation5 + $0x670] sm:$0xff]
    %v2175 = vld [vmem:[#allocation5 + $0x678] sm:$0xff]
    %v2176 = vld [vmem:[#allocation5 + $0x680] sm:$0xff]
    %v2177 = vld [vmem:[#allocation5 + $0x688] sm:$0xff]
    %v2178 = vld [vmem:[#allocation5 + $0x690] sm:$0xff]
    %v2179 = vld [vmem:[#allocation5 + $0x698] sm:$0xff]
    %v2180 = vld [vmem:[#allocation5 + $0x6a0] sm:$0xff]
    %v2181 = vld [vmem:[#allocation5 + $0x6a8] sm:$0xff]
    %v2182 = vld [vmem:[#allocation5 + $0x6b0] sm:$0xff]
    %v2183 = vld [vmem:[#allocation5 + $0x6b8] sm:$0xff]
    %v2184 = vld [vmem:[#allocation5 + $0x6c0] sm:$0xff]
    %v2185 = vld [vmem:[#allocation5 + $0x6c8] sm:$0xff]
    %v2186 = vld [vmem:[#allocation5 + $0x6d0] sm:$0xff]
    %v2187 = vld [vmem:[#allocation5 + $0x6d8] sm:$0xff]
    %v2188 = vld [vmem:[#allocation5 + $0x6e0] sm:$0xff]
    %v2189 = vld [vmem:[#allocation5 + $0x6e8] sm:$0xff]
    %v2190 = vld [vmem:[#allocation5 + $0x6f0] sm:$0xff]
    %v2191 = vld [vmem:[#allocation5 + $0x6f8] sm:$0xff]
    %v2192 = vld [vmem:[#allocation5 + $0x700] sm:$0xff]
    %v2193 = vld [vmem:[#allocation5 + $0x708] sm:$0xff]
    %v2194 = vld [vmem:[#allocation5 + $0x710] sm:$0xff]
    %v2195 = vld [vmem:[#allocation5 + $0x718] sm:$0xff]
    %v2196 = vld [vmem:[#allocation5 + $0x720] sm:$0xff]
    %v2197 = vld [vmem:[#allocation5 + $0x728] sm:$0xff]
    %v2198 = vld [vmem:[#allocation5 + $0x730] sm:$0xff]
    %v2199 = vld [vmem:[#allocation5 + $0x738] sm:$0xff]
    %v2200 = vld [vmem:[#allocation5 + $0x740] sm:$0xff]
    %v2201 = vld [vmem:[#allocation5 + $0x748] sm:$0xff]
    %v2202 = vld [vmem:[#allocation5 + $0x750] sm:$0xff]
    %v2203 = vld [vmem:[#allocation5 + $0x758] sm:$0xff]
    %v2204 = vld [vmem:[#allocation5 + $0x760] sm:$0xff]
    %v2205 = vld [vmem:[#allocation5 + $0x768] sm:$0xff]
    %v2206 = vld [vmem:[#allocation5 + $0x770] sm:$0xff]
    %v2207 = vld [vmem:[#allocation5 + $0x778] sm:$0xff]
    %v2208 = vld [vmem:[#allocation5 + $0x780] sm:$0xff]
    %v2209 = vld [vmem:[#allocation5 + $0x788] sm:$0xff]
    %v2210 = vld [vmem:[#allocation5 + $0x790] sm:$0xff]
    %v2211 = vld [vmem:[#allocation5 + $0x798] sm:$0xff]
    %v2212 = vld [vmem:[#allocation5 + $0x7a0] sm:$0xff]
    %v2213 = vld [vmem:[#allocation5 + $0x7a8] sm:$0xff]
    %s2214 = scalar_lea.vmem [#allocation7], 32
    %v2215 = vld [vmem:[%s2214] ss:$8 sm:$0x3]
    %v2217 = vlaneseq
    %v2218 = vshrl.u32 %v2217, 7
    %v2219 = vsub.s32 0, %v2218
    %v2220 = vrot.slane %v2215, %v2219
    %v2221 = vlaneseq
    %v2222 = vshrl.u32 %v2221, 7
    %v2223 = vsub.s32 1, %v2222
    %v2224 = vrot.slane %v2215, %v2223
    %v2239 = vunpack.c.l.b16 %v2106
    %v2240 = vunpack.c.h.b16 %v2106
    %v2241 = vunpack.c.l.b16 %v2107
    %v2242 = vunpack.c.h.b16 %v2107
    %v2243 = vunpack.c.l.b16 %v2108
    %v2244 = vunpack.c.h.b16 %v2108
    %v2245 = vunpack.c.l.b16 %v2109
    %v2246 = vunpack.c.h.b16 %v2109
    %v2247 = vunpack.c.l.b16 %v2110
    %v2248 = vunpack.c.h.b16 %v2110
    %v2249 = vunpack.c.l.b16 %v2111
    %v2250 = vunpack.c.h.b16 %v2111
    %v2251 = vunpack.c.l.b16 %v2112
    %v2252 = vunpack.c.h.b16 %v2112
    %v2253 = vunpack.c.l.b16 %v2113
    %v2254 = vunpack.c.h.b16 %v2113
    %v2255 = vunpack.c.l.b16 %v2114
    %v2256 = vunpack.c.h.b16 %v2114
    %v2257 = vunpack.c.l.b16 %v2115
    %v2258 = vunpack.c.h.b16 %v2115
    %v2259 = vunpack.c.l.b16 %v2116
    %v2260 = vunpack.c.h.b16 %v2116
    %v2261 = vunpack.c.l.b16 %v2117
    %v2262 = vunpack.c.h.b16 %v2117
    %v2263 = vpack.c.b16 %v2245, %v2239
    %v2264 = vpack.c.b16 %v2246, %v2240
    %v2265 = vpack.c.b16 %v2247, %v2241
    %v2266 = vpack.c.b16 %v2248, %v2242
    %v2267 = vpack.c.b16 %v2249, %v2243
    %v2268 = vpack.c.b16 %v2250, %v2244
    %v2269 = vpack.c.b16 %v2257, %v2251
    %v2270 = vpack.c.b16 %v2258, %v2252
    %v2271 = vpack.c.b16 %v2259, %v2253
    %v2272 = vpack.c.b16 %v2260, %v2254
    %v2273 = vpack.c.b16 %v2261, %v2255
    %v2274 = vpack.c.b16 %v2262, %v2256
    %v2383 = vunpack.c.l.b16 %v2118
    %v2384 = vunpack.c.h.b16 %v2118
    %v2385 = vunpack.c.l.b16 %v2119
    %v2386 = vunpack.c.h.b16 %v2119
    %v2387 = vunpack.c.l.b16 %v2120
    %v2388 = vunpack.c.h.b16 %v2120
    %v2389 = vunpack.c.l.b16 %v2121
    %v2390 = vunpack.c.h.b16 %v2121
    %v2391 = vunpack.c.l.b16 %v2122
    %v2392 = vunpack.c.h.b16 %v2122
    %v2393 = vunpack.c.l.b16 %v2123
    %v2394 = vunpack.c.h.b16 %v2123
    %v2395 = vunpack.c.l.b16 %v2124
    %v2396 = vunpack.c.h.b16 %v2124
    %v2397 = vunpack.c.l.b16 %v2125
    %v2398 = vunpack.c.h.b16 %v2125
    %v2399 = vunpack.c.l.b16 %v2126
    %v2400 = vunpack.c.h.b16 %v2126
    %v2401 = vunpack.c.l.b16 %v2127
    %v2402 = vunpack.c.h.b16 %v2127
    %v2403 = vunpack.c.l.b16 %v2128
    %v2404 = vunpack.c.h.b16 %v2128
    %v2405 = vunpack.c.l.b16 %v2129
    %v2406 = vunpack.c.h.b16 %v2129
    %v2407 = vunpack.c.l.b16 %v2130
    %v2408 = vunpack.c.h.b16 %v2130
    %v2409 = vunpack.c.l.b16 %v2131
    %v2410 = vunpack.c.h.b16 %v2131
    %v2411 = vunpack.c.l.b16 %v2132
    %v2412 = vunpack.c.h.b16 %v2132
    %v2413 = vunpack.c.l.b16 %v2133
    %v2414 = vunpack.c.h.b16 %v2133
    %v2415 = vunpack.c.l.b16 %v2134
    %v2416 = vunpack.c.h.b16 %v2134
    %v2417 = vunpack.c.l.b16 %v2135
    %v2418 = vunpack.c.h.b16 %v2135
    %v2419 = vunpack.c.l.b16 %v2136
    %v2420 = vunpack.c.h.b16 %v2136
    %v2421 = vunpack.c.l.b16 %v2137
    %v2422 = vunpack.c.h.b16 %v2137
    %v2423 = vunpack.c.l.b16 %v2138
    %v2424 = vunpack.c.h.b16 %v2138
    %v2425 = vunpack.c.l.b16 %v2139
    %v2426 = vunpack.c.h.b16 %v2139
    %v2427 = vunpack.c.l.b16 %v2140
    %v2428 = vunpack.c.h.b16 %v2140
    %v2429 = vunpack.c.l.b16 %v2141
    %v2430 = vunpack.c.h.b16 %v2141
    %v2431 = vunpack.c.l.b16 %v2142
    %v2432 = vunpack.c.h.b16 %v2142
    %v2433 = vunpack.c.l.b16 %v2143
    %v2434 = vunpack.c.h.b16 %v2143
    %v2435 = vunpack.c.l.b16 %v2144
    %v2436 = vunpack.c.h.b16 %v2144
    %v2437 = vunpack.c.l.b16 %v2145
    %v2438 = vunpack.c.h.b16 %v2145
    %v2439 = vunpack.c.l.b16 %v2146
    %v2440 = vunpack.c.h.b16 %v2146
    %v2441 = vunpack.c.l.b16 %v2147
    %v2442 = vunpack.c.h.b16 %v2147
    %v2443 = vunpack.c.l.b16 %v2148
    %v2444 = vunpack.c.h.b16 %v2148
    %v2445 = vunpack.c.l.b16 %v2149
    %v2446 = vunpack.c.h.b16 %v2149
    %v2447 = vunpack.c.l.b16 %v2150
    %v2448 = vunpack.c.h.b16 %v2150
    %v2449 = vunpack.c.l.b16 %v2151
    %v2450 = vunpack.c.h.b16 %v2151
    %v2451 = vunpack.c.l.b16 %v2152
    %v2452 = vunpack.c.h.b16 %v2152
    %v2453 = vunpack.c.l.b16 %v2153
    %v2454 = vunpack.c.h.b16 %v2153
    %v2455 = vunpack.c.l.b16 %v2154
    %v2456 = vunpack.c.h.b16 %v2154
    %v2457 = vunpack.c.l.b16 %v2155
    %v2458 = vunpack.c.h.b16 %v2155
    %v2459 = vunpack.c.l.b16 %v2156
    %v2460 = vunpack.c.h.b16 %v2156
    %v2461 = vunpack.c.l.b16 %v2157
    %v2462 = vunpack.c.h.b16 %v2157
    %v2463 = vunpack.c.l.b16 %v2158
    %v2464 = vunpack.c.h.b16 %v2158
    %v2465 = vunpack.c.l.b16 %v2159
    %v2466 = vunpack.c.h.b16 %v2159
    %v2467 = vunpack.c.l.b16 %v2160
    %v2468 = vunpack.c.h.b16 %v2160
    %v2469 = vunpack.c.l.b16 %v2161
    %v2470 = vunpack.c.h.b16 %v2161
    %v2471 = vunpack.c.l.b16 %v2162
    %v2472 = vunpack.c.h.b16 %v2162
    %v2473 = vunpack.c.l.b16 %v2163
    %v2474 = vunpack.c.h.b16 %v2163
    %v2475 = vunpack.c.l.b16 %v2164
    %v2476 = vunpack.c.h.b16 %v2164
    %v2477 = vunpack.c.l.b16 %v2165
    %v2478 = vunpack.c.h.b16 %v2165
    %v2479 = vunpack.c.l.b16 %v2166
    %v2480 = vunpack.c.h.b16 %v2166
    %v2481 = vunpack.c.l.b16 %v2167
    %v2482 = vunpack.c.h.b16 %v2167
    %v2483 = vunpack.c.l.b16 %v2168
    %v2484 = vunpack.c.h.b16 %v2168
    %v2485 = vunpack.c.l.b16 %v2169
    %v2486 = vunpack.c.h.b16 %v2169
    %v2487 = vunpack.c.l.b16 %v2170
    %v2488 = vunpack.c.h.b16 %v2170
    %v2489 = vunpack.c.l.b16 %v2171
    %v2490 = vunpack.c.h.b16 %v2171
    %v2491 = vunpack.c.l.b16 %v2172
    %v2492 = vunpack.c.h.b16 %v2172
    %v2493 = vunpack.c.l.b16 %v2173
    %v2494 = vunpack.c.h.b16 %v2173
    %v2495 = vunpack.c.l.b16 %v2174
    %v2496 = vunpack.c.h.b16 %v2174
    %v2497 = vunpack.c.l.b16 %v2175
    %v2498 = vunpack.c.h.b16 %v2175
    %v2499 = vunpack.c.l.b16 %v2176
    %v2500 = vunpack.c.h.b16 %v2176
    %v2501 = vunpack.c.l.b16 %v2177
    %v2502 = vunpack.c.h.b16 %v2177
    %v2503 = vunpack.c.l.b16 %v2178
    %v2504 = vunpack.c.h.b16 %v2178
    %v2505 = vunpack.c.l.b16 %v2179
    %v2506 = vunpack.c.h.b16 %v2179
    %v2507 = vunpack.c.l.b16 %v2180
    %v2508 = vunpack.c.h.b16 %v2180
    %v2509 = vunpack.c.l.b16 %v2181
    %v2510 = vunpack.c.h.b16 %v2181
    %v2511 = vunpack.c.l.b16 %v2182
    %v2512 = vunpack.c.h.b16 %v2182
    %v2513 = vunpack.c.l.b16 %v2183
    %v2514 = vunpack.c.h.b16 %v2183
    %v2515 = vunpack.c.l.b16 %v2184
    %v2516 = vunpack.c.h.b16 %v2184
    %v2517 = vunpack.c.l.b16 %v2185
    %v2518 = vunpack.c.h.b16 %v2185
    %v2519 = vunpack.c.l.b16 %v2186
    %v2520 = vunpack.c.h.b16 %v2186
    %v2521 = vunpack.c.l.b16 %v2187
    %v2522 = vunpack.c.h.b16 %v2187
    %v2523 = vunpack.c.l.b16 %v2188
    %v2524 = vunpack.c.h.b16 %v2188
    %v2525 = vunpack.c.l.b16 %v2189
    %v2526 = vunpack.c.h.b16 %v2189
    %v2527 = vunpack.c.l.b16 %v2190
    %v2528 = vunpack.c.h.b16 %v2190
    %v2529 = vunpack.c.l.b16 %v2191
    %v2530 = vunpack.c.h.b16 %v2191
    %v2531 = vunpack.c.l.b16 %v2192
    %v2532 = vunpack.c.h.b16 %v2192
    %v2533 = vunpack.c.l.b16 %v2193
    %v2534 = vunpack.c.h.b16 %v2193
    %v2535 = vunpack.c.l.b16 %v2194
    %v2536 = vunpack.c.h.b16 %v2194
    %v2537 = vunpack.c.l.b16 %v2195
    %v2538 = vunpack.c.h.b16 %v2195
    %v2539 = vunpack.c.l.b16 %v2196
    %v2540 = vunpack.c.h.b16 %v2196
    %v2541 = vunpack.c.l.b16 %v2197
    %v2542 = vunpack.c.h.b16 %v2197
    %v2543 = vunpack.c.l.b16 %v2198
    %v2544 = vunpack.c.h.b16 %v2198
    %v2545 = vunpack.c.l.b16 %v2199
    %v2546 = vunpack.c.h.b16 %v2199
    %v2547 = vunpack.c.l.b16 %v2200
    %v2548 = vunpack.c.h.b16 %v2200
    %v2549 = vunpack.c.l.b16 %v2201
    %v2550 = vunpack.c.h.b16 %v2201
    %v2551 = vunpack.c.l.b16 %v2202
    %v2552 = vunpack.c.h.b16 %v2202
    %v2553 = vunpack.c.l.b16 %v2203
    %v2554 = vunpack.c.h.b16 %v2203
    %v2555 = vunpack.c.l.b16 %v2204
    %v2556 = vunpack.c.h.b16 %v2204
    %v2557 = vunpack.c.l.b16 %v2205
    %v2558 = vunpack.c.h.b16 %v2205
    %v2559 = vunpack.c.l.b16 %v2206
    %v2560 = vunpack.c.h.b16 %v2206
    %v2561 = vunpack.c.l.b16 %v2207
    %v2562 = vunpack.c.h.b16 %v2207
    %v2563 = vunpack.c.l.b16 %v2208
    %v2564 = vunpack.c.h.b16 %v2208
    %v2565 = vunpack.c.l.b16 %v2209
    %v2566 = vunpack.c.h.b16 %v2209
    %v2567 = vunpack.c.l.b16 %v2210
    %v2568 = vunpack.c.h.b16 %v2210
    %v2569 = vunpack.c.l.b16 %v2211
    %v2570 = vunpack.c.h.b16 %v2211
    %v2571 = vunpack.c.l.b16 %v2212
    %v2572 = vunpack.c.h.b16 %v2212
    %v2573 = vunpack.c.l.b16 %v2213
    %v2574 = vunpack.c.h.b16 %v2213
    %v2575 = vpack.c.b16 %v2385, %v2383
    %v2576 = vpack.c.b16 %v2386, %v2384
    %v2577 = vpack.c.b16 %v2389, %v2387
    %v2578 = vpack.c.b16 %v2390, %v2388
    %v2579 = vpack.c.b16 %v2393, %v2391
    %v2580 = vpack.c.b16 %v2394, %v2392
    %v2581 = vpack.c.b16 %v2397, %v2395
    %v2582 = vpack.c.b16 %v2398, %v2396
    %v2583 = vpack.c.b16 %v2401, %v2399
    %v2584 = vpack.c.b16 %v2402, %v2400
    %v2585 = vpack.c.b16 %v2405, %v2403
    %v2586 = vpack.c.b16 %v2406, %v2404
    %v2587 = vpack.c.b16 %v2409, %v2407
    %v2588 = vpack.c.b16 %v2410, %v2408
    %v2589 = vpack.c.b16 %v2413, %v2411
    %v2590 = vpack.c.b16 %v2414, %v2412
    %v2591 = vpack.c.b16 %v2417, %v2415
    %v2592 = vpack.c.b16 %v2418, %v2416
    %v2593 = vpack.c.b16 %v2421, %v2419
    %v2594 = vpack.c.b16 %v2422, %v2420
    %v2595 = vpack.c.b16 %v2425, %v2423
    %v2596 = vpack.c.b16 %v2426, %v2424
    %v2597 = vpack.c.b16 %v2429, %v2427
    %v2598 = vpack.c.b16 %v2430, %v2428
    %v2599 = vpack.c.b16 %v2433, %v2431
    %v2600 = vpack.c.b16 %v2434, %v2432
    %v2601 = vpack.c.b16 %v2437, %v2435
    %v2602 = vpack.c.b16 %v2438, %v2436
    %v2603 = vpack.c.b16 %v2441, %v2439
    %v2604 = vpack.c.b16 %v2442, %v2440
    %v2605 = vpack.c.b16 %v2445, %v2443
    %v2606 = vpack.c.b16 %v2446, %v2444
    %v2607 = vpack.c.b16 %v2449, %v2447
    %v2608 = vpack.c.b16 %v2450, %v2448
    %v2609 = vpack.c.b16 %v2453, %v2451
    %v2610 = vpack.c.b16 %v2454, %v2452
    %v2611 = vpack.c.b16 %v2457, %v2455
    %v2612 = vpack.c.b16 %v2458, %v2456
    %v2613 = vpack.c.b16 %v2461, %v2459
    %v2614 = vpack.c.b16 %v2462, %v2460
    %v2615 = vpack.c.b16 %v2465, %v2463
    %v2616 = vpack.c.b16 %v2466, %v2464
    %v2617 = vpack.c.b16 %v2469, %v2467
    %v2618 = vpack.c.b16 %v2470, %v2468
    %v2619 = vpack.c.b16 %v2473, %v2471
    %v2620 = vpack.c.b16 %v2474, %v2472
    %v2621 = vpack.c.b16 %v2477, %v2475
    %v2622 = vpack.c.b16 %v2478, %v2476
    %v2623 = vpack.c.b16 %v2481, %v2479
    %v2624 = vpack.c.b16 %v2482, %v2480
    %v2625 = vpack.c.b16 %v2485, %v2483
    %v2626 = vpack.c.b16 %v2486, %v2484
    %v2627 = vpack.c.b16 %v2489, %v2487
    %v2628 = vpack.c.b16 %v2490, %v2488
    %v2629 = vpack.c.b16 %v2493, %v2491
    %v2630 = vpack.c.b16 %v2494, %v2492
    %v2631 = vpack.c.b16 %v2497, %v2495
    %v2632 = vpack.c.b16 %v2498, %v2496
    %v2633 = vpack.c.b16 %v2501, %v2499
    %v2634 = vpack.c.b16 %v2502, %v2500
    %v2635 = vpack.c.b16 %v2505, %v2503
    %v2636 = vpack.c.b16 %v2506, %v2504
    %v2637 = vpack.c.b16 %v2509, %v2507
    %v2638 = vpack.c.b16 %v2510, %v2508
    %v2639 = vpack.c.b16 %v2513, %v2511
    %v2640 = vpack.c.b16 %v2514, %v2512
    %v2641 = vpack.c.b16 %v2517, %v2515
    %v2642 = vpack.c.b16 %v2518, %v2516
    %v2643 = vpack.c.b16 %v2521, %v2519
    %v2644 = vpack.c.b16 %v2522, %v2520
    %v2645 = vpack.c.b16 %v2525, %v2523
    %v2646 = vpack.c.b16 %v2526, %v2524
    %v2647 = vpack.c.b16 %v2529, %v2527
    %v2648 = vpack.c.b16 %v2530, %v2528
    %v2649 = vpack.c.b16 %v2533, %v2531
    %v2650 = vpack.c.b16 %v2534, %v2532
    %v2651 = vpack.c.b16 %v2537, %v2535
    %v2652 = vpack.c.b16 %v2538, %v2536
    %v2653 = vpack.c.b16 %v2541, %v2539
    %v2654 = vpack.c.b16 %v2542, %v2540
    %v2655 = vpack.c.b16 %v2545, %v2543
    %v2656 = vpack.c.b16 %v2546, %v2544
    %v2657 = vpack.c.b16 %v2549, %v2547
    %v2658 = vpack.c.b16 %v2550, %v2548
    %v2659 = vpack.c.b16 %v2553, %v2551
    %v2660 = vpack.c.b16 %v2554, %v2552
    %v2661 = vpack.c.b16 %v2557, %v2555
    %v2662 = vpack.c.b16 %v2558, %v2556
    %v2663 = vpack.c.b16 %v2561, %v2559
    %v2664 = vpack.c.b16 %v2562, %v2560
    %v2665 = vpack.c.b16 %v2565, %v2563
    %v2666 = vpack.c.b16 %v2566, %v2564
    %v2667 = vpack.c.b16 %v2569, %v2567
    %v2668 = vpack.c.b16 %v2570, %v2568
    %v2669 = vpack.c.b16 %v2573, %v2571
    %v2670 = vpack.c.b16 %v2574, %v2572
    %2767 = vmatprep.subr.bf16.mxu0 %v2590
    %2768 = vmatpush1.bf16.msra.mxu0 %v2589
    %2769 = vmatprep.subr.bf16.mxu0 %v2588
    %2770 = vmatpush1.bf16.msra.mxu0 %v2587
    %2771 = vmatprep.subr.bf16.mxu0 %v2586
    %2772 = vmatpush1.bf16.msra.mxu0 %v2585
    %2773 = vmatprep.subr.bf16.mxu0 %v2584
    %2774 = vmatpush1.bf16.msra.mxu0 %v2583
    %2775 = vmatprep.subr.bf16.mxu0 %v2582
    %2776 = vmatpush1.bf16.msra.mxu0 %v2581
    %2777 = vmatprep.subr.bf16.mxu0 %v2580
    %2778 = vmatpush1.bf16.msra.mxu0 %v2579
    %2779 = vmatprep.subr.bf16.mxu0 %v2578
    %2780 = vmatpush1.bf16.msra.mxu0 %v2577
    %2781 = vmatprep.subr.bf16.mxu0 %v2576
    %2782 = vmatpush1.bf16.msra.mxu0 %v2575
    %2783 = vmatprep.subr.bf16.mxu0 %v2606
    %2784 = vmatpush2.bf16.msra.mxu0 %v2605
    %2785 = vmatprep.subr.bf16.mxu0 %v2604
    %2786 = vmatpush2.bf16.msra.mxu0 %v2603
    %2787 = vmatprep.subr.bf16.mxu0 %v2602
    %2788 = vmatpush2.bf16.msra.mxu0 %v2601
    %2789 = vmatprep.subr.bf16.mxu0 %v2600
    %2790 = vmatpush2.bf16.msra.mxu0 %v2599
    %2791 = vmatprep.subr.bf16.mxu0 %v2598
    %2792 = vmatpush2.bf16.msra.mxu0 %v2597
    %2793 = vmatprep.subr.bf16.mxu0 %v2596
    %2794 = vmatpush2.bf16.msra.mxu0 %v2595
    %2795 = vmatprep.subr.bf16.mxu0 %v2594
    %2796 = vmatpush2.bf16.msra.mxu0 %v2593
    %2797 = vmatprep.subr.bf16.mxu0 %v2592
    %2798 = vmatpush2.bf16.msra.mxu0 %v2591
    %2799 = vmatprep.mubr.bf16.mxu0 %v2264
    %2800 = vmatmul.mubr.bf16.gmra.mxu0 %v2263
    %v2801 = vpop.f32.mrf.mxu0
    %v2802 = vadd.f32 %v2220, %v2801
    %v2803 = vpop.f32.mrf.mxu0
    %v2804 = vadd.f32 %v2224, %v2803
    %v2805 = vpop.f32.mrf.mxu0
    %v2806 = vadd.f32 %v2220, %v2805
    %v2807 = vpop.f32.mrf.mxu0
    %v2808 = vadd.f32 %v2224, %v2807
    %2809 = vmatprep.mubr.bf16.mxu0 %v2270
    %2810 = vmatmul.mubr.bf16.gmra.mxu0 %v2269
    %v2811 = vpop.f32.mrf.mxu0
    %v2812 = vadd.f32 %v2220, %v2811
    %v2813 = vpop.f32.mrf.mxu0
    %v2814 = vadd.f32 %v2224, %v2813
    %v2815 = vpop.f32.mrf.mxu0
    %v2816 = vadd.f32 %v2220, %v2815
    %v2817 = vpop.f32.mrf.mxu0
    %v2818 = vadd.f32 %v2224, %v2817
    %2819 = vdwg.mxu0
    %2820 = vmatprep.subr.bf16.mxu0 %v2622
    %2821 = vmatpush1.bf16.msra.mxu0 %v2621
    %2822 = vmatprep.subr.bf16.mxu0 %v2620
    %2823 = vmatpush1.bf16.msra.mxu0 %v2619
    %2824 = vmatprep.subr.bf16.mxu0 %v2618
    %2825 = vmatpush1.bf16.msra.mxu0 %v2617
    %2826 = vmatprep.subr.bf16.mxu0 %v2616
    %2827 = vmatpush1.bf16.msra.mxu0 %v2615
    %2828 = vmatprep.subr.bf16.mxu0 %v2614
    %2829 = vmatpush1.bf16.msra.mxu0 %v2613
    %2830 = vmatprep.subr.bf16.mxu0 %v2612
    %2831 = vmatpush1.bf16.msra.mxu0 %v2611
    %2832 = vmatprep.subr.bf16.mxu0 %v2610
    %2833 = vmatpush1.bf16.msra.mxu0 %v2609
    %2834 = vmatprep.subr.bf16.mxu0 %v2608
    %2835 = vmatpush1.bf16.msra.mxu0 %v2607
    %2836 = vmatprep.subr.bf16.mxu0 %v2638
    %2837 = vmatpush2.bf16.msra.mxu0 %v2637
    %2838 = vmatprep.subr.bf16.mxu0 %v2636
    %2839 = vmatpush2.bf16.msra.mxu0 %v2635
    %2840 = vmatprep.subr.bf16.mxu0 %v2634
    %2841 = vmatpush2.bf16.msra.mxu0 %v2633
    %2842 = vmatprep.subr.bf16.mxu0 %v2632
    %2843 = vmatpush2.bf16.msra.mxu0 %v2631
    %2844 = vmatprep.subr.bf16.mxu0 %v2630
    %2845 = vmatpush2.bf16.msra.mxu0 %v2629
    %2846 = vmatprep.subr.bf16.mxu0 %v2628
    %2847 = vmatpush2.bf16.msra.mxu0 %v2627
    %2848 = vmatprep.subr.bf16.mxu0 %v2626
    %2849 = vmatpush2.bf16.msra.mxu0 %v2625
    %2850 = vmatprep.subr.bf16.mxu0 %v2624
    %2851 = vmatpush2.bf16.msra.mxu0 %v2623
    %2852 = vmatprep.mubr.bf16.mxu0 %v2266
    %2853 = vmatmul.mubr.bf16.gmra.mxu0 %v2265
    %v2854 = vpop.f32.mrf.mxu0
    %v2855 = vadd.f32 %v2802, %v2854
    %v2856 = vpop.f32.mrf.mxu0
    %v2857 = vadd.f32 %v2804, %v2856
    %v2858 = vpop.f32.mrf.mxu0
    %v2859 = vadd.f32 %v2806, %v2858
    %v2860 = vpop.f32.mrf.mxu0
    %v2861 = vadd.f32 %v2808, %v2860
    %2862 = vmatprep.mubr.bf16.mxu0 %v2272
    %2863 = vmatmul.mubr.bf16.gmra.mxu0 %v2271
    %v2864 = vpop.f32.mrf.mxu0
    %v2865 = vadd.f32 %v2812, %v2864
    %v2866 = vpop.f32.mrf.mxu0
    %v2867 = vadd.f32 %v2814, %v2866
    %v2868 = vpop.f32.mrf.mxu0
    %v2869 = vadd.f32 %v2816, %v2868
    %v2870 = vpop.f32.mrf.mxu0
    %v2871 = vadd.f32 %v2818, %v2870
    %2872 = vdwg.mxu0
    %2873 = vmatprep.subr.bf16.mxu0 %v2654
    %2874 = vmatpush1.bf16.msra.mxu0 %v2653
    %2875 = vmatprep.subr.bf16.mxu0 %v2652
    %2876 = vmatpush1.bf16.msra.mxu0 %v2651
    %2877 = vmatprep.subr.bf16.mxu0 %v2650
    %2878 = vmatpush1.bf16.msra.mxu0 %v2649
    %2879 = vmatprep.subr.bf16.mxu0 %v2648
    %2880 = vmatpush1.bf16.msra.mxu0 %v2647
    %2881 = vmatprep.subr.bf16.mxu0 %v2646
    %2882 = vmatpush1.bf16.msra.mxu0 %v2645
    %2883 = vmatprep.subr.bf16.mxu0 %v2644
    %2884 = vmatpush1.bf16.msra.mxu0 %v2643
    %2885 = vmatprep.subr.bf16.mxu0 %v2642
    %2886 = vmatpush1.bf16.msra.mxu0 %v2641
    %2887 = vmatprep.subr.bf16.mxu0 %v2640
    %2888 = vmatpush1.bf16.msra.mxu0 %v2639
    %2889 = vmatprep.subr.bf16.mxu0 %v2670
    %2890 = vmatpush2.bf16.msra.mxu0 %v2669
    %2891 = vmatprep.subr.bf16.mxu0 %v2668
    %2892 = vmatpush2.bf16.msra.mxu0 %v2667
    %2893 = vmatprep.subr.bf16.mxu0 %v2666
    %2894 = vmatpush2.bf16.msra.mxu0 %v2665
    %2895 = vmatprep.subr.bf16.mxu0 %v2664
    %2896 = vmatpush2.bf16.msra.mxu0 %v2663
    %2897 = vmatprep.subr.bf16.mxu0 %v2662
    %2898 = vmatpush2.bf16.msra.mxu0 %v2661
    %2899 = vmatprep.subr.bf16.mxu0 %v2660
    %2900 = vmatpush2.bf16.msra.mxu0 %v2659
    %2901 = vmatprep.subr.bf16.mxu0 %v2658
    %2902 = vmatpush2.bf16.msra.mxu0 %v2657
    %2903 = vmatprep.subr.bf16.mxu0 %v2656
    %2904 = vmatpush2.bf16.msra.mxu0 %v2655
    %2905 = vmatprep.mubr.bf16.mxu0 %v2268
    %2906 = vmatmul.mubr.bf16.gmra.mxu0 %v2267
    %v2907 = vpop.f32.mrf.mxu0
    %v2908 = vadd.f32 %v2855, %v2907
    %v2909 = vpop.f32.mrf.mxu0
    %v2910 = vadd.f32 %v2857, %v2909
    %v2911 = vpop.f32.mrf.mxu0
    %v2912 = vadd.f32 %v2859, %v2911
    %v2913 = vpop.f32.mrf.mxu0
    %v2914 = vadd.f32 %v2861, %v2913
    %2915 = vmatprep.mubr.bf16.mxu0 %v2274
    %2916 = vmatmul.mubr.bf16.gmra.mxu0 %v2273
    %v2917 = vpop.f32.mrf.mxu0
    %v2918 = vadd.f32 %v2865, %v2917
    %v2919 = vpop.f32.mrf.mxu0
    %v2920 = vadd.f32 %v2867, %v2919
    %v2921 = vpop.f32.mrf.mxu0
    %v2922 = vadd.f32 %v2869, %v2921
    %v2923 = vpop.f32.mrf.mxu0
    %v2924 = vadd.f32 %v2871, %v2923
    %2925 = vdwg.mxu0
    %v2926 = vpack.c.bf16 %v2912, %v2908
    %v2927 = vpack.c.bf16 %v2914, %v2910
    %v2928 = vpack.c.bf16 %v2922, %v2918
    %v2929 = vpack.c.bf16 %v2924, %v2920
    %v2930 = vld [vmem:[#allocation5 + $0x13b0] sm:$0x1]
    %v2932 = vsel %vm239, %v2930, 0
    %2934 = vmatprep.subr.bf16.mxu0 0
    %2935 = vmatpush1.bf16.msra.mxu0 0
    %2936 = vmatprep.subr.bf16.mxu0 0
    %2937 = vmatpush1.bf16.msra.mxu0 0
    %2938 = vmatprep.subr.bf16.mxu0 0
    %2939 = vmatpush1.bf16.msra.mxu0 0
    %2940 = vmatprep.subr.bf16.mxu0 0
    %2941 = vmatpush1.bf16.msra.mxu0 0
    %2942 = vmatprep.subr.bf16.mxu0 0
    %2943 = vmatpush1.bf16.msra.mxu0 0
    %2944 = vmatprep.subr.bf16.mxu0 0
    %2945 = vmatpush1.bf16.msra.mxu0 0
    %2946 = vmatprep.subr.bf16.mxu0 %v2929
    %2947 = vmatpush1.bf16.msra.mxu0 %v2928
    %2948 = vmatprep.subr.bf16.mxu0 %v2927
    %2949 = vmatpush1.bf16.msra.mxu0 %v2926
    %2950 = vmatprep.subr.bf16.mxu0 0
    %2951 = vmatpush2.bf16.msra.mxu0 0
    %2952 = vmatprep.subr.bf16.mxu0 0
    %2953 = vmatpush2.bf16.msra.mxu0 0
    %2954 = vmatprep.subr.bf16.mxu0 0
    %2955 = vmatpush2.bf16.msra.mxu0 0
    %2956 = vmatprep.subr.bf16.mxu0 0
    %2957 = vmatpush2.bf16.msra.mxu0 0
    %2958 = vmatprep.subr.bf16.mxu0 0
    %2959 = vmatpush2.bf16.msra.mxu0 0
    %2960 = vmatprep.subr.bf16.mxu0 0
    %2961 = vmatpush2.bf16.msra.mxu0 0
    %2962 = vmatprep.subr.bf16.mxu0 0
    %2963 = vmatpush2.bf16.msra.mxu0 0
    %2964 = vmatprep.subr.bf16.mxu0 0
    %2965 = vmatpush2.bf16.msra.mxu0 0
    %2966 = vmatprep.mubr.bf16.mxu0 0
    %2967 = vmatmul.mubr.bf16.gmra.mxu0 %v2932
    %v2968 = vpop.f32.mrf.mxu0
    %v2969 = vadd.f32 0.0, %v2968
    %v2970 = vpop.f32.mrf.mxu0
    %v2971 = vadd.f32 0.0, %v2970
    %v2972 = vpop.f32.mrf.mxu0
    %v2973 = vpop.f32.mrf.mxu0
    %2974 = vdwg.mxu0
    %v2975 = vpack.c.bf16 %v2969, %v2969
    %v2976 = vpack.c.bf16 %v2971, %v2971
    %v2977 = vld [vmem:[#allocation5 + $0x13c0] sm:$0xf]
    %v2978 = vld [vmem:[#allocation5 + $0x13c8] sm:$0xf]
    %v2979 = vld [vmem:[#allocation5 + $0x13d0] sm:$0xf]
    %v2980 = vld [vmem:[#allocation5 + $0x13d8] sm:$0xf]
    %v2981 = vld [vmem:[#allocation5 + $0x13e0] sm:$0xf]
    %v2982 = vld [vmem:[#allocation5 + $0x13e8] sm:$0xf]
    %v2983 = vld [vmem:[#allocation5 + $0x13f0] sm:$0xf]
    %v2984 = vld [vmem:[#allocation5 + $0x13f8] sm:$0xf]
    %v2985 = vld [vmem:[#allocation5 + $0x1400] sm:$0xf]
    %v2986 = vld [vmem:[#allocation5 + $0x1408] sm:$0xf]
    %v2987 = vld [vmem:[#allocation5 + $0x1410] sm:$0xf]
    %v2988 = vld [vmem:[#allocation5 + $0x1418] sm:$0xf]
    %v2989 = vld [vmem:[#allocation5 + $0x1420] sm:$0xf]
    %v2990 = vld [vmem:[#allocation5 + $0x1428] sm:$0xf]
    %v2991 = vld [vmem:[#allocation5 + $0x1430] sm:$0xf]
    %v2992 = vld [vmem:[#allocation5 + $0x1438] sm:$0xf]
    %v2993 = vld [vmem:[#allocation5 + $0x1440] sm:$0xf]
    %v2994 = vld [vmem:[#allocation5 + $0x1448] sm:$0xf]
    %v2995 = vld [vmem:[#allocation5 + $0x1450] sm:$0xf]
    %v2996 = vld [vmem:[#allocation5 + $0x1458] sm:$0xf]
    %v2997 = vld [vmem:[#allocation5 + $0x1460] sm:$0xf]
    %v2998 = vld [vmem:[#allocation5 + $0x1468] sm:$0xf]
    %v2999 = vld [vmem:[#allocation5 + $0x1470] sm:$0xf]
    %v3000 = vld [vmem:[#allocation5 + $0x1478] sm:$0xf]
    %v3001 = vld [vmem:[#allocation5 + $0x1480] sm:$0xf]
    %v3002 = vld [vmem:[#allocation5 + $0x1488] sm:$0xf]
    %v3003 = vld [vmem:[#allocation5 + $0x1490] sm:$0xf]
    %v3004 = vld [vmem:[#allocation5 + $0x1498] sm:$0xf]
    %v3005 = vld [vmem:[#allocation5 + $0x14a0] sm:$0xf]
    %v3006 = vld [vmem:[#allocation5 + $0x14a8] sm:$0xf]
    %v3007 = vld [vmem:[#allocation5 + $0x14b0] sm:$0xf]
    %v3008 = vld [vmem:[#allocation5 + $0x14b8] sm:$0xf]
    %v3041 = vunpack.c.l.b16 %v2977
    %v3042 = vunpack.c.l.b16 %v2978
    %v3043 = vunpack.c.l.b16 %v2979
    %v3044 = vunpack.c.l.b16 %v2980
    %v3045 = vunpack.c.l.b16 %v2981
    %v3046 = vunpack.c.l.b16 %v2982
    %v3047 = vunpack.c.l.b16 %v2983
    %v3048 = vunpack.c.l.b16 %v2984
    %v3049 = vunpack.c.l.b16 %v2985
    %v3050 = vunpack.c.l.b16 %v2986
    %v3051 = vunpack.c.l.b16 %v2987
    %v3052 = vunpack.c.l.b16 %v2988
    %v3053 = vunpack.c.l.b16 %v2989
    %v3054 = vunpack.c.l.b16 %v2990
    %v3055 = vunpack.c.l.b16 %v2991
    %v3056 = vunpack.c.l.b16 %v2992
    %v3057 = vunpack.c.l.b16 %v2993
    %v3058 = vunpack.c.l.b16 %v2994
    %v3059 = vunpack.c.l.b16 %v2995
    %v3060 = vunpack.c.l.b16 %v2996
    %v3061 = vunpack.c.l.b16 %v2997
    %v3062 = vunpack.c.l.b16 %v2998
    %v3063 = vunpack.c.l.b16 %v2999
    %v3064 = vunpack.c.l.b16 %v3000
    %v3065 = vunpack.c.l.b16 %v3001
    %v3066 = vunpack.c.l.b16 %v3002
    %v3067 = vunpack.c.l.b16 %v3003
    %v3068 = vunpack.c.l.b16 %v3004
    %v3069 = vunpack.c.l.b16 %v3005
    %v3070 = vunpack.c.l.b16 %v3006
    %v3071 = vunpack.c.l.b16 %v3007
    %v3072 = vunpack.c.l.b16 %v3008
    %v3073 = vpack.c.b16 %v3042, %v3041
    %v3074 = vpack.c.b16 %v3044, %v3043
    %v3075 = vpack.c.b16 %v3046, %v3045
    %v3076 = vpack.c.b16 %v3048, %v3047
    %v3077 = vpack.c.b16 %v3050, %v3049
    %v3078 = vpack.c.b16 %v3052, %v3051
    %v3079 = vpack.c.b16 %v3054, %v3053
    %v3080 = vpack.c.b16 %v3056, %v3055
    %v3081 = vpack.c.b16 %v3058, %v3057
    %v3082 = vpack.c.b16 %v3060, %v3059
    %v3083 = vpack.c.b16 %v3062, %v3061
    %v3084 = vpack.c.b16 %v3064, %v3063
    %v3085 = vpack.c.b16 %v3066, %v3065
    %v3086 = vpack.c.b16 %v3068, %v3067
    %v3087 = vpack.c.b16 %v3070, %v3069
    %v3088 = vpack.c.b16 %v3072, %v3071
    %3105 = vmatprep.subr.bf16.mxu0 0
    %3106 = vmatpush1.bf16.msra.mxu0 %v3080
    %3107 = vmatprep.subr.bf16.mxu0 0
    %3108 = vmatpush1.bf16.msra.mxu0 %v3079
    %3109 = vmatprep.subr.bf16.mxu0 0
    %3110 = vmatpush1.bf16.msra.mxu0 %v3078
    %3111 = vmatprep.subr.bf16.mxu0 0
    %3112 = vmatpush1.bf16.msra.mxu0 %v3077
    %3113 = vmatprep.subr.bf16.mxu0 0
    %3114 = vmatpush1.bf16.msra.mxu0 %v3076
    %3115 = vmatprep.subr.bf16.mxu0 0
    %3116 = vmatpush1.bf16.msra.mxu0 %v3075
    %3117 = vmatprep.subr.bf16.mxu0 0
    %3118 = vmatpush1.bf16.msra.mxu0 %v3074
    %3119 = vmatprep.subr.bf16.mxu0 0
    %3120 = vmatpush1.bf16.msra.mxu0 %v3073
    %3121 = vmatprep.subr.bf16.mxu0 0
    %3122 = vmatpush2.bf16.msra.mxu0 %v3088
    %3123 = vmatprep.subr.bf16.mxu0 0
    %3124 = vmatpush2.bf16.msra.mxu0 %v3087
    %3125 = vmatprep.subr.bf16.mxu0 0
    %3126 = vmatpush2.bf16.msra.mxu0 %v3086
    %3127 = vmatprep.subr.bf16.mxu0 0
    %3128 = vmatpush2.bf16.msra.mxu0 %v3085
    %3129 = vmatprep.subr.bf16.mxu0 0
    %3130 = vmatpush2.bf16.msra.mxu0 %v3084
    %3131 = vmatprep.subr.bf16.mxu0 0
    %3132 = vmatpush2.bf16.msra.mxu0 %v3083
    %3133 = vmatprep.subr.bf16.mxu0 0
    %3134 = vmatpush2.bf16.msra.mxu0 %v3082
    %3135 = vmatprep.subr.bf16.mxu0 0
    %3136 = vmatpush2.bf16.msra.mxu0 %v3081
    %3137 = vmatprep.mubr.bf16.mxu0 %v2976
    %3138 = vmatmul.mubr.bf16.gmra.mxu0 %v2975
    %v3139 = vpop.f32.mrf.mxu0
    %v3140 = vadd.f32 0.0, %v3139
    %v3141 = vpop.f32.mrf.mxu0
    %v3142 = vpop.f32.mrf.mxu0
    %v3143 = vpop.f32.mrf.mxu0
    %3144 = vdwg.mxu0
    %v3145 = vpack.c.bf16 %v3140, %v3140
    %v3146 = vld [vmem:[#allocation5 + $0x14f0] sm:$0xf]
    %v3147 = vld [vmem:[#allocation5 + $0x14f8] sm:$0xf]
    %v3148 = vld [vmem:[#allocation7 + $0x70] ss:$0 sm:$0xff]
    %v3151 = vunpack.c.l.b16 %v3146
    %v3152 = vunpack.c.l.b16 %v3147
    %v3153 = vpack.c.b16 %v3152, %v3151
    %vm3155 = vcmask 130048
    %v3157 = vsel %vm3155, %v3145, 0
    %3159 = vmatprep.subr.bf16.mxu0 0
    %3160 = vmatpush1.bf16.msra.mxu0 0
    %3161 = vmatprep.subr.bf16.mxu0 0
    %3162 = vmatpush1.bf16.msra.mxu0 0
    %3163 = vmatprep.subr.bf16.mxu0 0
    %3164 = vmatpush1.bf16.msra.mxu0 0
    %3165 = vmatprep.subr.bf16.mxu0 0
    %3166 = vmatpush1.bf16.msra.mxu0 0
    %3167 = vmatprep.subr.bf16.mxu0 0
    %3168 = vmatpush1.bf16.msra.mxu0 0
    %3169 = vmatprep.subr.bf16.mxu0 0
    %3170 = vmatpush1.bf16.msra.mxu0 0
    %3171 = vmatprep.subr.bf16.mxu0 0
    %3172 = vmatpush1.bf16.msra.mxu0 0
    %3173 = vmatprep.subr.bf16.mxu0 0
    %3174 = vmatpush1.bf16.msra.mxu0 %v3153
    %3175 = vmatprep.subr.bf16.mxu0 0
    %3176 = vmatpush2.bf16.msra.mxu0 0
    %3177 = vmatprep.subr.bf16.mxu0 0
    %3178 = vmatpush2.bf16.msra.mxu0 0
    %3179 = vmatprep.subr.bf16.mxu0 0
    %3180 = vmatpush2.bf16.msra.mxu0 0
    %3181 = vmatprep.subr.bf16.mxu0 0
    %3182 = vmatpush2.bf16.msra.mxu0 0
    %3183 = vmatprep.subr.bf16.mxu0 0
    %3184 = vmatpush2.bf16.msra.mxu0 0
    %3185 = vmatprep.subr.bf16.mxu0 0
    %3186 = vmatpush2.bf16.msra.mxu0 0
    %3187 = vmatprep.subr.bf16.mxu0 0
    %3188 = vmatpush2.bf16.msra.mxu0 0
    %3189 = vmatprep.subr.bf16.mxu0 0
    %3190 = vmatpush2.bf16.msra.mxu0 0
    %3191 = vmatprep.mubr.bf16.mxu0 0
    %3192 = vmatmul.mubr.bf16.gmra.mxu0 %v3157
    %v3193 = vpop.f32.mrf.mxu0
    %v3194 = vadd.f32 %v3148, %v3193
    %v3195 = vpop.f32.mrf.mxu0
    %v3196 = vpop.f32.mrf.mxu0
    %v3197 = vpop.f32.mrf.mxu0
    %3198 = vdwg.mxu0
    %v3199 = vxor.u32 %v3194, 2147483648
    %v3200 = vmul.f32 %v3199, 1.442695
    %v3201 = vpow.pop %v3200
    %v3202 = vadd.f32 %v3201, 1.0
    %v3203 = vrcp.pop %v3202
    %v3204 = vmul.f32 1.0, %v3203
    %v3205 = vmul.f32 %v3194, %v3204
    %v3206 = vpack.c.bf16 %v3205, %v3205
    %v3207 = vld [vmem:[#allocation5 + $0x1500] sm:$0x3]
    %v3208 = vld [vmem:[#allocation7 + $0x80] ss:$0 sm:$0xff]
    %vm3209 = vcmask 31744
    %v3211 = vsel %vm3209, %v3206, 0
    %vm3213 = vcmask 1041408
    %v3215 = vsel %vm3213, %v3207, 0
    %3217 = vmatprep.subr.bf16.mxu0 0
    %3218 = vmatpush1.bf16.msra.mxu0 0
    %3219 = vmatprep.subr.bf16.mxu0 0
    %3220 = vmatpush1.bf16.msra.mxu0 0
    %3221 = vmatprep.subr.bf16.mxu0 0
    %3222 = vmatpush1.bf16.msra.mxu0 0
    %3223 = vmatprep.subr.bf16.mxu0 0
    %3224 = vmatpush1.bf16.msra.mxu0 0
    %3225 = vmatprep.subr.bf16.mxu0 0
    %3226 = vmatpush1.bf16.msra.mxu0 0
    %3227 = vmatprep.subr.bf16.mxu0 0
    %3228 = vmatpush1.bf16.msra.mxu0 0
    %3229 = vmatprep.subr.bf16.mxu0 0
    %3230 = vmatpush1.bf16.msra.mxu0 0
    %3231 = vmatprep.subr.bf16.mxu0 0
    %3232 = vmatpush1.bf16.msra.mxu0 %v3215
    %3233 = vmatprep.subr.bf16.mxu0 0
    %3234 = vmatpush2.bf16.msra.mxu0 0
    %3235 = vmatprep.subr.bf16.mxu0 0
    %3236 = vmatpush2.bf16.msra.mxu0 0
    %3237 = vmatprep.subr.bf16.mxu0 0
    %3238 = vmatpush2.bf16.msra.mxu0 0
    %3239 = vmatprep.subr.bf16.mxu0 0
    %3240 = vmatpush2.bf16.msra.mxu0 0
    %3241 = vmatprep.subr.bf16.mxu0 0
    %3242 = vmatpush2.bf16.msra.mxu0 0
    %3243 = vmatprep.subr.bf16.mxu0 0
    %3244 = vmatpush2.bf16.msra.mxu0 0
    %3245 = vmatprep.subr.bf16.mxu0 0
    %3246 = vmatpush2.bf16.msra.mxu0 0
    %3247 = vmatprep.subr.bf16.mxu0 0
    %3248 = vmatpush2.bf16.msra.mxu0 0
    %3249 = vmatprep.mubr.bf16.mxu0 0
    %3250 = vmatmul.mubr.bf16.gmra.mxu0 %v3211
    %v3251 = vpop.f32.mrf.mxu0
    %v3252 = vadd.f32 %v3208, %v3251
    %v3253 = vpop.f32.mrf.mxu0
    %v3254 = vpop.f32.mrf.mxu0
    %v3255 = vpop.f32.mrf.mxu0
    %3256 = vdwg.mxu0
    %v3257 = vxor.u32 %v3252, 2147483648
    %v3258 = vmul.f32 %v3257, 1.442695
    %v3259 = vpow.pop %v3258
    %v3260 = vadd.f32 %v3259, 1.0
    %v3261 = vrcp.pop %v3260
    %v3262 = vmul.f32 1.0, %v3261
    %v3263 = vld [vmem:[#allocation5 + $0x14c0] sm:$0xf]
    %v3264 = vld [vmem:[#allocation5 + $0x14c8] sm:$0xf]
    %v3265 = vld [vmem:[#allocation5 + $0x14d0] sm:$0xf]
    %v3266 = vld [vmem:[#allocation5 + $0x14d8] sm:$0xf]
    %v3267 = vpack.c.bf16 %v3262, %v3262
    %v3272 = vunpack.c.l.b16 %v3263
    %v3273 = vunpack.c.l.b16 %v3264
    %v3274 = vunpack.c.l.b16 %v3265
    %v3275 = vunpack.c.l.b16 %v3266
    %v3276 = vpack.c.b16 %v3273, %v3272
    %v3277 = vpack.c.b16 %v3275, %v3274
    %vm3278 = vcmask 15360
    %v3280 = vsel %vm3278, %v3276, 0
    %v3283 = vsel %vm3278, %v3277, 0
    %vm3285 = vcmask 1040384
    %v3287 = vsel %vm3285, %v3267, 0
    %3289 = vmatprep.subr.bf16.mxu0 0
    %3290 = vmatpush1.bf16.msra.mxu0 0
    %3291 = vmatprep.subr.bf16.mxu0 0
    %3292 = vmatpush1.bf16.msra.mxu0 0
    %3293 = vmatprep.subr.bf16.mxu0 0
    %3294 = vmatpush1.bf16.msra.mxu0 0
    %3295 = vmatprep.subr.bf16.mxu0 0
    %3296 = vmatpush1.bf16.msra.mxu0 0
    %3297 = vmatprep.subr.bf16.mxu0 0
    %3298 = vmatpush1.bf16.msra.mxu0 0
    %3299 = vmatprep.subr.bf16.mxu0 0
    %3300 = vmatpush1.bf16.msra.mxu0 0
    %3301 = vmatprep.subr.bf16.mxu0 0
    %3302 = vmatpush1.bf16.msra.mxu0 0
    %3303 = vmatprep.subr.bf16.mxu0 0
    %3304 = vmatpush1.bf16.msra.mxu0 %v3287
    %3305 = vmatprep.subr.bf16.mxu0 0
    %3306 = vmatpush2.bf16.msra.mxu0 0
    %3307 = vmatprep.subr.bf16.mxu0 0
    %3308 = vmatpush2.bf16.msra.mxu0 0
    %3309 = vmatprep.subr.bf16.mxu0 0
    %3310 = vmatpush2.bf16.msra.mxu0 0
    %3311 = vmatprep.subr.bf16.mxu0 0
    %3312 = vmatpush2.bf16.msra.mxu0 0
    %3313 = vmatprep.subr.bf16.mxu0 0
    %3314 = vmatpush2.bf16.msra.mxu0 0
    %3315 = vmatprep.subr.bf16.mxu0 0
    %3316 = vmatpush2.bf16.msra.mxu0 0
    %3317 = vmatprep.subr.bf16.mxu0 0
    %3318 = vmatpush2.bf16.msra.mxu0 0
    %3319 = vmatprep.subr.bf16.mxu0 0
    %3320 = vmatpush2.bf16.msra.mxu0 0
    %3321 = vmatprep.mubr.bf16.mxu0 0
    %3322 = vmatmul.mubr.bf16.gmra.mxu0 %v3280
    %v3323 = vpop.f32.mrf.mxu0
    %v3324 = vadd.f32 0.0, %v3323
    %v3325 = vpop.f32.mrf.mxu0
    %v3326 = vpop.f32.mrf.mxu0
    %v3327 = vadd.f32 0.0, %v3326
    %v3328 = vpop.f32.mrf.mxu0
    %3329 = vmatprep.mubr.bf16.mxu0 0
    %3330 = vmatmul.mubr.bf16.gmra.mxu0 %v3283
    %v3331 = vpop.f32.mrf.mxu0
    %v3332 = vadd.f32 0.0, %v3331
    %v3333 = vpop.f32.mrf.mxu0
    %v3334 = vpop.f32.mrf.mxu0
    %v3335 = vadd.f32 0.0, %v3334
    %v3336 = vpop.f32.mrf.mxu0
    %3337 = vdwg.mxu0
    %v3338 = vpack.c.bf16 %v3327, %v3324
    %v3339 = vpack.c.bf16 %v3335, %v3332
    %v3340 = vld [vmem:[#allocation5 + $0x14e0] sm:$0xff]
    %v3341 = vld [vmem:[#allocation5 + $0x14e8] sm:$0xff]
    %v3344 = vunpack.c.l.b16 %v3340
    %v3345 = vunpack.c.h.b16 %v3340
    %v3346 = vunpack.c.l.b16 %v3341
    %v3347 = vunpack.c.h.b16 %v3341
    %v3348 = vpack.c.b16 %v3346, %v3344
    %v3349 = vpack.c.b16 %v3347, %v3345
    %v3353 = vsel %vm3155, %v3338, 0
    %v3356 = vsel %vm3155, %v3339, 0
    %3358 = vmatprep.subr.bf16.mxu0 0
    %3359 = vmatpush1.bf16.msra.mxu0 0
    %3360 = vmatprep.subr.bf16.mxu0 0
    %3361 = vmatpush1.bf16.msra.mxu0 0
    %3362 = vmatprep.subr.bf16.mxu0 0
    %3363 = vmatpush1.bf16.msra.mxu0 0
    %3364 = vmatprep.subr.bf16.mxu0 0
    %3365 = vmatpush1.bf16.msra.mxu0 0
    %3366 = vmatprep.subr.bf16.mxu0 0
    %3367 = vmatpush1.bf16.msra.mxu0 0
    %3368 = vmatprep.subr.bf16.mxu0 0
    %3369 = vmatpush1.bf16.msra.mxu0 0
    %3370 = vmatprep.subr.bf16.mxu0 0
    %3371 = vmatpush1.bf16.msra.mxu0 0
    %3372 = vmatprep.subr.bf16.mxu0 %v3349
    %3373 = vmatpush1.bf16.msra.mxu0 %v3348
    %3374 = vmatprep.subr.bf16.mxu0 0
    %3375 = vmatpush2.bf16.msra.mxu0 0
    %3376 = vmatprep.subr.bf16.mxu0 0
    %3377 = vmatpush2.bf16.msra.mxu0 0
    %3378 = vmatprep.subr.bf16.mxu0 0
    %3379 = vmatpush2.bf16.msra.mxu0 0
    %3380 = vmatprep.subr.bf16.mxu0 0
    %3381 = vmatpush2.bf16.msra.mxu0 0
    %3382 = vmatprep.subr.bf16.mxu0 0
    %3383 = vmatpush2.bf16.msra.mxu0 0
    %3384 = vmatprep.subr.bf16.mxu0 0
    %3385 = vmatpush2.bf16.msra.mxu0 0
    %3386 = vmatprep.subr.bf16.mxu0 0
    %3387 = vmatpush2.bf16.msra.mxu0 0
    %3388 = vmatprep.subr.bf16.mxu0 0
    %3389 = vmatpush2.bf16.msra.mxu0 0
    %3390 = vmatprep.mubr.bf16.mxu0 0
    %3391 = vmatmul.mubr.bf16.gmra.mxu0 %v3353
    %v3392 = vpop.f32.mrf.mxu0
    %v3393 = vadd.f32 0.0, %v3392
    %v3394 = vpop.f32.mrf.mxu0
    %v3395 = vadd.f32 0.0, %v3394
    %v3396 = vpop.f32.mrf.mxu0
    %v3397 = vadd.f32 0.0, %v3396
    %v3398 = vpop.f32.mrf.mxu0
    %v3399 = vadd.f32 0.0, %v3398
    %3400 = vmatprep.mubr.bf16.mxu0 0
    %3401 = vmatmul.mubr.bf16.gmra.mxu0 %v3356
    %v3402 = vpop.f32.mrf.mxu0
    %v3403 = vadd.f32 0.0, %v3402
    %v3404 = vpop.f32.mrf.mxu0
    %v3405 = vadd.f32 0.0, %v3404
    %v3406 = vpop.f32.mrf.mxu0
    %v3407 = vadd.f32 0.0, %v3406
    %v3408 = vpop.f32.mrf.mxu0
    %v3409 = vadd.f32 0.0, %v3408
    %3410 = vdwg.mxu0
    %v3411 = vmul.f32 %v2908, %v3393
    %v3412 = vmul.f32 %v2910, %v3395
    %v3413 = vmul.f32 %v2912, %v3397
    %v3414 = vmul.f32 %v2914, %v3399
    %v3415 = vmul.f32 %v2918, %v3403
    %v3416 = vmul.f32 %v2920, %v3405
    %v3417 = vmul.f32 %v2922, %v3407
    %v3418 = vmul.f32 %v2924, %v3409
    %v3419 = vpack.c.bf16 %v3413, %v3411
    %v3420 = vpack.c.bf16 %v3414, %v3412
    %v3421 = vpack.c.bf16 %v3417, %v3415
    %v3422 = vpack.c.bf16 %v3418, %v3416
    %v3423 = vld [vmem:[#allocation5 + $0xc0] sm:$0xf]
    %v3424 = vld [vmem:[#allocation5 + $0xc8] sm:$0xf]
    %v3427 = vunpack.c.l.b16 %v3423
    %v3428 = vunpack.c.l.b16 %v3424
    %v3429 = vpack.c.b16 %v3428, %v3427
    %v3431 = vsel %vm239, %v3429, 0
    %3433 = vmatprep.subr.bf16.mxu0 0
    %3434 = vmatpush1.bf16.msra.mxu0 0
    %3435 = vmatprep.subr.bf16.mxu0 0
    %3436 = vmatpush1.bf16.msra.mxu0 0
    %3437 = vmatprep.subr.bf16.mxu0 0
    %3438 = vmatpush1.bf16.msra.mxu0 0
    %3439 = vmatprep.subr.bf16.mxu0 0
    %3440 = vmatpush1.bf16.msra.mxu0 0
    %3441 = vmatprep.subr.bf16.mxu0 0
    %3442 = vmatpush1.bf16.msra.mxu0 0
    %3443 = vmatprep.subr.bf16.mxu0 0
    %3444 = vmatpush1.bf16.msra.mxu0 0
    %3445 = vmatprep.subr.bf16.mxu0 %v3422
    %3446 = vmatpush1.bf16.msra.mxu0 %v3421
    %3447 = vmatprep.subr.bf16.mxu0 %v3420
    %3448 = vmatpush1.bf16.msra.mxu0 %v3419
    %3449 = vmatprep.subr.bf16.mxu0 0
    %3450 = vmatpush2.bf16.msra.mxu0 0
    %3451 = vmatprep.subr.bf16.mxu0 0
    %3452 = vmatpush2.bf16.msra.mxu0 0
    %3453 = vmatprep.subr.bf16.mxu0 0
    %3454 = vmatpush2.bf16.msra.mxu0 0
    %3455 = vmatprep.subr.bf16.mxu0 0
    %3456 = vmatpush2.bf16.msra.mxu0 0
    %3457 = vmatprep.subr.bf16.mxu0 0
    %3458 = vmatpush2.bf16.msra.mxu0 0
    %3459 = vmatprep.subr.bf16.mxu0 0
    %3460 = vmatpush2.bf16.msra.mxu0 0
    %3461 = vmatprep.subr.bf16.mxu0 0
    %3462 = vmatpush2.bf16.msra.mxu0 0
    %3463 = vmatprep.subr.bf16.mxu0 0
    %3464 = vmatpush2.bf16.msra.mxu0 0
    %3465 = vmatprep.mubr.bf16.mxu0 0
    %3466 = vmatmul.mubr.bf16.gmra.mxu0 %v3431
    %v3467 = vpop.f32.mrf.mxu0
    %v3468 = vadd.f32 0.0, %v3467
    %v3469 = vpop.f32.mrf.mxu0
    %v3470 = vadd.f32 0.0, %v3469
    %v3471 = vpop.f32.mrf.mxu0
    %v3472 = vadd.f32 0.0, %v3471
    %v3473 = vpop.f32.mrf.mxu0
    %v3474 = vadd.f32 0.0, %v3473
    %3475 = vdwg.mxu0
    %v3476 = vpack.c.bf16 %v3472, %v3468
    %v3477 = vpack.c.bf16 %v3474, %v3470
    %v3480 = vunpack.c.l.b16 %v3476
    %v3481 = vunpack.c.l.b16 %v3477
    %v3482 = vunpack.c.h.b16 %v3476
    %v3483 = vunpack.c.h.b16 %v3477
    %v3484 = vpack.c.b16 %v3481, %v3480
    %v3485 = vpack.c.b16 %v3483, %v3482
    %3488 = vst [vmem:[#allocation2] sm:$0xff] %v3484
    %3489 = vst [vmem:[#allocation2 + $0x18] sm:$0xff] %v3485
    %v3490 = vld [vmem:[#allocation5 + $0xd0] sm:$0xf]
    %v3491 = vld [vmem:[#allocation5 + $0xd8] sm:$0xf]
    %v3494 = vunpack.c.l.b16 %v3490
    %v3495 = vunpack.c.l.b16 %v3491
    %v3496 = vpack.c.b16 %v3495, %v3494
    %v3498 = vsel %vm239, %v3496, 0
    %3500 = vmatprep.subr.bf16.mxu0 0
    %3501 = vmatpush1.bf16.msra.mxu0 0
    %3502 = vmatprep.subr.bf16.mxu0 0
    %3503 = vmatpush1.bf16.msra.mxu0 0
    %3504 = vmatprep.subr.bf16.mxu0 0
    %3505 = vmatpush1.bf16.msra.mxu0 0
    %3506 = vmatprep.subr.bf16.mxu0 0
    %3507 = vmatpush1.bf16.msra.mxu0 0
    %3508 = vmatprep.subr.bf16.mxu0 0
    %3509 = vmatpush1.bf16.msra.mxu0 0
    %3510 = vmatprep.subr.bf16.mxu0 0
    %3511 = vmatpush1.bf16.msra.mxu0 0
    %3512 = vmatprep.subr.bf16.mxu0 %v3422
    %3513 = vmatpush1.bf16.msra.mxu0 %v3421
    %3514 = vmatprep.subr.bf16.mxu0 %v3420
    %3515 = vmatpush1.bf16.msra.mxu0 %v3419
    %3516 = vmatprep.subr.bf16.mxu0 0
    %3517 = vmatpush2.bf16.msra.mxu0 0
    %3518 = vmatprep.subr.bf16.mxu0 0
    %3519 = vmatpush2.bf16.msra.mxu0 0
    %3520 = vmatprep.subr.bf16.mxu0 0
    %3521 = vmatpush2.bf16.msra.mxu0 0
    %3522 = vmatprep.subr.bf16.mxu0 0
    %3523 = vmatpush2.bf16.msra.mxu0 0
    %3524 = vmatprep.subr.bf16.mxu0 0
    %3525 = vmatpush2.bf16.msra.mxu0 0
    %3526 = vmatprep.subr.bf16.mxu0 0
    %3527 = vmatpush2.bf16.msra.mxu0 0
    %3528 = vmatprep.subr.bf16.mxu0 0
    %3529 = vmatpush2.bf16.msra.mxu0 0
    %3530 = vmatprep.subr.bf16.mxu0 0
    %3531 = vmatpush2.bf16.msra.mxu0 0
    %3532 = vmatprep.mubr.bf16.mxu0 0
    %3533 = vmatmul.mubr.bf16.gmra.mxu0 %v3498
    %v3534 = vpop.f32.mrf.mxu0
    %v3535 = vadd.f32 0.0, %v3534
    %v3536 = vpop.f32.mrf.mxu0
    %v3537 = vadd.f32 0.0, %v3536
    %v3538 = vpop.f32.mrf.mxu0
    %v3539 = vadd.f32 0.0, %v3538
    %v3540 = vpop.f32.mrf.mxu0
    %v3541 = vadd.f32 0.0, %v3540
    %3542 = vdwg.mxu0
    %v3543 = vpack.c.bf16 %v3539, %v3535
    %v3544 = vpack.c.bf16 %v3541, %v3537
    %v3547 = vunpack.c.l.b16 %v3543
    %v3548 = vunpack.c.l.b16 %v3544
    %v3549 = vunpack.c.h.b16 %v3543
    %v3550 = vunpack.c.h.b16 %v3544
    %v3551 = vpack.c.b16 %v3548, %v3547
    %v3552 = vpack.c.b16 %v3550, %v3549
    %3555 = vst [vmem:[#allocation2 + $0x8] sm:$0xff] %v3551
    %3556 = vst [vmem:[#allocation2 + $0x20] sm:$0xff] %v3552
    %v3557 = vld [vmem:[#allocation5 + $0xe0] sm:$0xf]
    %v3558 = vld [vmem:[#allocation5 + $0xe8] sm:$0xf]
    %v3561 = vunpack.c.l.b16 %v3557
    %v3562 = vunpack.c.l.b16 %v3558
    %v3563 = vpack.c.b16 %v3562, %v3561
    %v3565 = vsel %vm239, %v3563, 0
    %3567 = vmatprep.subr.bf16.mxu0 0
    %3568 = vmatpush1.bf16.msra.mxu0 0
    %3569 = vmatprep.subr.bf16.mxu0 0
    %3570 = vmatpush1.bf16.msra.mxu0 0
    %3571 = vmatprep.subr.bf16.mxu0 0
    %3572 = vmatpush1.bf16.msra.mxu0 0
    %3573 = vmatprep.subr.bf16.mxu0 0
    %3574 = vmatpush1.bf16.msra.mxu0 0
    %3575 = vmatprep.subr.bf16.mxu0 0
    %3576 = vmatpush1.bf16.msra.mxu0 0
    %3577 = vmatprep.subr.bf16.mxu0 0
    %3578 = vmatpush1.bf16.msra.mxu0 0
    %3579 = vmatprep.subr.bf16.mxu0 %v3422
    %3580 = vmatpush1.bf16.msra.mxu0 %v3421
    %3581 = vmatprep.subr.bf16.mxu0 %v3420
    %3582 = vmatpush1.bf16.msra.mxu0 %v3419
    %3583 = vmatprep.subr.bf16.mxu0 0
    %3584 = vmatpush2.bf16.msra.mxu0 0
    %3585 = vmatprep.subr.bf16.mxu0 0
    %3586 = vmatpush2.bf16.msra.mxu0 0
    %3587 = vmatprep.subr.bf16.mxu0 0
    %3588 = vmatpush2.bf16.msra.mxu0 0
    %3589 = vmatprep.subr.bf16.mxu0 0
    %3590 = vmatpush2.bf16.msra.mxu0 0
    %3591 = vmatprep.subr.bf16.mxu0 0
    %3592 = vmatpush2.bf16.msra.mxu0 0
    %3593 = vmatprep.subr.bf16.mxu0 0
    %3594 = vmatpush2.bf16.msra.mxu0 0
    %3595 = vmatprep.subr.bf16.mxu0 0
    %3596 = vmatpush2.bf16.msra.mxu0 0
    %3597 = vmatprep.subr.bf16.mxu0 0
    %3598 = vmatpush2.bf16.msra.mxu0 0
    %3599 = vmatprep.mubr.bf16.mxu0 0
    %3600 = vmatmul.mubr.bf16.gmra.mxu0 %v3565
    %v3601 = vpop.f32.mrf.mxu0
    %v3602 = vadd.f32 0.0, %v3601
    %v3603 = vpop.f32.mrf.mxu0
    %v3604 = vadd.f32 0.0, %v3603
    %v3605 = vpop.f32.mrf.mxu0
    %v3606 = vadd.f32 0.0, %v3605
    %v3607 = vpop.f32.mrf.mxu0
    %v3608 = vadd.f32 0.0, %v3607
    %3609 = vdwg.mxu0
    %v3610 = vpack.c.bf16 %v3606, %v3602
    %v3611 = vpack.c.bf16 %v3608, %v3604
    %v3614 = vunpack.c.l.b16 %v3610
    %v3615 = vunpack.c.l.b16 %v3611
    %v3616 = vunpack.c.h.b16 %v3610
    %v3617 = vunpack.c.h.b16 %v3611
    %v3618 = vpack.c.b16 %v3615, %v3614
    %v3619 = vpack.c.b16 %v3617, %v3616
    %3622 = vst [vmem:[#allocation2 + $0x10] sm:$0xff] %v3618
    %3623 = vst [vmem:[#allocation2 + $0x28] sm:$0xff] %v3619
    %v3624 = vld [vmem:[#allocation2] sm:$0xff]
    %v3625 = vld [vmem:[#allocation2 + $0x8] sm:$0xff]
    %v3626 = vld [vmem:[#allocation2 + $0x10] sm:$0xff]
    %v3627 = vld [vmem:[#allocation2 + $0x18] sm:$0xff]
    %v3628 = vld [vmem:[#allocation2 + $0x20] sm:$0xff]
    %v3629 = vld [vmem:[#allocation2 + $0x28] sm:$0xff]
    %v3630 = vld [vmem:[#allocation5 + $0x7b0] sm:$0xff]
    %v3631 = vld [vmem:[#allocation5 + $0x7b8] sm:$0xff]
    %v3632 = vld [vmem:[#allocation5 + $0x7c0] sm:$0xff]
    %v3633 = vld [vmem:[#allocation5 + $0x7c8] sm:$0xff]
    %v3634 = vld [vmem:[#allocation5 + $0x7d0] sm:$0xff]
    %v3635 = vld [vmem:[#allocation5 + $0x7d8] sm:$0xff]
    %v3636 = vld [vmem:[#allocation5 + $0x7e0] sm:$0xff]
    %v3637 = vld [vmem:[#allocation5 + $0x7e8] sm:$0xff]
    %v3638 = vld [vmem:[#allocation5 + $0x7f0] sm:$0xff]
    %v3639 = vld [vmem:[#allocation5 + $0x7f8] sm:$0xff]
    %v3640 = vld [vmem:[#allocation5 + $0x800] sm:$0xff]
    %v3641 = vld [vmem:[#allocation5 + $0x808] sm:$0xff]
    %v3642 = vld [vmem:[#allocation5 + $0x810] sm:$0xff]
    %v3643 = vld [vmem:[#allocation5 + $0x818] sm:$0xff]
    %v3644 = vld [vmem:[#allocation5 + $0x820] sm:$0xff]
    %v3645 = vld [vmem:[#allocation5 + $0x828] sm:$0xff]
    %v3646 = vld [vmem:[#allocation5 + $0x830] sm:$0xff]
    %v3647 = vld [vmem:[#allocation5 + $0x838] sm:$0xff]
    %v3648 = vld [vmem:[#allocation5 + $0x840] sm:$0xff]
    %v3649 = vld [vmem:[#allocation5 + $0x848] sm:$0xff]
    %v3650 = vld [vmem:[#allocation5 + $0x850] sm:$0xff]
    %v3651 = vld [vmem:[#allocation5 + $0x858] sm:$0xff]
    %v3652 = vld [vmem:[#allocation5 + $0x860] sm:$0xff]
    %v3653 = vld [vmem:[#allocation5 + $0x868] sm:$0xff]
    %v3654 = vld [vmem:[#allocation5 + $0x870] sm:$0xff]
    %v3655 = vld [vmem:[#allocation5 + $0x878] sm:$0xff]
    %v3656 = vld [vmem:[#allocation5 + $0x880] sm:$0xff]
    %v3657 = vld [vmem:[#allocation5 + $0x888] sm:$0xff]
    %v3658 = vld [vmem:[#allocation5 + $0x890] sm:$0xff]
    %v3659 = vld [vmem:[#allocation5 + $0x898] sm:$0xff]
    %v3660 = vld [vmem:[#allocation5 + $0x8a0] sm:$0xff]
    %v3661 = vld [vmem:[#allocation5 + $0x8a8] sm:$0xff]
    %v3662 = vld [vmem:[#allocation5 + $0x8b0] sm:$0xff]
    %v3663 = vld [vmem:[#allocation5 + $0x8b8] sm:$0xff]
    %v3664 = vld [vmem:[#allocation5 + $0x8c0] sm:$0xff]
    %v3665 = vld [vmem:[#allocation5 + $0x8c8] sm:$0xff]
    %v3666 = vld [vmem:[#allocation5 + $0x8d0] sm:$0xff]
    %v3667 = vld [vmem:[#allocation5 + $0x8d8] sm:$0xff]
    %v3668 = vld [vmem:[#allocation5 + $0x8e0] sm:$0xff]
    %v3669 = vld [vmem:[#allocation5 + $0x8e8] sm:$0xff]
    %v3670 = vld [vmem:[#allocation5 + $0x8f0] sm:$0xff]
    %v3671 = vld [vmem:[#allocation5 + $0x8f8] sm:$0xff]
    %v3672 = vld [vmem:[#allocation5 + $0x900] sm:$0xff]
    %v3673 = vld [vmem:[#allocation5 + $0x908] sm:$0xff]
    %v3674 = vld [vmem:[#allocation5 + $0x910] sm:$0xff]
    %v3675 = vld [vmem:[#allocation5 + $0x918] sm:$0xff]
    %v3676 = vld [vmem:[#allocation5 + $0x920] sm:$0xff]
    %v3677 = vld [vmem:[#allocation5 + $0x928] sm:$0xff]
    %v3678 = vld [vmem:[#allocation5 + $0x930] sm:$0xff]
    %v3679 = vld [vmem:[#allocation5 + $0x938] sm:$0xff]
    %v3680 = vld [vmem:[#allocation5 + $0x940] sm:$0xff]
    %v3681 = vld [vmem:[#allocation5 + $0x948] sm:$0xff]
    %v3682 = vld [vmem:[#allocation5 + $0x950] sm:$0xff]
    %v3683 = vld [vmem:[#allocation5 + $0x958] sm:$0xff]
    %v3684 = vld [vmem:[#allocation5 + $0x960] sm:$0xff]
    %v3685 = vld [vmem:[#allocation5 + $0x968] sm:$0xff]
    %v3686 = vld [vmem:[#allocation5 + $0x970] sm:$0xff]
    %v3687 = vld [vmem:[#allocation5 + $0x978] sm:$0xff]
    %v3688 = vld [vmem:[#allocation5 + $0x980] sm:$0xff]
    %v3689 = vld [vmem:[#allocation5 + $0x988] sm:$0xff]
    %v3690 = vld [vmem:[#allocation5 + $0x990] sm:$0xff]
    %v3691 = vld [vmem:[#allocation5 + $0x998] sm:$0xff]
    %v3692 = vld [vmem:[#allocation5 + $0x9a0] sm:$0xff]
    %v3693 = vld [vmem:[#allocation5 + $0x9a8] sm:$0xff]
    %v3694 = vld [vmem:[#allocation5 + $0x9b0] sm:$0xff]
    %v3695 = vld [vmem:[#allocation5 + $0x9b8] sm:$0xff]
    %v3696 = vld [vmem:[#allocation5 + $0x9c0] sm:$0xff]
    %v3697 = vld [vmem:[#allocation5 + $0x9c8] sm:$0xff]
    %v3698 = vld [vmem:[#allocation5 + $0x9d0] sm:$0xff]
    %v3699 = vld [vmem:[#allocation5 + $0x9d8] sm:$0xff]
    %v3700 = vld [vmem:[#allocation5 + $0x9e0] sm:$0xff]
    %v3701 = vld [vmem:[#allocation5 + $0x9e8] sm:$0xff]
    %v3702 = vld [vmem:[#allocation5 + $0x9f0] sm:$0xff]
    %v3703 = vld [vmem:[#allocation5 + $0x9f8] sm:$0xff]
    %v3704 = vld [vmem:[#allocation5 + $0xa00] sm:$0xff]
    %v3705 = vld [vmem:[#allocation5 + $0xa08] sm:$0xff]
    %v3706 = vld [vmem:[#allocation5 + $0xa10] sm:$0xff]
    %v3707 = vld [vmem:[#allocation5 + $0xa18] sm:$0xff]
    %v3708 = vld [vmem:[#allocation5 + $0xa20] sm:$0xff]
    %v3709 = vld [vmem:[#allocation5 + $0xa28] sm:$0xff]
    %v3710 = vld [vmem:[#allocation5 + $0xa30] sm:$0xff]
    %v3711 = vld [vmem:[#allocation5 + $0xa38] sm:$0xff]
    %v3712 = vld [vmem:[#allocation5 + $0xa40] sm:$0xff]
    %v3713 = vld [vmem:[#allocation5 + $0xa48] sm:$0xff]
    %v3714 = vld [vmem:[#allocation5 + $0xa50] sm:$0xff]
    %v3715 = vld [vmem:[#allocation5 + $0xa58] sm:$0xff]
    %v3716 = vld [vmem:[#allocation5 + $0xa60] sm:$0xff]
    %v3717 = vld [vmem:[#allocation5 + $0xa68] sm:$0xff]
    %v3718 = vld [vmem:[#allocation5 + $0xa70] sm:$0xff]
    %v3719 = vld [vmem:[#allocation5 + $0xa78] sm:$0xff]
    %v3720 = vld [vmem:[#allocation5 + $0xa80] sm:$0xff]
    %v3721 = vld [vmem:[#allocation5 + $0xa88] sm:$0xff]
    %v3722 = vld [vmem:[#allocation5 + $0xa90] sm:$0xff]
    %v3723 = vld [vmem:[#allocation5 + $0xa98] sm:$0xff]
    %v3724 = vld [vmem:[#allocation5 + $0xaa0] sm:$0xff]
    %v3725 = vld [vmem:[#allocation5 + $0xaa8] sm:$0xff]
    %s3726 = scalar_lea.vmem [#allocation7], 48
    %v3727 = vld [vmem:[%s3726] ss:$8 sm:$0x3]
    %v3729 = vlaneseq
    %v3730 = vshrl.u32 %v3729, 7
    %v3731 = vsub.s32 0, %v3730
    %v3732 = vrot.slane %v3727, %v3731
    %v3733 = vlaneseq
    %v3734 = vshrl.u32 %v3733, 7
    %v3735 = vsub.s32 1, %v3734
    %v3736 = vrot.slane %v3727, %v3735
    %v3745 = vunpack.c.l.b16 %v3624
    %v3746 = vunpack.c.h.b16 %v3624
    %v3747 = vunpack.c.l.b16 %v3625
    %v3748 = vunpack.c.h.b16 %v3625
    %v3749 = vunpack.c.l.b16 %v3626
    %v3750 = vunpack.c.h.b16 %v3626
    %v3751 = vunpack.c.l.b16 %v3627
    %v3752 = vunpack.c.h.b16 %v3627
    %v3753 = vunpack.c.l.b16 %v3628
    %v3754 = vunpack.c.h.b16 %v3628
    %v3755 = vunpack.c.l.b16 %v3629
    %v3756 = vunpack.c.h.b16 %v3629
    %v3757 = vpack.c.b16 %v3751, %v3745
    %v3758 = vpack.c.b16 %v3752, %v3746
    %v3759 = vpack.c.b16 %v3753, %v3747
    %v3760 = vpack.c.b16 %v3754, %v3748
    %v3761 = vpack.c.b16 %v3755, %v3749
    %v3762 = vpack.c.b16 %v3756, %v3750
    %v3865 = vunpack.c.l.b16 %v3630
    %v3866 = vunpack.c.h.b16 %v3630
    %v3867 = vunpack.c.l.b16 %v3631
    %v3868 = vunpack.c.h.b16 %v3631
    %v3869 = vunpack.c.l.b16 %v3632
    %v3870 = vunpack.c.h.b16 %v3632
    %v3871 = vunpack.c.l.b16 %v3633
    %v3872 = vunpack.c.h.b16 %v3633
    %v3873 = vunpack.c.l.b16 %v3634
    %v3874 = vunpack.c.h.b16 %v3634
    %v3875 = vunpack.c.l.b16 %v3635
    %v3876 = vunpack.c.h.b16 %v3635
    %v3877 = vunpack.c.l.b16 %v3636
    %v3878 = vunpack.c.h.b16 %v3636
    %v3879 = vunpack.c.l.b16 %v3637
    %v3880 = vunpack.c.h.b16 %v3637
    %v3881 = vunpack.c.l.b16 %v3638
    %v3882 = vunpack.c.h.b16 %v3638
    %v3883 = vunpack.c.l.b16 %v3639
    %v3884 = vunpack.c.h.b16 %v3639
    %v3885 = vunpack.c.l.b16 %v3640
    %v3886 = vunpack.c.h.b16 %v3640
    %v3887 = vunpack.c.l.b16 %v3641
    %v3888 = vunpack.c.h.b16 %v3641
    %v3889 = vunpack.c.l.b16 %v3642
    %v3890 = vunpack.c.h.b16 %v3642
    %v3891 = vunpack.c.l.b16 %v3643
    %v3892 = vunpack.c.h.b16 %v3643
    %v3893 = vunpack.c.l.b16 %v3644
    %v3894 = vunpack.c.h.b16 %v3644
    %v3895 = vunpack.c.l.b16 %v3645
    %v3896 = vunpack.c.h.b16 %v3645
    %v3897 = vunpack.c.l.b16 %v3646
    %v3898 = vunpack.c.h.b16 %v3646
    %v3899 = vunpack.c.l.b16 %v3647
    %v3900 = vunpack.c.h.b16 %v3647
    %v3901 = vunpack.c.l.b16 %v3648
    %v3902 = vunpack.c.h.b16 %v3648
    %v3903 = vunpack.c.l.b16 %v3649
    %v3904 = vunpack.c.h.b16 %v3649
    %v3905 = vunpack.c.l.b16 %v3650
    %v3906 = vunpack.c.h.b16 %v3650
    %v3907 = vunpack.c.l.b16 %v3651
    %v3908 = vunpack.c.h.b16 %v3651
    %v3909 = vunpack.c.l.b16 %v3652
    %v3910 = vunpack.c.h.b16 %v3652
    %v3911 = vunpack.c.l.b16 %v3653
    %v3912 = vunpack.c.h.b16 %v3653
    %v3913 = vunpack.c.l.b16 %v3654
    %v3914 = vunpack.c.h.b16 %v3654
    %v3915 = vunpack.c.l.b16 %v3655
    %v3916 = vunpack.c.h.b16 %v3655
    %v3917 = vunpack.c.l.b16 %v3656
    %v3918 = vunpack.c.h.b16 %v3656
    %v3919 = vunpack.c.l.b16 %v3657
    %v3920 = vunpack.c.h.b16 %v3657
    %v3921 = vunpack.c.l.b16 %v3658
    %v3922 = vunpack.c.h.b16 %v3658
    %v3923 = vunpack.c.l.b16 %v3659
    %v3924 = vunpack.c.h.b16 %v3659
    %v3925 = vunpack.c.l.b16 %v3660
    %v3926 = vunpack.c.h.b16 %v3660
    %v3927 = vunpack.c.l.b16 %v3661
    %v3928 = vunpack.c.h.b16 %v3661
    %v3929 = vunpack.c.l.b16 %v3662
    %v3930 = vunpack.c.h.b16 %v3662
    %v3931 = vunpack.c.l.b16 %v3663
    %v3932 = vunpack.c.h.b16 %v3663
    %v3933 = vunpack.c.l.b16 %v3664
    %v3934 = vunpack.c.h.b16 %v3664
    %v3935 = vunpack.c.l.b16 %v3665
    %v3936 = vunpack.c.h.b16 %v3665
    %v3937 = vunpack.c.l.b16 %v3666
    %v3938 = vunpack.c.h.b16 %v3666
    %v3939 = vunpack.c.l.b16 %v3667
    %v3940 = vunpack.c.h.b16 %v3667
    %v3941 = vunpack.c.l.b16 %v3668
    %v3942 = vunpack.c.h.b16 %v3668
    %v3943 = vunpack.c.l.b16 %v3669
    %v3944 = vunpack.c.h.b16 %v3669
    %v3945 = vunpack.c.l.b16 %v3670
    %v3946 = vunpack.c.h.b16 %v3670
    %v3947 = vunpack.c.l.b16 %v3671
    %v3948 = vunpack.c.h.b16 %v3671
    %v3949 = vunpack.c.l.b16 %v3672
    %v3950 = vunpack.c.h.b16 %v3672
    %v3951 = vunpack.c.l.b16 %v3673
    %v3952 = vunpack.c.h.b16 %v3673
    %v3953 = vunpack.c.l.b16 %v3674
    %v3954 = vunpack.c.h.b16 %v3674
    %v3955 = vunpack.c.l.b16 %v3675
    %v3956 = vunpack.c.h.b16 %v3675
    %v3957 = vunpack.c.l.b16 %v3676
    %v3958 = vunpack.c.h.b16 %v3676
    %v3959 = vunpack.c.l.b16 %v3677
    %v3960 = vunpack.c.h.b16 %v3677
    %v3961 = vunpack.c.l.b16 %v3678
    %v3962 = vunpack.c.h.b16 %v3678
    %v3963 = vunpack.c.l.b16 %v3679
    %v3964 = vunpack.c.h.b16 %v3679
    %v3965 = vunpack.c.l.b16 %v3680
    %v3966 = vunpack.c.h.b16 %v3680
    %v3967 = vunpack.c.l.b16 %v3681
    %v3968 = vunpack.c.h.b16 %v3681
    %v3969 = vunpack.c.l.b16 %v3682
    %v3970 = vunpack.c.h.b16 %v3682
    %v3971 = vunpack.c.l.b16 %v3683
    %v3972 = vunpack.c.h.b16 %v3683
    %v3973 = vunpack.c.l.b16 %v3684
    %v3974 = vunpack.c.h.b16 %v3684
    %v3975 = vunpack.c.l.b16 %v3685
    %v3976 = vunpack.c.h.b16 %v3685
    %v3977 = vunpack.c.l.b16 %v3686
    %v3978 = vunpack.c.h.b16 %v3686
    %v3979 = vunpack.c.l.b16 %v3687
    %v3980 = vunpack.c.h.b16 %v3687
    %v3981 = vunpack.c.l.b16 %v3688
    %v3982 = vunpack.c.h.b16 %v3688
    %v3983 = vunpack.c.l.b16 %v3689
    %v3984 = vunpack.c.h.b16 %v3689
    %v3985 = vunpack.c.l.b16 %v3690
    %v3986 = vunpack.c.h.b16 %v3690
    %v3987 = vunpack.c.l.b16 %v3691
    %v3988 = vunpack.c.h.b16 %v3691
    %v3989 = vunpack.c.l.b16 %v3692
    %v3990 = vunpack.c.h.b16 %v3692
    %v3991 = vunpack.c.l.b16 %v3693
    %v3992 = vunpack.c.h.b16 %v3693
    %v3993 = vunpack.c.l.b16 %v3694
    %v3994 = vunpack.c.h.b16 %v3694
    %v3995 = vunpack.c.l.b16 %v3695
    %v3996 = vunpack.c.h.b16 %v3695
    %v3997 = vunpack.c.l.b16 %v3696
    %v3998 = vunpack.c.h.b16 %v3696
    %v3999 = vunpack.c.l.b16 %v3697
    %v4000 = vunpack.c.h.b16 %v3697
    %v4001 = vunpack.c.l.b16 %v3698
    %v4002 = vunpack.c.h.b16 %v3698
    %v4003 = vunpack.c.l.b16 %v3699
    %v4004 = vunpack.c.h.b16 %v3699
    %v4005 = vunpack.c.l.b16 %v3700
    %v4006 = vunpack.c.h.b16 %v3700
    %v4007 = vunpack.c.l.b16 %v3701
    %v4008 = vunpack.c.h.b16 %v3701
    %v4009 = vunpack.c.l.b16 %v3702
    %v4010 = vunpack.c.h.b16 %v3702
    %v4011 = vunpack.c.l.b16 %v3703
    %v4012 = vunpack.c.h.b16 %v3703
    %v4013 = vunpack.c.l.b16 %v3704
    %v4014 = vunpack.c.h.b16 %v3704
    %v4015 = vunpack.c.l.b16 %v3705
    %v4016 = vunpack.c.h.b16 %v3705
    %v4017 = vunpack.c.l.b16 %v3706
    %v4018 = vunpack.c.h.b16 %v3706
    %v4019 = vunpack.c.l.b16 %v3707
    %v4020 = vunpack.c.h.b16 %v3707
    %v4021 = vunpack.c.l.b16 %v3708
    %v4022 = vunpack.c.h.b16 %v3708
    %v4023 = vunpack.c.l.b16 %v3709
    %v4024 = vunpack.c.h.b16 %v3709
    %v4025 = vunpack.c.l.b16 %v3710
    %v4026 = vunpack.c.h.b16 %v3710
    %v4027 = vunpack.c.l.b16 %v3711
    %v4028 = vunpack.c.h.b16 %v3711
    %v4029 = vunpack.c.l.b16 %v3712
    %v4030 = vunpack.c.h.b16 %v3712
    %v4031 = vunpack.c.l.b16 %v3713
    %v4032 = vunpack.c.h.b16 %v3713
    %v4033 = vunpack.c.l.b16 %v3714
    %v4034 = vunpack.c.h.b16 %v3714
    %v4035 = vunpack.c.l.b16 %v3715
    %v4036 = vunpack.c.h.b16 %v3715
    %v4037 = vunpack.c.l.b16 %v3716
    %v4038 = vunpack.c.h.b16 %v3716
    %v4039 = vunpack.c.l.b16 %v3717
    %v4040 = vunpack.c.h.b16 %v3717
    %v4041 = vunpack.c.l.b16 %v3718
    %v4042 = vunpack.c.h.b16 %v3718
    %v4043 = vunpack.c.l.b16 %v3719
    %v4044 = vunpack.c.h.b16 %v3719
    %v4045 = vunpack.c.l.b16 %v3720
    %v4046 = vunpack.c.h.b16 %v3720
    %v4047 = vunpack.c.l.b16 %v3721
    %v4048 = vunpack.c.h.b16 %v3721
    %v4049 = vunpack.c.l.b16 %v3722
    %v4050 = vunpack.c.h.b16 %v3722
    %v4051 = vunpack.c.l.b16 %v3723
    %v4052 = vunpack.c.h.b16 %v3723
    %v4053 = vunpack.c.l.b16 %v3724
    %v4054 = vunpack.c.h.b16 %v3724
    %v4055 = vunpack.c.l.b16 %v3725
    %v4056 = vunpack.c.h.b16 %v3725
    %v4057 = vpack.c.b16 %v3867, %v3865
    %v4058 = vpack.c.b16 %v3868, %v3866
    %v4059 = vpack.c.b16 %v3871, %v3869
    %v4060 = vpack.c.b16 %v3872, %v3870
    %v4061 = vpack.c.b16 %v3875, %v3873
    %v4062 = vpack.c.b16 %v3876, %v3874
    %v4063 = vpack.c.b16 %v3879, %v3877
    %v4064 = vpack.c.b16 %v3880, %v3878
    %v4065 = vpack.c.b16 %v3883, %v3881
    %v4066 = vpack.c.b16 %v3884, %v3882
    %v4067 = vpack.c.b16 %v3887, %v3885
    %v4068 = vpack.c.b16 %v3888, %v3886
    %v4069 = vpack.c.b16 %v3891, %v3889
    %v4070 = vpack.c.b16 %v3892, %v3890
    %v4071 = vpack.c.b16 %v3895, %v3893
    %v4072 = vpack.c.b16 %v3896, %v3894
    %v4073 = vpack.c.b16 %v3899, %v3897
    %v4074 = vpack.c.b16 %v3900, %v3898
    %v4075 = vpack.c.b16 %v3903, %v3901
    %v4076 = vpack.c.b16 %v3904, %v3902
    %v4077 = vpack.c.b16 %v3907, %v3905
    %v4078 = vpack.c.b16 %v3908, %v3906
    %v4079 = vpack.c.b16 %v3911, %v3909
    %v4080 = vpack.c.b16 %v3912, %v3910
    %v4081 = vpack.c.b16 %v3915, %v3913
    %v4082 = vpack.c.b16 %v3916, %v3914
    %v4083 = vpack.c.b16 %v3919, %v3917
    %v4084 = vpack.c.b16 %v3920, %v3918
    %v4085 = vpack.c.b16 %v3923, %v3921
    %v4086 = vpack.c.b16 %v3924, %v3922
    %v4087 = vpack.c.b16 %v3927, %v3925
    %v4088 = vpack.c.b16 %v3928, %v3926
    %v4089 = vpack.c.b16 %v3931, %v3929
    %v4090 = vpack.c.b16 %v3932, %v3930
    %v4091 = vpack.c.b16 %v3935, %v3933
    %v4092 = vpack.c.b16 %v3936, %v3934
    %v4093 = vpack.c.b16 %v3939, %v3937
    %v4094 = vpack.c.b16 %v3940, %v3938
    %v4095 = vpack.c.b16 %v3943, %v3941
    %v4096 = vpack.c.b16 %v3944, %v3942
    %v4097 = vpack.c.b16 %v3947, %v3945
    %v4098 = vpack.c.b16 %v3948, %v3946
    %v4099 = vpack.c.b16 %v3951, %v3949
    %v4100 = vpack.c.b16 %v3952, %v3950
    %v4101 = vpack.c.b16 %v3955, %v3953
    %v4102 = vpack.c.b16 %v3956, %v3954
    %v4103 = vpack.c.b16 %v3959, %v3957
    %v4104 = vpack.c.b16 %v3960, %v3958
    %v4105 = vpack.c.b16 %v3963, %v3961
    %v4106 = vpack.c.b16 %v3964, %v3962
    %v4107 = vpack.c.b16 %v3967, %v3965
    %v4108 = vpack.c.b16 %v3968, %v3966
    %v4109 = vpack.c.b16 %v3971, %v3969
    %v4110 = vpack.c.b16 %v3972, %v3970
    %v4111 = vpack.c.b16 %v3975, %v3973
    %v4112 = vpack.c.b16 %v3976, %v3974
    %v4113 = vpack.c.b16 %v3979, %v3977
    %v4114 = vpack.c.b16 %v3980, %v3978
    %v4115 = vpack.c.b16 %v3983, %v3981
    %v4116 = vpack.c.b16 %v3984, %v3982
    %v4117 = vpack.c.b16 %v3987, %v3985
    %v4118 = vpack.c.b16 %v3988, %v3986
    %v4119 = vpack.c.b16 %v3991, %v3989
    %v4120 = vpack.c.b16 %v3992, %v3990
    %v4121 = vpack.c.b16 %v3995, %v3993
    %v4122 = vpack.c.b16 %v3996, %v3994
    %v4123 = vpack.c.b16 %v3999, %v3997
    %v4124 = vpack.c.b16 %v4000, %v3998
    %v4125 = vpack.c.b16 %v4003, %v4001
    %v4126 = vpack.c.b16 %v4004, %v4002
    %v4127 = vpack.c.b16 %v4007, %v4005
    %v4128 = vpack.c.b16 %v4008, %v4006
    %v4129 = vpack.c.b16 %v4011, %v4009
    %v4130 = vpack.c.b16 %v4012, %v4010
    %v4131 = vpack.c.b16 %v4015, %v4013
    %v4132 = vpack.c.b16 %v4016, %v4014
    %v4133 = vpack.c.b16 %v4019, %v4017
    %v4134 = vpack.c.b16 %v4020, %v4018
    %v4135 = vpack.c.b16 %v4023, %v4021
    %v4136 = vpack.c.b16 %v4024, %v4022
    %v4137 = vpack.c.b16 %v4027, %v4025
    %v4138 = vpack.c.b16 %v4028, %v4026
    %v4139 = vpack.c.b16 %v4031, %v4029
    %v4140 = vpack.c.b16 %v4032, %v4030
    %v4141 = vpack.c.b16 %v4035, %v4033
    %v4142 = vpack.c.b16 %v4036, %v4034
    %v4143 = vpack.c.b16 %v4039, %v4037
    %v4144 = vpack.c.b16 %v4040, %v4038
    %v4145 = vpack.c.b16 %v4043, %v4041
    %v4146 = vpack.c.b16 %v4044, %v4042
    %v4147 = vpack.c.b16 %v4047, %v4045
    %v4148 = vpack.c.b16 %v4048, %v4046
    %v4149 = vpack.c.b16 %v4051, %v4049
    %v4150 = vpack.c.b16 %v4052, %v4050
    %v4151 = vpack.c.b16 %v4055, %v4053
    %v4152 = vpack.c.b16 %v4056, %v4054
    %4249 = vmatprep.subr.bf16.mxu0 %v4072
    %4250 = vmatpush1.bf16.msra.mxu0 %v4071
    %4251 = vmatprep.subr.bf16.mxu0 %v4070
    %4252 = vmatpush1.bf16.msra.mxu0 %v4069
    %4253 = vmatprep.subr.bf16.mxu0 %v4068
    %4254 = vmatpush1.bf16.msra.mxu0 %v4067
    %4255 = vmatprep.subr.bf16.mxu0 %v4066
    %4256 = vmatpush1.bf16.msra.mxu0 %v4065
    %4257 = vmatprep.subr.bf16.mxu0 %v4064
    %4258 = vmatpush1.bf16.msra.mxu0 %v4063
    %4259 = vmatprep.subr.bf16.mxu0 %v4062
    %4260 = vmatpush1.bf16.msra.mxu0 %v4061
    %4261 = vmatprep.subr.bf16.mxu0 %v4060
    %4262 = vmatpush1.bf16.msra.mxu0 %v4059
    %4263 = vmatprep.subr.bf16.mxu0 %v4058
    %4264 = vmatpush1.bf16.msra.mxu0 %v4057
    %4265 = vmatprep.subr.bf16.mxu0 %v4088
    %4266 = vmatpush2.bf16.msra.mxu0 %v4087
    %4267 = vmatprep.subr.bf16.mxu0 %v4086
    %4268 = vmatpush2.bf16.msra.mxu0 %v4085
    %4269 = vmatprep.subr.bf16.mxu0 %v4084
    %4270 = vmatpush2.bf16.msra.mxu0 %v4083
    %4271 = vmatprep.subr.bf16.mxu0 %v4082
    %4272 = vmatpush2.bf16.msra.mxu0 %v4081
    %4273 = vmatprep.subr.bf16.mxu0 %v4080
    %4274 = vmatpush2.bf16.msra.mxu0 %v4079
    %4275 = vmatprep.subr.bf16.mxu0 %v4078
    %4276 = vmatpush2.bf16.msra.mxu0 %v4077
    %4277 = vmatprep.subr.bf16.mxu0 %v4076
    %4278 = vmatpush2.bf16.msra.mxu0 %v4075
    %4279 = vmatprep.subr.bf16.mxu0 %v4074
    %4280 = vmatpush2.bf16.msra.mxu0 %v4073
    %4281 = vmatprep.mubr.bf16.mxu0 %v3758
    %4282 = vmatmul.mubr.bf16.gmra.mxu0 %v3757
    %v4283 = vpop.f32.mrf.mxu0
    %v4284 = vadd.f32 %v3732, %v4283
    %v4285 = vpop.f32.mrf.mxu0
    %v4286 = vadd.f32 %v3736, %v4285
    %v4287 = vpop.f32.mrf.mxu0
    %v4288 = vadd.f32 %v3732, %v4287
    %v4289 = vpop.f32.mrf.mxu0
    %v4290 = vadd.f32 %v3736, %v4289
    %4291 = vdwg.mxu0
    %4292 = vmatprep.subr.bf16.mxu0 %v4104
    %4293 = vmatpush1.bf16.msra.mxu0 %v4103
    %4294 = vmatprep.subr.bf16.mxu0 %v4102
    %4295 = vmatpush1.bf16.msra.mxu0 %v4101
    %4296 = vmatprep.subr.bf16.mxu0 %v4100
    %4297 = vmatpush1.bf16.msra.mxu0 %v4099
    %4298 = vmatprep.subr.bf16.mxu0 %v4098
    %4299 = vmatpush1.bf16.msra.mxu0 %v4097
    %4300 = vmatprep.subr.bf16.mxu0 %v4096
    %4301 = vmatpush1.bf16.msra.mxu0 %v4095
    %4302 = vmatprep.subr.bf16.mxu0 %v4094
    %4303 = vmatpush1.bf16.msra.mxu0 %v4093
    %4304 = vmatprep.subr.bf16.mxu0 %v4092
    %4305 = vmatpush1.bf16.msra.mxu0 %v4091
    %4306 = vmatprep.subr.bf16.mxu0 %v4090
    %4307 = vmatpush1.bf16.msra.mxu0 %v4089
    %4308 = vmatprep.subr.bf16.mxu0 %v4120
    %4309 = vmatpush2.bf16.msra.mxu0 %v4119
    %4310 = vmatprep.subr.bf16.mxu0 %v4118
    %4311 = vmatpush2.bf16.msra.mxu0 %v4117
    %4312 = vmatprep.subr.bf16.mxu0 %v4116
    %4313 = vmatpush2.bf16.msra.mxu0 %v4115
    %4314 = vmatprep.subr.bf16.mxu0 %v4114
    %4315 = vmatpush2.bf16.msra.mxu0 %v4113
    %4316 = vmatprep.subr.bf16.mxu0 %v4112
    %4317 = vmatpush2.bf16.msra.mxu0 %v4111
    %4318 = vmatprep.subr.bf16.mxu0 %v4110
    %4319 = vmatpush2.bf16.msra.mxu0 %v4109
    %4320 = vmatprep.subr.bf16.mxu0 %v4108
    %4321 = vmatpush2.bf16.msra.mxu0 %v4107
    %4322 = vmatprep.subr.bf16.mxu0 %v4106
    %4323 = vmatpush2.bf16.msra.mxu0 %v4105
    %4324 = vmatprep.mubr.bf16.mxu0 %v3760
    %4325 = vmatmul.mubr.bf16.gmra.mxu0 %v3759
    %v4326 = vpop.f32.mrf.mxu0
    %v4327 = vadd.f32 %v4284, %v4326
    %v4328 = vpop.f32.mrf.mxu0
    %v4329 = vadd.f32 %v4286, %v4328
    %v4330 = vpop.f32.mrf.mxu0
    %v4331 = vadd.f32 %v4288, %v4330
    %v4332 = vpop.f32.mrf.mxu0
    %v4333 = vadd.f32 %v4290, %v4332
    %4334 = vdwg.mxu0
    %4335 = vmatprep.subr.bf16.mxu0 %v4136
    %4336 = vmatpush1.bf16.msra.mxu0 %v4135
    %4337 = vmatprep.subr.bf16.mxu0 %v4134
    %4338 = vmatpush1.bf16.msra.mxu0 %v4133
    %4339 = vmatprep.subr.bf16.mxu0 %v4132
    %4340 = vmatpush1.bf16.msra.mxu0 %v4131
    %4341 = vmatprep.subr.bf16.mxu0 %v4130
    %4342 = vmatpush1.bf16.msra.mxu0 %v4129
    %4343 = vmatprep.subr.bf16.mxu0 %v4128
    %4344 = vmatpush1.bf16.msra.mxu0 %v4127
    %4345 = vmatprep.subr.bf16.mxu0 %v4126
    %4346 = vmatpush1.bf16.msra.mxu0 %v4125
    %4347 = vmatprep.subr.bf16.mxu0 %v4124
    %4348 = vmatpush1.bf16.msra.mxu0 %v4123
    %4349 = vmatprep.subr.bf16.mxu0 %v4122
    %4350 = vmatpush1.bf16.msra.mxu0 %v4121
    %4351 = vmatprep.subr.bf16.mxu0 %v4152
    %4352 = vmatpush2.bf16.msra.mxu0 %v4151
    %4353 = vmatprep.subr.bf16.mxu0 %v4150
    %4354 = vmatpush2.bf16.msra.mxu0 %v4149
    %4355 = vmatprep.subr.bf16.mxu0 %v4148
    %4356 = vmatpush2.bf16.msra.mxu0 %v4147
    %4357 = vmatprep.subr.bf16.mxu0 %v4146
    %4358 = vmatpush2.bf16.msra.mxu0 %v4145
    %4359 = vmatprep.subr.bf16.mxu0 %v4144
    %4360 = vmatpush2.bf16.msra.mxu0 %v4143
    %4361 = vmatprep.subr.bf16.mxu0 %v4142
    %4362 = vmatpush2.bf16.msra.mxu0 %v4141
    %4363 = vmatprep.subr.bf16.mxu0 %v4140
    %4364 = vmatpush2.bf16.msra.mxu0 %v4139
    %4365 = vmatprep.subr.bf16.mxu0 %v4138
    %4366 = vmatpush2.bf16.msra.mxu0 %v4137
    %4367 = vmatprep.mubr.bf16.mxu0 %v3762
    %4368 = vmatmul.mubr.bf16.gmra.mxu0 %v3761
    %v4369 = vpop.f32.mrf.mxu0
    %v4370 = vadd.f32 %v4327, %v4369
    %v4371 = vpop.f32.mrf.mxu0
    %v4372 = vadd.f32 %v4329, %v4371
    %v4373 = vpop.f32.mrf.mxu0
    %v4374 = vadd.f32 %v4331, %v4373
    %v4375 = vpop.f32.mrf.mxu0
    %v4376 = vadd.f32 %v4333, %v4375
    %4377 = vdwg.mxu0
    %v4378 = vxor.u32 %v4370, 2147483648
    %v4379 = vxor.u32 %v4372, 2147483648
    %v4380 = vxor.u32 %v4374, 2147483648
    %v4381 = vxor.u32 %v4376, 2147483648
    %v4382 = vmul.f32 %v4378, 1.442695
    %v4383 = vpow.pop %v4382
    %v4384 = vmul.f32 %v4379, 1.442695
    %v4385 = vpow.pop %v4384
    %v4386 = vmul.f32 %v4380, 1.442695
    %v4387 = vpow.pop %v4386
    %v4388 = vmul.f32 %v4381, 1.442695
    %v4389 = vpow.pop %v4388
    %v4390 = vadd.f32 %v4383, 1.0
    %v4391 = vadd.f32 %v4385, 1.0
    %v4392 = vadd.f32 %v4387, 1.0
    %v4393 = vadd.f32 %v4389, 1.0
    %v4394 = vrcp.pop %v4390
    %v4395 = vmul.f32 1.0, %v4394
    %v4396 = vrcp.pop %v4391
    %v4397 = vmul.f32 1.0, %v4396
    %v4398 = vrcp.pop %v4392
    %v4399 = vmul.f32 1.0, %v4398
    %v4400 = vrcp.pop %v4393
    %v4401 = vmul.f32 1.0, %v4400
    %v4402 = vmul.f32 %v4370, %v4395
    %v4403 = vmul.f32 %v4372, %v4397
    %v4404 = vmul.f32 %v4374, %v4399
    %v4405 = vmul.f32 %v4376, %v4401
    %v4406 = vpack.c.bf16 %v4404, %v4402
    %v4407 = vpack.c.bf16 %v4405, %v4403
    %v4408 = vld [vmem:[#allocation5 + $0xf0] sm:$0xf]
    %v4409 = vld [vmem:[#allocation5 + $0xf8] sm:$0xf]
    %v4412 = vunpack.c.l.b16 %v4408
    %v4413 = vunpack.c.l.b16 %v4409
    %v4414 = vpack.c.b16 %v4413, %v4412
    %v4416 = vsel %vm3155, %v4414, 0
    %4418 = vmatprep.subr.bf16.mxu0 0
    %4419 = vmatpush1.bf16.msra.mxu0 0
    %4420 = vmatprep.subr.bf16.mxu0 0
    %4421 = vmatpush1.bf16.msra.mxu0 0
    %4422 = vmatprep.subr.bf16.mxu0 0
    %4423 = vmatpush1.bf16.msra.mxu0 0
    %4424 = vmatprep.subr.bf16.mxu0 0
    %4425 = vmatpush1.bf16.msra.mxu0 0
    %4426 = vmatprep.subr.bf16.mxu0 0
    %4427 = vmatpush1.bf16.msra.mxu0 0
    %4428 = vmatprep.subr.bf16.mxu0 0
    %4429 = vmatpush1.bf16.msra.mxu0 0
    %4430 = vmatprep.subr.bf16.mxu0 0
    %4431 = vmatpush1.bf16.msra.mxu0 0
    %4432 = vmatprep.subr.bf16.mxu0 %v4407
    %4433 = vmatpush1.bf16.msra.mxu0 %v4406
    %4434 = vmatprep.subr.bf16.mxu0 0
    %4435 = vmatpush2.bf16.msra.mxu0 0
    %4436 = vmatprep.subr.bf16.mxu0 0
    %4437 = vmatpush2.bf16.msra.mxu0 0
    %4438 = vmatprep.subr.bf16.mxu0 0
    %4439 = vmatpush2.bf16.msra.mxu0 0
    %4440 = vmatprep.subr.bf16.mxu0 0
    %4441 = vmatpush2.bf16.msra.mxu0 0
    %4442 = vmatprep.subr.bf16.mxu0 0
    %4443 = vmatpush2.bf16.msra.mxu0 0
    %4444 = vmatprep.subr.bf16.mxu0 0
    %4445 = vmatpush2.bf16.msra.mxu0 0
    %4446 = vmatprep.subr.bf16.mxu0 0
    %4447 = vmatpush2.bf16.msra.mxu0 0
    %4448 = vmatprep.subr.bf16.mxu0 0
    %4449 = vmatpush2.bf16.msra.mxu0 0
    %4450 = vmatprep.mubr.bf16.mxu0 0
    %4451 = vmatmul.mubr.bf16.gmra.mxu0 %v4416
    %v4452 = vpop.f32.mrf.mxu0
    %v4453 = vadd.f32 0.0, %v4452
    %v4454 = vpop.f32.mrf.mxu0
    %v4455 = vadd.f32 0.0, %v4454
    %v4456 = vpop.f32.mrf.mxu0
    %v4457 = vadd.f32 0.0, %v4456
    %v4458 = vpop.f32.mrf.mxu0
    %v4459 = vadd.f32 0.0, %v4458
    %4460 = vdwg.mxu0
    %v4461 = vpack.c.bf16 %v4457, %v4453
    %v4462 = vpack.c.bf16 %v4459, %v4455
    %v4465 = vunpack.c.l.b16 %v4461
    %v4466 = vunpack.c.l.b16 %v4462
    %v4467 = vunpack.c.h.b16 %v4461
    %v4468 = vunpack.c.h.b16 %v4462
    %v4469 = vpack.c.b16 %v4466, %v4465
    %v4470 = vpack.c.b16 %v4468, %v4467
    %4473 = vst [vmem:[#allocation2] sm:$0xff] %v4469
    %4474 = vst [vmem:[#allocation2 + $0x18] sm:$0xff] %v4470
    %v4475 = vld [vmem:[#allocation5 + $0x100] sm:$0xf]
    %v4476 = vld [vmem:[#allocation5 + $0x108] sm:$0xf]
    %v4479 = vunpack.c.l.b16 %v4475
    %v4480 = vunpack.c.l.b16 %v4476
    %v4481 = vpack.c.b16 %v4480, %v4479
    %v4483 = vsel %vm3155, %v4481, 0
    %4485 = vmatprep.subr.bf16.mxu0 0
    %4486 = vmatpush1.bf16.msra.mxu0 0
    %4487 = vmatprep.subr.bf16.mxu0 0
    %4488 = vmatpush1.bf16.msra.mxu0 0
    %4489 = vmatprep.subr.bf16.mxu0 0
    %4490 = vmatpush1.bf16.msra.mxu0 0
    %4491 = vmatprep.subr.bf16.mxu0 0
    %4492 = vmatpush1.bf16.msra.mxu0 0
    %4493 = vmatprep.subr.bf16.mxu0 0
    %4494 = vmatpush1.bf16.msra.mxu0 0
    %4495 = vmatprep.subr.bf16.mxu0 0
    %4496 = vmatpush1.bf16.msra.mxu0 0
    %4497 = vmatprep.subr.bf16.mxu0 0
    %4498 = vmatpush1.bf16.msra.mxu0 0
    %4499 = vmatprep.subr.bf16.mxu0 %v4407
    %4500 = vmatpush1.bf16.msra.mxu0 %v4406
    %4501 = vmatprep.subr.bf16.mxu0 0
    %4502 = vmatpush2.bf16.msra.mxu0 0
    %4503 = vmatprep.subr.bf16.mxu0 0
    %4504 = vmatpush2.bf16.msra.mxu0 0
    %4505 = vmatprep.subr.bf16.mxu0 0
    %4506 = vmatpush2.bf16.msra.mxu0 0
    %4507 = vmatprep.subr.bf16.mxu0 0
    %4508 = vmatpush2.bf16.msra.mxu0 0
    %4509 = vmatprep.subr.bf16.mxu0 0
    %4510 = vmatpush2.bf16.msra.mxu0 0
    %4511 = vmatprep.subr.bf16.mxu0 0
    %4512 = vmatpush2.bf16.msra.mxu0 0
    %4513 = vmatprep.subr.bf16.mxu0 0
    %4514 = vmatpush2.bf16.msra.mxu0 0
    %4515 = vmatprep.subr.bf16.mxu0 0
    %4516 = vmatpush2.bf16.msra.mxu0 0
    %4517 = vmatprep.mubr.bf16.mxu0 0
    %4518 = vmatmul.mubr.bf16.gmra.mxu0 %v4483
    %v4519 = vpop.f32.mrf.mxu0
    %v4520 = vadd.f32 0.0, %v4519
    %v4521 = vpop.f32.mrf.mxu0
    %v4522 = vadd.f32 0.0, %v4521
    %v4523 = vpop.f32.mrf.mxu0
    %v4524 = vadd.f32 0.0, %v4523
    %v4525 = vpop.f32.mrf.mxu0
    %v4526 = vadd.f32 0.0, %v4525
    %4527 = vdwg.mxu0
    %v4528 = vpack.c.bf16 %v4524, %v4520
    %v4529 = vpack.c.bf16 %v4526, %v4522
    %v4532 = vunpack.c.l.b16 %v4528
    %v4533 = vunpack.c.l.b16 %v4529
    %v4534 = vunpack.c.h.b16 %v4528
    %v4535 = vunpack.c.h.b16 %v4529
    %v4536 = vpack.c.b16 %v4533, %v4532
    %v4537 = vpack.c.b16 %v4535, %v4534
    %4540 = vst [vmem:[#allocation2 + $0x8] sm:$0xff] %v4536
    %4541 = vst [vmem:[#allocation2 + $0x20] sm:$0xff] %v4537
    %v4542 = vld [vmem:[#allocation5 + $0x110] sm:$0xf]
    %v4543 = vld [vmem:[#allocation5 + $0x118] sm:$0xf]
    %v4546 = vunpack.c.l.b16 %v4542
    %v4547 = vunpack.c.l.b16 %v4543
    %v4548 = vpack.c.b16 %v4547, %v4546
    %v4550 = vsel %vm3155, %v4548, 0
    %4552 = vmatprep.subr.bf16.mxu0 0
    %4553 = vmatpush1.bf16.msra.mxu0 0
    %4554 = vmatprep.subr.bf16.mxu0 0
    %4555 = vmatpush1.bf16.msra.mxu0 0
    %4556 = vmatprep.subr.bf16.mxu0 0
    %4557 = vmatpush1.bf16.msra.mxu0 0
    %4558 = vmatprep.subr.bf16.mxu0 0
    %4559 = vmatpush1.bf16.msra.mxu0 0
    %4560 = vmatprep.subr.bf16.mxu0 0
    %4561 = vmatpush1.bf16.msra.mxu0 0
    %4562 = vmatprep.subr.bf16.mxu0 0
    %4563 = vmatpush1.bf16.msra.mxu0 0
    %4564 = vmatprep.subr.bf16.mxu0 0
    %4565 = vmatpush1.bf16.msra.mxu0 0
    %4566 = vmatprep.subr.bf16.mxu0 %v4407
    %4567 = vmatpush1.bf16.msra.mxu0 %v4406
    %4568 = vmatprep.subr.bf16.mxu0 0
    %4569 = vmatpush2.bf16.msra.mxu0 0
    %4570 = vmatprep.subr.bf16.mxu0 0
    %4571 = vmatpush2.bf16.msra.mxu0 0
    %4572 = vmatprep.subr.bf16.mxu0 0
    %4573 = vmatpush2.bf16.msra.mxu0 0
    %4574 = vmatprep.subr.bf16.mxu0 0
    %4575 = vmatpush2.bf16.msra.mxu0 0
    %4576 = vmatprep.subr.bf16.mxu0 0
    %4577 = vmatpush2.bf16.msra.mxu0 0
    %4578 = vmatprep.subr.bf16.mxu0 0
    %4579 = vmatpush2.bf16.msra.mxu0 0
    %4580 = vmatprep.subr.bf16.mxu0 0
    %4581 = vmatpush2.bf16.msra.mxu0 0
    %4582 = vmatprep.subr.bf16.mxu0 0
    %4583 = vmatpush2.bf16.msra.mxu0 0
    %4584 = vmatprep.mubr.bf16.mxu0 0
    %4585 = vmatmul.mubr.bf16.gmra.mxu0 %v4550
    %v4586 = vpop.f32.mrf.mxu0
    %v4587 = vadd.f32 0.0, %v4586
    %v4588 = vpop.f32.mrf.mxu0
    %v4589 = vadd.f32 0.0, %v4588
    %v4590 = vpop.f32.mrf.mxu0
    %v4591 = vadd.f32 0.0, %v4590
    %v4592 = vpop.f32.mrf.mxu0
    %v4593 = vadd.f32 0.0, %v4592
    %4594 = vdwg.mxu0
    %v4595 = vpack.c.bf16 %v4591, %v4587
    %v4596 = vpack.c.bf16 %v4593, %v4589
    %v4599 = vunpack.c.l.b16 %v4595
    %v4600 = vunpack.c.l.b16 %v4596
    %v4601 = vunpack.c.h.b16 %v4595
    %v4602 = vunpack.c.h.b16 %v4596
    %v4603 = vpack.c.b16 %v4600, %v4599
    %v4604 = vpack.c.b16 %v4602, %v4601
    %4607 = vst [vmem:[#allocation2 + $0x10] sm:$0xff] %v4603
    %4608 = vst [vmem:[#allocation2 + $0x28] sm:$0xff] %v4604
    %v4609 = vld [vmem:[#allocation2] sm:$0xff]
    %v4610 = vld [vmem:[#allocation2 + $0x8] sm:$0xff]
    %v4611 = vld [vmem:[#allocation2 + $0x10] sm:$0xff]
    %v4612 = vld [vmem:[#allocation2 + $0x18] sm:$0xff]
    %v4613 = vld [vmem:[#allocation2 + $0x20] sm:$0xff]
    %v4614 = vld [vmem:[#allocation2 + $0x28] sm:$0xff]
    %v4615 = vld [vmem:[#allocation5 + $0xab0] sm:$0xff]
    %v4616 = vld [vmem:[#allocation5 + $0xab8] sm:$0xff]
    %v4617 = vld [vmem:[#allocation5 + $0xac0] sm:$0xff]
    %v4618 = vld [vmem:[#allocation5 + $0xac8] sm:$0xff]
    %v4619 = vld [vmem:[#allocation5 + $0xad0] sm:$0xff]
    %v4620 = vld [vmem:[#allocation5 + $0xad8] sm:$0xff]
    %v4621 = vld [vmem:[#allocation5 + $0xae0] sm:$0xff]
    %v4622 = vld [vmem:[#allocation5 + $0xae8] sm:$0xff]
    %v4623 = vld [vmem:[#allocation5 + $0xaf0] sm:$0xff]
    %v4624 = vld [vmem:[#allocation5 + $0xaf8] sm:$0xff]
    %v4625 = vld [vmem:[#allocation5 + $0xb00] sm:$0xff]
    %v4626 = vld [vmem:[#allocation5 + $0xb08] sm:$0xff]
    %v4627 = vld [vmem:[#allocation5 + $0xb10] sm:$0xff]
    %v4628 = vld [vmem:[#allocation5 + $0xb18] sm:$0xff]
    %v4629 = vld [vmem:[#allocation5 + $0xb20] sm:$0xff]
    %v4630 = vld [vmem:[#allocation5 + $0xb28] sm:$0xff]
    %v4631 = vld [vmem:[#allocation5 + $0xb30] sm:$0xff]
    %v4632 = vld [vmem:[#allocation5 + $0xb38] sm:$0xff]
    %v4633 = vld [vmem:[#allocation5 + $0xb40] sm:$0xff]
    %v4634 = vld [vmem:[#allocation5 + $0xb48] sm:$0xff]
    %v4635 = vld [vmem:[#allocation5 + $0xb50] sm:$0xff]
    %v4636 = vld [vmem:[#allocation5 + $0xb58] sm:$0xff]
    %v4637 = vld [vmem:[#allocation5 + $0xb60] sm:$0xff]
    %v4638 = vld [vmem:[#allocation5 + $0xb68] sm:$0xff]
    %v4639 = vld [vmem:[#allocation5 + $0xb70] sm:$0xff]
    %v4640 = vld [vmem:[#allocation5 + $0xb78] sm:$0xff]
    %v4641 = vld [vmem:[#allocation5 + $0xb80] sm:$0xff]
    %v4642 = vld [vmem:[#allocation5 + $0xb88] sm:$0xff]
    %v4643 = vld [vmem:[#allocation5 + $0xb90] sm:$0xff]
    %v4644 = vld [vmem:[#allocation5 + $0xb98] sm:$0xff]
    %v4645 = vld [vmem:[#allocation5 + $0xba0] sm:$0xff]
    %v4646 = vld [vmem:[#allocation5 + $0xba8] sm:$0xff]
    %v4647 = vld [vmem:[#allocation5 + $0xbb0] sm:$0xff]
    %v4648 = vld [vmem:[#allocation5 + $0xbb8] sm:$0xff]
    %v4649 = vld [vmem:[#allocation5 + $0xbc0] sm:$0xff]
    %v4650 = vld [vmem:[#allocation5 + $0xbc8] sm:$0xff]
    %v4651 = vld [vmem:[#allocation5 + $0xbd0] sm:$0xff]
    %v4652 = vld [vmem:[#allocation5 + $0xbd8] sm:$0xff]
    %v4653 = vld [vmem:[#allocation5 + $0xbe0] sm:$0xff]
    %v4654 = vld [vmem:[#allocation5 + $0xbe8] sm:$0xff]
    %v4655 = vld [vmem:[#allocation5 + $0xbf0] sm:$0xff]
    %v4656 = vld [vmem:[#allocation5 + $0xbf8] sm:$0xff]
    %v4657 = vld [vmem:[#allocation5 + $0xc00] sm:$0xff]
    %v4658 = vld [vmem:[#allocation5 + $0xc08] sm:$0xff]
    %v4659 = vld [vmem:[#allocation5 + $0xc10] sm:$0xff]
    %v4660 = vld [vmem:[#allocation5 + $0xc18] sm:$0xff]
    %v4661 = vld [vmem:[#allocation5 + $0xc20] sm:$0xff]
    %v4662 = vld [vmem:[#allocation5 + $0xc28] sm:$0xff]
    %v4663 = vld [vmem:[#allocation5 + $0xc30] sm:$0xff]
    %v4664 = vld [vmem:[#allocation5 + $0xc38] sm:$0xff]
    %v4665 = vld [vmem:[#allocation5 + $0xc40] sm:$0xff]
    %v4666 = vld [vmem:[#allocation5 + $0xc48] sm:$0xff]
    %v4667 = vld [vmem:[#allocation5 + $0xc50] sm:$0xff]
    %v4668 = vld [vmem:[#allocation5 + $0xc58] sm:$0xff]
    %v4669 = vld [vmem:[#allocation5 + $0xc60] sm:$0xff]
    %v4670 = vld [vmem:[#allocation5 + $0xc68] sm:$0xff]
    %v4671 = vld [vmem:[#allocation5 + $0xc70] sm:$0xff]
    %v4672 = vld [vmem:[#allocation5 + $0xc78] sm:$0xff]
    %v4673 = vld [vmem:[#allocation5 + $0xc80] sm:$0xff]
    %v4674 = vld [vmem:[#allocation5 + $0xc88] sm:$0xff]
    %v4675 = vld [vmem:[#allocation5 + $0xc90] sm:$0xff]
    %v4676 = vld [vmem:[#allocation5 + $0xc98] sm:$0xff]
    %v4677 = vld [vmem:[#allocation5 + $0xca0] sm:$0xff]
    %v4678 = vld [vmem:[#allocation5 + $0xca8] sm:$0xff]
    %v4679 = vld [vmem:[#allocation5 + $0xcb0] sm:$0xff]
    %v4680 = vld [vmem:[#allocation5 + $0xcb8] sm:$0xff]
    %v4681 = vld [vmem:[#allocation5 + $0xcc0] sm:$0xff]
    %v4682 = vld [vmem:[#allocation5 + $0xcc8] sm:$0xff]
    %v4683 = vld [vmem:[#allocation5 + $0xcd0] sm:$0xff]
    %v4684 = vld [vmem:[#allocation5 + $0xcd8] sm:$0xff]
    %v4685 = vld [vmem:[#allocation5 + $0xce0] sm:$0xff]
    %v4686 = vld [vmem:[#allocation5 + $0xce8] sm:$0xff]
    %v4687 = vld [vmem:[#allocation5 + $0xcf0] sm:$0xff]
    %v4688 = vld [vmem:[#allocation5 + $0xcf8] sm:$0xff]
    %v4689 = vld [vmem:[#allocation5 + $0xd00] sm:$0xff]
    %v4690 = vld [vmem:[#allocation5 + $0xd08] sm:$0xff]
    %v4691 = vld [vmem:[#allocation5 + $0xd10] sm:$0xff]
    %v4692 = vld [vmem:[#allocation5 + $0xd18] sm:$0xff]
    %v4693 = vld [vmem:[#allocation5 + $0xd20] sm:$0xff]
    %v4694 = vld [vmem:[#allocation5 + $0xd28] sm:$0xff]
    %v4695 = vld [vmem:[#allocation5 + $0xd30] sm:$0xff]
    %v4696 = vld [vmem:[#allocation5 + $0xd38] sm:$0xff]
    %v4697 = vld [vmem:[#allocation5 + $0xd40] sm:$0xff]
    %v4698 = vld [vmem:[#allocation5 + $0xd48] sm:$0xff]
    %v4699 = vld [vmem:[#allocation5 + $0xd50] sm:$0xff]
    %v4700 = vld [vmem:[#allocation5 + $0xd58] sm:$0xff]
    %v4701 = vld [vmem:[#allocation5 + $0xd60] sm:$0xff]
    %v4702 = vld [vmem:[#allocation5 + $0xd68] sm:$0xff]
    %v4703 = vld [vmem:[#allocation5 + $0xd70] sm:$0xff]
    %v4704 = vld [vmem:[#allocation5 + $0xd78] sm:$0xff]
    %v4705 = vld [vmem:[#allocation5 + $0xd80] sm:$0xff]
    %v4706 = vld [vmem:[#allocation5 + $0xd88] sm:$0xff]
    %v4707 = vld [vmem:[#allocation5 + $0xd90] sm:$0xff]
    %v4708 = vld [vmem:[#allocation5 + $0xd98] sm:$0xff]
    %v4709 = vld [vmem:[#allocation5 + $0xda0] sm:$0xff]
    %v4710 = vld [vmem:[#allocation5 + $0xda8] sm:$0xff]
    %s4711 = scalar_lea.vmem [#allocation7], 64
    %v4712 = vld [vmem:[%s4711] ss:$8 sm:$0x3]
    %v4714 = vlaneseq
    %v4715 = vshrl.u32 %v4714, 7
    %v4716 = vsub.s32 0, %v4715
    %v4717 = vrot.slane %v4712, %v4716
    %v4718 = vlaneseq
    %v4719 = vshrl.u32 %v4718, 7
    %v4720 = vsub.s32 1, %v4719
    %v4721 = vrot.slane %v4712, %v4720
    %v4730 = vunpack.c.l.b16 %v4609
    %v4731 = vunpack.c.h.b16 %v4609
    %v4732 = vunpack.c.l.b16 %v4610
    %v4733 = vunpack.c.h.b16 %v4610
    %v4734 = vunpack.c.l.b16 %v4611
    %v4735 = vunpack.c.h.b16 %v4611
    %v4736 = vunpack.c.l.b16 %v4612
    %v4737 = vunpack.c.h.b16 %v4612
    %v4738 = vunpack.c.l.b16 %v4613
    %v4739 = vunpack.c.h.b16 %v4613
    %v4740 = vunpack.c.l.b16 %v4614
    %v4741 = vunpack.c.h.b16 %v4614
    %v4742 = vpack.c.b16 %v4736, %v4730
    %v4743 = vpack.c.b16 %v4737, %v4731
    %v4744 = vpack.c.b16 %v4738, %v4732
    %v4745 = vpack.c.b16 %v4739, %v4733
    %v4746 = vpack.c.b16 %v4740, %v4734
    %v4747 = vpack.c.b16 %v4741, %v4735
    %v4850 = vunpack.c.l.b16 %v4615
    %v4851 = vunpack.c.h.b16 %v4615
    %v4852 = vunpack.c.l.b16 %v4616
    %v4853 = vunpack.c.h.b16 %v4616
    %v4854 = vunpack.c.l.b16 %v4617
    %v4855 = vunpack.c.h.b16 %v4617
    %v4856 = vunpack.c.l.b16 %v4618
    %v4857 = vunpack.c.h.b16 %v4618
    %v4858 = vunpack.c.l.b16 %v4619
    %v4859 = vunpack.c.h.b16 %v4619
    %v4860 = vunpack.c.l.b16 %v4620
    %v4861 = vunpack.c.h.b16 %v4620
    %v4862 = vunpack.c.l.b16 %v4621
    %v4863 = vunpack.c.h.b16 %v4621
    %v4864 = vunpack.c.l.b16 %v4622
    %v4865 = vunpack.c.h.b16 %v4622
    %v4866 = vunpack.c.l.b16 %v4623
    %v4867 = vunpack.c.h.b16 %v4623
    %v4868 = vunpack.c.l.b16 %v4624
    %v4869 = vunpack.c.h.b16 %v4624
    %v4870 = vunpack.c.l.b16 %v4625
    %v4871 = vunpack.c.h.b16 %v4625
    %v4872 = vunpack.c.l.b16 %v4626
    %v4873 = vunpack.c.h.b16 %v4626
    %v4874 = vunpack.c.l.b16 %v4627
    %v4875 = vunpack.c.h.b16 %v4627
    %v4876 = vunpack.c.l.b16 %v4628
    %v4877 = vunpack.c.h.b16 %v4628
    %v4878 = vunpack.c.l.b16 %v4629
    %v4879 = vunpack.c.h.b16 %v4629
    %v4880 = vunpack.c.l.b16 %v4630
    %v4881 = vunpack.c.h.b16 %v4630
    %v4882 = vunpack.c.l.b16 %v4631
    %v4883 = vunpack.c.h.b16 %v4631
    %v4884 = vunpack.c.l.b16 %v4632
    %v4885 = vunpack.c.h.b16 %v4632
    %v4886 = vunpack.c.l.b16 %v4633
    %v4887 = vunpack.c.h.b16 %v4633
    %v4888 = vunpack.c.l.b16 %v4634
    %v4889 = vunpack.c.h.b16 %v4634
    %v4890 = vunpack.c.l.b16 %v4635
    %v4891 = vunpack.c.h.b16 %v4635
    %v4892 = vunpack.c.l.b16 %v4636
    %v4893 = vunpack.c.h.b16 %v4636
    %v4894 = vunpack.c.l.b16 %v4637
    %v4895 = vunpack.c.h.b16 %v4637
    %v4896 = vunpack.c.l.b16 %v4638
    %v4897 = vunpack.c.h.b16 %v4638
    %v4898 = vunpack.c.l.b16 %v4639
    %v4899 = vunpack.c.h.b16 %v4639
    %v4900 = vunpack.c.l.b16 %v4640
    %v4901 = vunpack.c.h.b16 %v4640
    %v4902 = vunpack.c.l.b16 %v4641
    %v4903 = vunpack.c.h.b16 %v4641
    %v4904 = vunpack.c.l.b16 %v4642
    %v4905 = vunpack.c.h.b16 %v4642
    %v4906 = vunpack.c.l.b16 %v4643
    %v4907 = vunpack.c.h.b16 %v4643
    %v4908 = vunpack.c.l.b16 %v4644
    %v4909 = vunpack.c.h.b16 %v4644
    %v4910 = vunpack.c.l.b16 %v4645
    %v4911 = vunpack.c.h.b16 %v4645
    %v4912 = vunpack.c.l.b16 %v4646
    %v4913 = vunpack.c.h.b16 %v4646
    %v4914 = vunpack.c.l.b16 %v4647
    %v4915 = vunpack.c.h.b16 %v4647
    %v4916 = vunpack.c.l.b16 %v4648
    %v4917 = vunpack.c.h.b16 %v4648
    %v4918 = vunpack.c.l.b16 %v4649
    %v4919 = vunpack.c.h.b16 %v4649
    %v4920 = vunpack.c.l.b16 %v4650
    %v4921 = vunpack.c.h.b16 %v4650
    %v4922 = vunpack.c.l.b16 %v4651
    %v4923 = vunpack.c.h.b16 %v4651
    %v4924 = vunpack.c.l.b16 %v4652
    %v4925 = vunpack.c.h.b16 %v4652
    %v4926 = vunpack.c.l.b16 %v4653
    %v4927 = vunpack.c.h.b16 %v4653
    %v4928 = vunpack.c.l.b16 %v4654
    %v4929 = vunpack.c.h.b16 %v4654
    %v4930 = vunpack.c.l.b16 %v4655
    %v4931 = vunpack.c.h.b16 %v4655
    %v4932 = vunpack.c.l.b16 %v4656
    %v4933 = vunpack.c.h.b16 %v4656
    %v4934 = vunpack.c.l.b16 %v4657
    %v4935 = vunpack.c.h.b16 %v4657
    %v4936 = vunpack.c.l.b16 %v4658
    %v4937 = vunpack.c.h.b16 %v4658
    %v4938 = vunpack.c.l.b16 %v4659
    %v4939 = vunpack.c.h.b16 %v4659
    %v4940 = vunpack.c.l.b16 %v4660
    %v4941 = vunpack.c.h.b16 %v4660
    %v4942 = vunpack.c.l.b16 %v4661
    %v4943 = vunpack.c.h.b16 %v4661
    %v4944 = vunpack.c.l.b16 %v4662
    %v4945 = vunpack.c.h.b16 %v4662
    %v4946 = vunpack.c.l.b16 %v4663
    %v4947 = vunpack.c.h.b16 %v4663
    %v4948 = vunpack.c.l.b16 %v4664
    %v4949 = vunpack.c.h.b16 %v4664
    %v4950 = vunpack.c.l.b16 %v4665
    %v4951 = vunpack.c.h.b16 %v4665
    %v4952 = vunpack.c.l.b16 %v4666
    %v4953 = vunpack.c.h.b16 %v4666
    %v4954 = vunpack.c.l.b16 %v4667
    %v4955 = vunpack.c.h.b16 %v4667
    %v4956 = vunpack.c.l.b16 %v4668
    %v4957 = vunpack.c.h.b16 %v4668
    %v4958 = vunpack.c.l.b16 %v4669
    %v4959 = vunpack.c.h.b16 %v4669
    %v4960 = vunpack.c.l.b16 %v4670
    %v4961 = vunpack.c.h.b16 %v4670
    %v4962 = vunpack.c.l.b16 %v4671
    %v4963 = vunpack.c.h.b16 %v4671
    %v4964 = vunpack.c.l.b16 %v4672
    %v4965 = vunpack.c.h.b16 %v4672
    %v4966 = vunpack.c.l.b16 %v4673
    %v4967 = vunpack.c.h.b16 %v4673
    %v4968 = vunpack.c.l.b16 %v4674
    %v4969 = vunpack.c.h.b16 %v4674
    %v4970 = vunpack.c.l.b16 %v4675
    %v4971 = vunpack.c.h.b16 %v4675
    %v4972 = vunpack.c.l.b16 %v4676
    %v4973 = vunpack.c.h.b16 %v4676
    %v4974 = vunpack.c.l.b16 %v4677
    %v4975 = vunpack.c.h.b16 %v4677
    %v4976 = vunpack.c.l.b16 %v4678
    %v4977 = vunpack.c.h.b16 %v4678
    %v4978 = vunpack.c.l.b16 %v4679
    %v4979 = vunpack.c.h.b16 %v4679
    %v4980 = vunpack.c.l.b16 %v4680
    %v4981 = vunpack.c.h.b16 %v4680
    %v4982 = vunpack.c.l.b16 %v4681
    %v4983 = vunpack.c.h.b16 %v4681
    %v4984 = vunpack.c.l.b16 %v4682
    %v4985 = vunpack.c.h.b16 %v4682
    %v4986 = vunpack.c.l.b16 %v4683
    %v4987 = vunpack.c.h.b16 %v4683
    %v4988 = vunpack.c.l.b16 %v4684
    %v4989 = vunpack.c.h.b16 %v4684
    %v4990 = vunpack.c.l.b16 %v4685
    %v4991 = vunpack.c.h.b16 %v4685
    %v4992 = vunpack.c.l.b16 %v4686
    %v4993 = vunpack.c.h.b16 %v4686
    %v4994 = vunpack.c.l.b16 %v4687
    %v4995 = vunpack.c.h.b16 %v4687
    %v4996 = vunpack.c.l.b16 %v4688
    %v4997 = vunpack.c.h.b16 %v4688
    %v4998 = vunpack.c.l.b16 %v4689
    %v4999 = vunpack.c.h.b16 %v4689
    %v5000 = vunpack.c.l.b16 %v4690
    %v5001 = vunpack.c.h.b16 %v4690
    %v5002 = vunpack.c.l.b16 %v4691
    %v5003 = vunpack.c.h.b16 %v4691
    %v5004 = vunpack.c.l.b16 %v4692
    %v5005 = vunpack.c.h.b16 %v4692
    %v5006 = vunpack.c.l.b16 %v4693
    %v5007 = vunpack.c.h.b16 %v4693
    %v5008 = vunpack.c.l.b16 %v4694
    %v5009 = vunpack.c.h.b16 %v4694
    %v5010 = vunpack.c.l.b16 %v4695
    %v5011 = vunpack.c.h.b16 %v4695
    %v5012 = vunpack.c.l.b16 %v4696
    %v5013 = vunpack.c.h.b16 %v4696
    %v5014 = vunpack.c.l.b16 %v4697
    %v5015 = vunpack.c.h.b16 %v4697
    %v5016 = vunpack.c.l.b16 %v4698
    %v5017 = vunpack.c.h.b16 %v4698
    %v5018 = vunpack.c.l.b16 %v4699
    %v5019 = vunpack.c.h.b16 %v4699
    %v5020 = vunpack.c.l.b16 %v4700
    %v5021 = vunpack.c.h.b16 %v4700
    %v5022 = vunpack.c.l.b16 %v4701
    %v5023 = vunpack.c.h.b16 %v4701
    %v5024 = vunpack.c.l.b16 %v4702
    %v5025 = vunpack.c.h.b16 %v4702
    %v5026 = vunpack.c.l.b16 %v4703
    %v5027 = vunpack.c.h.b16 %v4703
    %v5028 = vunpack.c.l.b16 %v4704
    %v5029 = vunpack.c.h.b16 %v4704
    %v5030 = vunpack.c.l.b16 %v4705
    %v5031 = vunpack.c.h.b16 %v4705
    %v5032 = vunpack.c.l.b16 %v4706
    %v5033 = vunpack.c.h.b16 %v4706
    %v5034 = vunpack.c.l.b16 %v4707
    %v5035 = vunpack.c.h.b16 %v4707
    %v5036 = vunpack.c.l.b16 %v4708
    %v5037 = vunpack.c.h.b16 %v4708
    %v5038 = vunpack.c.l.b16 %v4709
    %v5039 = vunpack.c.h.b16 %v4709
    %v5040 = vunpack.c.l.b16 %v4710
    %v5041 = vunpack.c.h.b16 %v4710
    %v5042 = vpack.c.b16 %v4852, %v4850
    %v5043 = vpack.c.b16 %v4853, %v4851
    %v5044 = vpack.c.b16 %v4856, %v4854
    %v5045 = vpack.c.b16 %v4857, %v4855
    %v5046 = vpack.c.b16 %v4860, %v4858
    %v5047 = vpack.c.b16 %v4861, %v4859
    %v5048 = vpack.c.b16 %v4864, %v4862
    %v5049 = vpack.c.b16 %v4865, %v4863
    %v5050 = vpack.c.b16 %v4868, %v4866
    %v5051 = vpack.c.b16 %v4869, %v4867
    %v5052 = vpack.c.b16 %v4872, %v4870
    %v5053 = vpack.c.b16 %v4873, %v4871
    %v5054 = vpack.c.b16 %v4876, %v4874
    %v5055 = vpack.c.b16 %v4877, %v4875
    %v5056 = vpack.c.b16 %v4880, %v4878
    %v5057 = vpack.c.b16 %v4881, %v4879
    %v5058 = vpack.c.b16 %v4884, %v4882
    %v5059 = vpack.c.b16 %v4885, %v4883
    %v5060 = vpack.c.b16 %v4888, %v4886
    %v5061 = vpack.c.b16 %v4889, %v4887
    %v5062 = vpack.c.b16 %v4892, %v4890
    %v5063 = vpack.c.b16 %v4893, %v4891
    %v5064 = vpack.c.b16 %v4896, %v4894
    %v5065 = vpack.c.b16 %v4897, %v4895
    %v5066 = vpack.c.b16 %v4900, %v4898
    %v5067 = vpack.c.b16 %v4901, %v4899
    %v5068 = vpack.c.b16 %v4904, %v4902
    %v5069 = vpack.c.b16 %v4905, %v4903
    %v5070 = vpack.c.b16 %v4908, %v4906
    %v5071 = vpack.c.b16 %v4909, %v4907
    %v5072 = vpack.c.b16 %v4912, %v4910
    %v5073 = vpack.c.b16 %v4913, %v4911
    %v5074 = vpack.c.b16 %v4916, %v4914
    %v5075 = vpack.c.b16 %v4917, %v4915
    %v5076 = vpack.c.b16 %v4920, %v4918
    %v5077 = vpack.c.b16 %v4921, %v4919
    %v5078 = vpack.c.b16 %v4924, %v4922
    %v5079 = vpack.c.b16 %v4925, %v4923
    %v5080 = vpack.c.b16 %v4928, %v4926
    %v5081 = vpack.c.b16 %v4929, %v4927
    %v5082 = vpack.c.b16 %v4932, %v4930
    %v5083 = vpack.c.b16 %v4933, %v4931
    %v5084 = vpack.c.b16 %v4936, %v4934
    %v5085 = vpack.c.b16 %v4937, %v4935
    %v5086 = vpack.c.b16 %v4940, %v4938
    %v5087 = vpack.c.b16 %v4941, %v4939
    %v5088 = vpack.c.b16 %v4944, %v4942
    %v5089 = vpack.c.b16 %v4945, %v4943
    %v5090 = vpack.c.b16 %v4948, %v4946
    %v5091 = vpack.c.b16 %v4949, %v4947
    %v5092 = vpack.c.b16 %v4952, %v4950
    %v5093 = vpack.c.b16 %v4953, %v4951
    %v5094 = vpack.c.b16 %v4956, %v4954
    %v5095 = vpack.c.b16 %v4957, %v4955
    %v5096 = vpack.c.b16 %v4960, %v4958
    %v5097 = vpack.c.b16 %v4961, %v4959
    %v5098 = vpack.c.b16 %v4964, %v4962
    %v5099 = vpack.c.b16 %v4965, %v4963
    %v5100 = vpack.c.b16 %v4968, %v4966
    %v5101 = vpack.c.b16 %v4969, %v4967
    %v5102 = vpack.c.b16 %v4972, %v4970
    %v5103 = vpack.c.b16 %v4973, %v4971
    %v5104 = vpack.c.b16 %v4976, %v4974
    %v5105 = vpack.c.b16 %v4977, %v4975
    %v5106 = vpack.c.b16 %v4980, %v4978
    %v5107 = vpack.c.b16 %v4981, %v4979
    %v5108 = vpack.c.b16 %v4984, %v4982
    %v5109 = vpack.c.b16 %v4985, %v4983
    %v5110 = vpack.c.b16 %v4988, %v4986
    %v5111 = vpack.c.b16 %v4989, %v4987
    %v5112 = vpack.c.b16 %v4992, %v4990
    %v5113 = vpack.c.b16 %v4993, %v4991
    %v5114 = vpack.c.b16 %v4996, %v4994
    %v5115 = vpack.c.b16 %v4997, %v4995
    %v5116 = vpack.c.b16 %v5000, %v4998
    %v5117 = vpack.c.b16 %v5001, %v4999
    %v5118 = vpack.c.b16 %v5004, %v5002
    %v5119 = vpack.c.b16 %v5005, %v5003
    %v5120 = vpack.c.b16 %v5008, %v5006
    %v5121 = vpack.c.b16 %v5009, %v5007
    %v5122 = vpack.c.b16 %v5012, %v5010
    %v5123 = vpack.c.b16 %v5013, %v5011
    %v5124 = vpack.c.b16 %v5016, %v5014
    %v5125 = vpack.c.b16 %v5017, %v5015
    %v5126 = vpack.c.b16 %v5020, %v5018
    %v5127 = vpack.c.b16 %v5021, %v5019
    %v5128 = vpack.c.b16 %v5024, %v5022
    %v5129 = vpack.c.b16 %v5025, %v5023
    %v5130 = vpack.c.b16 %v5028, %v5026
    %v5131 = vpack.c.b16 %v5029, %v5027
    %v5132 = vpack.c.b16 %v5032, %v5030
    %v5133 = vpack.c.b16 %v5033, %v5031
    %v5134 = vpack.c.b16 %v5036, %v5034
    %v5135 = vpack.c.b16 %v5037, %v5035
    %v5136 = vpack.c.b16 %v5040, %v5038
    %v5137 = vpack.c.b16 %v5041, %v5039
    %5234 = vmatprep.subr.bf16.mxu0 %v5057
    %5235 = vmatpush1.bf16.msra.mxu0 %v5056
    %5236 = vmatprep.subr.bf16.mxu0 %v5055
    %5237 = vmatpush1.bf16.msra.mxu0 %v5054
    %5238 = vmatprep.subr.bf16.mxu0 %v5053
    %5239 = vmatpush1.bf16.msra.mxu0 %v5052
    %5240 = vmatprep.subr.bf16.mxu0 %v5051
    %5241 = vmatpush1.bf16.msra.mxu0 %v5050
    %5242 = vmatprep.subr.bf16.mxu0 %v5049
    %5243 = vmatpush1.bf16.msra.mxu0 %v5048
    %5244 = vmatprep.subr.bf16.mxu0 %v5047
    %5245 = vmatpush1.bf16.msra.mxu0 %v5046
    %5246 = vmatprep.subr.bf16.mxu0 %v5045
    %5247 = vmatpush1.bf16.msra.mxu0 %v5044
    %5248 = vmatprep.subr.bf16.mxu0 %v5043
    %5249 = vmatpush1.bf16.msra.mxu0 %v5042
    %5250 = vmatprep.subr.bf16.mxu0 %v5073
    %5251 = vmatpush2.bf16.msra.mxu0 %v5072
    %5252 = vmatprep.subr.bf16.mxu0 %v5071
    %5253 = vmatpush2.bf16.msra.mxu0 %v5070
    %5254 = vmatprep.subr.bf16.mxu0 %v5069
    %5255 = vmatpush2.bf16.msra.mxu0 %v5068
    %5256 = vmatprep.subr.bf16.mxu0 %v5067
    %5257 = vmatpush2.bf16.msra.mxu0 %v5066
    %5258 = vmatprep.subr.bf16.mxu0 %v5065
    %5259 = vmatpush2.bf16.msra.mxu0 %v5064
    %5260 = vmatprep.subr.bf16.mxu0 %v5063
    %5261 = vmatpush2.bf16.msra.mxu0 %v5062
    %5262 = vmatprep.subr.bf16.mxu0 %v5061
    %5263 = vmatpush2.bf16.msra.mxu0 %v5060
    %5264 = vmatprep.subr.bf16.mxu0 %v5059
    %5265 = vmatpush2.bf16.msra.mxu0 %v5058
    %5266 = vmatprep.mubr.bf16.mxu0 %v4743
    %5267 = vmatmul.mubr.bf16.gmra.mxu0 %v4742
    %v5268 = vpop.f32.mrf.mxu0
    %v5269 = vadd.f32 %v4717, %v5268
    %v5270 = vpop.f32.mrf.mxu0
    %v5271 = vadd.f32 %v4721, %v5270
    %v5272 = vpop.f32.mrf.mxu0
    %v5273 = vadd.f32 %v4717, %v5272
    %v5274 = vpop.f32.mrf.mxu0
    %v5275 = vadd.f32 %v4721, %v5274
    %5276 = vdwg.mxu0
    %5277 = vmatprep.subr.bf16.mxu0 %v5089
    %5278 = vmatpush1.bf16.msra.mxu0 %v5088
    %5279 = vmatprep.subr.bf16.mxu0 %v5087
    %5280 = vmatpush1.bf16.msra.mxu0 %v5086
    %5281 = vmatprep.subr.bf16.mxu0 %v5085
    %5282 = vmatpush1.bf16.msra.mxu0 %v5084
    %5283 = vmatprep.subr.bf16.mxu0 %v5083
    %5284 = vmatpush1.bf16.msra.mxu0 %v5082
    %5285 = vmatprep.subr.bf16.mxu0 %v5081
    %5286 = vmatpush1.bf16.msra.mxu0 %v5080
    %5287 = vmatprep.subr.bf16.mxu0 %v5079
    %5288 = vmatpush1.bf16.msra.mxu0 %v5078
    %5289 = vmatprep.subr.bf16.mxu0 %v5077
    %5290 = vmatpush1.bf16.msra.mxu0 %v5076
    %5291 = vmatprep.subr.bf16.mxu0 %v5075
    %5292 = vmatpush1.bf16.msra.mxu0 %v5074
    %5293 = vmatprep.subr.bf16.mxu0 %v5105
    %5294 = vmatpush2.bf16.msra.mxu0 %v5104
    %5295 = vmatprep.subr.bf16.mxu0 %v5103
    %5296 = vmatpush2.bf16.msra.mxu0 %v5102
    %5297 = vmatprep.subr.bf16.mxu0 %v5101
    %5298 = vmatpush2.bf16.msra.mxu0 %v5100
    %5299 = vmatprep.subr.bf16.mxu0 %v5099
    %5300 = vmatpush2.bf16.msra.mxu0 %v5098
    %5301 = vmatprep.subr.bf16.mxu0 %v5097
    %5302 = vmatpush2.bf16.msra.mxu0 %v5096
    %5303 = vmatprep.subr.bf16.mxu0 %v5095
    %5304 = vmatpush2.bf16.msra.mxu0 %v5094
    %5305 = vmatprep.subr.bf16.mxu0 %v5093
    %5306 = vmatpush2.bf16.msra.mxu0 %v5092
    %5307 = vmatprep.subr.bf16.mxu0 %v5091
    %5308 = vmatpush2.bf16.msra.mxu0 %v5090
    %5309 = vmatprep.mubr.bf16.mxu0 %v4745
    %5310 = vmatmul.mubr.bf16.gmra.mxu0 %v4744
    %v5311 = vpop.f32.mrf.mxu0
    %v5312 = vadd.f32 %v5269, %v5311
    %v5313 = vpop.f32.mrf.mxu0
    %v5314 = vadd.f32 %v5271, %v5313
    %v5315 = vpop.f32.mrf.mxu0
    %v5316 = vadd.f32 %v5273, %v5315
    %v5317 = vpop.f32.mrf.mxu0
    %v5318 = vadd.f32 %v5275, %v5317
    %5319 = vdwg.mxu0
    %5320 = vmatprep.subr.bf16.mxu0 %v5121
    %5321 = vmatpush1.bf16.msra.mxu0 %v5120
    %5322 = vmatprep.subr.bf16.mxu0 %v5119
    %5323 = vmatpush1.bf16.msra.mxu0 %v5118
    %5324 = vmatprep.subr.bf16.mxu0 %v5117
    %5325 = vmatpush1.bf16.msra.mxu0 %v5116
    %5326 = vmatprep.subr.bf16.mxu0 %v5115
    %5327 = vmatpush1.bf16.msra.mxu0 %v5114
    %5328 = vmatprep.subr.bf16.mxu0 %v5113
    %5329 = vmatpush1.bf16.msra.mxu0 %v5112
    %5330 = vmatprep.subr.bf16.mxu0 %v5111
    %5331 = vmatpush1.bf16.msra.mxu0 %v5110
    %5332 = vmatprep.subr.bf16.mxu0 %v5109
    %5333 = vmatpush1.bf16.msra.mxu0 %v5108
    %5334 = vmatprep.subr.bf16.mxu0 %v5107
    %5335 = vmatpush1.bf16.msra.mxu0 %v5106
    %5336 = vmatprep.subr.bf16.mxu0 %v5137
    %5337 = vmatpush2.bf16.msra.mxu0 %v5136
    %5338 = vmatprep.subr.bf16.mxu0 %v5135
    %5339 = vmatpush2.bf16.msra.mxu0 %v5134
    %5340 = vmatprep.subr.bf16.mxu0 %v5133
    %5341 = vmatpush2.bf16.msra.mxu0 %v5132
    %5342 = vmatprep.subr.bf16.mxu0 %v5131
    %5343 = vmatpush2.bf16.msra.mxu0 %v5130
    %5344 = vmatprep.subr.bf16.mxu0 %v5129
    %5345 = vmatpush2.bf16.msra.mxu0 %v5128
    %5346 = vmatprep.subr.bf16.mxu0 %v5127
    %5347 = vmatpush2.bf16.msra.mxu0 %v5126
    %5348 = vmatprep.subr.bf16.mxu0 %v5125
    %5349 = vmatpush2.bf16.msra.mxu0 %v5124
    %5350 = vmatprep.subr.bf16.mxu0 %v5123
    %5351 = vmatpush2.bf16.msra.mxu0 %v5122
    %5352 = vmatprep.mubr.bf16.mxu0 %v4747
    %5353 = vmatmul.mubr.bf16.gmra.mxu0 %v4746
    %v5354 = vpop.f32.mrf.mxu0
    %v5355 = vadd.f32 %v5312, %v5354
    %v5356 = vpop.f32.mrf.mxu0
    %v5357 = vadd.f32 %v5314, %v5356
    %v5358 = vpop.f32.mrf.mxu0
    %v5359 = vadd.f32 %v5316, %v5358
    %v5360 = vpop.f32.mrf.mxu0
    %v5361 = vadd.f32 %v5318, %v5360
    %5362 = vdwg.mxu0
    %v5363 = vxor.u32 %v5355, 2147483648
    %v5364 = vxor.u32 %v5357, 2147483648
    %v5365 = vxor.u32 %v5359, 2147483648
    %v5366 = vxor.u32 %v5361, 2147483648
    %v5367 = vmul.f32 %v5363, 1.442695
    %v5368 = vpow.pop %v5367
    %v5369 = vmul.f32 %v5364, 1.442695
    %v5370 = vpow.pop %v5369
    %v5371 = vmul.f32 %v5365, 1.442695
    %v5372 = vpow.pop %v5371
    %v5373 = vmul.f32 %v5366, 1.442695
    %v5374 = vpow.pop %v5373
    %v5375 = vadd.f32 %v5368, 1.0
    %v5376 = vadd.f32 %v5370, 1.0
    %v5377 = vadd.f32 %v5372, 1.0
    %v5378 = vadd.f32 %v5374, 1.0
    %v5379 = vrcp.pop %v5375
    %v5380 = vmul.f32 1.0, %v5379
    %v5381 = vrcp.pop %v5376
    %v5382 = vmul.f32 1.0, %v5381
    %v5383 = vrcp.pop %v5377
    %v5384 = vmul.f32 1.0, %v5383
    %v5385 = vrcp.pop %v5378
    %v5386 = vmul.f32 1.0, %v5385
    %v5387 = vmul.f32 %v5355, %v5380
    %v5388 = vmul.f32 %v5357, %v5382
    %v5389 = vmul.f32 %v5359, %v5384
    %v5390 = vmul.f32 %v5361, %v5386
    %v5391 = vpack.c.bf16 %v5389, %v5387
    %v5392 = vpack.c.bf16 %v5390, %v5388
    %v5393 = vld [vmem:[#allocation5 + $0xf0] sm:$0xf]
    %v5394 = vld [vmem:[#allocation5 + $0xf8] sm:$0xf]
    %v5397 = vunpack.c.l.b16 %v5393
    %v5398 = vunpack.c.l.b16 %v5394
    %v5399 = vpack.c.b16 %v5398, %v5397
    %v5401 = vsel %vm3155, %v5399, 0
    %5403 = vmatprep.subr.bf16.mxu0 0
    %5404 = vmatpush1.bf16.msra.mxu0 0
    %5405 = vmatprep.subr.bf16.mxu0 0
    %5406 = vmatpush1.bf16.msra.mxu0 0
    %5407 = vmatprep.subr.bf16.mxu0 0
    %5408 = vmatpush1.bf16.msra.mxu0 0
    %5409 = vmatprep.subr.bf16.mxu0 0
    %5410 = vmatpush1.bf16.msra.mxu0 0
    %5411 = vmatprep.subr.bf16.mxu0 0
    %5412 = vmatpush1.bf16.msra.mxu0 0
    %5413 = vmatprep.subr.bf16.mxu0 0
    %5414 = vmatpush1.bf16.msra.mxu0 0
    %5415 = vmatprep.subr.bf16.mxu0 0
    %5416 = vmatpush1.bf16.msra.mxu0 0
    %5417 = vmatprep.subr.bf16.mxu0 %v5392
    %5418 = vmatpush1.bf16.msra.mxu0 %v5391
    %5419 = vmatprep.subr.bf16.mxu0 0
    %5420 = vmatpush2.bf16.msra.mxu0 0
    %5421 = vmatprep.subr.bf16.mxu0 0
    %5422 = vmatpush2.bf16.msra.mxu0 0
    %5423 = vmatprep.subr.bf16.mxu0 0
    %5424 = vmatpush2.bf16.msra.mxu0 0
    %5425 = vmatprep.subr.bf16.mxu0 0
    %5426 = vmatpush2.bf16.msra.mxu0 0
    %5427 = vmatprep.subr.bf16.mxu0 0
    %5428 = vmatpush2.bf16.msra.mxu0 0
    %5429 = vmatprep.subr.bf16.mxu0 0
    %5430 = vmatpush2.bf16.msra.mxu0 0
    %5431 = vmatprep.subr.bf16.mxu0 0
    %5432 = vmatpush2.bf16.msra.mxu0 0
    %5433 = vmatprep.subr.bf16.mxu0 0
    %5434 = vmatpush2.bf16.msra.mxu0 0
    %5435 = vmatprep.mubr.bf16.mxu0 0
    %5436 = vmatmul.mubr.bf16.gmra.mxu0 %v5401
    %v5437 = vpop.f32.mrf.mxu0
    %v5438 = vadd.f32 0.0, %v5437
    %v5439 = vpop.f32.mrf.mxu0
    %v5440 = vadd.f32 0.0, %v5439
    %v5441 = vpop.f32.mrf.mxu0
    %v5442 = vadd.f32 0.0, %v5441
    %v5443 = vpop.f32.mrf.mxu0
    %v5444 = vadd.f32 0.0, %v5443
    %5445 = vdwg.mxu0
    %v5446 = vpack.c.bf16 %v5442, %v5438
    %v5447 = vpack.c.bf16 %v5444, %v5440
    %v5450 = vunpack.c.l.b16 %v5446
    %v5451 = vunpack.c.l.b16 %v5447
    %v5452 = vunpack.c.h.b16 %v5446
    %v5453 = vunpack.c.h.b16 %v5447
    %v5454 = vpack.c.b16 %v5451, %v5450
    %v5455 = vpack.c.b16 %v5453, %v5452
    %5458 = vst [vmem:[#allocation2] sm:$0xff] %v5454
    %5459 = vst [vmem:[#allocation2 + $0x18] sm:$0xff] %v5455
    %v5460 = vld [vmem:[#allocation5 + $0x100] sm:$0xf]
    %v5461 = vld [vmem:[#allocation5 + $0x108] sm:$0xf]
    %v5464 = vunpack.c.l.b16 %v5460
    %v5465 = vunpack.c.l.b16 %v5461
    %v5466 = vpack.c.b16 %v5465, %v5464
    %v5468 = vsel %vm3155, %v5466, 0
    %5470 = vmatprep.subr.bf16.mxu0 0
    %5471 = vmatpush1.bf16.msra.mxu0 0
    %5472 = vmatprep.subr.bf16.mxu0 0
    %5473 = vmatpush1.bf16.msra.mxu0 0
    %5474 = vmatprep.subr.bf16.mxu0 0
    %5475 = vmatpush1.bf16.msra.mxu0 0
    %5476 = vmatprep.subr.bf16.mxu0 0
    %5477 = vmatpush1.bf16.msra.mxu0 0
    %5478 = vmatprep.subr.bf16.mxu0 0
    %5479 = vmatpush1.bf16.msra.mxu0 0
    %5480 = vmatprep.subr.bf16.mxu0 0
    %5481 = vmatpush1.bf16.msra.mxu0 0
    %5482 = vmatprep.subr.bf16.mxu0 0
    %5483 = vmatpush1.bf16.msra.mxu0 0
    %5484 = vmatprep.subr.bf16.mxu0 %v5392
    %5485 = vmatpush1.bf16.msra.mxu0 %v5391
    %5486 = vmatprep.subr.bf16.mxu0 0
    %5487 = vmatpush2.bf16.msra.mxu0 0
    %5488 = vmatprep.subr.bf16.mxu0 0
    %5489 = vmatpush2.bf16.msra.mxu0 0
    %5490 = vmatprep.subr.bf16.mxu0 0
    %5491 = vmatpush2.bf16.msra.mxu0 0
    %5492 = vmatprep.subr.bf16.mxu0 0
    %5493 = vmatpush2.bf16.msra.mxu0 0
    %5494 = vmatprep.subr.bf16.mxu0 0
    %5495 = vmatpush2.bf16.msra.mxu0 0
    %5496 = vmatprep.subr.bf16.mxu0 0
    %5497 = vmatpush2.bf16.msra.mxu0 0
    %5498 = vmatprep.subr.bf16.mxu0 0
    %5499 = vmatpush2.bf16.msra.mxu0 0
    %5500 = vmatprep.subr.bf16.mxu0 0
    %5501 = vmatpush2.bf16.msra.mxu0 0
    %5502 = vmatprep.mubr.bf16.mxu0 0
    %5503 = vmatmul.mubr.bf16.gmra.mxu0 %v5468
    %v5504 = vpop.f32.mrf.mxu0
    %v5505 = vadd.f32 0.0, %v5504
    %v5506 = vpop.f32.mrf.mxu0
    %v5507 = vadd.f32 0.0, %v5506
    %v5508 = vpop.f32.mrf.mxu0
    %v5509 = vadd.f32 0.0, %v5508
    %v5510 = vpop.f32.mrf.mxu0
    %v5511 = vadd.f32 0.0, %v5510
    %5512 = vdwg.mxu0
    %v5513 = vpack.c.bf16 %v5509, %v5505
    %v5514 = vpack.c.bf16 %v5511, %v5507
    %v5517 = vunpack.c.l.b16 %v5513
    %v5518 = vunpack.c.l.b16 %v5514
    %v5519 = vunpack.c.h.b16 %v5513
    %v5520 = vunpack.c.h.b16 %v5514
    %v5521 = vpack.c.b16 %v5518, %v5517
    %v5522 = vpack.c.b16 %v5520, %v5519
    %5525 = vst [vmem:[#allocation2 + $0x8] sm:$0xff] %v5521
    %5526 = vst [vmem:[#allocation2 + $0x20] sm:$0xff] %v5522
    %v5527 = vld [vmem:[#allocation5 + $0x110] sm:$0xf]
    %v5528 = vld [vmem:[#allocation5 + $0x118] sm:$0xf]
    %v5531 = vunpack.c.l.b16 %v5527
    %v5532 = vunpack.c.l.b16 %v5528
    %v5533 = vpack.c.b16 %v5532, %v5531
    %v5535 = vsel %vm3155, %v5533, 0
    %5537 = vmatprep.subr.bf16.mxu0 0
    %5538 = vmatpush1.bf16.msra.mxu0 0
    %5539 = vmatprep.subr.bf16.mxu0 0
    %5540 = vmatpush1.bf16.msra.mxu0 0
    %5541 = vmatprep.subr.bf16.mxu0 0
    %5542 = vmatpush1.bf16.msra.mxu0 0
    %5543 = vmatprep.subr.bf16.mxu0 0
    %5544 = vmatpush1.bf16.msra.mxu0 0
    %5545 = vmatprep.subr.bf16.mxu0 0
    %5546 = vmatpush1.bf16.msra.mxu0 0
    %5547 = vmatprep.subr.bf16.mxu0 0
    %5548 = vmatpush1.bf16.msra.mxu0 0
    %5549 = vmatprep.subr.bf16.mxu0 0
    %5550 = vmatpush1.bf16.msra.mxu0 0
    %5551 = vmatprep.subr.bf16.mxu0 %v5392
    %5552 = vmatpush1.bf16.msra.mxu0 %v5391
    %5553 = vmatprep.subr.bf16.mxu0 0
    %5554 = vmatpush2.bf16.msra.mxu0 0
    %5555 = vmatprep.subr.bf16.mxu0 0
    %5556 = vmatpush2.bf16.msra.mxu0 0
    %5557 = vmatprep.subr.bf16.mxu0 0
    %5558 = vmatpush2.bf16.msra.mxu0 0
    %5559 = vmatprep.subr.bf16.mxu0 0
    %5560 = vmatpush2.bf16.msra.mxu0 0
    %5561 = vmatprep.subr.bf16.mxu0 0
    %5562 = vmatpush2.bf16.msra.mxu0 0
    %5563 = vmatprep.subr.bf16.mxu0 0
    %5564 = vmatpush2.bf16.msra.mxu0 0
    %5565 = vmatprep.subr.bf16.mxu0 0
    %5566 = vmatpush2.bf16.msra.mxu0 0
    %5567 = vmatprep.subr.bf16.mxu0 0
    %5568 = vmatpush2.bf16.msra.mxu0 0
    %5569 = vmatprep.mubr.bf16.mxu0 0
    %5570 = vmatmul.mubr.bf16.gmra.mxu0 %v5535
    %v5571 = vpop.f32.mrf.mxu0
    %v5572 = vadd.f32 0.0, %v5571
    %v5573 = vpop.f32.mrf.mxu0
    %v5574 = vadd.f32 0.0, %v5573
    %v5575 = vpop.f32.mrf.mxu0
    %v5576 = vadd.f32 0.0, %v5575
    %v5577 = vpop.f32.mrf.mxu0
    %v5578 = vadd.f32 0.0, %v5577
    %5579 = vdwg.mxu0
    %v5580 = vpack.c.bf16 %v5576, %v5572
    %v5581 = vpack.c.bf16 %v5578, %v5574
    %v5584 = vunpack.c.l.b16 %v5580
    %v5585 = vunpack.c.l.b16 %v5581
    %v5586 = vunpack.c.h.b16 %v5580
    %v5587 = vunpack.c.h.b16 %v5581
    %v5588 = vpack.c.b16 %v5585, %v5584
    %v5589 = vpack.c.b16 %v5587, %v5586
    %5592 = vst [vmem:[#allocation2 + $0x10] sm:$0xff] %v5588
    %5593 = vst [vmem:[#allocation2 + $0x28] sm:$0xff] %v5589
    %v5594 = vld [vmem:[#allocation2] sm:$0xff]
    %v5595 = vld [vmem:[#allocation2 + $0x8] sm:$0xff]
    %v5596 = vld [vmem:[#allocation2 + $0x10] sm:$0xff]
    %v5597 = vld [vmem:[#allocation2 + $0x18] sm:$0xff]
    %v5598 = vld [vmem:[#allocation2 + $0x20] sm:$0xff]
    %v5599 = vld [vmem:[#allocation2 + $0x28] sm:$0xff]
    %v5600 = vld [vmem:[#allocation5 + $0xdb0] sm:$0xff]
    %v5601 = vld [vmem:[#allocation5 + $0xdb8] sm:$0xff]
    %v5602 = vld [vmem:[#allocation5 + $0xdc0] sm:$0xff]
    %v5603 = vld [vmem:[#allocation5 + $0xdc8] sm:$0xff]
    %v5604 = vld [vmem:[#allocation5 + $0xdd0] sm:$0xff]
    %v5605 = vld [vmem:[#allocation5 + $0xdd8] sm:$0xff]
    %v5606 = vld [vmem:[#allocation5 + $0xde0] sm:$0xff]
    %v5607 = vld [vmem:[#allocation5 + $0xde8] sm:$0xff]
    %v5608 = vld [vmem:[#allocation5 + $0xdf0] sm:$0xff]
    %v5609 = vld [vmem:[#allocation5 + $0xdf8] sm:$0xff]
    %v5610 = vld [vmem:[#allocation5 + $0xe00] sm:$0xff]
    %v5611 = vld [vmem:[#allocation5 + $0xe08] sm:$0xff]
    %v5612 = vld [vmem:[#allocation5 + $0xe10] sm:$0xff]
    %v5613 = vld [vmem:[#allocation5 + $0xe18] sm:$0xff]
    %v5614 = vld [vmem:[#allocation5 + $0xe20] sm:$0xff]
    %v5615 = vld [vmem:[#allocation5 + $0xe28] sm:$0xff]
    %v5616 = vld [vmem:[#allocation5 + $0xe30] sm:$0xff]
    %v5617 = vld [vmem:[#allocation5 + $0xe38] sm:$0xff]
    %v5618 = vld [vmem:[#allocation5 + $0xe40] sm:$0xff]
    %v5619 = vld [vmem:[#allocation5 + $0xe48] sm:$0xff]
    %v5620 = vld [vmem:[#allocation5 + $0xe50] sm:$0xff]
    %v5621 = vld [vmem:[#allocation5 + $0xe58] sm:$0xff]
    %v5622 = vld [vmem:[#allocation5 + $0xe60] sm:$0xff]
    %v5623 = vld [vmem:[#allocation5 + $0xe68] sm:$0xff]
    %v5624 = vld [vmem:[#allocation5 + $0xe70] sm:$0xff]
    %v5625 = vld [vmem:[#allocation5 + $0xe78] sm:$0xff]
    %v5626 = vld [vmem:[#allocation5 + $0xe80] sm:$0xff]
    %v5627 = vld [vmem:[#allocation5 + $0xe88] sm:$0xff]
    %v5628 = vld [vmem:[#allocation5 + $0xe90] sm:$0xff]
    %v5629 = vld [vmem:[#allocation5 + $0xe98] sm:$0xff]
    %v5630 = vld [vmem:[#allocation5 + $0xea0] sm:$0xff]
    %v5631 = vld [vmem:[#allocation5 + $0xea8] sm:$0xff]
    %v5632 = vld [vmem:[#allocation5 + $0xeb0] sm:$0xff]
    %v5633 = vld [vmem:[#allocation5 + $0xeb8] sm:$0xff]
    %v5634 = vld [vmem:[#allocation5 + $0xec0] sm:$0xff]
    %v5635 = vld [vmem:[#allocation5 + $0xec8] sm:$0xff]
    %v5636 = vld [vmem:[#allocation5 + $0xed0] sm:$0xff]
    %v5637 = vld [vmem:[#allocation5 + $0xed8] sm:$0xff]
    %v5638 = vld [vmem:[#allocation5 + $0xee0] sm:$0xff]
    %v5639 = vld [vmem:[#allocation5 + $0xee8] sm:$0xff]
    %v5640 = vld [vmem:[#allocation5 + $0xef0] sm:$0xff]
    %v5641 = vld [vmem:[#allocation5 + $0xef8] sm:$0xff]
    %v5642 = vld [vmem:[#allocation5 + $0xf00] sm:$0xff]
    %v5643 = vld [vmem:[#allocation5 + $0xf08] sm:$0xff]
    %v5644 = vld [vmem:[#allocation5 + $0xf10] sm:$0xff]
    %v5645 = vld [vmem:[#allocation5 + $0xf18] sm:$0xff]
    %v5646 = vld [vmem:[#allocation5 + $0xf20] sm:$0xff]
    %v5647 = vld [vmem:[#allocation5 + $0xf28] sm:$0xff]
    %v5648 = vld [vmem:[#allocation5 + $0xf30] sm:$0xff]
    %v5649 = vld [vmem:[#allocation5 + $0xf38] sm:$0xff]
    %v5650 = vld [vmem:[#allocation5 + $0xf40] sm:$0xff]
    %v5651 = vld [vmem:[#allocation5 + $0xf48] sm:$0xff]
    %v5652 = vld [vmem:[#allocation5 + $0xf50] sm:$0xff]
    %v5653 = vld [vmem:[#allocation5 + $0xf58] sm:$0xff]
    %v5654 = vld [vmem:[#allocation5 + $0xf60] sm:$0xff]
    %v5655 = vld [vmem:[#allocation5 + $0xf68] sm:$0xff]
    %v5656 = vld [vmem:[#allocation5 + $0xf70] sm:$0xff]
    %v5657 = vld [vmem:[#allocation5 + $0xf78] sm:$0xff]
    %v5658 = vld [vmem:[#allocation5 + $0xf80] sm:$0xff]
    %v5659 = vld [vmem:[#allocation5 + $0xf88] sm:$0xff]
    %v5660 = vld [vmem:[#allocation5 + $0xf90] sm:$0xff]
    %v5661 = vld [vmem:[#allocation5 + $0xf98] sm:$0xff]
    %v5662 = vld [vmem:[#allocation5 + $0xfa0] sm:$0xff]
    %v5663 = vld [vmem:[#allocation5 + $0xfa8] sm:$0xff]
    %v5664 = vld [vmem:[#allocation5 + $0xfb0] sm:$0xff]
    %v5665 = vld [vmem:[#allocation5 + $0xfb8] sm:$0xff]
    %v5666 = vld [vmem:[#allocation5 + $0xfc0] sm:$0xff]
    %v5667 = vld [vmem:[#allocation5 + $0xfc8] sm:$0xff]
    %v5668 = vld [vmem:[#allocation5 + $0xfd0] sm:$0xff]
    %v5669 = vld [vmem:[#allocation5 + $0xfd8] sm:$0xff]
    %v5670 = vld [vmem:[#allocation5 + $0xfe0] sm:$0xff]
    %v5671 = vld [vmem:[#allocation5 + $0xfe8] sm:$0xff]
    %v5672 = vld [vmem:[#allocation5 + $0xff0] sm:$0xff]
    %v5673 = vld [vmem:[#allocation5 + $0xff8] sm:$0xff]
    %v5674 = vld [vmem:[#allocation5 + $0x1000] sm:$0xff]
    %v5675 = vld [vmem:[#allocation5 + $0x1008] sm:$0xff]
    %v5676 = vld [vmem:[#allocation5 + $0x1010] sm:$0xff]
    %v5677 = vld [vmem:[#allocation5 + $0x1018] sm:$0xff]
    %v5678 = vld [vmem:[#allocation5 + $0x1020] sm:$0xff]
    %v5679 = vld [vmem:[#allocation5 + $0x1028] sm:$0xff]
    %v5680 = vld [vmem:[#allocation5 + $0x1030] sm:$0xff]
    %v5681 = vld [vmem:[#allocation5 + $0x1038] sm:$0xff]
    %v5682 = vld [vmem:[#allocation5 + $0x1040] sm:$0xff]
    %v5683 = vld [vmem:[#allocation5 + $0x1048] sm:$0xff]
    %v5684 = vld [vmem:[#allocation5 + $0x1050] sm:$0xff]
    %v5685 = vld [vmem:[#allocation5 + $0x1058] sm:$0xff]
    %v5686 = vld [vmem:[#allocation5 + $0x1060] sm:$0xff]
    %v5687 = vld [vmem:[#allocation5 + $0x1068] sm:$0xff]
    %v5688 = vld [vmem:[#allocation5 + $0x1070] sm:$0xff]
    %v5689 = vld [vmem:[#allocation5 + $0x1078] sm:$0xff]
    %v5690 = vld [vmem:[#allocation5 + $0x1080] sm:$0xff]
    %v5691 = vld [vmem:[#allocation5 + $0x1088] sm:$0xff]
    %v5692 = vld [vmem:[#allocation5 + $0x1090] sm:$0xff]
    %v5693 = vld [vmem:[#allocation5 + $0x1098] sm:$0xff]
    %v5694 = vld [vmem:[#allocation5 + $0x10a0] sm:$0xff]
    %v5695 = vld [vmem:[#allocation5 + $0x10a8] sm:$0xff]
    %s5696 = scalar_lea.vmem [#allocation7], 80
    %v5697 = vld [vmem:[%s5696] ss:$8 sm:$0x3]
    %v5699 = vlaneseq
    %v5700 = vshrl.u32 %v5699, 7
    %v5701 = vsub.s32 0, %v5700
    %v5702 = vrot.slane %v5697, %v5701
    %v5703 = vlaneseq
    %v5704 = vshrl.u32 %v5703, 7
    %v5705 = vsub.s32 1, %v5704
    %v5706 = vrot.slane %v5697, %v5705
    %v5715 = vunpack.c.l.b16 %v5594
    %v5716 = vunpack.c.h.b16 %v5594
    %v5717 = vunpack.c.l.b16 %v5595
    %v5718 = vunpack.c.h.b16 %v5595
    %v5719 = vunpack.c.l.b16 %v5596
    %v5720 = vunpack.c.h.b16 %v5596
    %v5721 = vunpack.c.l.b16 %v5597
    %v5722 = vunpack.c.h.b16 %v5597
    %v5723 = vunpack.c.l.b16 %v5598
    %v5724 = vunpack.c.h.b16 %v5598
    %v5725 = vunpack.c.l.b16 %v5599
    %v5726 = vunpack.c.h.b16 %v5599
    %v5727 = vpack.c.b16 %v5721, %v5715
    %v5728 = vpack.c.b16 %v5722, %v5716
    %v5729 = vpack.c.b16 %v5723, %v5717
    %v5730 = vpack.c.b16 %v5724, %v5718
    %v5731 = vpack.c.b16 %v5725, %v5719
    %v5732 = vpack.c.b16 %v5726, %v5720
    %v5835 = vunpack.c.l.b16 %v5600
    %v5836 = vunpack.c.h.b16 %v5600
    %v5837 = vunpack.c.l.b16 %v5601
    %v5838 = vunpack.c.h.b16 %v5601
    %v5839 = vunpack.c.l.b16 %v5602
    %v5840 = vunpack.c.h.b16 %v5602
    %v5841 = vunpack.c.l.b16 %v5603
    %v5842 = vunpack.c.h.b16 %v5603
    %v5843 = vunpack.c.l.b16 %v5604
    %v5844 = vunpack.c.h.b16 %v5604
    %v5845 = vunpack.c.l.b16 %v5605
    %v5846 = vunpack.c.h.b16 %v5605
    %v5847 = vunpack.c.l.b16 %v5606
    %v5848 = vunpack.c.h.b16 %v5606
    %v5849 = vunpack.c.l.b16 %v5607
    %v5850 = vunpack.c.h.b16 %v5607
    %v5851 = vunpack.c.l.b16 %v5608
    %v5852 = vunpack.c.h.b16 %v5608
    %v5853 = vunpack.c.l.b16 %v5609
    %v5854 = vunpack.c.h.b16 %v5609
    %v5855 = vunpack.c.l.b16 %v5610
    %v5856 = vunpack.c.h.b16 %v5610
    %v5857 = vunpack.c.l.b16 %v5611
    %v5858 = vunpack.c.h.b16 %v5611
    %v5859 = vunpack.c.l.b16 %v5612
    %v5860 = vunpack.c.h.b16 %v5612
    %v5861 = vunpack.c.l.b16 %v5613
    %v5862 = vunpack.c.h.b16 %v5613
    %v5863 = vunpack.c.l.b16 %v5614
    %v5864 = vunpack.c.h.b16 %v5614
    %v5865 = vunpack.c.l.b16 %v5615
    %v5866 = vunpack.c.h.b16 %v5615
    %v5867 = vunpack.c.l.b16 %v5616
    %v5868 = vunpack.c.h.b16 %v5616
    %v5869 = vunpack.c.l.b16 %v5617
    %v5870 = vunpack.c.h.b16 %v5617
    %v5871 = vunpack.c.l.b16 %v5618
    %v5872 = vunpack.c.h.b16 %v5618
    %v5873 = vunpack.c.l.b16 %v5619
    %v5874 = vunpack.c.h.b16 %v5619
    %v5875 = vunpack.c.l.b16 %v5620
    %v5876 = vunpack.c.h.b16 %v5620
    %v5877 = vunpack.c.l.b16 %v5621
    %v5878 = vunpack.c.h.b16 %v5621
    %v5879 = vunpack.c.l.b16 %v5622
    %v5880 = vunpack.c.h.b16 %v5622
    %v5881 = vunpack.c.l.b16 %v5623
    %v5882 = vunpack.c.h.b16 %v5623
    %v5883 = vunpack.c.l.b16 %v5624
    %v5884 = vunpack.c.h.b16 %v5624
    %v5885 = vunpack.c.l.b16 %v5625
    %v5886 = vunpack.c.h.b16 %v5625
    %v5887 = vunpack.c.l.b16 %v5626
    %v5888 = vunpack.c.h.b16 %v5626
    %v5889 = vunpack.c.l.b16 %v5627
    %v5890 = vunpack.c.h.b16 %v5627
    %v5891 = vunpack.c.l.b16 %v5628
    %v5892 = vunpack.c.h.b16 %v5628
    %v5893 = vunpack.c.l.b16 %v5629
    %v5894 = vunpack.c.h.b16 %v5629
    %v5895 = vunpack.c.l.b16 %v5630
    %v5896 = vunpack.c.h.b16 %v5630
    %v5897 = vunpack.c.l.b16 %v5631
    %v5898 = vunpack.c.h.b16 %v5631
    %v5899 = vunpack.c.l.b16 %v5632
    %v5900 = vunpack.c.h.b16 %v5632
    %v5901 = vunpack.c.l.b16 %v5633
    %v5902 = vunpack.c.h.b16 %v5633
    %v5903 = vunpack.c.l.b16 %v5634
    %v5904 = vunpack.c.h.b16 %v5634
    %v5905 = vunpack.c.l.b16 %v5635
    %v5906 = vunpack.c.h.b16 %v5635
    %v5907 = vunpack.c.l.b16 %v5636
    %v5908 = vunpack.c.h.b16 %v5636
    %v5909 = vunpack.c.l.b16 %v5637
    %v5910 = vunpack.c.h.b16 %v5637
    %v5911 = vunpack.c.l.b16 %v5638
    %v5912 = vunpack.c.h.b16 %v5638
    %v5913 = vunpack.c.l.b16 %v5639
    %v5914 = vunpack.c.h.b16 %v5639
    %v5915 = vunpack.c.l.b16 %v5640
    %v5916 = vunpack.c.h.b16 %v5640
    %v5917 = vunpack.c.l.b16 %v5641
    %v5918 = vunpack.c.h.b16 %v5641
    %v5919 = vunpack.c.l.b16 %v5642
    %v5920 = vunpack.c.h.b16 %v5642
    %v5921 = vunpack.c.l.b16 %v5643
    %v5922 = vunpack.c.h.b16 %v5643
    %v5923 = vunpack.c.l.b16 %v5644
    %v5924 = vunpack.c.h.b16 %v5644
    %v5925 = vunpack.c.l.b16 %v5645
    %v5926 = vunpack.c.h.b16 %v5645
    %v5927 = vunpack.c.l.b16 %v5646
    %v5928 = vunpack.c.h.b16 %v5646
    %v5929 = vunpack.c.l.b16 %v5647
    %v5930 = vunpack.c.h.b16 %v5647
    %v5931 = vunpack.c.l.b16 %v5648
    %v5932 = vunpack.c.h.b16 %v5648
    %v5933 = vunpack.c.l.b16 %v5649
    %v5934 = vunpack.c.h.b16 %v5649
    %v5935 = vunpack.c.l.b16 %v5650
    %v5936 = vunpack.c.h.b16 %v5650
    %v5937 = vunpack.c.l.b16 %v5651
    %v5938 = vunpack.c.h.b16 %v5651
    %v5939 = vunpack.c.l.b16 %v5652
    %v5940 = vunpack.c.h.b16 %v5652
    %v5941 = vunpack.c.l.b16 %v5653
    %v5942 = vunpack.c.h.b16 %v5653
    %v5943 = vunpack.c.l.b16 %v5654
    %v5944 = vunpack.c.h.b16 %v5654
    %v5945 = vunpack.c.l.b16 %v5655
    %v5946 = vunpack.c.h.b16 %v5655
    %v5947 = vunpack.c.l.b16 %v5656
    %v5948 = vunpack.c.h.b16 %v5656
    %v5949 = vunpack.c.l.b16 %v5657
    %v5950 = vunpack.c.h.b16 %v5657
    %v5951 = vunpack.c.l.b16 %v5658
    %v5952 = vunpack.c.h.b16 %v5658
    %v5953 = vunpack.c.l.b16 %v5659
    %v5954 = vunpack.c.h.b16 %v5659
    %v5955 = vunpack.c.l.b16 %v5660
    %v5956 = vunpack.c.h.b16 %v5660
    %v5957 = vunpack.c.l.b16 %v5661
    %v5958 = vunpack.c.h.b16 %v5661
    %v5959 = vunpack.c.l.b16 %v5662
    %v5960 = vunpack.c.h.b16 %v5662
    %v5961 = vunpack.c.l.b16 %v5663
    %v5962 = vunpack.c.h.b16 %v5663
    %v5963 = vunpack.c.l.b16 %v5664
    %v5964 = vunpack.c.h.b16 %v5664
    %v5965 = vunpack.c.l.b16 %v5665
    %v5966 = vunpack.c.h.b16 %v5665
    %v5967 = vunpack.c.l.b16 %v5666
    %v5968 = vunpack.c.h.b16 %v5666
    %v5969 = vunpack.c.l.b16 %v5667
    %v5970 = vunpack.c.h.b16 %v5667
    %v5971 = vunpack.c.l.b16 %v5668
    %v5972 = vunpack.c.h.b16 %v5668
    %v5973 = vunpack.c.l.b16 %v5669
    %v5974 = vunpack.c.h.b16 %v5669
    %v5975 = vunpack.c.l.b16 %v5670
    %v5976 = vunpack.c.h.b16 %v5670
    %v5977 = vunpack.c.l.b16 %v5671
    %v5978 = vunpack.c.h.b16 %v5671
    %v5979 = vunpack.c.l.b16 %v5672
    %v5980 = vunpack.c.h.b16 %v5672
    %v5981 = vunpack.c.l.b16 %v5673
    %v5982 = vunpack.c.h.b16 %v5673
    %v5983 = vunpack.c.l.b16 %v5674
    %v5984 = vunpack.c.h.b16 %v5674
    %v5985 = vunpack.c.l.b16 %v5675
    %v5986 = vunpack.c.h.b16 %v5675
    %v5987 = vunpack.c.l.b16 %v5676
    %v5988 = vunpack.c.h.b16 %v5676
    %v5989 = vunpack.c.l.b16 %v5677
    %v5990 = vunpack.c.h.b16 %v5677
    %v5991 = vunpack.c.l.b16 %v5678
    %v5992 = vunpack.c.h.b16 %v5678
    %v5993 = vunpack.c.l.b16 %v5679
    %v5994 = vunpack.c.h.b16 %v5679
    %v5995 = vunpack.c.l.b16 %v5680
    %v5996 = vunpack.c.h.b16 %v5680
    %v5997 = vunpack.c.l.b16 %v5681
    %v5998 = vunpack.c.h.b16 %v5681
    %v5999 = vunpack.c.l.b16 %v5682
    %v6000 = vunpack.c.h.b16 %v5682
    %v6001 = vunpack.c.l.b16 %v5683
    %v6002 = vunpack.c.h.b16 %v5683
    %v6003 = vunpack.c.l.b16 %v5684
    %v6004 = vunpack.c.h.b16 %v5684
    %v6005 = vunpack.c.l.b16 %v5685
    %v6006 = vunpack.c.h.b16 %v5685
    %v6007 = vunpack.c.l.b16 %v5686
    %v6008 = vunpack.c.h.b16 %v5686
    %v6009 = vunpack.c.l.b16 %v5687
    %v6010 = vunpack.c.h.b16 %v5687
    %v6011 = vunpack.c.l.b16 %v5688
    %v6012 = vunpack.c.h.b16 %v5688
    %v6013 = vunpack.c.l.b16 %v5689
    %v6014 = vunpack.c.h.b16 %v5689
    %v6015 = vunpack.c.l.b16 %v5690
    %v6016 = vunpack.c.h.b16 %v5690
    %v6017 = vunpack.c.l.b16 %v5691
    %v6018 = vunpack.c.h.b16 %v5691
    %v6019 = vunpack.c.l.b16 %v5692
    %v6020 = vunpack.c.h.b16 %v5692
    %v6021 = vunpack.c.l.b16 %v5693
    %v6022 = vunpack.c.h.b16 %v5693
    %v6023 = vunpack.c.l.b16 %v5694
    %v6024 = vunpack.c.h.b16 %v5694
    %v6025 = vunpack.c.l.b16 %v5695
    %v6026 = vunpack.c.h.b16 %v5695
    %v6027 = vpack.c.b16 %v5837, %v5835
    %v6028 = vpack.c.b16 %v5838, %v5836
    %v6029 = vpack.c.b16 %v5841, %v5839
    %v6030 = vpack.c.b16 %v5842, %v5840
    %v6031 = vpack.c.b16 %v5845, %v5843
    %v6032 = vpack.c.b16 %v5846, %v5844
    %v6033 = vpack.c.b16 %v5849, %v5847
    %v6034 = vpack.c.b16 %v5850, %v5848
    %v6035 = vpack.c.b16 %v5853, %v5851
    %v6036 = vpack.c.b16 %v5854, %v5852
    %v6037 = vpack.c.b16 %v5857, %v5855
    %v6038 = vpack.c.b16 %v5858, %v5856
    %v6039 = vpack.c.b16 %v5861, %v5859
    %v6040 = vpack.c.b16 %v5862, %v5860
    %v6041 = vpack.c.b16 %v5865, %v5863
    %v6042 = vpack.c.b16 %v5866, %v5864
    %v6043 = vpack.c.b16 %v5869, %v5867
    %v6044 = vpack.c.b16 %v5870, %v5868
    %v6045 = vpack.c.b16 %v5873, %v5871
    %v6046 = vpack.c.b16 %v5874, %v5872
    %v6047 = vpack.c.b16 %v5877, %v5875
    %v6048 = vpack.c.b16 %v5878, %v5876
    %v6049 = vpack.c.b16 %v5881, %v5879
    %v6050 = vpack.c.b16 %v5882, %v5880
    %v6051 = vpack.c.b16 %v5885, %v5883
    %v6052 = vpack.c.b16 %v5886, %v5884
    %v6053 = vpack.c.b16 %v5889, %v5887
    %v6054 = vpack.c.b16 %v5890, %v5888
    %v6055 = vpack.c.b16 %v5893, %v5891
    %v6056 = vpack.c.b16 %v5894, %v5892
    %v6057 = vpack.c.b16 %v5897, %v5895
    %v6058 = vpack.c.b16 %v5898, %v5896
    %v6059 = vpack.c.b16 %v5901, %v5899
    %v6060 = vpack.c.b16 %v5902, %v5900
    %v6061 = vpack.c.b16 %v5905, %v5903
    %v6062 = vpack.c.b16 %v5906, %v5904
    %v6063 = vpack.c.b16 %v5909, %v5907
    %v6064 = vpack.c.b16 %v5910, %v5908
    %v6065 = vpack.c.b16 %v5913, %v5911
    %v6066 = vpack.c.b16 %v5914, %v5912
    %v6067 = vpack.c.b16 %v5917, %v5915
    %v6068 = vpack.c.b16 %v5918, %v5916
    %v6069 = vpack.c.b16 %v5921, %v5919
    %v6070 = vpack.c.b16 %v5922, %v5920
    %v6071 = vpack.c.b16 %v5925, %v5923
    %v6072 = vpack.c.b16 %v5926, %v5924
    %v6073 = vpack.c.b16 %v5929, %v5927
    %v6074 = vpack.c.b16 %v5930, %v5928
    %v6075 = vpack.c.b16 %v5933, %v5931
    %v6076 = vpack.c.b16 %v5934, %v5932
    %v6077 = vpack.c.b16 %v5937, %v5935
    %v6078 = vpack.c.b16 %v5938, %v5936
    %v6079 = vpack.c.b16 %v5941, %v5939
    %v6080 = vpack.c.b16 %v5942, %v5940
    %v6081 = vpack.c.b16 %v5945, %v5943
    %v6082 = vpack.c.b16 %v5946, %v5944
    %v6083 = vpack.c.b16 %v5949, %v5947
    %v6084 = vpack.c.b16 %v5950, %v5948
    %v6085 = vpack.c.b16 %v5953, %v5951
    %v6086 = vpack.c.b16 %v5954, %v5952
    %v6087 = vpack.c.b16 %v5957, %v5955
    %v6088 = vpack.c.b16 %v5958, %v5956
    %v6089 = vpack.c.b16 %v5961, %v5959
    %v6090 = vpack.c.b16 %v5962, %v5960
    %v6091 = vpack.c.b16 %v5965, %v5963
    %v6092 = vpack.c.b16 %v5966, %v5964
    %v6093 = vpack.c.b16 %v5969, %v5967
    %v6094 = vpack.c.b16 %v5970, %v5968
    %v6095 = vpack.c.b16 %v5973, %v5971
    %v6096 = vpack.c.b16 %v5974, %v5972
    %v6097 = vpack.c.b16 %v5977, %v5975
    %v6098 = vpack.c.b16 %v5978, %v5976
    %v6099 = vpack.c.b16 %v5981, %v5979
    %v6100 = vpack.c.b16 %v5982, %v5980
    %v6101 = vpack.c.b16 %v5985, %v5983
    %v6102 = vpack.c.b16 %v5986, %v5984
    %v6103 = vpack.c.b16 %v5989, %v5987
    %v6104 = vpack.c.b16 %v5990, %v5988
    %v6105 = vpack.c.b16 %v5993, %v5991
    %v6106 = vpack.c.b16 %v5994, %v5992
    %v6107 = vpack.c.b16 %v5997, %v5995
    %v6108 = vpack.c.b16 %v5998, %v5996
    %v6109 = vpack.c.b16 %v6001, %v5999
    %v6110 = vpack.c.b16 %v6002, %v6000
    %v6111 = vpack.c.b16 %v6005, %v6003
    %v6112 = vpack.c.b16 %v6006, %v6004
    %v6113 = vpack.c.b16 %v6009, %v6007
    %v6114 = vpack.c.b16 %v6010, %v6008
    %v6115 = vpack.c.b16 %v6013, %v6011
    %v6116 = vpack.c.b16 %v6014, %v6012
    %v6117 = vpack.c.b16 %v6017, %v6015
    %v6118 = vpack.c.b16 %v6018, %v6016
    %v6119 = vpack.c.b16 %v6021, %v6019
    %v6120 = vpack.c.b16 %v6022, %v6020
    %v6121 = vpack.c.b16 %v6025, %v6023
    %v6122 = vpack.c.b16 %v6026, %v6024
    %6219 = vmatprep.subr.bf16.mxu0 %v6042
    %6220 = vmatpush1.bf16.msra.mxu0 %v6041
    %6221 = vmatprep.subr.bf16.mxu0 %v6040
    %6222 = vmatpush1.bf16.msra.mxu0 %v6039
    %6223 = vmatprep.subr.bf16.mxu0 %v6038
    %6224 = vmatpush1.bf16.msra.mxu0 %v6037
    %6225 = vmatprep.subr.bf16.mxu0 %v6036
    %6226 = vmatpush1.bf16.msra.mxu0 %v6035
    %6227 = vmatprep.subr.bf16.mxu0 %v6034
    %6228 = vmatpush1.bf16.msra.mxu0 %v6033
    %6229 = vmatprep.subr.bf16.mxu0 %v6032
    %6230 = vmatpush1.bf16.msra.mxu0 %v6031
    %6231 = vmatprep.subr.bf16.mxu0 %v6030
    %6232 = vmatpush1.bf16.msra.mxu0 %v6029
    %6233 = vmatprep.subr.bf16.mxu0 %v6028
    %6234 = vmatpush1.bf16.msra.mxu0 %v6027
    %6235 = vmatprep.subr.bf16.mxu0 %v6058
    %6236 = vmatpush2.bf16.msra.mxu0 %v6057
    %6237 = vmatprep.subr.bf16.mxu0 %v6056
    %6238 = vmatpush2.bf16.msra.mxu0 %v6055
    %6239 = vmatprep.subr.bf16.mxu0 %v6054
    %6240 = vmatpush2.bf16.msra.mxu0 %v6053
    %6241 = vmatprep.subr.bf16.mxu0 %v6052
    %6242 = vmatpush2.bf16.msra.mxu0 %v6051
    %6243 = vmatprep.subr.bf16.mxu0 %v6050
    %6244 = vmatpush2.bf16.msra.mxu0 %v6049
    %6245 = vmatprep.subr.bf16.mxu0 %v6048
    %6246 = vmatpush2.bf16.msra.mxu0 %v6047
    %6247 = vmatprep.subr.bf16.mxu0 %v6046
    %6248 = vmatpush2.bf16.msra.mxu0 %v6045
    %6249 = vmatprep.subr.bf16.mxu0 %v6044
    %6250 = vmatpush2.bf16.msra.mxu0 %v6043
    %6251 = vmatprep.mubr.bf16.mxu0 %v5728
    %6252 = vmatmul.mubr.bf16.gmra.mxu0 %v5727
    %v6253 = vpop.f32.mrf.mxu0
    %v6254 = vadd.f32 %v5702, %v6253
    %v6255 = vpop.f32.mrf.mxu0
    %v6256 = vadd.f32 %v5706, %v6255
    %v6257 = vpop.f32.mrf.mxu0
    %v6258 = vadd.f32 %v5702, %v6257
    %v6259 = vpop.f32.mrf.mxu0
    %v6260 = vadd.f32 %v5706, %v6259
    %6261 = vdwg.mxu0
    %6262 = vmatprep.subr.bf16.mxu0 %v6074
    %6263 = vmatpush1.bf16.msra.mxu0 %v6073
    %6264 = vmatprep.subr.bf16.mxu0 %v6072
    %6265 = vmatpush1.bf16.msra.mxu0 %v6071
    %6266 = vmatprep.subr.bf16.mxu0 %v6070
    %6267 = vmatpush1.bf16.msra.mxu0 %v6069
    %6268 = vmatprep.subr.bf16.mxu0 %v6068
    %6269 = vmatpush1.bf16.msra.mxu0 %v6067
    %6270 = vmatprep.subr.bf16.mxu0 %v6066
    %6271 = vmatpush1.bf16.msra.mxu0 %v6065
    %6272 = vmatprep.subr.bf16.mxu0 %v6064
    %6273 = vmatpush1.bf16.msra.mxu0 %v6063
    %6274 = vmatprep.subr.bf16.mxu0 %v6062
    %6275 = vmatpush1.bf16.msra.mxu0 %v6061
    %6276 = vmatprep.subr.bf16.mxu0 %v6060
    %6277 = vmatpush1.bf16.msra.mxu0 %v6059
    %6278 = vmatprep.subr.bf16.mxu0 %v6090
    %6279 = vmatpush2.bf16.msra.mxu0 %v6089
    %6280 = vmatprep.subr.bf16.mxu0 %v6088
    %6281 = vmatpush2.bf16.msra.mxu0 %v6087
    %6282 = vmatprep.subr.bf16.mxu0 %v6086
    %6283 = vmatpush2.bf16.msra.mxu0 %v6085
    %6284 = vmatprep.subr.bf16.mxu0 %v6084
    %6285 = vmatpush2.bf16.msra.mxu0 %v6083
    %6286 = vmatprep.subr.bf16.mxu0 %v6082
    %6287 = vmatpush2.bf16.msra.mxu0 %v6081
    %6288 = vmatprep.subr.bf16.mxu0 %v6080
    %6289 = vmatpush2.bf16.msra.mxu0 %v6079
    %6290 = vmatprep.subr.bf16.mxu0 %v6078
    %6291 = vmatpush2.bf16.msra.mxu0 %v6077
    %6292 = vmatprep.subr.bf16.mxu0 %v6076
    %6293 = vmatpush2.bf16.msra.mxu0 %v6075
    %6294 = vmatprep.mubr.bf16.mxu0 %v5730
    %6295 = vmatmul.mubr.bf16.gmra.mxu0 %v5729
    %v6296 = vpop.f32.mrf.mxu0
    %v6297 = vadd.f32 %v6254, %v6296
    %v6298 = vpop.f32.mrf.mxu0
    %v6299 = vadd.f32 %v6256, %v6298
    %v6300 = vpop.f32.mrf.mxu0
    %v6301 = vadd.f32 %v6258, %v6300
    %v6302 = vpop.f32.mrf.mxu0
    %v6303 = vadd.f32 %v6260, %v6302
    %6304 = vdwg.mxu0
    %6305 = vmatprep.subr.bf16.mxu0 %v6106
    %6306 = vmatpush1.bf16.msra.mxu0 %v6105
    %6307 = vmatprep.subr.bf16.mxu0 %v6104
    %6308 = vmatpush1.bf16.msra.mxu0 %v6103
    %6309 = vmatprep.subr.bf16.mxu0 %v6102
    %6310 = vmatpush1.bf16.msra.mxu0 %v6101
    %6311 = vmatprep.subr.bf16.mxu0 %v6100
    %6312 = vmatpush1.bf16.msra.mxu0 %v6099
    %6313 = vmatprep.subr.bf16.mxu0 %v6098
    %6314 = vmatpush1.bf16.msra.mxu0 %v6097
    %6315 = vmatprep.subr.bf16.mxu0 %v6096
    %6316 = vmatpush1.bf16.msra.mxu0 %v6095
    %6317 = vmatprep.subr.bf16.mxu0 %v6094
    %6318 = vmatpush1.bf16.msra.mxu0 %v6093
    %6319 = vmatprep.subr.bf16.mxu0 %v6092
    %6320 = vmatpush1.bf16.msra.mxu0 %v6091
    %6321 = vmatprep.subr.bf16.mxu0 %v6122
    %6322 = vmatpush2.bf16.msra.mxu0 %v6121
    %6323 = vmatprep.subr.bf16.mxu0 %v6120
    %6324 = vmatpush2.bf16.msra.mxu0 %v6119
    %6325 = vmatprep.subr.bf16.mxu0 %v6118
    %6326 = vmatpush2.bf16.msra.mxu0 %v6117
    %6327 = vmatprep.subr.bf16.mxu0 %v6116
    %6328 = vmatpush2.bf16.msra.mxu0 %v6115
    %6329 = vmatprep.subr.bf16.mxu0 %v6114
    %6330 = vmatpush2.bf16.msra.mxu0 %v6113
    %6331 = vmatprep.subr.bf16.mxu0 %v6112
    %6332 = vmatpush2.bf16.msra.mxu0 %v6111
    %6333 = vmatprep.subr.bf16.mxu0 %v6110
    %6334 = vmatpush2.bf16.msra.mxu0 %v6109
    %6335 = vmatprep.subr.bf16.mxu0 %v6108
    %6336 = vmatpush2.bf16.msra.mxu0 %v6107
    %6337 = vmatprep.mubr.bf16.mxu0 %v5732
    %6338 = vmatmul.mubr.bf16.gmra.mxu0 %v5731
    %v6339 = vpop.f32.mrf.mxu0
    %v6340 = vadd.f32 %v6297, %v6339
    %v6341 = vpop.f32.mrf.mxu0
    %v6342 = vadd.f32 %v6299, %v6341
    %v6343 = vpop.f32.mrf.mxu0
    %v6344 = vadd.f32 %v6301, %v6343
    %v6345 = vpop.f32.mrf.mxu0
    %v6346 = vadd.f32 %v6303, %v6345
    %6347 = vdwg.mxu0
    %v6348 = vpack.c.bf16 %v6344, %v6340
    %v6349 = vpack.c.bf16 %v6346, %v6342
    %v6350 = vld [vmem:[#allocation5 + $0x1510] sm:$0x1]
    %v6352 = vsel %vm3155, %v6350, 0
    %6354 = vmatprep.subr.bf16.mxu0 0
    %6355 = vmatpush1.bf16.msra.mxu0 0
    %6356 = vmatprep.subr.bf16.mxu0 0
    %6357 = vmatpush1.bf16.msra.mxu0 0
    %6358 = vmatprep.subr.bf16.mxu0 0
    %6359 = vmatpush1.bf16.msra.mxu0 0
    %6360 = vmatprep.subr.bf16.mxu0 0
    %6361 = vmatpush1.bf16.msra.mxu0 0
    %6362 = vmatprep.subr.bf16.mxu0 0
    %6363 = vmatpush1.bf16.msra.mxu0 0
    %6364 = vmatprep.subr.bf16.mxu0 0
    %6365 = vmatpush1.bf16.msra.mxu0 0
    %6366 = vmatprep.subr.bf16.mxu0 0
    %6367 = vmatpush1.bf16.msra.mxu0 0
    %6368 = vmatprep.subr.bf16.mxu0 %v6349
    %6369 = vmatpush1.bf16.msra.mxu0 %v6348
    %6370 = vmatprep.subr.bf16.mxu0 0
    %6371 = vmatpush2.bf16.msra.mxu0 0
    %6372 = vmatprep.subr.bf16.mxu0 0
    %6373 = vmatpush2.bf16.msra.mxu0 0
    %6374 = vmatprep.subr.bf16.mxu0 0
    %6375 = vmatpush2.bf16.msra.mxu0 0
    %6376 = vmatprep.subr.bf16.mxu0 0
    %6377 = vmatpush2.bf16.msra.mxu0 0
    %6378 = vmatprep.subr.bf16.mxu0 0
    %6379 = vmatpush2.bf16.msra.mxu0 0
    %6380 = vmatprep.subr.bf16.mxu0 0
    %6381 = vmatpush2.bf16.msra.mxu0 0
    %6382 = vmatprep.subr.bf16.mxu0 0
    %6383 = vmatpush2.bf16.msra.mxu0 0
    %6384 = vmatprep.subr.bf16.mxu0 0
    %6385 = vmatpush2.bf16.msra.mxu0 0
    %6386 = vmatprep.mubr.bf16.mxu0 0
    %6387 = vmatmul.mubr.bf16.gmra.mxu0 %v6352
    %v6388 = vpop.f32.mrf.mxu0
    %v6389 = vadd.f32 0.0, %v6388
    %v6390 = vpop.f32.mrf.mxu0
    %v6391 = vadd.f32 0.0, %v6390
    %v6392 = vpop.f32.mrf.mxu0
    %v6393 = vpop.f32.mrf.mxu0
    %6394 = vdwg.mxu0
    %v6395 = vpack.c.bf16 %v6389, %v6389
    %v6396 = vpack.c.bf16 %v6391, %v6391
    %v6397 = vld [vmem:[#allocation5 + $0x1520] sm:$0xf]
    %v6398 = vld [vmem:[#allocation5 + $0x1528] sm:$0xf]
    %v6399 = vld [vmem:[#allocation5 + $0x1530] sm:$0xf]
    %v6400 = vld [vmem:[#allocation5 + $0x1538] sm:$0xf]
    %v6401 = vld [vmem:[#allocation5 + $0x1540] sm:$0xf]
    %v6402 = vld [vmem:[#allocation5 + $0x1548] sm:$0xf]
    %v6403 = vld [vmem:[#allocation5 + $0x1550] sm:$0xf]
    %v6404 = vld [vmem:[#allocation5 + $0x1558] sm:$0xf]
    %v6405 = vld [vmem:[#allocation5 + $0x1560] sm:$0xf]
    %v6406 = vld [vmem:[#allocation5 + $0x1568] sm:$0xf]
    %v6407 = vld [vmem:[#allocation5 + $0x1570] sm:$0xf]
    %v6408 = vld [vmem:[#allocation5 + $0x1578] sm:$0xf]
    %v6409 = vld [vmem:[#allocation5 + $0x1580] sm:$0xf]
    %v6410 = vld [vmem:[#allocation5 + $0x1588] sm:$0xf]
    %v6411 = vld [vmem:[#allocation5 + $0x1590] sm:$0xf]
    %v6412 = vld [vmem:[#allocation5 + $0x1598] sm:$0xf]
    %v6413 = vld [vmem:[#allocation5 + $0x15a0] sm:$0xf]
    %v6414 = vld [vmem:[#allocation5 + $0x15a8] sm:$0xf]
    %v6415 = vld [vmem:[#allocation5 + $0x15b0] sm:$0xf]
    %v6416 = vld [vmem:[#allocation5 + $0x15b8] sm:$0xf]
    %v6417 = vld [vmem:[#allocation5 + $0x15c0] sm:$0xf]
    %v6418 = vld [vmem:[#allocation5 + $0x15c8] sm:$0xf]
    %v6419 = vld [vmem:[#allocation5 + $0x15d0] sm:$0xf]
    %v6420 = vld [vmem:[#allocation5 + $0x15d8] sm:$0xf]
    %v6421 = vld [vmem:[#allocation5 + $0x15e0] sm:$0xf]
    %v6422 = vld [vmem:[#allocation5 + $0x15e8] sm:$0xf]
    %v6423 = vld [vmem:[#allocation5 + $0x15f0] sm:$0xf]
    %v6424 = vld [vmem:[#allocation5 + $0x15f8] sm:$0xf]
    %v6425 = vld [vmem:[#allocation5 + $0x1600] sm:$0xf]
    %v6426 = vld [vmem:[#allocation5 + $0x1608] sm:$0xf]
    %v6427 = vld [vmem:[#allocation5 + $0x1610] sm:$0xf]
    %v6428 = vld [vmem:[#allocation5 + $0x1618] sm:$0xf]
    %v6461 = vunpack.c.l.b16 %v6397
    %v6462 = vunpack.c.l.b16 %v6398
    %v6463 = vunpack.c.l.b16 %v6399
    %v6464 = vunpack.c.l.b16 %v6400
    %v6465 = vunpack.c.l.b16 %v6401
    %v6466 = vunpack.c.l.b16 %v6402
    %v6467 = vunpack.c.l.b16 %v6403
    %v6468 = vunpack.c.l.b16 %v6404
    %v6469 = vunpack.c.l.b16 %v6405
    %v6470 = vunpack.c.l.b16 %v6406
    %v6471 = vunpack.c.l.b16 %v6407
    %v6472 = vunpack.c.l.b16 %v6408
    %v6473 = vunpack.c.l.b16 %v6409
    %v6474 = vunpack.c.l.b16 %v6410
    %v6475 = vunpack.c.l.b16 %v6411
    %v6476 = vunpack.c.l.b16 %v6412
    %v6477 = vunpack.c.l.b16 %v6413
    %v6478 = vunpack.c.l.b16 %v6414
    %v6479 = vunpack.c.l.b16 %v6415
    %v6480 = vunpack.c.l.b16 %v6416
    %v6481 = vunpack.c.l.b16 %v6417
    %v6482 = vunpack.c.l.b16 %v6418
    %v6483 = vunpack.c.l.b16 %v6419
    %v6484 = vunpack.c.l.b16 %v6420
    %v6485 = vunpack.c.l.b16 %v6421
    %v6486 = vunpack.c.l.b16 %v6422
    %v6487 = vunpack.c.l.b16 %v6423
    %v6488 = vunpack.c.l.b16 %v6424
    %v6489 = vunpack.c.l.b16 %v6425
    %v6490 = vunpack.c.l.b16 %v6426
    %v6491 = vunpack.c.l.b16 %v6427
    %v6492 = vunpack.c.l.b16 %v6428
    %v6493 = vpack.c.b16 %v6462, %v6461
    %v6494 = vpack.c.b16 %v6464, %v6463
    %v6495 = vpack.c.b16 %v6466, %v6465
    %v6496 = vpack.c.b16 %v6468, %v6467
    %v6497 = vpack.c.b16 %v6470, %v6469
    %v6498 = vpack.c.b16 %v6472, %v6471
    %v6499 = vpack.c.b16 %v6474, %v6473
    %v6500 = vpack.c.b16 %v6476, %v6475
    %v6501 = vpack.c.b16 %v6478, %v6477
    %v6502 = vpack.c.b16 %v6480, %v6479
    %v6503 = vpack.c.b16 %v6482, %v6481
    %v6504 = vpack.c.b16 %v6484, %v6483
    %v6505 = vpack.c.b16 %v6486, %v6485
    %v6506 = vpack.c.b16 %v6488, %v6487
    %v6507 = vpack.c.b16 %v6490, %v6489
    %v6508 = vpack.c.b16 %v6492, %v6491
    %6525 = vmatprep.subr.bf16.mxu0 0
    %6526 = vmatpush1.bf16.msra.mxu0 %v6500
    %6527 = vmatprep.subr.bf16.mxu0 0
    %6528 = vmatpush1.bf16.msra.mxu0 %v6499
    %6529 = vmatprep.subr.bf16.mxu0 0
    %6530 = vmatpush1.bf16.msra.mxu0 %v6498
    %6531 = vmatprep.subr.bf16.mxu0 0
    %6532 = vmatpush1.bf16.msra.mxu0 %v6497
    %6533 = vmatprep.subr.bf16.mxu0 0
    %6534 = vmatpush1.bf16.msra.mxu0 %v6496
    %6535 = vmatprep.subr.bf16.mxu0 0
    %6536 = vmatpush1.bf16.msra.mxu0 %v6495
    %6537 = vmatprep.subr.bf16.mxu0 0
    %6538 = vmatpush1.bf16.msra.mxu0 %v6494
    %6539 = vmatprep.subr.bf16.mxu0 0
    %6540 = vmatpush1.bf16.msra.mxu0 %v6493
    %6541 = vmatprep.subr.bf16.mxu0 0
    %6542 = vmatpush2.bf16.msra.mxu0 %v6508
    %6543 = vmatprep.subr.bf16.mxu0 0
    %6544 = vmatpush2.bf16.msra.mxu0 %v6507
    %6545 = vmatprep.subr.bf16.mxu0 0
    %6546 = vmatpush2.bf16.msra.mxu0 %v6506
    %6547 = vmatprep.subr.bf16.mxu0 0
    %6548 = vmatpush2.bf16.msra.mxu0 %v6505
    %6549 = vmatprep.subr.bf16.mxu0 0
    %6550 = vmatpush2.bf16.msra.mxu0 %v6504
    %6551 = vmatprep.subr.bf16.mxu0 0
    %6552 = vmatpush2.bf16.msra.mxu0 %v6503
    %6553 = vmatprep.subr.bf16.mxu0 0
    %6554 = vmatpush2.bf16.msra.mxu0 %v6502
    %6555 = vmatprep.subr.bf16.mxu0 0
    %6556 = vmatpush2.bf16.msra.mxu0 %v6501
    %6557 = vmatprep.mubr.bf16.mxu0 %v6396
    %6558 = vmatmul.mubr.bf16.gmra.mxu0 %v6395
    %v6559 = vpop.f32.mrf.mxu0
    %v6560 = vadd.f32 0.0, %v6559
    %v6561 = vpop.f32.mrf.mxu0
    %v6562 = vpop.f32.mrf.mxu0
    %v6563 = vpop.f32.mrf.mxu0
    %6564 = vdwg.mxu0
    %v6565 = vpack.c.bf16 %v6560, %v6560
    %v6566 = vld [vmem:[#allocation5 + $0x1650] sm:$0xf]
    %v6567 = vld [vmem:[#allocation5 + $0x1658] sm:$0xf]
    %v6568 = vld [vmem:[#allocation5 + $0x1660] sm:$0xf]
    %v6569 = vld [vmem:[#allocation5 + $0x1668] sm:$0xf]
    %v6570 = vld [vmem:[#allocation7 + $0x90] ss:$0 sm:$0xff]
    %v6575 = vunpack.c.l.b16 %v6566
    %v6576 = vunpack.c.l.b16 %v6567
    %v6577 = vunpack.c.l.b16 %v6568
    %v6578 = vunpack.c.l.b16 %v6569
    %v6579 = vpack.c.b16 %v6576, %v6575
    %v6580 = vpack.c.b16 %v6578, %v6577
    %v6584 = vsel %vm239, %v6565, 0
    %6586 = vmatprep.subr.bf16.mxu0 0
    %6587 = vmatpush1.bf16.msra.mxu0 0
    %6588 = vmatprep.subr.bf16.mxu0 0
    %6589 = vmatpush1.bf16.msra.mxu0 0
    %6590 = vmatprep.subr.bf16.mxu0 0
    %6591 = vmatpush1.bf16.msra.mxu0 0
    %6592 = vmatprep.subr.bf16.mxu0 0
    %6593 = vmatpush1.bf16.msra.mxu0 0
    %6594 = vmatprep.subr.bf16.mxu0 0
    %6595 = vmatpush1.bf16.msra.mxu0 0
    %6596 = vmatprep.subr.bf16.mxu0 0
    %6597 = vmatpush1.bf16.msra.mxu0 0
    %6598 = vmatprep.subr.bf16.mxu0 0
    %6599 = vmatpush1.bf16.msra.mxu0 %v6580
    %6600 = vmatprep.subr.bf16.mxu0 0
    %6601 = vmatpush1.bf16.msra.mxu0 %v6579
    %6602 = vmatprep.subr.bf16.mxu0 0
    %6603 = vmatpush2.bf16.msra.mxu0 0
    %6604 = vmatprep.subr.bf16.mxu0 0
    %6605 = vmatpush2.bf16.msra.mxu0 0
    %6606 = vmatprep.subr.bf16.mxu0 0
    %6607 = vmatpush2.bf16.msra.mxu0 0
    %6608 = vmatprep.subr.bf16.mxu0 0
    %6609 = vmatpush2.bf16.msra.mxu0 0
    %6610 = vmatprep.subr.bf16.mxu0 0
    %6611 = vmatpush2.bf16.msra.mxu0 0
    %6612 = vmatprep.subr.bf16.mxu0 0
    %6613 = vmatpush2.bf16.msra.mxu0 0
    %6614 = vmatprep.subr.bf16.mxu0 0
    %6615 = vmatpush2.bf16.msra.mxu0 0
    %6616 = vmatprep.subr.bf16.mxu0 0
    %6617 = vmatpush2.bf16.msra.mxu0 0
    %6618 = vmatprep.mubr.bf16.mxu0 0
    %6619 = vmatmul.mubr.bf16.gmra.mxu0 %v6584
    %v6620 = vpop.f32.mrf.mxu0
    %v6621 = vadd.f32 %v6570, %v6620
    %v6622 = vpop.f32.mrf.mxu0
    %v6623 = vpop.f32.mrf.mxu0
    %v6624 = vpop.f32.mrf.mxu0
    %6625 = vdwg.mxu0
    %v6626 = vxor.u32 %v6621, 2147483648
    %v6627 = vmul.f32 %v6626, 1.442695
    %v6628 = vpow.pop %v6627
    %v6629 = vadd.f32 %v6628, 1.0
    %v6630 = vrcp.pop %v6629
    %v6631 = vmul.f32 1.0, %v6630
    %v6632 = vmul.f32 %v6621, %v6631
    %v6633 = vpack.c.bf16 %v6632, %v6632
    %v6634 = vld [vmem:[#allocation5 + $0x1670] sm:$0xf]
    %v6635 = vld [vmem:[#allocation7 + $0xa0] ss:$0 sm:$0xff]
    %vm6636 = vcmask 64512
    %v6638 = vsel %vm6636, %v6633, 0
    %vm6640 = vcmask 1043456
    %v6642 = vsel %vm6640, %v6634, 0
    %6644 = vmatprep.subr.bf16.mxu0 0
    %6645 = vmatpush1.bf16.msra.mxu0 0
    %6646 = vmatprep.subr.bf16.mxu0 0
    %6647 = vmatpush1.bf16.msra.mxu0 0
    %6648 = vmatprep.subr.bf16.mxu0 0
    %6649 = vmatpush1.bf16.msra.mxu0 0
    %6650 = vmatprep.subr.bf16.mxu0 0
    %6651 = vmatpush1.bf16.msra.mxu0 0
    %6652 = vmatprep.subr.bf16.mxu0 0
    %6653 = vmatpush1.bf16.msra.mxu0 0
    %6654 = vmatprep.subr.bf16.mxu0 0
    %6655 = vmatpush1.bf16.msra.mxu0 0
    %6656 = vmatprep.subr.bf16.mxu0 0
    %6657 = vmatpush1.bf16.msra.mxu0 0
    %6658 = vmatprep.subr.bf16.mxu0 0
    %6659 = vmatpush1.bf16.msra.mxu0 %v6642
    %6660 = vmatprep.subr.bf16.mxu0 0
    %6661 = vmatpush2.bf16.msra.mxu0 0
    %6662 = vmatprep.subr.bf16.mxu0 0
    %6663 = vmatpush2.bf16.msra.mxu0 0
    %6664 = vmatprep.subr.bf16.mxu0 0
    %6665 = vmatpush2.bf16.msra.mxu0 0
    %6666 = vmatprep.subr.bf16.mxu0 0
    %6667 = vmatpush2.bf16.msra.mxu0 0
    %6668 = vmatprep.subr.bf16.mxu0 0
    %6669 = vmatpush2.bf16.msra.mxu0 0
    %6670 = vmatprep.subr.bf16.mxu0 0
    %6671 = vmatpush2.bf16.msra.mxu0 0
    %6672 = vmatprep.subr.bf16.mxu0 0
    %6673 = vmatpush2.bf16.msra.mxu0 0
    %6674 = vmatprep.subr.bf16.mxu0 0
    %6675 = vmatpush2.bf16.msra.mxu0 0
    %6676 = vmatprep.mubr.bf16.mxu0 0
    %6677 = vmatmul.mubr.bf16.gmra.mxu0 %v6638
    %v6678 = vpop.f32.mrf.mxu0
    %v6679 = vadd.f32 %v6635, %v6678
    %v6680 = vpop.f32.mrf.mxu0
    %v6681 = vpop.f32.mrf.mxu0
    %v6682 = vpop.f32.mrf.mxu0
    %6683 = vdwg.mxu0
    %v6684 = vxor.u32 %v6679, 2147483648
    %v6685 = vmul.f32 %v6684, 1.442695
    %v6686 = vpow.pop %v6685
    %v6687 = vadd.f32 %v6686, 1.0
    %v6688 = vrcp.pop %v6687
    %v6689 = vmul.f32 1.0, %v6688
    %v6690 = vld [vmem:[#allocation5 + $0x1620] sm:$0xf]
    %v6691 = vld [vmem:[#allocation5 + $0x1628] sm:$0xf]
    %v6692 = vpack.c.bf16 %v6689, %v6689
    %v6695 = vunpack.c.l.b16 %v6690
    %v6696 = vunpack.c.l.b16 %v6691
    %v6697 = vpack.c.b16 %v6696, %v6695
    %v6699 = vsel %vm3278, %v6697, 0
    %v6702 = vsel %vm3285, %v6692, 0
    %6704 = vmatprep.subr.bf16.mxu0 0
    %6705 = vmatpush1.bf16.msra.mxu0 0
    %6706 = vmatprep.subr.bf16.mxu0 0
    %6707 = vmatpush1.bf16.msra.mxu0 0
    %6708 = vmatprep.subr.bf16.mxu0 0
    %6709 = vmatpush1.bf16.msra.mxu0 0
    %6710 = vmatprep.subr.bf16.mxu0 0
    %6711 = vmatpush1.bf16.msra.mxu0 0
    %6712 = vmatprep.subr.bf16.mxu0 0
    %6713 = vmatpush1.bf16.msra.mxu0 0
    %6714 = vmatprep.subr.bf16.mxu0 0
    %6715 = vmatpush1.bf16.msra.mxu0 0
    %6716 = vmatprep.subr.bf16.mxu0 0
    %6717 = vmatpush1.bf16.msra.mxu0 0
    %6718 = vmatprep.subr.bf16.mxu0 0
    %6719 = vmatpush1.bf16.msra.mxu0 %v6702
    %6720 = vmatprep.subr.bf16.mxu0 0
    %6721 = vmatpush2.bf16.msra.mxu0 0
    %6722 = vmatprep.subr.bf16.mxu0 0
    %6723 = vmatpush2.bf16.msra.mxu0 0
    %6724 = vmatprep.subr.bf16.mxu0 0
    %6725 = vmatpush2.bf16.msra.mxu0 0
    %6726 = vmatprep.subr.bf16.mxu0 0
    %6727 = vmatpush2.bf16.msra.mxu0 0
    %6728 = vmatprep.subr.bf16.mxu0 0
    %6729 = vmatpush2.bf16.msra.mxu0 0
    %6730 = vmatprep.subr.bf16.mxu0 0
    %6731 = vmatpush2.bf16.msra.mxu0 0
    %6732 = vmatprep.subr.bf16.mxu0 0
    %6733 = vmatpush2.bf16.msra.mxu0 0
    %6734 = vmatprep.subr.bf16.mxu0 0
    %6735 = vmatpush2.bf16.msra.mxu0 0
    %6736 = vmatprep.mubr.bf16.mxu0 0
    %6737 = vmatmul.mubr.bf16.gmra.mxu0 %v6699
    %v6738 = vpop.f32.mrf.mxu0
    %v6739 = vadd.f32 0.0, %v6738
    %v6740 = vpop.f32.mrf.mxu0
    %v6741 = vpop.f32.mrf.mxu0
    %v6742 = vadd.f32 0.0, %v6741
    %v6743 = vpop.f32.mrf.mxu0
    %6744 = vdwg.mxu0
    %v6745 = vpack.c.bf16 %v6742, %v6739
    %v6746 = vld [vmem:[#allocation5 + $0x1630] sm:$0xff]
    %v6747 = vld [vmem:[#allocation5 + $0x1638] sm:$0xff]
    %v6748 = vld [vmem:[#allocation5 + $0x1640] sm:$0xff]
    %v6749 = vld [vmem:[#allocation5 + $0x1648] sm:$0xff]
    %v6754 = vunpack.c.l.b16 %v6746
    %v6755 = vunpack.c.h.b16 %v6746
    %v6756 = vunpack.c.l.b16 %v6747
    %v6757 = vunpack.c.h.b16 %v6747
    %v6758 = vunpack.c.l.b16 %v6748
    %v6759 = vunpack.c.h.b16 %v6748
    %v6760 = vunpack.c.l.b16 %v6749
    %v6761 = vunpack.c.h.b16 %v6749
    %v6762 = vpack.c.b16 %v6756, %v6754
    %v6763 = vpack.c.b16 %v6757, %v6755
    %v6764 = vpack.c.b16 %v6760, %v6758
    %v6765 = vpack.c.b16 %v6761, %v6759
    %v6771 = vsel %vm239, %v6745, 0
    %6773 = vmatprep.subr.bf16.mxu0 0
    %6774 = vmatpush1.bf16.msra.mxu0 0
    %6775 = vmatprep.subr.bf16.mxu0 0
    %6776 = vmatpush1.bf16.msra.mxu0 0
    %6777 = vmatprep.subr.bf16.mxu0 0
    %6778 = vmatpush1.bf16.msra.mxu0 0
    %6779 = vmatprep.subr.bf16.mxu0 0
    %6780 = vmatpush1.bf16.msra.mxu0 0
    %6781 = vmatprep.subr.bf16.mxu0 0
    %6782 = vmatpush1.bf16.msra.mxu0 0
    %6783 = vmatprep.subr.bf16.mxu0 0
    %6784 = vmatpush1.bf16.msra.mxu0 0
    %6785 = vmatprep.subr.bf16.mxu0 %v6765
    %6786 = vmatpush1.bf16.msra.mxu0 %v6764
    %6787 = vmatprep.subr.bf16.mxu0 %v6763
    %6788 = vmatpush1.bf16.msra.mxu0 %v6762
    %6789 = vmatprep.subr.bf16.mxu0 0
    %6790 = vmatpush2.bf16.msra.mxu0 0
    %6791 = vmatprep.subr.bf16.mxu0 0
    %6792 = vmatpush2.bf16.msra.mxu0 0
    %6793 = vmatprep.subr.bf16.mxu0 0
    %6794 = vmatpush2.bf16.msra.mxu0 0
    %6795 = vmatprep.subr.bf16.mxu0 0
    %6796 = vmatpush2.bf16.msra.mxu0 0
    %6797 = vmatprep.subr.bf16.mxu0 0
    %6798 = vmatpush2.bf16.msra.mxu0 0
    %6799 = vmatprep.subr.bf16.mxu0 0
    %6800 = vmatpush2.bf16.msra.mxu0 0
    %6801 = vmatprep.subr.bf16.mxu0 0
    %6802 = vmatpush2.bf16.msra.mxu0 0
    %6803 = vmatprep.subr.bf16.mxu0 0
    %6804 = vmatpush2.bf16.msra.mxu0 0
    %6805 = vmatprep.mubr.bf16.mxu0 0
    %6806 = vmatmul.mubr.bf16.gmra.mxu0 %v6771
    %v6807 = vpop.f32.mrf.mxu0
    %v6808 = vadd.f32 0.0, %v6807
    %v6809 = vpop.f32.mrf.mxu0
    %v6810 = vadd.f32 0.0, %v6809
    %v6811 = vpop.f32.mrf.mxu0
    %v6812 = vadd.f32 0.0, %v6811
    %v6813 = vpop.f32.mrf.mxu0
    %v6814 = vadd.f32 0.0, %v6813
    %6815 = vdwg.mxu0
    %v6816 = vmul.f32 %v6340, %v6808
    %v6817 = vmul.f32 %v6342, %v6810
    %v6818 = vmul.f32 %v6344, %v6812
    %v6819 = vmul.f32 %v6346, %v6814
    %v6820 = vpack.c.bf16 %v6818, %v6816
    %v6821 = vpack.c.bf16 %v6819, %v6817
    %v6822 = vld [vmem:[#allocation5 + $0x120] sm:$0xf]
    %v6824 = vsel %vm3155, %v6822, 0
    %6826 = vmatprep.subr.bf16.mxu0 0
    %6827 = vmatpush1.bf16.msra.mxu0 0
    %6828 = vmatprep.subr.bf16.mxu0 0
    %6829 = vmatpush1.bf16.msra.mxu0 0
    %6830 = vmatprep.subr.bf16.mxu0 0
    %6831 = vmatpush1.bf16.msra.mxu0 0
    %6832 = vmatprep.subr.bf16.mxu0 0
    %6833 = vmatpush1.bf16.msra.mxu0 0
    %6834 = vmatprep.subr.bf16.mxu0 0
    %6835 = vmatpush1.bf16.msra.mxu0 0
    %6836 = vmatprep.subr.bf16.mxu0 0
    %6837 = vmatpush1.bf16.msra.mxu0 0
    %6838 = vmatprep.subr.bf16.mxu0 0
    %6839 = vmatpush1.bf16.msra.mxu0 0
    %6840 = vmatprep.subr.bf16.mxu0 %v6821
    %6841 = vmatpush1.bf16.msra.mxu0 %v6820
    %6842 = vmatprep.subr.bf16.mxu0 0
    %6843 = vmatpush2.bf16.msra.mxu0 0
    %6844 = vmatprep.subr.bf16.mxu0 0
    %6845 = vmatpush2.bf16.msra.mxu0 0
    %6846 = vmatprep.subr.bf16.mxu0 0
    %6847 = vmatpush2.bf16.msra.mxu0 0
    %6848 = vmatprep.subr.bf16.mxu0 0
    %6849 = vmatpush2.bf16.msra.mxu0 0
    %6850 = vmatprep.subr.bf16.mxu0 0
    %6851 = vmatpush2.bf16.msra.mxu0 0
    %6852 = vmatprep.subr.bf16.mxu0 0
    %6853 = vmatpush2.bf16.msra.mxu0 0
    %6854 = vmatprep.subr.bf16.mxu0 0
    %6855 = vmatpush2.bf16.msra.mxu0 0
    %6856 = vmatprep.subr.bf16.mxu0 0
    %6857 = vmatpush2.bf16.msra.mxu0 0
    %6858 = vmatprep.mubr.bf16.mxu0 0
    %6859 = vmatmul.mubr.bf16.gmra.mxu0 %v6824
    %v6860 = vpop.f32.mrf.mxu0
    %v6861 = vadd.f32 0.0, %v6860
    %v6862 = vpop.f32.mrf.mxu0
    %v6863 = vadd.f32 0.0, %v6862
    %v6864 = vpop.f32.mrf.mxu0
    %v6865 = vpop.f32.mrf.mxu0
    %6866 = vdwg.mxu0
    %v6867 = vpack.c.bf16 %v6861, %v6861
    %v6868 = vpack.c.bf16 %v6863, %v6863
    %v6871 = vunpack.c.l.b16 %v6867
    %v6872 = vunpack.c.l.b16 %v6868
    %v6873 = vpack.c.b16 %v6872, %v6871
    %6875 = vst [vmem:[#allocation2] sm:$0xff] %v6873
    %v6876 = vld [vmem:[#allocation5 + $0x130] sm:$0xf]
    %v6878 = vsel %vm3155, %v6876, 0
    %6880 = vmatprep.subr.bf16.mxu0 0
    %6881 = vmatpush1.bf16.msra.mxu0 0
    %6882 = vmatprep.subr.bf16.mxu0 0
    %6883 = vmatpush1.bf16.msra.mxu0 0
    %6884 = vmatprep.subr.bf16.mxu0 0
    %6885 = vmatpush1.bf16.msra.mxu0 0
    %6886 = vmatprep.subr.bf16.mxu0 0
    %6887 = vmatpush1.bf16.msra.mxu0 0
    %6888 = vmatprep.subr.bf16.mxu0 0
    %6889 = vmatpush1.bf16.msra.mxu0 0
    %6890 = vmatprep.subr.bf16.mxu0 0
    %6891 = vmatpush1.bf16.msra.mxu0 0
    %6892 = vmatprep.subr.bf16.mxu0 0
    %6893 = vmatpush1.bf16.msra.mxu0 0
    %6894 = vmatprep.subr.bf16.mxu0 %v6821
    %6895 = vmatpush1.bf16.msra.mxu0 %v6820
    %6896 = vmatprep.subr.bf16.mxu0 0
    %6897 = vmatpush2.bf16.msra.mxu0 0
    %6898 = vmatprep.subr.bf16.mxu0 0
    %6899 = vmatpush2.bf16.msra.mxu0 0
    %6900 = vmatprep.subr.bf16.mxu0 0
    %6901 = vmatpush2.bf16.msra.mxu0 0
    %6902 = vmatprep.subr.bf16.mxu0 0
    %6903 = vmatpush2.bf16.msra.mxu0 0
    %6904 = vmatprep.subr.bf16.mxu0 0
    %6905 = vmatpush2.bf16.msra.mxu0 0
    %6906 = vmatprep.subr.bf16.mxu0 0
    %6907 = vmatpush2.bf16.msra.mxu0 0
    %6908 = vmatprep.subr.bf16.mxu0 0
    %6909 = vmatpush2.bf16.msra.mxu0 0
    %6910 = vmatprep.subr.bf16.mxu0 0
    %6911 = vmatpush2.bf16.msra.mxu0 0
    %6912 = vmatprep.mubr.bf16.mxu0 0
    %6913 = vmatmul.mubr.bf16.gmra.mxu0 %v6878
    %v6914 = vpop.f32.mrf.mxu0
    %v6915 = vadd.f32 0.0, %v6914
    %v6916 = vpop.f32.mrf.mxu0
    %v6917 = vadd.f32 0.0, %v6916
    %v6918 = vpop.f32.mrf.mxu0
    %v6919 = vpop.f32.mrf.mxu0
    %6920 = vdwg.mxu0
    %v6921 = vpack.c.bf16 %v6915, %v6915
    %v6922 = vpack.c.bf16 %v6917, %v6917
    %v6925 = vunpack.c.l.b16 %v6921
    %v6926 = vunpack.c.l.b16 %v6922
    %v6927 = vpack.c.b16 %v6926, %v6925
    %6929 = vst [vmem:[#allocation2 + $0x8] sm:$0xff] %v6927
    %v6930 = vld [vmem:[#allocation5 + $0x140] sm:$0xf]
    %v6932 = vsel %vm3155, %v6930, 0
    %6934 = vmatprep.subr.bf16.mxu0 0
    %6935 = vmatpush1.bf16.msra.mxu0 0
    %6936 = vmatprep.subr.bf16.mxu0 0
    %6937 = vmatpush1.bf16.msra.mxu0 0
    %6938 = vmatprep.subr.bf16.mxu0 0
    %6939 = vmatpush1.bf16.msra.mxu0 0
    %6940 = vmatprep.subr.bf16.mxu0 0
    %6941 = vmatpush1.bf16.msra.mxu0 0
    %6942 = vmatprep.subr.bf16.mxu0 0
    %6943 = vmatpush1.bf16.msra.mxu0 0
    %6944 = vmatprep.subr.bf16.mxu0 0
    %6945 = vmatpush1.bf16.msra.mxu0 0
    %6946 = vmatprep.subr.bf16.mxu0 0
    %6947 = vmatpush1.bf16.msra.mxu0 0
    %6948 = vmatprep.subr.bf16.mxu0 %v6821
    %6949 = vmatpush1.bf16.msra.mxu0 %v6820
    %6950 = vmatprep.subr.bf16.mxu0 0
    %6951 = vmatpush2.bf16.msra.mxu0 0
    %6952 = vmatprep.subr.bf16.mxu0 0
    %6953 = vmatpush2.bf16.msra.mxu0 0
    %6954 = vmatprep.subr.bf16.mxu0 0
    %6955 = vmatpush2.bf16.msra.mxu0 0
    %6956 = vmatprep.subr.bf16.mxu0 0
    %6957 = vmatpush2.bf16.msra.mxu0 0
    %6958 = vmatprep.subr.bf16.mxu0 0
    %6959 = vmatpush2.bf16.msra.mxu0 0
    %6960 = vmatprep.subr.bf16.mxu0 0
    %6961 = vmatpush2.bf16.msra.mxu0 0
    %6962 = vmatprep.subr.bf16.mxu0 0
    %6963 = vmatpush2.bf16.msra.mxu0 0
    %6964 = vmatprep.subr.bf16.mxu0 0
    %6965 = vmatpush2.bf16.msra.mxu0 0
    %6966 = vmatprep.mubr.bf16.mxu0 0
    %6967 = vmatmul.mubr.bf16.gmra.mxu0 %v6932
    %v6968 = vpop.f32.mrf.mxu0
    %v6969 = vadd.f32 0.0, %v6968
    %v6970 = vpop.f32.mrf.mxu0
    %v6971 = vadd.f32 0.0, %v6970
    %v6972 = vpop.f32.mrf.mxu0
    %v6973 = vpop.f32.mrf.mxu0
    %6974 = vdwg.mxu0
    %v6975 = vpack.c.bf16 %v6969, %v6969
    %v6976 = vpack.c.bf16 %v6971, %v6971
    %v6979 = vunpack.c.l.b16 %v6975
    %v6980 = vunpack.c.l.b16 %v6976
    %v6981 = vpack.c.b16 %v6980, %v6979
    %6983 = vst [vmem:[#allocation2 + $0x10] sm:$0xff] %v6981
    %v6984 = vld [vmem:[#allocation2] sm:$0xff]
    %v6985 = vld [vmem:[#allocation2 + $0x8] sm:$0xff]
    %v6986 = vld [vmem:[#allocation2 + $0x10] sm:$0xff]
    %v6987 = vld [vmem:[#allocation5 + $0x10b0] sm:$0xff]
    %v6988 = vld [vmem:[#allocation5 + $0x10b8] sm:$0xff]
    %v6989 = vld [vmem:[#allocation5 + $0x10c0] sm:$0xff]
    %v6990 = vld [vmem:[#allocation5 + $0x10c8] sm:$0xff]
    %v6991 = vld [vmem:[#allocation5 + $0x10d0] sm:$0xff]
    %v6992 = vld [vmem:[#allocation5 + $0x10d8] sm:$0xff]
    %v6993 = vld [vmem:[#allocation5 + $0x10e0] sm:$0xff]
    %v6994 = vld [vmem:[#allocation5 + $0x10e8] sm:$0xff]
    %v6995 = vld [vmem:[#allocation5 + $0x10f0] sm:$0xff]
    %v6996 = vld [vmem:[#allocation5 + $0x10f8] sm:$0xff]
    %v6997 = vld [vmem:[#allocation5 + $0x1100] sm:$0xff]
    %v6998 = vld [vmem:[#allocation5 + $0x1108] sm:$0xff]
    %v6999 = vld [vmem:[#allocation5 + $0x1110] sm:$0xff]
    %v7000 = vld [vmem:[#allocation5 + $0x1118] sm:$0xff]
    %v7001 = vld [vmem:[#allocation5 + $0x1120] sm:$0xff]
    %v7002 = vld [vmem:[#allocation5 + $0x1128] sm:$0xff]
    %v7003 = vld [vmem:[#allocation5 + $0x1130] sm:$0xff]
    %v7004 = vld [vmem:[#allocation5 + $0x1138] sm:$0xff]
    %v7005 = vld [vmem:[#allocation5 + $0x1140] sm:$0xff]
    %v7006 = vld [vmem:[#allocation5 + $0x1148] sm:$0xff]
    %v7007 = vld [vmem:[#allocation5 + $0x1150] sm:$0xff]
    %v7008 = vld [vmem:[#allocation5 + $0x1158] sm:$0xff]
    %v7009 = vld [vmem:[#allocation5 + $0x1160] sm:$0xff]
    %v7010 = vld [vmem:[#allocation5 + $0x1168] sm:$0xff]
    %v7011 = vld [vmem:[#allocation5 + $0x1170] sm:$0xff]
    %v7012 = vld [vmem:[#allocation5 + $0x1178] sm:$0xff]
    %v7013 = vld [vmem:[#allocation5 + $0x1180] sm:$0xff]
    %v7014 = vld [vmem:[#allocation5 + $0x1188] sm:$0xff]
    %v7015 = vld [vmem:[#allocation5 + $0x1190] sm:$0xff]
    %v7016 = vld [vmem:[#allocation5 + $0x1198] sm:$0xff]
    %v7017 = vld [vmem:[#allocation5 + $0x11a0] sm:$0xff]
    %v7018 = vld [vmem:[#allocation5 + $0x11a8] sm:$0xff]
    %v7019 = vld [vmem:[#allocation5 + $0x11b0] sm:$0xff]
    %v7020 = vld [vmem:[#allocation5 + $0x11b8] sm:$0xff]
    %v7021 = vld [vmem:[#allocation5 + $0x11c0] sm:$0xff]
    %v7022 = vld [vmem:[#allocation5 + $0x11c8] sm:$0xff]
    %v7023 = vld [vmem:[#allocation5 + $0x11d0] sm:$0xff]
    %v7024 = vld [vmem:[#allocation5 + $0x11d8] sm:$0xff]
    %v7025 = vld [vmem:[#allocation5 + $0x11e0] sm:$0xff]
    %v7026 = vld [vmem:[#allocation5 + $0x11e8] sm:$0xff]
    %v7027 = vld [vmem:[#allocation5 + $0x11f0] sm:$0xff]
    %v7028 = vld [vmem:[#allocation5 + $0x11f8] sm:$0xff]
    %v7029 = vld [vmem:[#allocation5 + $0x1200] sm:$0xff]
    %v7030 = vld [vmem:[#allocation5 + $0x1208] sm:$0xff]
    %v7031 = vld [vmem:[#allocation5 + $0x1210] sm:$0xff]
    %v7032 = vld [vmem:[#allocation5 + $0x1218] sm:$0xff]
    %v7033 = vld [vmem:[#allocation5 + $0x1220] sm:$0xff]
    %v7034 = vld [vmem:[#allocation5 + $0x1228] sm:$0xff]
    %v7035 = vld [vmem:[#allocation5 + $0x1230] sm:$0xff]
    %v7036 = vld [vmem:[#allocation5 + $0x1238] sm:$0xff]
    %v7037 = vld [vmem:[#allocation5 + $0x1240] sm:$0xff]
    %v7038 = vld [vmem:[#allocation5 + $0x1248] sm:$0xff]
    %v7039 = vld [vmem:[#allocation5 + $0x1250] sm:$0xff]
    %v7040 = vld [vmem:[#allocation5 + $0x1258] sm:$0xff]
    %v7041 = vld [vmem:[#allocation5 + $0x1260] sm:$0xff]
    %v7042 = vld [vmem:[#allocation5 + $0x1268] sm:$0xff]
    %v7043 = vld [vmem:[#allocation5 + $0x1270] sm:$0xff]
    %v7044 = vld [vmem:[#allocation5 + $0x1278] sm:$0xff]
    %v7045 = vld [vmem:[#allocation5 + $0x1280] sm:$0xff]
    %v7046 = vld [vmem:[#allocation5 + $0x1288] sm:$0xff]
    %v7047 = vld [vmem:[#allocation5 + $0x1290] sm:$0xff]
    %v7048 = vld [vmem:[#allocation5 + $0x1298] sm:$0xff]
    %v7049 = vld [vmem:[#allocation5 + $0x12a0] sm:$0xff]
    %v7050 = vld [vmem:[#allocation5 + $0x12a8] sm:$0xff]
    %v7051 = vld [vmem:[#allocation5 + $0x12b0] sm:$0xff]
    %v7052 = vld [vmem:[#allocation5 + $0x12b8] sm:$0xff]
    %v7053 = vld [vmem:[#allocation5 + $0x12c0] sm:$0xff]
    %v7054 = vld [vmem:[#allocation5 + $0x12c8] sm:$0xff]
    %v7055 = vld [vmem:[#allocation5 + $0x12d0] sm:$0xff]
    %v7056 = vld [vmem:[#allocation5 + $0x12d8] sm:$0xff]
    %v7057 = vld [vmem:[#allocation5 + $0x12e0] sm:$0xff]
    %v7058 = vld [vmem:[#allocation5 + $0x12e8] sm:$0xff]
    %v7059 = vld [vmem:[#allocation5 + $0x12f0] sm:$0xff]
    %v7060 = vld [vmem:[#allocation5 + $0x12f8] sm:$0xff]
    %v7061 = vld [vmem:[#allocation5 + $0x1300] sm:$0xff]
    %v7062 = vld [vmem:[#allocation5 + $0x1308] sm:$0xff]
    %v7063 = vld [vmem:[#allocation5 + $0x1310] sm:$0xff]
    %v7064 = vld [vmem:[#allocation5 + $0x1318] sm:$0xff]
    %v7065 = vld [vmem:[#allocation5 + $0x1320] sm:$0xff]
    %v7066 = vld [vmem:[#allocation5 + $0x1328] sm:$0xff]
    %v7067 = vld [vmem:[#allocation5 + $0x1330] sm:$0xff]
    %v7068 = vld [vmem:[#allocation5 + $0x1338] sm:$0xff]
    %v7069 = vld [vmem:[#allocation5 + $0x1340] sm:$0xff]
    %v7070 = vld [vmem:[#allocation5 + $0x1348] sm:$0xff]
    %v7071 = vld [vmem:[#allocation5 + $0x1350] sm:$0xff]
    %v7072 = vld [vmem:[#allocation5 + $0x1358] sm:$0xff]
    %v7073 = vld [vmem:[#allocation5 + $0x1360] sm:$0xff]
    %v7074 = vld [vmem:[#allocation5 + $0x1368] sm:$0xff]
    %v7075 = vld [vmem:[#allocation5 + $0x1370] sm:$0xff]
    %v7076 = vld [vmem:[#allocation5 + $0x1378] sm:$0xff]
    %v7077 = vld [vmem:[#allocation5 + $0x1380] sm:$0xff]
    %v7078 = vld [vmem:[#allocation5 + $0x1388] sm:$0xff]
    %v7079 = vld [vmem:[#allocation5 + $0x1390] sm:$0xff]
    %v7080 = vld [vmem:[#allocation5 + $0x1398] sm:$0xff]
    %v7081 = vld [vmem:[#allocation5 + $0x13a0] sm:$0xff]
    %v7082 = vld [vmem:[#allocation5 + $0x13a8] sm:$0xff]
    %s7083 = scalar_lea.vmem [#allocation7], 96
    %v7084 = vld [vmem:[%s7083] ss:$8 sm:$0x3]
    %v7086 = vlaneseq
    %v7087 = vshrl.u32 %v7086, 7
    %v7088 = vsub.s32 0, %v7087
    %v7089 = vrot.slane %v7084, %v7088
    %v7090 = vlaneseq
    %v7091 = vshrl.u32 %v7090, 7
    %v7092 = vsub.s32 1, %v7091
    %v7093 = vrot.slane %v7084, %v7092
    %v7099 = vunpack.c.l.b16 %v6984
    %v7100 = vunpack.c.h.b16 %v6984
    %v7101 = vunpack.c.l.b16 %v6985
    %v7102 = vunpack.c.h.b16 %v6985
    %v7103 = vunpack.c.l.b16 %v6986
    %v7104 = vunpack.c.h.b16 %v6986
    %v7105 = vpack.c.b16 %v7099, %v7099
    %v7106 = vpack.c.b16 %v7100, %v7100
    %v7107 = vpack.c.b16 %v7101, %v7101
    %v7108 = vpack.c.b16 %v7102, %v7102
    %v7109 = vpack.c.b16 %v7103, %v7103
    %v7110 = vpack.c.b16 %v7104, %v7104
    %v7213 = vunpack.c.l.b16 %v6987
    %v7214 = vunpack.c.h.b16 %v6987
    %v7215 = vunpack.c.l.b16 %v6988
    %v7216 = vunpack.c.h.b16 %v6988
    %v7217 = vunpack.c.l.b16 %v6989
    %v7218 = vunpack.c.h.b16 %v6989
    %v7219 = vunpack.c.l.b16 %v6990
    %v7220 = vunpack.c.h.b16 %v6990
    %v7221 = vunpack.c.l.b16 %v6991
    %v7222 = vunpack.c.h.b16 %v6991
    %v7223 = vunpack.c.l.b16 %v6992
    %v7224 = vunpack.c.h.b16 %v6992
    %v7225 = vunpack.c.l.b16 %v6993
    %v7226 = vunpack.c.h.b16 %v6993
    %v7227 = vunpack.c.l.b16 %v6994
    %v7228 = vunpack.c.h.b16 %v6994
    %v7229 = vunpack.c.l.b16 %v6995
    %v7230 = vunpack.c.h.b16 %v6995
    %v7231 = vunpack.c.l.b16 %v6996
    %v7232 = vunpack.c.h.b16 %v6996
    %v7233 = vunpack.c.l.b16 %v6997
    %v7234 = vunpack.c.h.b16 %v6997
    %v7235 = vunpack.c.l.b16 %v6998
    %v7236 = vunpack.c.h.b16 %v6998
    %v7237 = vunpack.c.l.b16 %v6999
    %v7238 = vunpack.c.h.b16 %v6999
    %v7239 = vunpack.c.l.b16 %v7000
    %v7240 = vunpack.c.h.b16 %v7000
    %v7241 = vunpack.c.l.b16 %v7001
    %v7242 = vunpack.c.h.b16 %v7001
    %v7243 = vunpack.c.l.b16 %v7002
    %v7244 = vunpack.c.h.b16 %v7002
    %v7245 = vunpack.c.l.b16 %v7003
    %v7246 = vunpack.c.h.b16 %v7003
    %v7247 = vunpack.c.l.b16 %v7004
    %v7248 = vunpack.c.h.b16 %v7004
    %v7249 = vunpack.c.l.b16 %v7005
    %v7250 = vunpack.c.h.b16 %v7005
    %v7251 = vunpack.c.l.b16 %v7006
    %v7252 = vunpack.c.h.b16 %v7006
    %v7253 = vunpack.c.l.b16 %v7007
    %v7254 = vunpack.c.h.b16 %v7007
    %v7255 = vunpack.c.l.b16 %v7008
    %v7256 = vunpack.c.h.b16 %v7008
    %v7257 = vunpack.c.l.b16 %v7009
    %v7258 = vunpack.c.h.b16 %v7009
    %v7259 = vunpack.c.l.b16 %v7010
    %v7260 = vunpack.c.h.b16 %v7010
    %v7261 = vunpack.c.l.b16 %v7011
    %v7262 = vunpack.c.h.b16 %v7011
    %v7263 = vunpack.c.l.b16 %v7012
    %v7264 = vunpack.c.h.b16 %v7012
    %v7265 = vunpack.c.l.b16 %v7013
    %v7266 = vunpack.c.h.b16 %v7013
    %v7267 = vunpack.c.l.b16 %v7014
    %v7268 = vunpack.c.h.b16 %v7014
    %v7269 = vunpack.c.l.b16 %v7015
    %v7270 = vunpack.c.h.b16 %v7015
    %v7271 = vunpack.c.l.b16 %v7016
    %v7272 = vunpack.c.h.b16 %v7016
    %v7273 = vunpack.c.l.b16 %v7017
    %v7274 = vunpack.c.h.b16 %v7017
    %v7275 = vunpack.c.l.b16 %v7018
    %v7276 = vunpack.c.h.b16 %v7018
    %v7277 = vunpack.c.l.b16 %v7019
    %v7278 = vunpack.c.h.b16 %v7019
    %v7279 = vunpack.c.l.b16 %v7020
    %v7280 = vunpack.c.h.b16 %v7020
    %v7281 = vunpack.c.l.b16 %v7021
    %v7282 = vunpack.c.h.b16 %v7021
    %v7283 = vunpack.c.l.b16 %v7022
    %v7284 = vunpack.c.h.b16 %v7022
    %v7285 = vunpack.c.l.b16 %v7023
    %v7286 = vunpack.c.h.b16 %v7023
    %v7287 = vunpack.c.l.b16 %v7024
    %v7288 = vunpack.c.h.b16 %v7024
    %v7289 = vunpack.c.l.b16 %v7025
    %v7290 = vunpack.c.h.b16 %v7025
    %v7291 = vunpack.c.l.b16 %v7026
    %v7292 = vunpack.c.h.b16 %v7026
    %v7293 = vunpack.c.l.b16 %v7027
    %v7294 = vunpack.c.h.b16 %v7027
    %v7295 = vunpack.c.l.b16 %v7028
    %v7296 = vunpack.c.h.b16 %v7028
    %v7297 = vunpack.c.l.b16 %v7029
    %v7298 = vunpack.c.h.b16 %v7029
    %v7299 = vunpack.c.l.b16 %v7030
    %v7300 = vunpack.c.h.b16 %v7030
    %v7301 = vunpack.c.l.b16 %v7031
    %v7302 = vunpack.c.h.b16 %v7031
    %v7303 = vunpack.c.l.b16 %v7032
    %v7304 = vunpack.c.h.b16 %v7032
    %v7305 = vunpack.c.l.b16 %v7033
    %v7306 = vunpack.c.h.b16 %v7033
    %v7307 = vunpack.c.l.b16 %v7034
    %v7308 = vunpack.c.h.b16 %v7034
    %v7309 = vunpack.c.l.b16 %v7035
    %v7310 = vunpack.c.h.b16 %v7035
    %v7311 = vunpack.c.l.b16 %v7036
    %v7312 = vunpack.c.h.b16 %v7036
    %v7313 = vunpack.c.l.b16 %v7037
    %v7314 = vunpack.c.h.b16 %v7037
    %v7315 = vunpack.c.l.b16 %v7038
    %v7316 = vunpack.c.h.b16 %v7038
    %v7317 = vunpack.c.l.b16 %v7039
    %v7318 = vunpack.c.h.b16 %v7039
    %v7319 = vunpack.c.l.b16 %v7040
    %v7320 = vunpack.c.h.b16 %v7040
    %v7321 = vunpack.c.l.b16 %v7041
    %v7322 = vunpack.c.h.b16 %v7041
    %v7323 = vunpack.c.l.b16 %v7042
    %v7324 = vunpack.c.h.b16 %v7042
    %v7325 = vunpack.c.l.b16 %v7043
    %v7326 = vunpack.c.h.b16 %v7043
    %v7327 = vunpack.c.l.b16 %v7044
    %v7328 = vunpack.c.h.b16 %v7044
    %v7329 = vunpack.c.l.b16 %v7045
    %v7330 = vunpack.c.h.b16 %v7045
    %v7331 = vunpack.c.l.b16 %v7046
    %v7332 = vunpack.c.h.b16 %v7046
    %v7333 = vunpack.c.l.b16 %v7047
    %v7334 = vunpack.c.h.b16 %v7047
    %v7335 = vunpack.c.l.b16 %v7048
    %v7336 = vunpack.c.h.b16 %v7048
    %v7337 = vunpack.c.l.b16 %v7049
    %v7338 = vunpack.c.h.b16 %v7049
    %v7339 = vunpack.c.l.b16 %v7050
    %v7340 = vunpack.c.h.b16 %v7050
    %v7341 = vunpack.c.l.b16 %v7051
    %v7342 = vunpack.c.h.b16 %v7051
    %v7343 = vunpack.c.l.b16 %v7052
    %v7344 = vunpack.c.h.b16 %v7052
    %v7345 = vunpack.c.l.b16 %v7053
    %v7346 = vunpack.c.h.b16 %v7053
    %v7347 = vunpack.c.l.b16 %v7054
    %v7348 = vunpack.c.h.b16 %v7054
    %v7349 = vunpack.c.l.b16 %v7055
    %v7350 = vunpack.c.h.b16 %v7055
    %v7351 = vunpack.c.l.b16 %v7056
    %v7352 = vunpack.c.h.b16 %v7056
    %v7353 = vunpack.c.l.b16 %v7057
    %v7354 = vunpack.c.h.b16 %v7057
    %v7355 = vunpack.c.l.b16 %v7058
    %v7356 = vunpack.c.h.b16 %v7058
    %v7357 = vunpack.c.l.b16 %v7059
    %v7358 = vunpack.c.h.b16 %v7059
    %v7359 = vunpack.c.l.b16 %v7060
    %v7360 = vunpack.c.h.b16 %v7060
    %v7361 = vunpack.c.l.b16 %v7061
    %v7362 = vunpack.c.h.b16 %v7061
    %v7363 = vunpack.c.l.b16 %v7062
    %v7364 = vunpack.c.h.b16 %v7062
    %v7365 = vunpack.c.l.b16 %v7063
    %v7366 = vunpack.c.h.b16 %v7063
    %v7367 = vunpack.c.l.b16 %v7064
    %v7368 = vunpack.c.h.b16 %v7064
    %v7369 = vunpack.c.l.b16 %v7065
    %v7370 = vunpack.c.h.b16 %v7065
    %v7371 = vunpack.c.l.b16 %v7066
    %v7372 = vunpack.c.h.b16 %v7066
    %v7373 = vunpack.c.l.b16 %v7067
    %v7374 = vunpack.c.h.b16 %v7067
    %v7375 = vunpack.c.l.b16 %v7068
    %v7376 = vunpack.c.h.b16 %v7068
    %v7377 = vunpack.c.l.b16 %v7069
    %v7378 = vunpack.c.h.b16 %v7069
    %v7379 = vunpack.c.l.b16 %v7070
    %v7380 = vunpack.c.h.b16 %v7070
    %v7381 = vunpack.c.l.b16 %v7071
    %v7382 = vunpack.c.h.b16 %v7071
    %v7383 = vunpack.c.l.b16 %v7072
    %v7384 = vunpack.c.h.b16 %v7072
    %v7385 = vunpack.c.l.b16 %v7073
    %v7386 = vunpack.c.h.b16 %v7073
    %v7387 = vunpack.c.l.b16 %v7074
    %v7388 = vunpack.c.h.b16 %v7074
    %v7389 = vunpack.c.l.b16 %v7075
    %v7390 = vunpack.c.h.b16 %v7075
    %v7391 = vunpack.c.l.b16 %v7076
    %v7392 = vunpack.c.h.b16 %v7076
    %v7393 = vunpack.c.l.b16 %v7077
    %v7394 = vunpack.c.h.b16 %v7077
    %v7395 = vunpack.c.l.b16 %v7078
    %v7396 = vunpack.c.h.b16 %v7078
    %v7397 = vunpack.c.l.b16 %v7079
    %v7398 = vunpack.c.h.b16 %v7079
    %v7399 = vunpack.c.l.b16 %v7080
    %v7400 = vunpack.c.h.b16 %v7080
    %v7401 = vunpack.c.l.b16 %v7081
    %v7402 = vunpack.c.h.b16 %v7081
    %v7403 = vunpack.c.l.b16 %v7082
    %v7404 = vunpack.c.h.b16 %v7082
    %v7405 = vpack.c.b16 %v7215, %v7213
    %v7406 = vpack.c.b16 %v7216, %v7214
    %v7407 = vpack.c.b16 %v7219, %v7217
    %v7408 = vpack.c.b16 %v7220, %v7218
    %v7409 = vpack.c.b16 %v7223, %v7221
    %v7410 = vpack.c.b16 %v7224, %v7222
    %v7411 = vpack.c.b16 %v7227, %v7225
    %v7412 = vpack.c.b16 %v7228, %v7226
    %v7413 = vpack.c.b16 %v7231, %v7229
    %v7414 = vpack.c.b16 %v7232, %v7230
    %v7415 = vpack.c.b16 %v7235, %v7233
    %v7416 = vpack.c.b16 %v7236, %v7234
    %v7417 = vpack.c.b16 %v7239, %v7237
    %v7418 = vpack.c.b16 %v7240, %v7238
    %v7419 = vpack.c.b16 %v7243, %v7241
    %v7420 = vpack.c.b16 %v7244, %v7242
    %v7421 = vpack.c.b16 %v7247, %v7245
    %v7422 = vpack.c.b16 %v7248, %v7246
    %v7423 = vpack.c.b16 %v7251, %v7249
    %v7424 = vpack.c.b16 %v7252, %v7250
    %v7425 = vpack.c.b16 %v7255, %v7253
    %v7426 = vpack.c.b16 %v7256, %v7254
    %v7427 = vpack.c.b16 %v7259, %v7257
    %v7428 = vpack.c.b16 %v7260, %v7258
    %v7429 = vpack.c.b16 %v7263, %v7261
    %v7430 = vpack.c.b16 %v7264, %v7262
    %v7431 = vpack.c.b16 %v7267, %v7265
    %v7432 = vpack.c.b16 %v7268, %v7266
    %v7433 = vpack.c.b16 %v7271, %v7269
    %v7434 = vpack.c.b16 %v7272, %v7270
    %v7435 = vpack.c.b16 %v7275, %v7273
    %v7436 = vpack.c.b16 %v7276, %v7274
    %v7437 = vpack.c.b16 %v7279, %v7277
    %v7438 = vpack.c.b16 %v7280, %v7278
    %v7439 = vpack.c.b16 %v7283, %v7281
    %v7440 = vpack.c.b16 %v7284, %v7282
    %v7441 = vpack.c.b16 %v7287, %v7285
    %v7442 = vpack.c.b16 %v7288, %v7286
    %v7443 = vpack.c.b16 %v7291, %v7289
    %v7444 = vpack.c.b16 %v7292, %v7290
    %v7445 = vpack.c.b16 %v7295, %v7293
    %v7446 = vpack.c.b16 %v7296, %v7294
    %v7447 = vpack.c.b16 %v7299, %v7297
    %v7448 = vpack.c.b16 %v7300, %v7298
    %v7449 = vpack.c.b16 %v7303, %v7301
    %v7450 = vpack.c.b16 %v7304, %v7302
    %v7451 = vpack.c.b16 %v7307, %v7305
    %v7452 = vpack.c.b16 %v7308, %v7306
    %v7453 = vpack.c.b16 %v7311, %v7309
    %v7454 = vpack.c.b16 %v7312, %v7310
    %v7455 = vpack.c.b16 %v7315, %v7313
    %v7456 = vpack.c.b16 %v7316, %v7314
    %v7457 = vpack.c.b16 %v7319, %v7317
    %v7458 = vpack.c.b16 %v7320, %v7318
    %v7459 = vpack.c.b16 %v7323, %v7321
    %v7460 = vpack.c.b16 %v7324, %v7322
    %v7461 = vpack.c.b16 %v7327, %v7325
    %v7462 = vpack.c.b16 %v7328, %v7326
    %v7463 = vpack.c.b16 %v7331, %v7329
    %v7464 = vpack.c.b16 %v7332, %v7330
    %v7465 = vpack.c.b16 %v7335, %v7333
    %v7466 = vpack.c.b16 %v7336, %v7334
    %v7467 = vpack.c.b16 %v7339, %v7337
    %v7468 = vpack.c.b16 %v7340, %v7338
    %v7469 = vpack.c.b16 %v7343, %v7341
    %v7470 = vpack.c.b16 %v7344, %v7342
    %v7471 = vpack.c.b16 %v7347, %v7345
    %v7472 = vpack.c.b16 %v7348, %v7346
    %v7473 = vpack.c.b16 %v7351, %v7349
    %v7474 = vpack.c.b16 %v7352, %v7350
    %v7475 = vpack.c.b16 %v7355, %v7353
    %v7476 = vpack.c.b16 %v7356, %v7354
    %v7477 = vpack.c.b16 %v7359, %v7357
    %v7478 = vpack.c.b16 %v7360, %v7358
    %v7479 = vpack.c.b16 %v7363, %v7361
    %v7480 = vpack.c.b16 %v7364, %v7362
    %v7481 = vpack.c.b16 %v7367, %v7365
    %v7482 = vpack.c.b16 %v7368, %v7366
    %v7483 = vpack.c.b16 %v7371, %v7369
    %v7484 = vpack.c.b16 %v7372, %v7370
    %v7485 = vpack.c.b16 %v7375, %v7373
    %v7486 = vpack.c.b16 %v7376, %v7374
    %v7487 = vpack.c.b16 %v7379, %v7377
    %v7488 = vpack.c.b16 %v7380, %v7378
    %v7489 = vpack.c.b16 %v7383, %v7381
    %v7490 = vpack.c.b16 %v7384, %v7382
    %v7491 = vpack.c.b16 %v7387, %v7385
    %v7492 = vpack.c.b16 %v7388, %v7386
    %v7493 = vpack.c.b16 %v7391, %v7389
    %v7494 = vpack.c.b16 %v7392, %v7390
    %v7495 = vpack.c.b16 %v7395, %v7393
    %v7496 = vpack.c.b16 %v7396, %v7394
    %v7497 = vpack.c.b16 %v7399, %v7397
    %v7498 = vpack.c.b16 %v7400, %v7398
    %v7499 = vpack.c.b16 %v7403, %v7401
    %v7500 = vpack.c.b16 %v7404, %v7402
    %7597 = vmatprep.subr.bf16.mxu0 %v7420
    %7598 = vmatpush1.bf16.msra.mxu0 %v7419
    %7599 = vmatprep.subr.bf16.mxu0 %v7418
    %7600 = vmatpush1.bf16.msra.mxu0 %v7417
    %7601 = vmatprep.subr.bf16.mxu0 %v7416
    %7602 = vmatpush1.bf16.msra.mxu0 %v7415
    %7603 = vmatprep.subr.bf16.mxu0 %v7414
    %7604 = vmatpush1.bf16.msra.mxu0 %v7413
    %7605 = vmatprep.subr.bf16.mxu0 %v7412
    %7606 = vmatpush1.bf16.msra.mxu0 %v7411
    %7607 = vmatprep.subr.bf16.mxu0 %v7410
    %7608 = vmatpush1.bf16.msra.mxu0 %v7409
    %7609 = vmatprep.subr.bf16.mxu0 %v7408
    %7610 = vmatpush1.bf16.msra.mxu0 %v7407
    %7611 = vmatprep.subr.bf16.mxu0 %v7406
    %7612 = vmatpush1.bf16.msra.mxu0 %v7405
    %7613 = vmatprep.subr.bf16.mxu0 %v7436
    %7614 = vmatpush2.bf16.msra.mxu0 %v7435
    %7615 = vmatprep.subr.bf16.mxu0 %v7434
    %7616 = vmatpush2.bf16.msra.mxu0 %v7433
    %7617 = vmatprep.subr.bf16.mxu0 %v7432
    %7618 = vmatpush2.bf16.msra.mxu0 %v7431
    %7619 = vmatprep.subr.bf16.mxu0 %v7430
    %7620 = vmatpush2.bf16.msra.mxu0 %v7429
    %7621 = vmatprep.subr.bf16.mxu0 %v7428
    %7622 = vmatpush2.bf16.msra.mxu0 %v7427
    %7623 = vmatprep.subr.bf16.mxu0 %v7426
    %7624 = vmatpush2.bf16.msra.mxu0 %v7425
    %7625 = vmatprep.subr.bf16.mxu0 %v7424
    %7626 = vmatpush2.bf16.msra.mxu0 %v7423
    %7627 = vmatprep.subr.bf16.mxu0 %v7422
    %7628 = vmatpush2.bf16.msra.mxu0 %v7421
    %7629 = vmatprep.mubr.bf16.mxu0 %v7106
    %7630 = vmatmul.mubr.bf16.gmra.mxu0 %v7105
    %v7631 = vpop.f32.mrf.mxu0
    %v7632 = vadd.f32 %v7089, %v7631
    %v7633 = vpop.f32.mrf.mxu0
    %v7634 = vadd.f32 %v7093, %v7633
    %v7635 = vpop.f32.mrf.mxu0
    %v7636 = vpop.f32.mrf.mxu0
    %7637 = vdwg.mxu0
    %7638 = vmatprep.subr.bf16.mxu0 %v7452
    %7639 = vmatpush1.bf16.msra.mxu0 %v7451
    %7640 = vmatprep.subr.bf16.mxu0 %v7450
    %7641 = vmatpush1.bf16.msra.mxu0 %v7449
    %7642 = vmatprep.subr.bf16.mxu0 %v7448
    %7643 = vmatpush1.bf16.msra.mxu0 %v7447
    %7644 = vmatprep.subr.bf16.mxu0 %v7446
    %7645 = vmatpush1.bf16.msra.mxu0 %v7445
    %7646 = vmatprep.subr.bf16.mxu0 %v7444
    %7647 = vmatpush1.bf16.msra.mxu0 %v7443
    %7648 = vmatprep.subr.bf16.mxu0 %v7442
    %7649 = vmatpush1.bf16.msra.mxu0 %v7441
    %7650 = vmatprep.subr.bf16.mxu0 %v7440
    %7651 = vmatpush1.bf16.msra.mxu0 %v7439
    %7652 = vmatprep.subr.bf16.mxu0 %v7438
    %7653 = vmatpush1.bf16.msra.mxu0 %v7437
    %7654 = vmatprep.subr.bf16.mxu0 %v7468
    %7655 = vmatpush2.bf16.msra.mxu0 %v7467
    %7656 = vmatprep.subr.bf16.mxu0 %v7466
    %7657 = vmatpush2.bf16.msra.mxu0 %v7465
    %7658 = vmatprep.subr.bf16.mxu0 %v7464
    %7659 = vmatpush2.bf16.msra.mxu0 %v7463
    %7660 = vmatprep.subr.bf16.mxu0 %v7462
    %7661 = vmatpush2.bf16.msra.mxu0 %v7461
    %7662 = vmatprep.subr.bf16.mxu0 %v7460
    %7663 = vmatpush2.bf16.msra.mxu0 %v7459
    %7664 = vmatprep.subr.bf16.mxu0 %v7458
    %7665 = vmatpush2.bf16.msra.mxu0 %v7457
    %7666 = vmatprep.subr.bf16.mxu0 %v7456
    %7667 = vmatpush2.bf16.msra.mxu0 %v7455
    %7668 = vmatprep.subr.bf16.mxu0 %v7454
    %7669 = vmatpush2.bf16.msra.mxu0 %v7453
    %7670 = vmatprep.mubr.bf16.mxu0 %v7108
    %7671 = vmatmul.mubr.bf16.gmra.mxu0 %v7107
    %v7672 = vpop.f32.mrf.mxu0
    %v7673 = vadd.f32 %v7632, %v7672
    %v7674 = vpop.f32.mrf.mxu0
    %v7675 = vadd.f32 %v7634, %v7674
    %v7676 = vpop.f32.mrf.mxu0
    %v7677 = vpop.f32.mrf.mxu0
    %7678 = vdwg.mxu0
    %7679 = vmatprep.subr.bf16.mxu0 %v7484
    %7680 = vmatpush1.bf16.msra.mxu0 %v7483
    %7681 = vmatprep.subr.bf16.mxu0 %v7482
    %7682 = vmatpush1.bf16.msra.mxu0 %v7481
    %7683 = vmatprep.subr.bf16.mxu0 %v7480
    %7684 = vmatpush1.bf16.msra.mxu0 %v7479
    %7685 = vmatprep.subr.bf16.mxu0 %v7478
    %7686 = vmatpush1.bf16.msra.mxu0 %v7477
    %7687 = vmatprep.subr.bf16.mxu0 %v7476
    %7688 = vmatpush1.bf16.msra.mxu0 %v7475
    %7689 = vmatprep.subr.bf16.mxu0 %v7474
    %7690 = vmatpush1.bf16.msra.mxu0 %v7473
    %7691 = vmatprep.subr.bf16.mxu0 %v7472
    %7692 = vmatpush1.bf16.msra.mxu0 %v7471
    %7693 = vmatprep.subr.bf16.mxu0 %v7470
    %7694 = vmatpush1.bf16.msra.mxu0 %v7469
    %7695 = vmatprep.subr.bf16.mxu0 %v7500
    %7696 = vmatpush2.bf16.msra.mxu0 %v7499
    %7697 = vmatprep.subr.bf16.mxu0 %v7498
    %7698 = vmatpush2.bf16.msra.mxu0 %v7497
    %7699 = vmatprep.subr.bf16.mxu0 %v7496
    %7700 = vmatpush2.bf16.msra.mxu0 %v7495
    %7701 = vmatprep.subr.bf16.mxu0 %v7494
    %7702 = vmatpush2.bf16.msra.mxu0 %v7493
    %7703 = vmatprep.subr.bf16.mxu0 %v7492
    %7704 = vmatpush2.bf16.msra.mxu0 %v7491
    %7705 = vmatprep.subr.bf16.mxu0 %v7490
    %7706 = vmatpush2.bf16.msra.mxu0 %v7489
    %7707 = vmatprep.subr.bf16.mxu0 %v7488
    %7708 = vmatpush2.bf16.msra.mxu0 %v7487
    %7709 = vmatprep.subr.bf16.mxu0 %v7486
    %7710 = vmatpush2.bf16.msra.mxu0 %v7485
    %7711 = vmatprep.mubr.bf16.mxu0 %v7110
    %7712 = vmatmul.mubr.bf16.gmra.mxu0 %v7109
    %v7713 = vpop.f32.mrf.mxu0
    %v7714 = vadd.f32 %v7673, %v7713
    %v7715 = vpop.f32.mrf.mxu0
    %v7716 = vadd.f32 %v7675, %v7715
    %v7717 = vpop.f32.mrf.mxu0
    %v7718 = vpop.f32.mrf.mxu0
    %7719 = vdwg.mxu0
    %v7720 = vxor.u32 %v7714, 2147483648
    %v7721 = vxor.u32 %v7716, 2147483648
    %v7722 = vmul.f32 %v7720, 1.442695
    %v7723 = vpow.pop %v7722
    %v7724 = vmul.f32 %v7721, 1.442695
    %v7725 = vpow.pop %v7724
    %v7726 = vadd.f32 %v7723, 1.0
    %v7727 = vadd.f32 %v7725, 1.0
    %v7728 = vrcp.pop %v7726
    %v7729 = vmul.f32 1.0, %v7728
    %v7730 = vrcp.pop %v7727
    %v7731 = vmul.f32 1.0, %v7730
    %v7732 = vmul.f32 %v7714, %v7729
    %v7733 = vmul.f32 %v7716, %v7731
    %v7734 = vld [vmem:[#allocation7 + $0xb0] sm:$0xff]
    %v7735 = vld [vmem:[#allocation7 + $0xb8] sm:$0xff]
    %v7736 = vmul.f32 %v7732, %v7734
    %v7737 = vmul.f32 %v7733, %v7735
    %v7738 = vadd.f32 %v7736, %v7737
    %7739 = vadd.xlane.f32.xlu0 %v7738
    %v7740 = vpop.xlane.xlu0 %7739
    %v7741 = vld [vmem:[#allocation7 + $0xc0] sm:$0x3]
    %v7742 = vld [vmem:[#allocation7 + $0xd0] ss:$0 sm:$0xff]
    %v7744 = vsel %vm6636, %v7741, 0
    %7746 = vmatprep.subr.mxu0 0.0
    %7747 = vmatpush1.msra.mxu0 0.0
    %7748 = vmatprep.subr.mxu0 0.0
    %7749 = vmatpush1.msra.mxu0 0.0
    %7750 = vmatprep.subr.mxu0 0.0
    %7751 = vmatpush1.msra.mxu0 0.0
    %7752 = vmatprep.subr.mxu0 0.0
    %7753 = vmatpush1.msra.mxu0 0.0
    %7754 = vmatprep.subr.mxu0 0.0
    %7755 = vmatpush1.msra.mxu0 0.0
    %7756 = vmatprep.subr.mxu0 0.0
    %7757 = vmatpush1.msra.mxu0 0.0
    %7758 = vmatprep.subr.mxu0 0.0
    %7759 = vmatpush1.msra.mxu0 0.0
    %7760 = vmatprep.subr.mxu0 0.0
    %7761 = vmatpush1.msra.mxu0 0.0
    %7762 = vmatprep.subr.mxu0 0.0
    %7763 = vmatpush1.msra.mxu0 0.0
    %7764 = vmatprep.subr.mxu0 0.0
    %7765 = vmatpush1.msra.mxu0 0.0
    %7766 = vmatprep.subr.mxu0 0.0
    %7767 = vmatpush1.msra.mxu0 0.0
    %7768 = vmatprep.subr.mxu0 0.0
    %7769 = vmatpush1.msra.mxu0 0.0
    %7770 = vmatprep.subr.mxu0 0.0
    %7771 = vmatpush1.msra.mxu0 0.0
    %7772 = vmatprep.subr.mxu0 0.0
    %7773 = vmatpush1.msra.mxu0 0.0
    %7774 = vmatprep.subr.mxu0 0.0
    %7775 = vmatpush1.msra.mxu0 0.0
    %7776 = vmatprep.subr.mxu0 0.0
    %7777 = vmatpush1.msra.mxu0 %v7740
    %7778 = vmatprep.subr.mxu0 0.0
    %7779 = vmatpush2.msra.mxu0 0.0
    %7780 = vmatprep.subr.mxu0 0.0
    %7781 = vmatpush2.msra.mxu0 0.0
    %7782 = vmatprep.subr.mxu0 0.0
    %7783 = vmatpush2.msra.mxu0 0.0
    %7784 = vmatprep.subr.mxu0 0.0
    %7785 = vmatpush2.msra.mxu0 0.0
    %7786 = vmatprep.subr.mxu0 0.0
    %7787 = vmatpush2.msra.mxu0 0.0
    %7788 = vmatprep.subr.mxu0 0.0
    %7789 = vmatpush2.msra.mxu0 0.0
    %7790 = vmatprep.subr.mxu0 0.0
    %7791 = vmatpush2.msra.mxu0 0.0
    %7792 = vmatprep.subr.mxu0 0.0
    %7793 = vmatpush2.msra.mxu0 0.0
    %7794 = vmatprep.subr.mxu0 0.0
    %7795 = vmatpush2.msra.mxu0 0.0
    %7796 = vmatprep.subr.mxu0 0.0
    %7797 = vmatpush2.msra.mxu0 0.0
    %7798 = vmatprep.subr.mxu0 0.0
    %7799 = vmatpush2.msra.mxu0 0.0
    %7800 = vmatprep.subr.mxu0 0.0
    %7801 = vmatpush2.msra.mxu0 0.0
    %7802 = vmatprep.subr.mxu0 0.0
    %7803 = vmatpush2.msra.mxu0 0.0
    %7804 = vmatprep.subr.mxu0 0.0
    %7805 = vmatpush2.msra.mxu0 0.0
    %7806 = vmatprep.subr.mxu0 0.0
    %7807 = vmatpush2.msra.mxu0 0.0
    %7808 = vmatprep.subr.mxu0 0.0
    %7809 = vmatpush2.msra.mxu0 0.0
    %7810 = vmatprep.mubr.f32.mxu0 0.0
    %7811 = vmatmul.mubr.f32.gmra.mxu0 %v7744
    %v7812 = vpop.f32.mrf.mxu0
    %v7813 = vadd.f32 %v7742, %v7812
    %v7814 = vpop.f32.mrf.mxu0
    %7815 = vdwg.mxu0
    %vm7816 = vcmask 1024
    %7817 = vst.msk [vmem:[%s3] sm:$0x3] %vm7816, %v7813
    // Predicated region
    $region26: #{forward.1} parent=1 // pred_check
      _
    $region27: #{forward.1} parent=1 // pred_check_branch
      %7819 = sbr.rel (0) target = $region29
    $region28: #{forward.1} parent=1 // pred_region
      _
    $region29: #{forward.1} parent=1 // pred_fallthru
      _
    // Predicated region
    $region30: #{forward.1} parent=1 // pred_check
      _
    $region31: #{forward.1} parent=1 // pred_check_branch
      %7821 = sbr.rel (0) target = $region33
    $region32: #{forward.1} parent=1 // pred_region
      _
    $region33: #{forward.1} parent=1 // pred_fallthru
      _
    %7822 = vsyncpa [#allocation4], 1
    %7823 = vsyncpa [#allocation6], 1

</llo_original>
